<compile_context>
chip_gen: v7x
topology: tpu7x:2x2x1
jax: 0.10.0
libtpu: 0.0.40
codegen_flags: <defaults>
</compile_context>

<pallas_src>
import functools
import math

import jax
import jax.numpy as jnp
from jax import lax
from jax.experimental import pallas as pl
from jax.experimental.pallas import tpu as pltpu


# ---------------------------------------------------------------------------
# In-kernel helpers (operate on traced jnp values inside the fused kernel)
# ---------------------------------------------------------------------------

def _mm(a, b):
    """a @ b with bf16 MXU operands and f32 accumulation."""
    return jnp.dot(a.astype(jnp.bfloat16), b.astype(jnp.bfloat16),
                   preferred_element_type=jnp.float32)


def _mm_t(a, b):
    """a @ b.T with bf16 MXU operands and f32 accumulation."""
    return lax.dot_general(a.astype(jnp.bfloat16), b.astype(jnp.bfloat16),
                           (((1,), (1,)), ((), ())),
                           preferred_element_type=jnp.float32)


def _layernorm(x, g, b, eps=1e-5):
    mu = jnp.mean(x, axis=-1, keepdims=True)
    xc = x - mu
    var = jnp.mean(xc * xc, axis=-1, keepdims=True)
    return xc * lax.rsqrt(var + eps) * g + b


def _act(x, name):
    if name == "relu":
        return jnp.maximum(x, 0.0)
    return jax.nn.gelu(x)


def _mha(ap, x_q, x_kv, key_bias, n_heads, scale):
    """Multi-head attention for one batch element.

    x_q: (Lq, D), x_kv: (Lk, D), key_bias: (1, Lk) additive (0 valid, -1e30
    padded key).  Head split is a static lane slice; head merge is fused into
    the output projection (sum over per-head row-blocks of Wo)."""
    D = x_q.shape[-1]
    dh = D // n_heads
    q = _mm(x_q, ap["wq"]) + ap["bq"]          # (Lq, D)
    kv = _mm(x_kv, ap["wkv"]) + ap["bkv"]      # (Lk, 2D)
    acc = None
    for h in range(n_heads):
        qh = q[:, h * dh:(h + 1) * dh]                     # (Lq, dh)
        kh = kv[:, h * dh:(h + 1) * dh]                    # (Lk, dh)
        vh = kv[:, D + h * dh:D + (h + 1) * dh]            # (Lk, dh)
        s = _mm_t(qh, kh) * scale + key_bias               # (Lq, Lk) f32
        s = s - jnp.max(s, axis=-1, keepdims=True)
        e = jnp.exp(s)
        inv = pl.reciprocal(jnp.sum(e, axis=-1, keepdims=True), approx=True)
        p = e * inv
        oh = _mm(p, vh)                                    # (Lq, dh)
        contrib = _mm(oh, ap["wo"][h * dh:(h + 1) * dh, :])  # (Lq, D)
        acc = contrib if acc is None else acc + contrib
    return acc + ap["bo"]


def _ffn(lp, x, act):
    y = _act(_mm(x, lp["w1"]) + lp["b1"], act)
    return _mm(y, lp["w2"]) + lp["b2"]


def _encoder_layer(lp, x, key_bias, n_heads, scale, act):
    new_x = _mha(lp["attn"], x, x, key_bias, n_heads, scale)
    x = _layernorm(x + new_x, lp["norm1_g"], lp["norm1_b"])
    y = _ffn(lp, x, act)
    return _layernorm(x + y, lp["norm2_g"], lp["norm2_b"])


def _decoder_layer(lp, x, cross, self_bias, cross_bias, n_heads, scale, act):
    x = x + _mha(lp["self_attn"], x, x, self_bias, n_heads, scale)
    x = _layernorm(x, lp["norm1_g"], lp["norm1_b"])
    x = x + _mha(lp["cross_attn"], x, cross, cross, n_heads, scale) \
        if False else x + _mha(lp["cross_attn"], x, cross, cross_bias, n_heads, scale)
    x = _layernorm(x, lp["norm2_g"], lp["norm2_b"])
    y = _ffn(lp, x, act)
    return _layernorm(x + y, lp["norm3_g"], lp["norm3_b"])


# ---------------------------------------------------------------------------
# The single fused kernel: one grid step == one batch element, full forward
# ---------------------------------------------------------------------------

def _osformer_kernel(*refs, treedef, n_params, cfg):
    x_enc_ref, x_dec_ref, m_enc_ref, m_dec_ref, lpos_ref = refs[:5]
    param_refs = refs[5:5 + n_params]
    out_ref = refs[5 + n_params]

    p = jax.tree_util.tree_unflatten(treedef, [r[...] for r in param_refs])

    S = cfg["seq_len"]
    H = cfg["num_heads"]
    D = cfg["mhsa_dim"]
    act = cfg["activation"]
    scale = 1.0 / math.sqrt(D // H)

    x_enc = x_enc_ref[0]                                    # (S, d_inp)
    x_dec = x_dec_ref[0]                                    # (S+P, d_inp)
    # build additive attention bias in-kernel from the raw padding masks
    bias_enc = jnp.where(m_enc_ref[0] != 0.0, -1e30, 0.0).astype(jnp.float32)
    bias_dec = jnp.where(m_dec_ref[0] != 0.0, -1e30, 0.0).astype(jnp.float32)
    pe = p["pe"]                                            # (S+P, D)

    # ----- encoder -----
    enc = _mm(x_enc, p["enc_emb_w"]) + p["enc_emb_b"] + pe[:S]
    for lp_ in p["enc_layers"]:
        enc = _encoder_layer(lp_, enc, bias_enc, H, scale, act)
    enc_out = _layernorm(enc, p["enc_norm_g"], p["enc_norm_b"])

    # ----- decoder -----
    dec = _mm(x_dec, p["dec_emb_w"]) + p["dec_emb_b"] + pe
    for lp_ in p["dec_layers"]:
        dec = _decoder_layer(lp_, dec, enc_out, bias_dec, bias_enc,
                             H, scale, act)

    # ----- output projection (Linear -> ReLU -> Linear) + post-process -----
    h = _act(_mm(dec, p["out_w1"]) + p["out_b1"], "relu")
    o = _mm(h, p["out_w2"]) + p["out_b2"]                   # (S+P, out_dim)
    pred = o[S:, :]                                         # (P, out_dim)
    pos_idx = (lax.broadcasted_iota(jnp.int32, pred.shape, 0) + 1
               ).astype(jnp.float32)
    out_ref[0] = pred * pos_idx + lpos_ref[0]               # (P, out_dim)


# ---------------------------------------------------------------------------
# Host wrapper: one pallas_call for the whole forward
# ---------------------------------------------------------------------------

def one_step_former_forward(params, cfg, x_enc, x_enc_padding_mask, latest_pos):
    S, P = cfg["seq_len"], cfg["pred_len"]
    B = x_enc.shape[1]
    d_inp = x_enc.shape[2]
    Lsp = S + P
    out_dim = cfg["motion_out_dim"]

    # batch-major packing of the (tiny) inputs; done once per forward
    x_enc3 = jnp.transpose(x_enc, (1, 0, 2)).astype(jnp.float32)       # (B,S,d)
    x_dec3 = jnp.concatenate(
        [x_enc3, jnp.zeros((B, P, d_inp), jnp.float32)], axis=1)       # (B,S+P,d)
    m_enc3 = jnp.transpose(x_enc_padding_mask, (1, 2, 0)).astype(jnp.float32)  # (B,1,S)
    m_dec3 = jnp.concatenate(
        [m_enc3, jnp.zeros((B, 1, P), jnp.float32)], axis=2)           # (B,1,S+P)
    lpos3 = jnp.transpose(latest_pos, (1, 0, 2)).astype(jnp.float32)   # (B,1,d)

    # flatten the parameter pytree; 1-D leaves become (1, n) so every leaf is 2-D
    params2d = jax.tree_util.tree_map(
        lambda a: a.reshape(1, -1) if a.ndim == 1 else a, params)
    flat_params, treedef = jax.tree_util.tree_flatten(params2d)
    n_params = len(flat_params)

    def full_spec(a):
        return pl.BlockSpec(tuple(a.shape), lambda b, _nd=a.ndim: (0,) * _nd)

    data_in = [x_enc3, x_dec3, m_enc3, m_dec3, lpos3]
    data_specs = [
        pl.BlockSpec((1, S, d_inp), lambda b: (b, 0, 0)),
        pl.BlockSpec((1, Lsp, d_inp), lambda b: (b, 0, 0)),
        pl.BlockSpec((1, 1, S), lambda b: (b, 0, 0)),
        pl.BlockSpec((1, 1, Lsp), lambda b: (b, 0, 0)),
        pl.BlockSpec((1, 1, d_inp), lambda b: (b, 0, 0)),
    ]
    param_specs = [full_spec(a) for a in flat_params]

    kernel = functools.partial(_osformer_kernel, treedef=treedef,
                               n_params=n_params, cfg=cfg)

    out = pl.pallas_call(
        kernel,
        grid=(B,),
        in_specs=data_specs + param_specs,
        out_specs=pl.BlockSpec((1, P, out_dim), lambda b: (b, 0, 0)),
        out_shape=jax.ShapeDtypeStruct((B, P, out_dim), jnp.float32),
        compiler_params=pltpu.CompilerParams(
            dimension_semantics=("parallel",),
            vmem_limit_bytes=32 * 1024 * 1024),
    )(*data_in, *flat_params)
    return out                                              # (B, P, out_dim)


# ---------------------------------------------------------------------------
# Deterministic parameter init (synthetic weights)
# ---------------------------------------------------------------------------

def sinusoid_pe(max_len, d_model):
    pos = jnp.arange(max_len, dtype=jnp.float32)[:, None]
    div = jnp.exp(jnp.arange(0, d_model, 2, dtype=jnp.float32)
                  * (-math.log(10000.0) / d_model))
    pe = jnp.zeros((max_len, d_model), jnp.float32)
    pe = pe.at[:, 0::2].set(jnp.sin(pos * div))
    pe = pe.at[:, 1::2].set(jnp.cos(pos * div))
    return pe                                               # (max_len, d_model)


def _dense(key, din, dout, scale=0.1):
    kw, kb = jax.random.split(key)
    return (scale * jax.random.normal(kw, (din, dout), jnp.float32),
            scale * jax.random.normal(kb, (dout,), jnp.float32))


def _attn_params(key, d_model):
    kq, kk, kv, ko = jax.random.split(key, 4)
    wq, bq = _dense(kq, d_model, d_model)
    wk, bk = _dense(kk, d_model, d_model)
    wv, bv = _dense(kv, d_model, d_model)
    wo, bo = _dense(ko, d_model, d_model)
    return dict(wq=wq, bq=bq,
                wkv=jnp.concatenate([wk, wv], axis=1),      # fused K/V proj
                bkv=jnp.concatenate([bk, bv], axis=0),
                wo=wo, bo=bo)


def _enc_layer_params(key, d_model, d_ff):
    ka, k1, k2 = jax.random.split(key, 3)
    w1, b1 = _dense(k1, d_model, d_ff)
    w2, b2 = _dense(k2, d_ff, d_model)
    ones = jnp.ones((d_model,), jnp.float32)
    zeros = jnp.zeros((d_model,), jnp.float32)
    return dict(attn=_attn_params(ka, d_model), w1=w1, b1=b1, w2=w2, b2=b2,
                norm1_g=ones, norm1_b=zeros, norm2_g=ones, norm2_b=zeros)


def _dec_layer_params(key, d_model, d_ff):
    ks, kc, k1, k2 = jax.random.split(key, 4)
    w1, b1 = _dense(k1, d_model, d_ff)
    w2, b2 = _dense(k2, d_ff, d_model)
    ones = jnp.ones((d_model,), jnp.float32)
    zeros = jnp.zeros((d_model,), jnp.float32)
    return dict(self_attn=_attn_params(ks, d_model),
                cross_attn=_attn_params(kc, d_model),
                w1=w1, b1=b1, w2=w2, b2=b2,
                norm1_g=ones, norm1_b=zeros,
                norm2_g=ones, norm2_b=zeros,
                norm3_g=ones, norm3_b=zeros)


def init_params(key, cfg):
    D, F = cfg["mhsa_dim"], cfg["mhsa_d_ff"]
    keys = jax.random.split(key, 8)
    enc_emb_w, enc_emb_b = _dense(keys[0], cfg["in_dim"], D)
    dec_emb_w, dec_emb_b = _dense(keys[1], cfg["in_dim"], D)
    enc_layers = [_enc_layer_params(k, D, F)
                  for k in jax.random.split(keys[2], cfg["e_layers"])]
    dec_layers = [_dec_layer_params(k, D, F)
                  for k in jax.random.split(keys[3], cfg["d_layers"])]
    out_w1, out_b1 = _dense(keys[4], D, D)
    out_w2, out_b2 = _dense(keys[5], D, cfg["motion_out_dim"])
    # NOTE: the module's self.norm1 / self.norm2 are declared but unused.
    return dict(
        pe=sinusoid_pe(cfg["seq_len"] + cfg["pred_len"], D),
        enc_emb_w=enc_emb_w, enc_emb_b=enc_emb_b,
        dec_emb_w=dec_emb_w, dec_emb_b=dec_emb_b,
        enc_layers=enc_layers,
        enc_norm_g=jnp.ones((D,), jnp.float32),
        enc_norm_b=jnp.zeros((D,), jnp.float32),
        dec_layers=dec_layers,
        out_w1=out_w1, out_b1=out_b1, out_w2=out_w2, out_b2=out_b2,
    )


# ---------------------------------------------------------------------------

if __name__ == "__main__":
    cfg = dict(seq_len=8, pred_len=1, in_dim=4, mhsa_dim=32, mhsa_d_ff=64,
               num_heads=4, dropout=0.0, activation="relu",
               e_layers=1, d_layers=1, motion_out_dim=4)
    B = 2

    key = jax.random.PRNGKey(0)
    k1, k2 = jax.random.split(key)
    x_enc = jax.random.normal(k1, (cfg["seq_len"], B, cfg["in_dim"]), jnp.float32)
    x_enc_padding_mask = jnp.zeros((cfg["seq_len"], B, 1), jnp.float32)  # 0 = valid
    latest_pos = jax.random.normal(k2, (1, B, cfg["in_dim"]), jnp.float32)

    params = init_params(jax.random.PRNGKey(42), cfg)

    pred = one_step_former_forward(params, cfg, x_enc, x_enc_padding_mask,
                                   latest_pos)
    pred = jax.block_until_ready(pred)

    assert pred.shape == (B, cfg["pred_len"], cfg["motion_out_dim"]), pred.shape
    assert bool(jnp.all(jnp.isfinite(pred)))
    print("KERNEL_OK")
</pallas_src>

<mosaic_0001>
module attributes {stable_mosaic.version = 11 : i64} {
  func.func @_osformer_kernel(%arg0: i32, %arg1: memref<1x8x4xf32, #tpu.memory_space<vmem>>, %arg2: memref<1x9x4xf32, #tpu.memory_space<vmem>>, %arg3: memref<1x1x8xf32, #tpu.memory_space<vmem>>, %arg4: memref<1x1x9xf32, #tpu.memory_space<vmem>>, %arg5: memref<1x1x4xf32, #tpu.memory_space<vmem>>, %arg6: memref<1x32xf32, #tpu.memory_space<vmem>>, %arg7: memref<4x32xf32, #tpu.memory_space<vmem>>, %arg8: memref<1x64xf32, #tpu.memory_space<vmem>>, %arg9: memref<1x32xf32, #tpu.memory_space<vmem>>, %arg10: memref<1x64xf32, #tpu.memory_space<vmem>>, %arg11: memref<1x32xf32, #tpu.memory_space<vmem>>, %arg12: memref<1x32xf32, #tpu.memory_space<vmem>>, %arg13: memref<32x64xf32, #tpu.memory_space<vmem>>, %arg14: memref<32x32xf32, #tpu.memory_space<vmem>>, %arg15: memref<32x32xf32, #tpu.memory_space<vmem>>, %arg16: memref<1x32xf32, #tpu.memory_space<vmem>>, %arg17: memref<1x32xf32, #tpu.memory_space<vmem>>, %arg18: memref<1x32xf32, #tpu.memory_space<vmem>>, %arg19: memref<1x32xf32, #tpu.memory_space<vmem>>, %arg20: memref<1x32xf32, #tpu.memory_space<vmem>>, %arg21: memref<1x32xf32, #tpu.memory_space<vmem>>, %arg22: memref<1x64xf32, #tpu.memory_space<vmem>>, %arg23: memref<1x32xf32, #tpu.memory_space<vmem>>, %arg24: memref<1x32xf32, #tpu.memory_space<vmem>>, %arg25: memref<32x64xf32, #tpu.memory_space<vmem>>, %arg26: memref<32x32xf32, #tpu.memory_space<vmem>>, %arg27: memref<32x32xf32, #tpu.memory_space<vmem>>, %arg28: memref<32x64xf32, #tpu.memory_space<vmem>>, %arg29: memref<64x32xf32, #tpu.memory_space<vmem>>, %arg30: memref<1x32xf32, #tpu.memory_space<vmem>>, %arg31: memref<4x32xf32, #tpu.memory_space<vmem>>, %arg32: memref<1x64xf32, #tpu.memory_space<vmem>>, %arg33: memref<1x32xf32, #tpu.memory_space<vmem>>, %arg34: memref<1x32xf32, #tpu.memory_space<vmem>>, %arg35: memref<32x64xf32, #tpu.memory_space<vmem>>, %arg36: memref<32x32xf32, #tpu.memory_space<vmem>>, %arg37: memref<32x32xf32, #tpu.memory_space<vmem>>, %arg38: memref<1x64xf32, #tpu.memory_space<vmem>>, %arg39: memref<1x32xf32, #tpu.memory_space<vmem>>, %arg40: memref<1x32xf32, #tpu.memory_space<vmem>>, %arg41: memref<1x32xf32, #tpu.memory_space<vmem>>, %arg42: memref<1x32xf32, #tpu.memory_space<vmem>>, %arg43: memref<1x32xf32, #tpu.memory_space<vmem>>, %arg44: memref<32x64xf32, #tpu.memory_space<vmem>>, %arg45: memref<64x32xf32, #tpu.memory_space<vmem>>, %arg46: memref<1x32xf32, #tpu.memory_space<vmem>>, %arg47: memref<1x32xf32, #tpu.memory_space<vmem>>, %arg48: memref<1x32xf32, #tpu.memory_space<vmem>>, %arg49: memref<1x4xf32, #tpu.memory_space<vmem>>, %arg50: memref<32x32xf32, #tpu.memory_space<vmem>>, %arg51: memref<32x4xf32, #tpu.memory_space<vmem>>, %arg52: memref<9x32xf32, #tpu.memory_space<vmem>>, %arg53: memref<1x1x4xf32, #tpu.memory_space<vmem>>) attributes {dimension_semantics = [#tpu.dimension_semantics<parallel>], iteration_bounds = array<i64: 2>, scalar_prefetch = 0 : i64, scratch_operands = 0 : i64, tpu.core_type = #tpu.core_type<tc>, window_params = [{transform_indices = @transform_0, window_bounds = array<i64: 1, 8, 4>}, {transform_indices = @transform_1, window_bounds = array<i64: 1, 9, 4>}, {transform_indices = @transform_2, window_bounds = array<i64: 1, 1, 8>}, {transform_indices = @transform_3, window_bounds = array<i64: 1, 1, 9>}, {transform_indices = @transform_4, window_bounds = array<i64: 1, 1, 4>}, {pipeline_mode = #tpu.pipeline_mode<synchronous>, transform_indices = @transform_5, window_bounds = array<i64: 1, 32>}, {pipeline_mode = #tpu.pipeline_mode<synchronous>, transform_indices = @transform_6, window_bounds = array<i64: 4, 32>}, {pipeline_mode = #tpu.pipeline_mode<synchronous>, transform_indices = @transform_7, window_bounds = array<i64: 1, 64>}, {pipeline_mode = #tpu.pipeline_mode<synchronous>, transform_indices = @transform_8, window_bounds = array<i64: 1, 32>}, {pipeline_mode = #tpu.pipeline_mode<synchronous>, transform_indices = @transform_9, window_bounds = array<i64: 1, 64>}, {pipeline_mode = #tpu.pipeline_mode<synchronous>, transform_indices = @transform_10, window_bounds = array<i64: 1, 32>}, {pipeline_mode = #tpu.pipeline_mode<synchronous>, transform_indices = @transform_11, window_bounds = array<i64: 1, 32>}, {pipeline_mode = #tpu.pipeline_mode<synchronous>, transform_indices = @transform_12, window_bounds = array<i64: 32, 64>}, {pipeline_mode = #tpu.pipeline_mode<synchronous>, transform_indices = @transform_13, window_bounds = array<i64: 32, 32>}, {pipeline_mode = #tpu.pipeline_mode<synchronous>, transform_indices = @transform_14, window_bounds = array<i64: 32, 32>}, {pipeline_mode = #tpu.pipeline_mode<synchronous>, transform_indices = @transform_15, window_bounds = array<i64: 1, 32>}, {pipeline_mode = #tpu.pipeline_mode<synchronous>, transform_indices = @transform_16, window_bounds = array<i64: 1, 32>}, {pipeline_mode = #tpu.pipeline_mode<synchronous>, transform_indices = @transform_17, window_bounds = array<i64: 1, 32>}, {pipeline_mode = #tpu.pipeline_mode<synchronous>, transform_indices = @transform_18, window_bounds = array<i64: 1, 32>}, {pipeline_mode = #tpu.pipeline_mode<synchronous>, transform_indices = @transform_19, window_bounds = array<i64: 1, 32>}, {pipeline_mode = #tpu.pipeline_mode<synchronous>, transform_indices = @transform_20, window_bounds = array<i64: 1, 32>}, {pipeline_mode = #tpu.pipeline_mode<synchronous>, transform_indices = @transform_21, window_bounds = array<i64: 1, 64>}, {pipeline_mode = #tpu.pipeline_mode<synchronous>, transform_indices = @transform_22, window_bounds = array<i64: 1, 32>}, {pipeline_mode = #tpu.pipeline_mode<synchronous>, transform_indices = @transform_23, window_bounds = array<i64: 1, 32>}, {pipeline_mode = #tpu.pipeline_mode<synchronous>, transform_indices = @transform_24, window_bounds = array<i64: 32, 64>}, {pipeline_mode = #tpu.pipeline_mode<synchronous>, transform_indices = @transform_25, window_bounds = array<i64: 32, 32>}, {pipeline_mode = #tpu.pipeline_mode<synchronous>, transform_indices = @transform_26, window_bounds = array<i64: 32, 32>}, {pipeline_mode = #tpu.pipeline_mode<synchronous>, transform_indices = @transform_27, window_bounds = array<i64: 32, 64>}, {pipeline_mode = #tpu.pipeline_mode<synchronous>, transform_indices = @transform_28, window_bounds = array<i64: 64, 32>}, {pipeline_mode = #tpu.pipeline_mode<synchronous>, transform_indices = @transform_29, window_bounds = array<i64: 1, 32>}, {pipeline_mode = #tpu.pipeline_mode<synchronous>, transform_indices = @transform_30, window_bounds = array<i64: 4, 32>}, {pipeline_mode = #tpu.pipeline_mode<synchronous>, transform_indices = @transform_31, window_bounds = array<i64: 1, 64>}, {pipeline_mode = #tpu.pipeline_mode<synchronous>, transform_indices = @transform_32, window_bounds = array<i64: 1, 32>}, {pipeline_mode = #tpu.pipeline_mode<synchronous>, transform_indices = @transform_33, window_bounds = array<i64: 1, 32>}, {pipeline_mode = #tpu.pipeline_mode<synchronous>, transform_indices = @transform_34, window_bounds = array<i64: 32, 64>}, {pipeline_mode = #tpu.pipeline_mode<synchronous>, transform_indices = @transform_35, window_bounds = array<i64: 32, 32>}, {pipeline_mode = #tpu.pipeline_mode<synchronous>, transform_indices = @transform_36, window_bounds = array<i64: 32, 32>}, {pipeline_mode = #tpu.pipeline_mode<synchronous>, transform_indices = @transform_37, window_bounds = array<i64: 1, 64>}, {pipeline_mode = #tpu.pipeline_mode<synchronous>, transform_indices = @transform_38, window_bounds = array<i64: 1, 32>}, {pipeline_mode = #tpu.pipeline_mode<synchronous>, transform_indices = @transform_39, window_bounds = array<i64: 1, 32>}, {pipeline_mode = #tpu.pipeline_mode<synchronous>, transform_indices = @transform_40, window_bounds = array<i64: 1, 32>}, {pipeline_mode = #tpu.pipeline_mode<synchronous>, transform_indices = @transform_41, window_bounds = array<i64: 1, 32>}, {pipeline_mode = #tpu.pipeline_mode<synchronous>, transform_indices = @transform_42, window_bounds = array<i64: 1, 32>}, {pipeline_mode = #tpu.pipeline_mode<synchronous>, transform_indices = @transform_43, window_bounds = array<i64: 32, 64>}, {pipeline_mode = #tpu.pipeline_mode<synchronous>, transform_indices = @transform_44, window_bounds = array<i64: 64, 32>}, {pipeline_mode = #tpu.pipeline_mode<synchronous>, transform_indices = @transform_45, window_bounds = array<i64: 1, 32>}, {pipeline_mode = #tpu.pipeline_mode<synchronous>, transform_indices = @transform_46, window_bounds = array<i64: 1, 32>}, {pipeline_mode = #tpu.pipeline_mode<synchronous>, transform_indices = @transform_47, window_bounds = array<i64: 1, 32>}, {pipeline_mode = #tpu.pipeline_mode<synchronous>, transform_indices = @transform_48, window_bounds = array<i64: 1, 4>}, {pipeline_mode = #tpu.pipeline_mode<synchronous>, transform_indices = @transform_49, window_bounds = array<i64: 32, 32>}, {pipeline_mode = #tpu.pipeline_mode<synchronous>, transform_indices = @transform_50, window_bounds = array<i64: 32, 4>}, {pipeline_mode = #tpu.pipeline_mode<synchronous>, transform_indices = @transform_51, window_bounds = array<i64: 9, 32>}, {transform_indices = @transform_52, window_bounds = array<i64: 1, 1, 4>}]} {
    %c0 = arith.constant 0 : index
    %c0_0 = arith.constant 0 : index
    %0 = vector.load %arg6[%c0, %c0_0] : memref<1x32xf32, #tpu.memory_space<vmem>>, vector<1x32xf32>
    %c0_1 = arith.constant 0 : index
    %c0_2 = arith.constant 0 : index
    %1 = vector.load %arg7[%c0_1, %c0_2] : memref<4x32xf32, #tpu.memory_space<vmem>>, vector<4x32xf32>
    %c0_3 = arith.constant 0 : index
    %c0_4 = arith.constant 0 : index
    %2 = vector.load %arg8[%c0_3, %c0_4] : memref<1x64xf32, #tpu.memory_space<vmem>>, vector<1x64xf32>
    %c0_5 = arith.constant 0 : index
    %c0_6 = arith.constant 0 : index
    %3 = vector.load %arg9[%c0_5, %c0_6] : memref<1x32xf32, #tpu.memory_space<vmem>>, vector<1x32xf32>
    %c0_7 = arith.constant 0 : index
    %c0_8 = arith.constant 0 : index
    %4 = vector.load %arg10[%c0_7, %c0_8] : memref<1x64xf32, #tpu.memory_space<vmem>>, vector<1x64xf32>
    %c0_9 = arith.constant 0 : index
    %c0_10 = arith.constant 0 : index
    %5 = vector.load %arg11[%c0_9, %c0_10] : memref<1x32xf32, #tpu.memory_space<vmem>>, vector<1x32xf32>
    %c0_11 = arith.constant 0 : index
    %c0_12 = arith.constant 0 : index
    %6 = vector.load %arg12[%c0_11, %c0_12] : memref<1x32xf32, #tpu.memory_space<vmem>>, vector<1x32xf32>
    %c0_13 = arith.constant 0 : index
    %c0_14 = arith.constant 0 : index
    %7 = vector.load %arg13[%c0_13, %c0_14] : memref<32x64xf32, #tpu.memory_space<vmem>>, vector<32x64xf32>
    %c0_15 = arith.constant 0 : index
    %c0_16 = arith.constant 0 : index
    %8 = vector.load %arg14[%c0_15, %c0_16] : memref<32x32xf32, #tpu.memory_space<vmem>>, vector<32x32xf32>
    %c0_17 = arith.constant 0 : index
    %c0_18 = arith.constant 0 : index
    %9 = vector.load %arg15[%c0_17, %c0_18] : memref<32x32xf32, #tpu.memory_space<vmem>>, vector<32x32xf32>
    %c0_19 = arith.constant 0 : index
    %c0_20 = arith.constant 0 : index
    %10 = vector.load %arg16[%c0_19, %c0_20] : memref<1x32xf32, #tpu.memory_space<vmem>>, vector<1x32xf32>
    %c0_21 = arith.constant 0 : index
    %c0_22 = arith.constant 0 : index
    %11 = vector.load %arg17[%c0_21, %c0_22] : memref<1x32xf32, #tpu.memory_space<vmem>>, vector<1x32xf32>
    %c0_23 = arith.constant 0 : index
    %c0_24 = arith.constant 0 : index
    %12 = vector.load %arg18[%c0_23, %c0_24] : memref<1x32xf32, #tpu.memory_space<vmem>>, vector<1x32xf32>
    %c0_25 = arith.constant 0 : index
    %c0_26 = arith.constant 0 : index
    %13 = vector.load %arg19[%c0_25, %c0_26] : memref<1x32xf32, #tpu.memory_space<vmem>>, vector<1x32xf32>
    %c0_27 = arith.constant 0 : index
    %c0_28 = arith.constant 0 : index
    %14 = vector.load %arg20[%c0_27, %c0_28] : memref<1x32xf32, #tpu.memory_space<vmem>>, vector<1x32xf32>
    %c0_29 = arith.constant 0 : index
    %c0_30 = arith.constant 0 : index
    %15 = vector.load %arg21[%c0_29, %c0_30] : memref<1x32xf32, #tpu.memory_space<vmem>>, vector<1x32xf32>
    %c0_31 = arith.constant 0 : index
    %c0_32 = arith.constant 0 : index
    %16 = vector.load %arg22[%c0_31, %c0_32] : memref<1x64xf32, #tpu.memory_space<vmem>>, vector<1x64xf32>
    %c0_33 = arith.constant 0 : index
    %c0_34 = arith.constant 0 : index
    %17 = vector.load %arg23[%c0_33, %c0_34] : memref<1x32xf32, #tpu.memory_space<vmem>>, vector<1x32xf32>
    %c0_35 = arith.constant 0 : index
    %c0_36 = arith.constant 0 : index
    %18 = vector.load %arg24[%c0_35, %c0_36] : memref<1x32xf32, #tpu.memory_space<vmem>>, vector<1x32xf32>
    %c0_37 = arith.constant 0 : index
    %c0_38 = arith.constant 0 : index
    %19 = vector.load %arg25[%c0_37, %c0_38] : memref<32x64xf32, #tpu.memory_space<vmem>>, vector<32x64xf32>
    %c0_39 = arith.constant 0 : index
    %c0_40 = arith.constant 0 : index
    %20 = vector.load %arg26[%c0_39, %c0_40] : memref<32x32xf32, #tpu.memory_space<vmem>>, vector<32x32xf32>
    %c0_41 = arith.constant 0 : index
    %c0_42 = arith.constant 0 : index
    %21 = vector.load %arg27[%c0_41, %c0_42] : memref<32x32xf32, #tpu.memory_space<vmem>>, vector<32x32xf32>
    %c0_43 = arith.constant 0 : index
    %c0_44 = arith.constant 0 : index
    %22 = vector.load %arg28[%c0_43, %c0_44] : memref<32x64xf32, #tpu.memory_space<vmem>>, vector<32x64xf32>
    %c0_45 = arith.constant 0 : index
    %c0_46 = arith.constant 0 : index
    %23 = vector.load %arg29[%c0_45, %c0_46] : memref<64x32xf32, #tpu.memory_space<vmem>>, vector<64x32xf32>
    %c0_47 = arith.constant 0 : index
    %c0_48 = arith.constant 0 : index
    %24 = vector.load %arg30[%c0_47, %c0_48] : memref<1x32xf32, #tpu.memory_space<vmem>>, vector<1x32xf32>
    %c0_49 = arith.constant 0 : index
    %c0_50 = arith.constant 0 : index
    %25 = vector.load %arg31[%c0_49, %c0_50] : memref<4x32xf32, #tpu.memory_space<vmem>>, vector<4x32xf32>
    %c0_51 = arith.constant 0 : index
    %c0_52 = arith.constant 0 : index
    %26 = vector.load %arg32[%c0_51, %c0_52] : memref<1x64xf32, #tpu.memory_space<vmem>>, vector<1x64xf32>
    %c0_53 = arith.constant 0 : index
    %c0_54 = arith.constant 0 : index
    %27 = vector.load %arg33[%c0_53, %c0_54] : memref<1x32xf32, #tpu.memory_space<vmem>>, vector<1x32xf32>
    %c0_55 = arith.constant 0 : index
    %c0_56 = arith.constant 0 : index
    %28 = vector.load %arg34[%c0_55, %c0_56] : memref<1x32xf32, #tpu.memory_space<vmem>>, vector<1x32xf32>
    %c0_57 = arith.constant 0 : index
    %c0_58 = arith.constant 0 : index
    %29 = vector.load %arg35[%c0_57, %c0_58] : memref<32x64xf32, #tpu.memory_space<vmem>>, vector<32x64xf32>
    %c0_59 = arith.constant 0 : index
    %c0_60 = arith.constant 0 : index
    %30 = vector.load %arg36[%c0_59, %c0_60] : memref<32x32xf32, #tpu.memory_space<vmem>>, vector<32x32xf32>
    %c0_61 = arith.constant 0 : index
    %c0_62 = arith.constant 0 : index
    %31 = vector.load %arg37[%c0_61, %c0_62] : memref<32x32xf32, #tpu.memory_space<vmem>>, vector<32x32xf32>
    %c0_63 = arith.constant 0 : index
    %c0_64 = arith.constant 0 : index
    %32 = vector.load %arg38[%c0_63, %c0_64] : memref<1x64xf32, #tpu.memory_space<vmem>>, vector<1x64xf32>
    %c0_65 = arith.constant 0 : index
    %c0_66 = arith.constant 0 : index
    %33 = vector.load %arg39[%c0_65, %c0_66] : memref<1x32xf32, #tpu.memory_space<vmem>>, vector<1x32xf32>
    %c0_67 = arith.constant 0 : index
    %c0_68 = arith.constant 0 : index
    %34 = vector.load %arg40[%c0_67, %c0_68] : memref<1x32xf32, #tpu.memory_space<vmem>>, vector<1x32xf32>
    %c0_69 = arith.constant 0 : index
    %c0_70 = arith.constant 0 : index
    %35 = vector.load %arg41[%c0_69, %c0_70] : memref<1x32xf32, #tpu.memory_space<vmem>>, vector<1x32xf32>
    %c0_71 = arith.constant 0 : index
    %c0_72 = arith.constant 0 : index
    %36 = vector.load %arg42[%c0_71, %c0_72] : memref<1x32xf32, #tpu.memory_space<vmem>>, vector<1x32xf32>
    %c0_73 = arith.constant 0 : index
    %c0_74 = arith.constant 0 : index
    %37 = vector.load %arg43[%c0_73, %c0_74] : memref<1x32xf32, #tpu.memory_space<vmem>>, vector<1x32xf32>
    %c0_75 = arith.constant 0 : index
    %c0_76 = arith.constant 0 : index
    %38 = vector.load %arg44[%c0_75, %c0_76] : memref<32x64xf32, #tpu.memory_space<vmem>>, vector<32x64xf32>
    %c0_77 = arith.constant 0 : index
    %c0_78 = arith.constant 0 : index
    %39 = vector.load %arg45[%c0_77, %c0_78] : memref<64x32xf32, #tpu.memory_space<vmem>>, vector<64x32xf32>
    %c0_79 = arith.constant 0 : index
    %c0_80 = arith.constant 0 : index
    %40 = vector.load %arg46[%c0_79, %c0_80] : memref<1x32xf32, #tpu.memory_space<vmem>>, vector<1x32xf32>
    %c0_81 = arith.constant 0 : index
    %c0_82 = arith.constant 0 : index
    %41 = vector.load %arg47[%c0_81, %c0_82] : memref<1x32xf32, #tpu.memory_space<vmem>>, vector<1x32xf32>
    %c0_83 = arith.constant 0 : index
    %c0_84 = arith.constant 0 : index
    %42 = vector.load %arg48[%c0_83, %c0_84] : memref<1x32xf32, #tpu.memory_space<vmem>>, vector<1x32xf32>
    %c0_85 = arith.constant 0 : index
    %c0_86 = arith.constant 0 : index
    %43 = vector.load %arg49[%c0_85, %c0_86] : memref<1x4xf32, #tpu.memory_space<vmem>>, vector<1x4xf32>
    %c0_87 = arith.constant 0 : index
    %c0_88 = arith.constant 0 : index
    %44 = vector.load %arg50[%c0_87, %c0_88] : memref<32x32xf32, #tpu.memory_space<vmem>>, vector<32x32xf32>
    %c0_89 = arith.constant 0 : index
    %c0_90 = arith.constant 0 : index
    %45 = vector.load %arg51[%c0_89, %c0_90] : memref<32x4xf32, #tpu.memory_space<vmem>>, vector<32x4xf32>
    %c0_91 = arith.constant 0 : index
    %c0_92 = arith.constant 0 : index
    %46 = vector.load %arg52[%c0_91, %c0_92] : memref<9x32xf32, #tpu.memory_space<vmem>>, vector<9x32xf32>
    %c0_93 = arith.constant 0 : index
    %c0_94 = arith.constant 0 : index
    %c0_95 = arith.constant 0 : index
    %47 = vector.load %arg1[%c0_93, %c0_94, %c0_95] : memref<1x8x4xf32, #tpu.memory_space<vmem>>, vector<1x8x4xf32>
    %48 = vector.shape_cast %47 : vector<1x8x4xf32> to vector<8x4xf32>
    %c0_96 = arith.constant 0 : index
    %c0_97 = arith.constant 0 : index
    %c0_98 = arith.constant 0 : index
    %49 = vector.load %arg2[%c0_96, %c0_97, %c0_98] : memref<1x9x4xf32, #tpu.memory_space<vmem>>, vector<1x9x4xf32>
    %50 = vector.shape_cast %49 : vector<1x9x4xf32> to vector<9x4xf32>
    %c0_99 = arith.constant 0 : index
    %c0_100 = arith.constant 0 : index
    %c0_101 = arith.constant 0 : index
    %51 = vector.load %arg3[%c0_99, %c0_100, %c0_101] : memref<1x1x8xf32, #tpu.memory_space<vmem>>, vector<1x1x8xf32>
    %52 = vector.shape_cast %51 : vector<1x1x8xf32> to vector<1x8xf32>
    %cst = arith.constant 0.000000e+00 : f32
    %53 = vector.broadcast %cst : f32 to vector<1x8xf32>
    %54 = arith.cmpf one, %52, %53 : vector<1x8xf32>
    %cst_102 = arith.constant -1.000000e+30 : f32
    %cst_103 = arith.constant 0.000000e+00 : f32
    %55 = vector.broadcast %cst_102 : f32 to vector<1x8xf32>
    %56 = vector.broadcast %cst_103 : f32 to vector<1x8xf32>
    %57 = arith.select %54, %55, %56 : vector<1x8xi1>, vector<1x8xf32>
    %c0_104 = arith.constant 0 : index
    %c0_105 = arith.constant 0 : index
    %c0_106 = arith.constant 0 : index
    %58 = vector.load %arg4[%c0_104, %c0_105, %c0_106] : memref<1x1x9xf32, #tpu.memory_space<vmem>>, vector<1x1x9xf32>
    %59 = vector.shape_cast %58 : vector<1x1x9xf32> to vector<1x9xf32>
    %cst_107 = arith.constant 0.000000e+00 : f32
    %60 = vector.broadcast %cst_107 : f32 to vector<1x9xf32>
    %61 = arith.cmpf one, %59, %60 : vector<1x9xf32>
    %cst_108 = arith.constant -1.000000e+30 : f32
    %cst_109 = arith.constant 0.000000e+00 : f32
    %62 = vector.broadcast %cst_108 : f32 to vector<1x9xf32>
    %63 = vector.broadcast %cst_109 : f32 to vector<1x9xf32>
    %64 = arith.select %61, %62, %63 : vector<1x9xi1>, vector<1x9xf32>
    %65 = arith.truncf %48 : vector<8x4xf32> to vector<8x4xbf16>
    %66 = arith.truncf %25 : vector<4x32xf32> to vector<4x32xbf16>
    %cst_110 = arith.constant dense<0.000000e+00> : vector<8x32xf32>
    %67 = tpu.matmul %65, %66, %cst_110 {dimension_numbers = #tpu.dot_dimension_numbers<[1], [0], [0], [1], [0, 0, 1, 1], [], []>} : vector<8x4xbf16>, vector<4x32xbf16>, vector<8x32xf32> -> vector<8x32xf32>
    %68 = vector.broadcast %24 : vector<1x32xf32> to vector<8x32xf32>
    %69 = arith.addf %67, %68 : vector<8x32xf32>
    %70 = vector.extract_strided_slice %46 {offsets = [0, 0], sizes = [8, 32], strides = [1, 1]} : vector<9x32xf32> to vector<8x32xf32>
    %71 = arith.addf %69, %70 : vector<8x32xf32>
    %72 = arith.truncf %71 : vector<8x32xf32> to vector<8x32xbf16>
    %73 = arith.truncf %31 : vector<32x32xf32> to vector<32x32xbf16>
    %cst_111 = arith.constant dense<0.000000e+00> : vector<8x32xf32>
    %74 = tpu.matmul %72, %73, %cst_111 {dimension_numbers = #tpu.dot_dimension_numbers<[1], [0], [0], [1], [0, 0, 1, 1], [], []>} : vector<8x32xbf16>, vector<32x32xbf16>, vector<8x32xf32> -> vector<8x32xf32>
    %75 = vector.broadcast %28 : vector<1x32xf32> to vector<8x32xf32>
    %76 = arith.addf %74, %75 : vector<8x32xf32>
    %77 = arith.truncf %71 : vector<8x32xf32> to vector<8x32xbf16>
    %78 = arith.truncf %29 : vector<32x64xf32> to vector<32x64xbf16>
    %cst_112 = arith.constant dense<0.000000e+00> : vector<8x64xf32>
    %79 = tpu.matmul %77, %78, %cst_112 {dimension_numbers = #tpu.dot_dimension_numbers<[1], [0], [0], [1], [0, 0, 1, 1], [], []>} : vector<8x32xbf16>, vector<32x64xbf16>, vector<8x64xf32> -> vector<8x64xf32>
    %80 = vector.broadcast %26 : vector<1x64xf32> to vector<8x64xf32>
    %81 = arith.addf %79, %80 : vector<8x64xf32>
    %82 = vector.extract_strided_slice %76 {offsets = [0, 0], sizes = [8, 8], strides = [1, 1]} : vector<8x32xf32> to vector<8x8xf32>
    %83 = vector.extract_strided_slice %81 {offsets = [0, 0], sizes = [8, 8], strides = [1, 1]} : vector<8x64xf32> to vector<8x8xf32>
    %84 = vector.extract_strided_slice %81 {offsets = [0, 32], sizes = [8, 8], strides = [1, 1]} : vector<8x64xf32> to vector<8x8xf32>
    %85 = arith.truncf %82 : vector<8x8xf32> to vector<8x8xbf16>
    %86 = arith.truncf %83 : vector<8x8xf32> to vector<8x8xbf16>
    %cst_113 = arith.constant dense<0.000000e+00> : vector<8x8xf32>
    %87 = tpu.matmul %85, %86, %cst_113 {dimension_numbers = #tpu.dot_dimension_numbers<[1], [1], [0], [0], [0, 0, 1, 0], [], []>} : vector<8x8xbf16>, vector<8x8xbf16>, vector<8x8xf32> -> vector<8x8xf32>
    %cst_114 = arith.constant 0.353553385 : f32
    %88 = vector.broadcast %cst_114 : f32 to vector<8x8xf32>
    %89 = arith.mulf %87, %88 : vector<8x8xf32>
    %90 = vector.broadcast %57 : vector<1x8xf32> to vector<8x8xf32>
    %91 = arith.addf %89, %90 : vector<8x8xf32>
    %cst_115 = arith.constant dense<0xFF800000> : vector<8xf32>
    %92 = vector.multi_reduction <maximumf>, %91, %cst_115 [1] : vector<8x8xf32> to vector<8xf32>
    %93 = vector.shape_cast %92 : vector<8xf32> to vector<8x1xf32>
    %94 = vector.broadcast %93 : vector<8x1xf32> to vector<8x8xf32>
    %95 = arith.subf %91, %94 : vector<8x8xf32>
    %96 = math.exp %95 : vector<8x8xf32>
    %cst_116 = arith.constant dense<0.000000e+00> : vector<8xf32>
    %97 = vector.multi_reduction <add>, %96, %cst_116 [1] : vector<8x8xf32> to vector<8xf32>
    %98 = vector.shape_cast %97 : vector<8xf32> to vector<8x1xf32>
    %99 = tpu.reciprocal %98 {approx = true} : vector<8x1xf32> -> vector<8x1xf32>
    %100 = vector.broadcast %99 : vector<8x1xf32> to vector<8x8xf32>
    %101 = arith.mulf %96, %100 : vector<8x8xf32>
    %102 = arith.truncf %101 : vector<8x8xf32> to vector<8x8xbf16>
    %103 = arith.truncf %84 : vector<8x8xf32> to vector<8x8xbf16>
    %cst_117 = arith.constant dense<0.000000e+00> : vector<8x8xf32>
    %104 = tpu.matmul %102, %103, %cst_117 {dimension_numbers = #tpu.dot_dimension_numbers<[1], [0], [0], [1], [0, 0, 1, 1], [], []>} : vector<8x8xbf16>, vector<8x8xbf16>, vector<8x8xf32> -> vector<8x8xf32>
    %105 = vector.extract_strided_slice %30 {offsets = [0, 0], sizes = [8, 32], strides = [1, 1]} : vector<32x32xf32> to vector<8x32xf32>
    %106 = arith.truncf %104 : vector<8x8xf32> to vector<8x8xbf16>
    %107 = arith.truncf %105 : vector<8x32xf32> to vector<8x32xbf16>
    %cst_118 = arith.constant dense<0.000000e+00> : vector<8x32xf32>
    %108 = tpu.matmul %106, %107, %cst_118 {dimension_numbers = #tpu.dot_dimension_numbers<[1], [0], [0], [1], [0, 0, 1, 1], [], []>} : vector<8x8xbf16>, vector<8x32xbf16>, vector<8x32xf32> -> vector<8x32xf32>
    %109 = vector.extract_strided_slice %76 {offsets = [0, 8], sizes = [8, 8], strides = [1, 1]} : vector<8x32xf32> to vector<8x8xf32>
    %110 = vector.extract_strided_slice %81 {offsets = [0, 8], sizes = [8, 8], strides = [1, 1]} : vector<8x64xf32> to vector<8x8xf32>
    %111 = vector.extract_strided_slice %81 {offsets = [0, 40], sizes = [8, 8], strides = [1, 1]} : vector<8x64xf32> to vector<8x8xf32>
    %112 = arith.truncf %109 : vector<8x8xf32> to vector<8x8xbf16>
    %113 = arith.truncf %110 : vector<8x8xf32> to vector<8x8xbf16>
    %cst_119 = arith.constant dense<0.000000e+00> : vector<8x8xf32>
    %114 = tpu.matmul %112, %113, %cst_119 {dimension_numbers = #tpu.dot_dimension_numbers<[1], [1], [0], [0], [0, 0, 1, 0], [], []>} : vector<8x8xbf16>, vector<8x8xbf16>, vector<8x8xf32> -> vector<8x8xf32>
    %cst_120 = arith.constant 0.353553385 : f32
    %115 = vector.broadcast %cst_120 : f32 to vector<8x8xf32>
    %116 = arith.mulf %114, %115 : vector<8x8xf32>
    %117 = vector.broadcast %57 : vector<1x8xf32> to vector<8x8xf32>
    %118 = arith.addf %116, %117 : vector<8x8xf32>
    %cst_121 = arith.constant dense<0xFF800000> : vector<8xf32>
    %119 = vector.multi_reduction <maximumf>, %118, %cst_121 [1] : vector<8x8xf32> to vector<8xf32>
    %120 = vector.shape_cast %119 : vector<8xf32> to vector<8x1xf32>
    %121 = vector.broadcast %120 : vector<8x1xf32> to vector<8x8xf32>
    %122 = arith.subf %118, %121 : vector<8x8xf32>
    %123 = math.exp %122 : vector<8x8xf32>
    %cst_122 = arith.constant dense<0.000000e+00> : vector<8xf32>
    %124 = vector.multi_reduction <add>, %123, %cst_122 [1] : vector<8x8xf32> to vector<8xf32>
    %125 = vector.shape_cast %124 : vector<8xf32> to vector<8x1xf32>
    %126 = tpu.reciprocal %125 {approx = true} : vector<8x1xf32> -> vector<8x1xf32>
    %127 = vector.broadcast %126 : vector<8x1xf32> to vector<8x8xf32>
    %128 = arith.mulf %123, %127 : vector<8x8xf32>
    %129 = arith.truncf %128 : vector<8x8xf32> to vector<8x8xbf16>
    %130 = arith.truncf %111 : vector<8x8xf32> to vector<8x8xbf16>
    %cst_123 = arith.constant dense<0.000000e+00> : vector<8x8xf32>
    %131 = tpu.matmul %129, %130, %cst_123 {dimension_numbers = #tpu.dot_dimension_numbers<[1], [0], [0], [1], [0, 0, 1, 1], [], []>} : vector<8x8xbf16>, vector<8x8xbf16>, vector<8x8xf32> -> vector<8x8xf32>
    %132 = vector.extract_strided_slice %30 {offsets = [8, 0], sizes = [8, 32], strides = [1, 1]} : vector<32x32xf32> to vector<8x32xf32>
    %133 = arith.truncf %131 : vector<8x8xf32> to vector<8x8xbf16>
    %134 = arith.truncf %132 : vector<8x32xf32> to vector<8x32xbf16>
    %cst_124 = arith.constant dense<0.000000e+00> : vector<8x32xf32>
    %135 = tpu.matmul %133, %134, %cst_124 {dimension_numbers = #tpu.dot_dimension_numbers<[1], [0], [0], [1], [0, 0, 1, 1], [], []>} : vector<8x8xbf16>, vector<8x32xbf16>, vector<8x32xf32> -> vector<8x32xf32>
    %136 = arith.addf %108, %135 : vector<8x32xf32>
    %137 = vector.extract_strided_slice %76 {offsets = [0, 16], sizes = [8, 8], strides = [1, 1]} : vector<8x32xf32> to vector<8x8xf32>
    %138 = vector.extract_strided_slice %81 {offsets = [0, 16], sizes = [8, 8], strides = [1, 1]} : vector<8x64xf32> to vector<8x8xf32>
    %139 = vector.extract_strided_slice %81 {offsets = [0, 48], sizes = [8, 8], strides = [1, 1]} : vector<8x64xf32> to vector<8x8xf32>
    %140 = arith.truncf %137 : vector<8x8xf32> to vector<8x8xbf16>
    %141 = arith.truncf %138 : vector<8x8xf32> to vector<8x8xbf16>
    %cst_125 = arith.constant dense<0.000000e+00> : vector<8x8xf32>
    %142 = tpu.matmul %140, %141, %cst_125 {dimension_numbers = #tpu.dot_dimension_numbers<[1], [1], [0], [0], [0, 0, 1, 0], [], []>} : vector<8x8xbf16>, vector<8x8xbf16>, vector<8x8xf32> -> vector<8x8xf32>
    %cst_126 = arith.constant 0.353553385 : f32
    %143 = vector.broadcast %cst_126 : f32 to vector<8x8xf32>
    %144 = arith.mulf %142, %143 : vector<8x8xf32>
    %145 = vector.broadcast %57 : vector<1x8xf32> to vector<8x8xf32>
    %146 = arith.addf %144, %145 : vector<8x8xf32>
    %cst_127 = arith.constant dense<0xFF800000> : vector<8xf32>
    %147 = vector.multi_reduction <maximumf>, %146, %cst_127 [1] : vector<8x8xf32> to vector<8xf32>
    %148 = vector.shape_cast %147 : vector<8xf32> to vector<8x1xf32>
    %149 = vector.broadcast %148 : vector<8x1xf32> to vector<8x8xf32>
    %150 = arith.subf %146, %149 : vector<8x8xf32>
    %151 = math.exp %150 : vector<8x8xf32>
    %cst_128 = arith.constant dense<0.000000e+00> : vector<8xf32>
    %152 = vector.multi_reduction <add>, %151, %cst_128 [1] : vector<8x8xf32> to vector<8xf32>
    %153 = vector.shape_cast %152 : vector<8xf32> to vector<8x1xf32>
    %154 = tpu.reciprocal %153 {approx = true} : vector<8x1xf32> -> vector<8x1xf32>
    %155 = vector.broadcast %154 : vector<8x1xf32> to vector<8x8xf32>
    %156 = arith.mulf %151, %155 : vector<8x8xf32>
    %157 = arith.truncf %156 : vector<8x8xf32> to vector<8x8xbf16>
    %158 = arith.truncf %139 : vector<8x8xf32> to vector<8x8xbf16>
    %cst_129 = arith.constant dense<0.000000e+00> : vector<8x8xf32>
    %159 = tpu.matmul %157, %158, %cst_129 {dimension_numbers = #tpu.dot_dimension_numbers<[1], [0], [0], [1], [0, 0, 1, 1], [], []>} : vector<8x8xbf16>, vector<8x8xbf16>, vector<8x8xf32> -> vector<8x8xf32>
    %160 = vector.extract_strided_slice %30 {offsets = [16, 0], sizes = [8, 32], strides = [1, 1]} : vector<32x32xf32> to vector<8x32xf32>
    %161 = arith.truncf %159 : vector<8x8xf32> to vector<8x8xbf16>
    %162 = arith.truncf %160 : vector<8x32xf32> to vector<8x32xbf16>
    %cst_130 = arith.constant dense<0.000000e+00> : vector<8x32xf32>
    %163 = tpu.matmul %161, %162, %cst_130 {dimension_numbers = #tpu.dot_dimension_numbers<[1], [0], [0], [1], [0, 0, 1, 1], [], []>} : vector<8x8xbf16>, vector<8x32xbf16>, vector<8x32xf32> -> vector<8x32xf32>
    %164 = arith.addf %136, %163 : vector<8x32xf32>
    %165 = vector.extract_strided_slice %76 {offsets = [0, 24], sizes = [8, 8], strides = [1, 1]} : vector<8x32xf32> to vector<8x8xf32>
    %166 = vector.extract_strided_slice %81 {offsets = [0, 24], sizes = [8, 8], strides = [1, 1]} : vector<8x64xf32> to vector<8x8xf32>
    %167 = vector.extract_strided_slice %81 {offsets = [0, 56], sizes = [8, 8], strides = [1, 1]} : vector<8x64xf32> to vector<8x8xf32>
    %168 = arith.truncf %165 : vector<8x8xf32> to vector<8x8xbf16>
    %169 = arith.truncf %166 : vector<8x8xf32> to vector<8x8xbf16>
    %cst_131 = arith.constant dense<0.000000e+00> : vector<8x8xf32>
    %170 = tpu.matmul %168, %169, %cst_131 {dimension_numbers = #tpu.dot_dimension_numbers<[1], [1], [0], [0], [0, 0, 1, 0], [], []>} : vector<8x8xbf16>, vector<8x8xbf16>, vector<8x8xf32> -> vector<8x8xf32>
    %cst_132 = arith.constant 0.353553385 : f32
    %171 = vector.broadcast %cst_132 : f32 to vector<8x8xf32>
    %172 = arith.mulf %170, %171 : vector<8x8xf32>
    %173 = vector.broadcast %57 : vector<1x8xf32> to vector<8x8xf32>
    %174 = arith.addf %172, %173 : vector<8x8xf32>
    %cst_133 = arith.constant dense<0xFF800000> : vector<8xf32>
    %175 = vector.multi_reduction <maximumf>, %174, %cst_133 [1] : vector<8x8xf32> to vector<8xf32>
    %176 = vector.shape_cast %175 : vector<8xf32> to vector<8x1xf32>
    %177 = vector.broadcast %176 : vector<8x1xf32> to vector<8x8xf32>
    %178 = arith.subf %174, %177 : vector<8x8xf32>
    %179 = math.exp %178 : vector<8x8xf32>
    %cst_134 = arith.constant dense<0.000000e+00> : vector<8xf32>
    %180 = vector.multi_reduction <add>, %179, %cst_134 [1] : vector<8x8xf32> to vector<8xf32>
    %181 = vector.shape_cast %180 : vector<8xf32> to vector<8x1xf32>
    %182 = tpu.reciprocal %181 {approx = true} : vector<8x1xf32> -> vector<8x1xf32>
    %183 = vector.broadcast %182 : vector<8x1xf32> to vector<8x8xf32>
    %184 = arith.mulf %179, %183 : vector<8x8xf32>
    %185 = arith.truncf %184 : vector<8x8xf32> to vector<8x8xbf16>
    %186 = arith.truncf %167 : vector<8x8xf32> to vector<8x8xbf16>
    %cst_135 = arith.constant dense<0.000000e+00> : vector<8x8xf32>
    %187 = tpu.matmul %185, %186, %cst_135 {dimension_numbers = #tpu.dot_dimension_numbers<[1], [0], [0], [1], [0, 0, 1, 1], [], []>} : vector<8x8xbf16>, vector<8x8xbf16>, vector<8x8xf32> -> vector<8x8xf32>
    %188 = vector.extract_strided_slice %30 {offsets = [24, 0], sizes = [8, 32], strides = [1, 1]} : vector<32x32xf32> to vector<8x32xf32>
    %189 = arith.truncf %187 : vector<8x8xf32> to vector<8x8xbf16>
    %190 = arith.truncf %188 : vector<8x32xf32> to vector<8x32xbf16>
    %cst_136 = arith.constant dense<0.000000e+00> : vector<8x32xf32>
    %191 = tpu.matmul %189, %190, %cst_136 {dimension_numbers = #tpu.dot_dimension_numbers<[1], [0], [0], [1], [0, 0, 1, 1], [], []>} : vector<8x8xbf16>, vector<8x32xbf16>, vector<8x32xf32> -> vector<8x32xf32>
    %192 = arith.addf %164, %191 : vector<8x32xf32>
    %193 = vector.broadcast %27 : vector<1x32xf32> to vector<8x32xf32>
    %194 = arith.addf %192, %193 : vector<8x32xf32>
    %195 = arith.addf %71, %194 : vector<8x32xf32>
    %cst_137 = arith.constant dense<0.000000e+00> : vector<8xf32>
    %196 = vector.multi_reduction <add>, %195, %cst_137 [1] : vector<8x32xf32> to vector<8xf32>
    %197 = vector.shape_cast %196 : vector<8xf32> to vector<8x1xf32>
    %cst_138 = arith.constant 3.200000e+01 : f32
    %198 = vector.broadcast %cst_138 : f32 to vector<8x1xf32>
    %199 = arith.divf %197, %198 : vector<8x1xf32>
    %200 = vector.broadcast %199 : vector<8x1xf32> to vector<8x32xf32>
    %201 = arith.subf %195, %200 : vector<8x32xf32>
    %202 = arith.mulf %201, %201 : vector<8x32xf32>
    %cst_139 = arith.constant dense<0.000000e+00> : vector<8xf32>
    %203 = vector.multi_reduction <add>, %202, %cst_139 [1] : vector<8x32xf32> to vector<8xf32>
    %204 = vector.shape_cast %203 : vector<8xf32> to vector<8x1xf32>
    %cst_140 = arith.constant 3.200000e+01 : f32
    %205 = vector.broadcast %cst_140 : f32 to vector<8x1xf32>
    %206 = arith.divf %204, %205 : vector<8x1xf32>
    %cst_141 = arith.constant 9.99999974E-6 : f32
    %207 = vector.broadcast %cst_141 : f32 to vector<8x1xf32>
    %208 = arith.addf %206, %207 : vector<8x1xf32>
    %209 = math.rsqrt %208 : vector<8x1xf32>
    %210 = vector.broadcast %209 : vector<8x1xf32> to vector<8x32xf32>
    %211 = arith.mulf %201, %210 : vector<8x32xf32>
    %212 = vector.broadcast %35 : vector<1x32xf32> to vector<8x32xf32>
    %213 = arith.mulf %211, %212 : vector<8x32xf32>
    %214 = vector.broadcast %34 : vector<1x32xf32> to vector<8x32xf32>
    %215 = arith.addf %213, %214 : vector<8x32xf32>
    %216 = arith.truncf %215 : vector<8x32xf32> to vector<8x32xbf16>
    %217 = arith.truncf %38 : vector<32x64xf32> to vector<32x64xbf16>
    %cst_142 = arith.constant dense<0.000000e+00> : vector<8x64xf32>
    %218 = tpu.matmul %216, %217, %cst_142 {dimension_numbers = #tpu.dot_dimension_numbers<[1], [0], [0], [1], [0, 0, 1, 1], [], []>} : vector<8x32xbf16>, vector<32x64xbf16>, vector<8x64xf32> -> vector<8x64xf32>
    %219 = vector.broadcast %32 : vector<1x64xf32> to vector<8x64xf32>
    %220 = arith.addf %218, %219 : vector<8x64xf32>
    %cst_143 = arith.constant 0.000000e+00 : f32
    %221 = vector.broadcast %cst_143 : f32 to vector<8x64xf32>
    %222 = arith.maximumf %220, %221 : vector<8x64xf32>
    %223 = arith.truncf %222 : vector<8x64xf32> to vector<8x64xbf16>
    %224 = arith.truncf %39 : vector<64x32xf32> to vector<64x32xbf16>
    %cst_144 = arith.constant dense<0.000000e+00> : vector<8x32xf32>
    %225 = tpu.matmul %223, %224, %cst_144 {dimension_numbers = #tpu.dot_dimension_numbers<[1], [0], [0], [1], [0, 0, 1, 1], [], []>} : vector<8x64xbf16>, vector<64x32xbf16>, vector<8x32xf32> -> vector<8x32xf32>
    %226 = vector.broadcast %33 : vector<1x32xf32> to vector<8x32xf32>
    %227 = arith.addf %225, %226 : vector<8x32xf32>
    %228 = arith.addf %215, %227 : vector<8x32xf32>
    %cst_145 = arith.constant dense<0.000000e+00> : vector<8xf32>
    %229 = vector.multi_reduction <add>, %228, %cst_145 [1] : vector<8x32xf32> to vector<8xf32>
    %230 = vector.shape_cast %229 : vector<8xf32> to vector<8x1xf32>
    %cst_146 = arith.constant 3.200000e+01 : f32
    %231 = vector.broadcast %cst_146 : f32 to vector<8x1xf32>
    %232 = arith.divf %230, %231 : vector<8x1xf32>
    %233 = vector.broadcast %232 : vector<8x1xf32> to vector<8x32xf32>
    %234 = arith.subf %228, %233 : vector<8x32xf32>
    %235 = arith.mulf %234, %234 : vector<8x32xf32>
    %cst_147 = arith.constant dense<0.000000e+00> : vector<8xf32>
    %236 = vector.multi_reduction <add>, %235, %cst_147 [1] : vector<8x32xf32> to vector<8xf32>
    %237 = vector.shape_cast %236 : vector<8xf32> to vector<8x1xf32>
    %cst_148 = arith.constant 3.200000e+01 : f32
    %238 = vector.broadcast %cst_148 : f32 to vector<8x1xf32>
    %239 = arith.divf %237, %238 : vector<8x1xf32>
    %cst_149 = arith.constant 9.99999974E-6 : f32
    %240 = vector.broadcast %cst_149 : f32 to vector<8x1xf32>
    %241 = arith.addf %239, %240 : vector<8x1xf32>
    %242 = math.rsqrt %241 : vector<8x1xf32>
    %243 = vector.broadcast %242 : vector<8x1xf32> to vector<8x32xf32>
    %244 = arith.mulf %234, %243 : vector<8x32xf32>
    %245 = vector.broadcast %37 : vector<1x32xf32> to vector<8x32xf32>
    %246 = arith.mulf %244, %245 : vector<8x32xf32>
    %247 = vector.broadcast %36 : vector<1x32xf32> to vector<8x32xf32>
    %248 = arith.addf %246, %247 : vector<8x32xf32>
    %cst_150 = arith.constant dense<0.000000e+00> : vector<8xf32>
    %249 = vector.multi_reduction <add>, %248, %cst_150 [1] : vector<8x32xf32> to vector<8xf32>
    %250 = vector.shape_cast %249 : vector<8xf32> to vector<8x1xf32>
    %cst_151 = arith.constant 3.200000e+01 : f32
    %251 = vector.broadcast %cst_151 : f32 to vector<8x1xf32>
    %252 = arith.divf %250, %251 : vector<8x1xf32>
    %253 = vector.broadcast %252 : vector<8x1xf32> to vector<8x32xf32>
    %254 = arith.subf %248, %253 : vector<8x32xf32>
    %255 = arith.mulf %254, %254 : vector<8x32xf32>
    %cst_152 = arith.constant dense<0.000000e+00> : vector<8xf32>
    %256 = vector.multi_reduction <add>, %255, %cst_152 [1] : vector<8x32xf32> to vector<8xf32>
    %257 = vector.shape_cast %256 : vector<8xf32> to vector<8x1xf32>
    %cst_153 = arith.constant 3.200000e+01 : f32
    %258 = vector.broadcast %cst_153 : f32 to vector<8x1xf32>
    %259 = arith.divf %257, %258 : vector<8x1xf32>
    %cst_154 = arith.constant 9.99999974E-6 : f32
    %260 = vector.broadcast %cst_154 : f32 to vector<8x1xf32>
    %261 = arith.addf %259, %260 : vector<8x1xf32>
    %262 = math.rsqrt %261 : vector<8x1xf32>
    %263 = vector.broadcast %262 : vector<8x1xf32> to vector<8x32xf32>
    %264 = arith.mulf %254, %263 : vector<8x32xf32>
    %265 = vector.broadcast %41 : vector<1x32xf32> to vector<8x32xf32>
    %266 = arith.mulf %264, %265 : vector<8x32xf32>
    %267 = vector.broadcast %40 : vector<1x32xf32> to vector<8x32xf32>
    %268 = arith.addf %266, %267 : vector<8x32xf32>
    %269 = arith.truncf %50 : vector<9x4xf32> to vector<9x4xbf16>
    %270 = arith.truncf %1 : vector<4x32xf32> to vector<4x32xbf16>
    %cst_155 = arith.constant dense<0.000000e+00> : vector<9x32xf32>
    %271 = tpu.matmul %269, %270, %cst_155 {dimension_numbers = #tpu.dot_dimension_numbers<[1], [0], [0], [1], [0, 0, 1, 1], [], []>} : vector<9x4xbf16>, vector<4x32xbf16>, vector<9x32xf32> -> vector<9x32xf32>
    %272 = vector.broadcast %0 : vector<1x32xf32> to vector<9x32xf32>
    %273 = arith.addf %271, %272 : vector<9x32xf32>
    %274 = arith.addf %273, %46 : vector<9x32xf32>
    %275 = arith.truncf %274 : vector<9x32xf32> to vector<9x32xbf16>
    %276 = arith.truncf %21 : vector<32x32xf32> to vector<32x32xbf16>
    %cst_156 = arith.constant dense<0.000000e+00> : vector<9x32xf32>
    %277 = tpu.matmul %275, %276, %cst_156 {dimension_numbers = #tpu.dot_dimension_numbers<[1], [0], [0], [1], [0, 0, 1, 1], [], []>} : vector<9x32xbf16>, vector<32x32xbf16>, vector<9x32xf32> -> vector<9x32xf32>
    %278 = vector.broadcast %18 : vector<1x32xf32> to vector<9x32xf32>
    %279 = arith.addf %277, %278 : vector<9x32xf32>
    %280 = arith.truncf %274 : vector<9x32xf32> to vector<9x32xbf16>
    %281 = arith.truncf %19 : vector<32x64xf32> to vector<32x64xbf16>
    %cst_157 = arith.constant dense<0.000000e+00> : vector<9x64xf32>
    %282 = tpu.matmul %280, %281, %cst_157 {dimension_numbers = #tpu.dot_dimension_numbers<[1], [0], [0], [1], [0, 0, 1, 1], [], []>} : vector<9x32xbf16>, vector<32x64xbf16>, vector<9x64xf32> -> vector<9x64xf32>
    %283 = vector.broadcast %16 : vector<1x64xf32> to vector<9x64xf32>
    %284 = arith.addf %282, %283 : vector<9x64xf32>
    %285 = vector.extract_strided_slice %279 {offsets = [0, 0], sizes = [9, 8], strides = [1, 1]} : vector<9x32xf32> to vector<9x8xf32>
    %286 = vector.extract_strided_slice %284 {offsets = [0, 0], sizes = [9, 8], strides = [1, 1]} : vector<9x64xf32> to vector<9x8xf32>
    %287 = vector.extract_strided_slice %284 {offsets = [0, 32], sizes = [9, 8], strides = [1, 1]} : vector<9x64xf32> to vector<9x8xf32>
    %288 = arith.truncf %285 : vector<9x8xf32> to vector<9x8xbf16>
    %289 = arith.truncf %286 : vector<9x8xf32> to vector<9x8xbf16>
    %cst_158 = arith.constant dense<0.000000e+00> : vector<9x9xf32>
    %290 = tpu.matmul %288, %289, %cst_158 {dimension_numbers = #tpu.dot_dimension_numbers<[1], [1], [0], [0], [0, 0, 1, 0], [], []>} : vector<9x8xbf16>, vector<9x8xbf16>, vector<9x9xf32> -> vector<9x9xf32>
    %cst_159 = arith.constant 0.353553385 : f32
    %291 = vector.broadcast %cst_159 : f32 to vector<9x9xf32>
    %292 = arith.mulf %290, %291 : vector<9x9xf32>
    %293 = vector.broadcast %64 : vector<1x9xf32> to vector<9x9xf32>
    %294 = arith.addf %292, %293 : vector<9x9xf32>
    %cst_160 = arith.constant dense<0xFF800000> : vector<9xf32>
    %295 = vector.multi_reduction <maximumf>, %294, %cst_160 [1] : vector<9x9xf32> to vector<9xf32>
    %296 = vector.shape_cast %295 : vector<9xf32> to vector<9x1xf32>
    %297 = vector.broadcast %296 : vector<9x1xf32> to vector<9x9xf32>
    %298 = arith.subf %294, %297 : vector<9x9xf32>
    %299 = math.exp %298 : vector<9x9xf32>
    %cst_161 = arith.constant dense<0.000000e+00> : vector<9xf32>
    %300 = vector.multi_reduction <add>, %299, %cst_161 [1] : vector<9x9xf32> to vector<9xf32>
    %301 = vector.shape_cast %300 : vector<9xf32> to vector<9x1xf32>
    %302 = tpu.reciprocal %301 {approx = true} : vector<9x1xf32> -> vector<9x1xf32>
    %303 = vector.broadcast %302 : vector<9x1xf32> to vector<9x9xf32>
    %304 = arith.mulf %299, %303 : vector<9x9xf32>
    %305 = arith.truncf %304 : vector<9x9xf32> to vector<9x9xbf16>
    %306 = arith.truncf %287 : vector<9x8xf32> to vector<9x8xbf16>
    %cst_162 = arith.constant dense<0.000000e+00> : vector<9x8xf32>
    %307 = tpu.matmul %305, %306, %cst_162 {dimension_numbers = #tpu.dot_dimension_numbers<[1], [0], [0], [1], [0, 0, 1, 1], [], []>} : vector<9x9xbf16>, vector<9x8xbf16>, vector<9x8xf32> -> vector<9x8xf32>
    %308 = vector.extract_strided_slice %20 {offsets = [0, 0], sizes = [8, 32], strides = [1, 1]} : vector<32x32xf32> to vector<8x32xf32>
    %309 = arith.truncf %307 : vector<9x8xf32> to vector<9x8xbf16>
    %310 = arith.truncf %308 : vector<8x32xf32> to vector<8x32xbf16>
    %cst_163 = arith.constant dense<0.000000e+00> : vector<9x32xf32>
    %311 = tpu.matmul %309, %310, %cst_163 {dimension_numbers = #tpu.dot_dimension_numbers<[1], [0], [0], [1], [0, 0, 1, 1], [], []>} : vector<9x8xbf16>, vector<8x32xbf16>, vector<9x32xf32> -> vector<9x32xf32>
    %312 = vector.extract_strided_slice %279 {offsets = [0, 8], sizes = [9, 8], strides = [1, 1]} : vector<9x32xf32> to vector<9x8xf32>
    %313 = vector.extract_strided_slice %284 {offsets = [0, 8], sizes = [9, 8], strides = [1, 1]} : vector<9x64xf32> to vector<9x8xf32>
    %314 = vector.extract_strided_slice %284 {offsets = [0, 40], sizes = [9, 8], strides = [1, 1]} : vector<9x64xf32> to vector<9x8xf32>
    %315 = arith.truncf %312 : vector<9x8xf32> to vector<9x8xbf16>
    %316 = arith.truncf %313 : vector<9x8xf32> to vector<9x8xbf16>
    %cst_164 = arith.constant dense<0.000000e+00> : vector<9x9xf32>
    %317 = tpu.matmul %315, %316, %cst_164 {dimension_numbers = #tpu.dot_dimension_numbers<[1], [1], [0], [0], [0, 0, 1, 0], [], []>} : vector<9x8xbf16>, vector<9x8xbf16>, vector<9x9xf32> -> vector<9x9xf32>
    %cst_165 = arith.constant 0.353553385 : f32
    %318 = vector.broadcast %cst_165 : f32 to vector<9x9xf32>
    %319 = arith.mulf %317, %318 : vector<9x9xf32>
    %320 = vector.broadcast %64 : vector<1x9xf32> to vector<9x9xf32>
    %321 = arith.addf %319, %320 : vector<9x9xf32>
    %cst_166 = arith.constant dense<0xFF800000> : vector<9xf32>
    %322 = vector.multi_reduction <maximumf>, %321, %cst_166 [1] : vector<9x9xf32> to vector<9xf32>
    %323 = vector.shape_cast %322 : vector<9xf32> to vector<9x1xf32>
    %324 = vector.broadcast %323 : vector<9x1xf32> to vector<9x9xf32>
    %325 = arith.subf %321, %324 : vector<9x9xf32>
    %326 = math.exp %325 : vector<9x9xf32>
    %cst_167 = arith.constant dense<0.000000e+00> : vector<9xf32>
    %327 = vector.multi_reduction <add>, %326, %cst_167 [1] : vector<9x9xf32> to vector<9xf32>
    %328 = vector.shape_cast %327 : vector<9xf32> to vector<9x1xf32>
    %329 = tpu.reciprocal %328 {approx = true} : vector<9x1xf32> -> vector<9x1xf32>
    %330 = vector.broadcast %329 : vector<9x1xf32> to vector<9x9xf32>
    %331 = arith.mulf %326, %330 : vector<9x9xf32>
    %332 = arith.truncf %331 : vector<9x9xf32> to vector<9x9xbf16>
    %333 = arith.truncf %314 : vector<9x8xf32> to vector<9x8xbf16>
    %cst_168 = arith.constant dense<0.000000e+00> : vector<9x8xf32>
    %334 = tpu.matmul %332, %333, %cst_168 {dimension_numbers = #tpu.dot_dimension_numbers<[1], [0], [0], [1], [0, 0, 1, 1], [], []>} : vector<9x9xbf16>, vector<9x8xbf16>, vector<9x8xf32> -> vector<9x8xf32>
    %335 = vector.extract_strided_slice %20 {offsets = [8, 0], sizes = [8, 32], strides = [1, 1]} : vector<32x32xf32> to vector<8x32xf32>
    %336 = arith.truncf %334 : vector<9x8xf32> to vector<9x8xbf16>
    %337 = arith.truncf %335 : vector<8x32xf32> to vector<8x32xbf16>
    %cst_169 = arith.constant dense<0.000000e+00> : vector<9x32xf32>
    %338 = tpu.matmul %336, %337, %cst_169 {dimension_numbers = #tpu.dot_dimension_numbers<[1], [0], [0], [1], [0, 0, 1, 1], [], []>} : vector<9x8xbf16>, vector<8x32xbf16>, vector<9x32xf32> -> vector<9x32xf32>
    %339 = arith.addf %311, %338 : vector<9x32xf32>
    %340 = vector.extract_strided_slice %279 {offsets = [0, 16], sizes = [9, 8], strides = [1, 1]} : vector<9x32xf32> to vector<9x8xf32>
    %341 = vector.extract_strided_slice %284 {offsets = [0, 16], sizes = [9, 8], strides = [1, 1]} : vector<9x64xf32> to vector<9x8xf32>
    %342 = vector.extract_strided_slice %284 {offsets = [0, 48], sizes = [9, 8], strides = [1, 1]} : vector<9x64xf32> to vector<9x8xf32>
    %343 = arith.truncf %340 : vector<9x8xf32> to vector<9x8xbf16>
    %344 = arith.truncf %341 : vector<9x8xf32> to vector<9x8xbf16>
    %cst_170 = arith.constant dense<0.000000e+00> : vector<9x9xf32>
    %345 = tpu.matmul %343, %344, %cst_170 {dimension_numbers = #tpu.dot_dimension_numbers<[1], [1], [0], [0], [0, 0, 1, 0], [], []>} : vector<9x8xbf16>, vector<9x8xbf16>, vector<9x9xf32> -> vector<9x9xf32>
    %cst_171 = arith.constant 0.353553385 : f32
    %346 = vector.broadcast %cst_171 : f32 to vector<9x9xf32>
    %347 = arith.mulf %345, %346 : vector<9x9xf32>
    %348 = vector.broadcast %64 : vector<1x9xf32> to vector<9x9xf32>
    %349 = arith.addf %347, %348 : vector<9x9xf32>
    %cst_172 = arith.constant dense<0xFF800000> : vector<9xf32>
    %350 = vector.multi_reduction <maximumf>, %349, %cst_172 [1] : vector<9x9xf32> to vector<9xf32>
    %351 = vector.shape_cast %350 : vector<9xf32> to vector<9x1xf32>
    %352 = vector.broadcast %351 : vector<9x1xf32> to vector<9x9xf32>
    %353 = arith.subf %349, %352 : vector<9x9xf32>
    %354 = math.exp %353 : vector<9x9xf32>
    %cst_173 = arith.constant dense<0.000000e+00> : vector<9xf32>
    %355 = vector.multi_reduction <add>, %354, %cst_173 [1] : vector<9x9xf32> to vector<9xf32>
    %356 = vector.shape_cast %355 : vector<9xf32> to vector<9x1xf32>
    %357 = tpu.reciprocal %356 {approx = true} : vector<9x1xf32> -> vector<9x1xf32>
    %358 = vector.broadcast %357 : vector<9x1xf32> to vector<9x9xf32>
    %359 = arith.mulf %354, %358 : vector<9x9xf32>
    %360 = arith.truncf %359 : vector<9x9xf32> to vector<9x9xbf16>
    %361 = arith.truncf %342 : vector<9x8xf32> to vector<9x8xbf16>
    %cst_174 = arith.constant dense<0.000000e+00> : vector<9x8xf32>
    %362 = tpu.matmul %360, %361, %cst_174 {dimension_numbers = #tpu.dot_dimension_numbers<[1], [0], [0], [1], [0, 0, 1, 1], [], []>} : vector<9x9xbf16>, vector<9x8xbf16>, vector<9x8xf32> -> vector<9x8xf32>
    %363 = vector.extract_strided_slice %20 {offsets = [16, 0], sizes = [8, 32], strides = [1, 1]} : vector<32x32xf32> to vector<8x32xf32>
    %364 = arith.truncf %362 : vector<9x8xf32> to vector<9x8xbf16>
    %365 = arith.truncf %363 : vector<8x32xf32> to vector<8x32xbf16>
    %cst_175 = arith.constant dense<0.000000e+00> : vector<9x32xf32>
    %366 = tpu.matmul %364, %365, %cst_175 {dimension_numbers = #tpu.dot_dimension_numbers<[1], [0], [0], [1], [0, 0, 1, 1], [], []>} : vector<9x8xbf16>, vector<8x32xbf16>, vector<9x32xf32> -> vector<9x32xf32>
    %367 = arith.addf %339, %366 : vector<9x32xf32>
    %368 = vector.extract_strided_slice %279 {offsets = [0, 24], sizes = [9, 8], strides = [1, 1]} : vector<9x32xf32> to vector<9x8xf32>
    %369 = vector.extract_strided_slice %284 {offsets = [0, 24], sizes = [9, 8], strides = [1, 1]} : vector<9x64xf32> to vector<9x8xf32>
    %370 = vector.extract_strided_slice %284 {offsets = [0, 56], sizes = [9, 8], strides = [1, 1]} : vector<9x64xf32> to vector<9x8xf32>
    %371 = arith.truncf %368 : vector<9x8xf32> to vector<9x8xbf16>
    %372 = arith.truncf %369 : vector<9x8xf32> to vector<9x8xbf16>
    %cst_176 = arith.constant dense<0.000000e+00> : vector<9x9xf32>
    %373 = tpu.matmul %371, %372, %cst_176 {dimension_numbers = #tpu.dot_dimension_numbers<[1], [1], [0], [0], [0, 0, 1, 0], [], []>} : vector<9x8xbf16>, vector<9x8xbf16>, vector<9x9xf32> -> vector<9x9xf32>
    %cst_177 = arith.constant 0.353553385 : f32
    %374 = vector.broadcast %cst_177 : f32 to vector<9x9xf32>
    %375 = arith.mulf %373, %374 : vector<9x9xf32>
    %376 = vector.broadcast %64 : vector<1x9xf32> to vector<9x9xf32>
    %377 = arith.addf %375, %376 : vector<9x9xf32>
    %cst_178 = arith.constant dense<0xFF800000> : vector<9xf32>
    %378 = vector.multi_reduction <maximumf>, %377, %cst_178 [1] : vector<9x9xf32> to vector<9xf32>
    %379 = vector.shape_cast %378 : vector<9xf32> to vector<9x1xf32>
    %380 = vector.broadcast %379 : vector<9x1xf32> to vector<9x9xf32>
    %381 = arith.subf %377, %380 : vector<9x9xf32>
    %382 = math.exp %381 : vector<9x9xf32>
    %cst_179 = arith.constant dense<0.000000e+00> : vector<9xf32>
    %383 = vector.multi_reduction <add>, %382, %cst_179 [1] : vector<9x9xf32> to vector<9xf32>
    %384 = vector.shape_cast %383 : vector<9xf32> to vector<9x1xf32>
    %385 = tpu.reciprocal %384 {approx = true} : vector<9x1xf32> -> vector<9x1xf32>
    %386 = vector.broadcast %385 : vector<9x1xf32> to vector<9x9xf32>
    %387 = arith.mulf %382, %386 : vector<9x9xf32>
    %388 = arith.truncf %387 : vector<9x9xf32> to vector<9x9xbf16>
    %389 = arith.truncf %370 : vector<9x8xf32> to vector<9x8xbf16>
    %cst_180 = arith.constant dense<0.000000e+00> : vector<9x8xf32>
    %390 = tpu.matmul %388, %389, %cst_180 {dimension_numbers = #tpu.dot_dimension_numbers<[1], [0], [0], [1], [0, 0, 1, 1], [], []>} : vector<9x9xbf16>, vector<9x8xbf16>, vector<9x8xf32> -> vector<9x8xf32>
    %391 = vector.extract_strided_slice %20 {offsets = [24, 0], sizes = [8, 32], strides = [1, 1]} : vector<32x32xf32> to vector<8x32xf32>
    %392 = arith.truncf %390 : vector<9x8xf32> to vector<9x8xbf16>
    %393 = arith.truncf %391 : vector<8x32xf32> to vector<8x32xbf16>
    %cst_181 = arith.constant dense<0.000000e+00> : vector<9x32xf32>
    %394 = tpu.matmul %392, %393, %cst_181 {dimension_numbers = #tpu.dot_dimension_numbers<[1], [0], [0], [1], [0, 0, 1, 1], [], []>} : vector<9x8xbf16>, vector<8x32xbf16>, vector<9x32xf32> -> vector<9x32xf32>
    %395 = arith.addf %367, %394 : vector<9x32xf32>
    %396 = vector.broadcast %17 : vector<1x32xf32> to vector<9x32xf32>
    %397 = arith.addf %395, %396 : vector<9x32xf32>
    %398 = arith.addf %274, %397 : vector<9x32xf32>
    %cst_182 = arith.constant dense<0.000000e+00> : vector<9xf32>
    %399 = vector.multi_reduction <add>, %398, %cst_182 [1] : vector<9x32xf32> to vector<9xf32>
    %400 = vector.shape_cast %399 : vector<9xf32> to vector<9x1xf32>
    %cst_183 = arith.constant 3.200000e+01 : f32
    %401 = vector.broadcast %cst_183 : f32 to vector<9x1xf32>
    %402 = arith.divf %400, %401 : vector<9x1xf32>
    %403 = vector.broadcast %402 : vector<9x1xf32> to vector<9x32xf32>
    %404 = arith.subf %398, %403 : vector<9x32xf32>
    %405 = arith.mulf %404, %404 : vector<9x32xf32>
    %cst_184 = arith.constant dense<0.000000e+00> : vector<9xf32>
    %406 = vector.multi_reduction <add>, %405, %cst_184 [1] : vector<9x32xf32> to vector<9xf32>
    %407 = vector.shape_cast %406 : vector<9xf32> to vector<9x1xf32>
    %cst_185 = arith.constant 3.200000e+01 : f32
    %408 = vector.broadcast %cst_185 : f32 to vector<9x1xf32>
    %409 = arith.divf %407, %408 : vector<9x1xf32>
    %cst_186 = arith.constant 9.99999974E-6 : f32
    %410 = vector.broadcast %cst_186 : f32 to vector<9x1xf32>
    %411 = arith.addf %409, %410 : vector<9x1xf32>
    %412 = math.rsqrt %411 : vector<9x1xf32>
    %413 = vector.broadcast %412 : vector<9x1xf32> to vector<9x32xf32>
    %414 = arith.mulf %404, %413 : vector<9x32xf32>
    %415 = vector.broadcast %11 : vector<1x32xf32> to vector<9x32xf32>
    %416 = arith.mulf %414, %415 : vector<9x32xf32>
    %417 = vector.broadcast %10 : vector<1x32xf32> to vector<9x32xf32>
    %418 = arith.addf %416, %417 : vector<9x32xf32>
    %419 = arith.truncf %418 : vector<9x32xf32> to vector<9x32xbf16>
    %420 = arith.truncf %9 : vector<32x32xf32> to vector<32x32xbf16>
    %cst_187 = arith.constant dense<0.000000e+00> : vector<9x32xf32>
    %421 = tpu.matmul %419, %420, %cst_187 {dimension_numbers = #tpu.dot_dimension_numbers<[1], [0], [0], [1], [0, 0, 1, 1], [], []>} : vector<9x32xbf16>, vector<32x32xbf16>, vector<9x32xf32> -> vector<9x32xf32>
    %422 = vector.broadcast %6 : vector<1x32xf32> to vector<9x32xf32>
    %423 = arith.addf %421, %422 : vector<9x32xf32>
    %424 = arith.truncf %268 : vector<8x32xf32> to vector<8x32xbf16>
    %425 = arith.truncf %7 : vector<32x64xf32> to vector<32x64xbf16>
    %cst_188 = arith.constant dense<0.000000e+00> : vector<8x64xf32>
    %426 = tpu.matmul %424, %425, %cst_188 {dimension_numbers = #tpu.dot_dimension_numbers<[1], [0], [0], [1], [0, 0, 1, 1], [], []>} : vector<8x32xbf16>, vector<32x64xbf16>, vector<8x64xf32> -> vector<8x64xf32>
    %427 = vector.broadcast %4 : vector<1x64xf32> to vector<8x64xf32>
    %428 = arith.addf %426, %427 : vector<8x64xf32>
    %429 = vector.extract_strided_slice %423 {offsets = [0, 0], sizes = [9, 8], strides = [1, 1]} : vector<9x32xf32> to vector<9x8xf32>
    %430 = vector.extract_strided_slice %428 {offsets = [0, 0], sizes = [8, 8], strides = [1, 1]} : vector<8x64xf32> to vector<8x8xf32>
    %431 = vector.extract_strided_slice %428 {offsets = [0, 32], sizes = [8, 8], strides = [1, 1]} : vector<8x64xf32> to vector<8x8xf32>
    %432 = arith.truncf %429 : vector<9x8xf32> to vector<9x8xbf16>
    %433 = arith.truncf %430 : vector<8x8xf32> to vector<8x8xbf16>
    %cst_189 = arith.constant dense<0.000000e+00> : vector<9x8xf32>
    %434 = tpu.matmul %432, %433, %cst_189 {dimension_numbers = #tpu.dot_dimension_numbers<[1], [1], [0], [0], [0, 0, 1, 0], [], []>} : vector<9x8xbf16>, vector<8x8xbf16>, vector<9x8xf32> -> vector<9x8xf32>
    %cst_190 = arith.constant 0.353553385 : f32
    %435 = vector.broadcast %cst_190 : f32 to vector<9x8xf32>
    %436 = arith.mulf %434, %435 : vector<9x8xf32>
    %437 = vector.broadcast %57 : vector<1x8xf32> to vector<9x8xf32>
    %438 = arith.addf %436, %437 : vector<9x8xf32>
    %cst_191 = arith.constant dense<0xFF800000> : vector<9xf32>
    %439 = vector.multi_reduction <maximumf>, %438, %cst_191 [1] : vector<9x8xf32> to vector<9xf32>
    %440 = vector.shape_cast %439 : vector<9xf32> to vector<9x1xf32>
    %441 = vector.broadcast %440 : vector<9x1xf32> to vector<9x8xf32>
    %442 = arith.subf %438, %441 : vector<9x8xf32>
    %443 = math.exp %442 : vector<9x8xf32>
    %cst_192 = arith.constant dense<0.000000e+00> : vector<9xf32>
    %444 = vector.multi_reduction <add>, %443, %cst_192 [1] : vector<9x8xf32> to vector<9xf32>
    %445 = vector.shape_cast %444 : vector<9xf32> to vector<9x1xf32>
    %446 = tpu.reciprocal %445 {approx = true} : vector<9x1xf32> -> vector<9x1xf32>
    %447 = vector.broadcast %446 : vector<9x1xf32> to vector<9x8xf32>
    %448 = arith.mulf %443, %447 : vector<9x8xf32>
    %449 = arith.truncf %448 : vector<9x8xf32> to vector<9x8xbf16>
    %450 = arith.truncf %431 : vector<8x8xf32> to vector<8x8xbf16>
    %cst_193 = arith.constant dense<0.000000e+00> : vector<9x8xf32>
    %451 = tpu.matmul %449, %450, %cst_193 {dimension_numbers = #tpu.dot_dimension_numbers<[1], [0], [0], [1], [0, 0, 1, 1], [], []>} : vector<9x8xbf16>, vector<8x8xbf16>, vector<9x8xf32> -> vector<9x8xf32>
    %452 = vector.extract_strided_slice %8 {offsets = [0, 0], sizes = [8, 32], strides = [1, 1]} : vector<32x32xf32> to vector<8x32xf32>
    %453 = arith.truncf %451 : vector<9x8xf32> to vector<9x8xbf16>
    %454 = arith.truncf %452 : vector<8x32xf32> to vector<8x32xbf16>
    %cst_194 = arith.constant dense<0.000000e+00> : vector<9x32xf32>
    %455 = tpu.matmul %453, %454, %cst_194 {dimension_numbers = #tpu.dot_dimension_numbers<[1], [0], [0], [1], [0, 0, 1, 1], [], []>} : vector<9x8xbf16>, vector<8x32xbf16>, vector<9x32xf32> -> vector<9x32xf32>
    %456 = vector.extract_strided_slice %423 {offsets = [0, 8], sizes = [9, 8], strides = [1, 1]} : vector<9x32xf32> to vector<9x8xf32>
    %457 = vector.extract_strided_slice %428 {offsets = [0, 8], sizes = [8, 8], strides = [1, 1]} : vector<8x64xf32> to vector<8x8xf32>
    %458 = vector.extract_strided_slice %428 {offsets = [0, 40], sizes = [8, 8], strides = [1, 1]} : vector<8x64xf32> to vector<8x8xf32>
    %459 = arith.truncf %456 : vector<9x8xf32> to vector<9x8xbf16>
    %460 = arith.truncf %457 : vector<8x8xf32> to vector<8x8xbf16>
    %cst_195 = arith.constant dense<0.000000e+00> : vector<9x8xf32>
    %461 = tpu.matmul %459, %460, %cst_195 {dimension_numbers = #tpu.dot_dimension_numbers<[1], [1], [0], [0], [0, 0, 1, 0], [], []>} : vector<9x8xbf16>, vector<8x8xbf16>, vector<9x8xf32> -> vector<9x8xf32>
    %cst_196 = arith.constant 0.353553385 : f32
    %462 = vector.broadcast %cst_196 : f32 to vector<9x8xf32>
    %463 = arith.mulf %461, %462 : vector<9x8xf32>
    %464 = vector.broadcast %57 : vector<1x8xf32> to vector<9x8xf32>
    %465 = arith.addf %463, %464 : vector<9x8xf32>
    %cst_197 = arith.constant dense<0xFF800000> : vector<9xf32>
    %466 = vector.multi_reduction <maximumf>, %465, %cst_197 [1] : vector<9x8xf32> to vector<9xf32>
    %467 = vector.shape_cast %466 : vector<9xf32> to vector<9x1xf32>
    %468 = vector.broadcast %467 : vector<9x1xf32> to vector<9x8xf32>
    %469 = arith.subf %465, %468 : vector<9x8xf32>
    %470 = math.exp %469 : vector<9x8xf32>
    %cst_198 = arith.constant dense<0.000000e+00> : vector<9xf32>
    %471 = vector.multi_reduction <add>, %470, %cst_198 [1] : vector<9x8xf32> to vector<9xf32>
    %472 = vector.shape_cast %471 : vector<9xf32> to vector<9x1xf32>
    %473 = tpu.reciprocal %472 {approx = true} : vector<9x1xf32> -> vector<9x1xf32>
    %474 = vector.broadcast %473 : vector<9x1xf32> to vector<9x8xf32>
    %475 = arith.mulf %470, %474 : vector<9x8xf32>
    %476 = arith.truncf %475 : vector<9x8xf32> to vector<9x8xbf16>
    %477 = arith.truncf %458 : vector<8x8xf32> to vector<8x8xbf16>
    %cst_199 = arith.constant dense<0.000000e+00> : vector<9x8xf32>
    %478 = tpu.matmul %476, %477, %cst_199 {dimension_numbers = #tpu.dot_dimension_numbers<[1], [0], [0], [1], [0, 0, 1, 1], [], []>} : vector<9x8xbf16>, vector<8x8xbf16>, vector<9x8xf32> -> vector<9x8xf32>
    %479 = vector.extract_strided_slice %8 {offsets = [8, 0], sizes = [8, 32], strides = [1, 1]} : vector<32x32xf32> to vector<8x32xf32>
    %480 = arith.truncf %478 : vector<9x8xf32> to vector<9x8xbf16>
    %481 = arith.truncf %479 : vector<8x32xf32> to vector<8x32xbf16>
    %cst_200 = arith.constant dense<0.000000e+00> : vector<9x32xf32>
    %482 = tpu.matmul %480, %481, %cst_200 {dimension_numbers = #tpu.dot_dimension_numbers<[1], [0], [0], [1], [0, 0, 1, 1], [], []>} : vector<9x8xbf16>, vector<8x32xbf16>, vector<9x32xf32> -> vector<9x32xf32>
    %483 = arith.addf %455, %482 : vector<9x32xf32>
    %484 = vector.extract_strided_slice %423 {offsets = [0, 16], sizes = [9, 8], strides = [1, 1]} : vector<9x32xf32> to vector<9x8xf32>
    %485 = vector.extract_strided_slice %428 {offsets = [0, 16], sizes = [8, 8], strides = [1, 1]} : vector<8x64xf32> to vector<8x8xf32>
    %486 = vector.extract_strided_slice %428 {offsets = [0, 48], sizes = [8, 8], strides = [1, 1]} : vector<8x64xf32> to vector<8x8xf32>
    %487 = arith.truncf %484 : vector<9x8xf32> to vector<9x8xbf16>
    %488 = arith.truncf %485 : vector<8x8xf32> to vector<8x8xbf16>
    %cst_201 = arith.constant dense<0.000000e+00> : vector<9x8xf32>
    %489 = tpu.matmul %487, %488, %cst_201 {dimension_numbers = #tpu.dot_dimension_numbers<[1], [1], [0], [0], [0, 0, 1, 0], [], []>} : vector<9x8xbf16>, vector<8x8xbf16>, vector<9x8xf32> -> vector<9x8xf32>
    %cst_202 = arith.constant 0.353553385 : f32
    %490 = vector.broadcast %cst_202 : f32 to vector<9x8xf32>
    %491 = arith.mulf %489, %490 : vector<9x8xf32>
    %492 = vector.broadcast %57 : vector<1x8xf32> to vector<9x8xf32>
    %493 = arith.addf %491, %492 : vector<9x8xf32>
    %cst_203 = arith.constant dense<0xFF800000> : vector<9xf32>
    %494 = vector.multi_reduction <maximumf>, %493, %cst_203 [1] : vector<9x8xf32> to vector<9xf32>
    %495 = vector.shape_cast %494 : vector<9xf32> to vector<9x1xf32>
    %496 = vector.broadcast %495 : vector<9x1xf32> to vector<9x8xf32>
    %497 = arith.subf %493, %496 : vector<9x8xf32>
    %498 = math.exp %497 : vector<9x8xf32>
    %cst_204 = arith.constant dense<0.000000e+00> : vector<9xf32>
    %499 = vector.multi_reduction <add>, %498, %cst_204 [1] : vector<9x8xf32> to vector<9xf32>
    %500 = vector.shape_cast %499 : vector<9xf32> to vector<9x1xf32>
    %501 = tpu.reciprocal %500 {approx = true} : vector<9x1xf32> -> vector<9x1xf32>
    %502 = vector.broadcast %501 : vector<9x1xf32> to vector<9x8xf32>
    %503 = arith.mulf %498, %502 : vector<9x8xf32>
    %504 = arith.truncf %503 : vector<9x8xf32> to vector<9x8xbf16>
    %505 = arith.truncf %486 : vector<8x8xf32> to vector<8x8xbf16>
    %cst_205 = arith.constant dense<0.000000e+00> : vector<9x8xf32>
    %506 = tpu.matmul %504, %505, %cst_205 {dimension_numbers = #tpu.dot_dimension_numbers<[1], [0], [0], [1], [0, 0, 1, 1], [], []>} : vector<9x8xbf16>, vector<8x8xbf16>, vector<9x8xf32> -> vector<9x8xf32>
    %507 = vector.extract_strided_slice %8 {offsets = [16, 0], sizes = [8, 32], strides = [1, 1]} : vector<32x32xf32> to vector<8x32xf32>
    %508 = arith.truncf %506 : vector<9x8xf32> to vector<9x8xbf16>
    %509 = arith.truncf %507 : vector<8x32xf32> to vector<8x32xbf16>
    %cst_206 = arith.constant dense<0.000000e+00> : vector<9x32xf32>
    %510 = tpu.matmul %508, %509, %cst_206 {dimension_numbers = #tpu.dot_dimension_numbers<[1], [0], [0], [1], [0, 0, 1, 1], [], []>} : vector<9x8xbf16>, vector<8x32xbf16>, vector<9x32xf32> -> vector<9x32xf32>
    %511 = arith.addf %483, %510 : vector<9x32xf32>
    %512 = vector.extract_strided_slice %423 {offsets = [0, 24], sizes = [9, 8], strides = [1, 1]} : vector<9x32xf32> to vector<9x8xf32>
    %513 = vector.extract_strided_slice %428 {offsets = [0, 24], sizes = [8, 8], strides = [1, 1]} : vector<8x64xf32> to vector<8x8xf32>
    %514 = vector.extract_strided_slice %428 {offsets = [0, 56], sizes = [8, 8], strides = [1, 1]} : vector<8x64xf32> to vector<8x8xf32>
    %515 = arith.truncf %512 : vector<9x8xf32> to vector<9x8xbf16>
    %516 = arith.truncf %513 : vector<8x8xf32> to vector<8x8xbf16>
    %cst_207 = arith.constant dense<0.000000e+00> : vector<9x8xf32>
    %517 = tpu.matmul %515, %516, %cst_207 {dimension_numbers = #tpu.dot_dimension_numbers<[1], [1], [0], [0], [0, 0, 1, 0], [], []>} : vector<9x8xbf16>, vector<8x8xbf16>, vector<9x8xf32> -> vector<9x8xf32>
    %cst_208 = arith.constant 0.353553385 : f32
    %518 = vector.broadcast %cst_208 : f32 to vector<9x8xf32>
    %519 = arith.mulf %517, %518 : vector<9x8xf32>
    %520 = vector.broadcast %57 : vector<1x8xf32> to vector<9x8xf32>
    %521 = arith.addf %519, %520 : vector<9x8xf32>
    %cst_209 = arith.constant dense<0xFF800000> : vector<9xf32>
    %522 = vector.multi_reduction <maximumf>, %521, %cst_209 [1] : vector<9x8xf32> to vector<9xf32>
    %523 = vector.shape_cast %522 : vector<9xf32> to vector<9x1xf32>
    %524 = vector.broadcast %523 : vector<9x1xf32> to vector<9x8xf32>
    %525 = arith.subf %521, %524 : vector<9x8xf32>
    %526 = math.exp %525 : vector<9x8xf32>
    %cst_210 = arith.constant dense<0.000000e+00> : vector<9xf32>
    %527 = vector.multi_reduction <add>, %526, %cst_210 [1] : vector<9x8xf32> to vector<9xf32>
    %528 = vector.shape_cast %527 : vector<9xf32> to vector<9x1xf32>
    %529 = tpu.reciprocal %528 {approx = true} : vector<9x1xf32> -> vector<9x1xf32>
    %530 = vector.broadcast %529 : vector<9x1xf32> to vector<9x8xf32>
    %531 = arith.mulf %526, %530 : vector<9x8xf32>
    %532 = arith.truncf %531 : vector<9x8xf32> to vector<9x8xbf16>
    %533 = arith.truncf %514 : vector<8x8xf32> to vector<8x8xbf16>
    %cst_211 = arith.constant dense<0.000000e+00> : vector<9x8xf32>
    %534 = tpu.matmul %532, %533, %cst_211 {dimension_numbers = #tpu.dot_dimension_numbers<[1], [0], [0], [1], [0, 0, 1, 1], [], []>} : vector<9x8xbf16>, vector<8x8xbf16>, vector<9x8xf32> -> vector<9x8xf32>
    %535 = vector.extract_strided_slice %8 {offsets = [24, 0], sizes = [8, 32], strides = [1, 1]} : vector<32x32xf32> to vector<8x32xf32>
    %536 = arith.truncf %534 : vector<9x8xf32> to vector<9x8xbf16>
    %537 = arith.truncf %535 : vector<8x32xf32> to vector<8x32xbf16>
    %cst_212 = arith.constant dense<0.000000e+00> : vector<9x32xf32>
    %538 = tpu.matmul %536, %537, %cst_212 {dimension_numbers = #tpu.dot_dimension_numbers<[1], [0], [0], [1], [0, 0, 1, 1], [], []>} : vector<9x8xbf16>, vector<8x32xbf16>, vector<9x32xf32> -> vector<9x32xf32>
    %539 = arith.addf %511, %538 : vector<9x32xf32>
    %540 = vector.broadcast %5 : vector<1x32xf32> to vector<9x32xf32>
    %541 = arith.addf %539, %540 : vector<9x32xf32>
    %542 = arith.addf %418, %541 : vector<9x32xf32>
    %cst_213 = arith.constant dense<0.000000e+00> : vector<9xf32>
    %543 = vector.multi_reduction <add>, %542, %cst_213 [1] : vector<9x32xf32> to vector<9xf32>
    %544 = vector.shape_cast %543 : vector<9xf32> to vector<9x1xf32>
    %cst_214 = arith.constant 3.200000e+01 : f32
    %545 = vector.broadcast %cst_214 : f32 to vector<9x1xf32>
    %546 = arith.divf %544, %545 : vector<9x1xf32>
    %547 = vector.broadcast %546 : vector<9x1xf32> to vector<9x32xf32>
    %548 = arith.subf %542, %547 : vector<9x32xf32>
    %549 = arith.mulf %548, %548 : vector<9x32xf32>
    %cst_215 = arith.constant dense<0.000000e+00> : vector<9xf32>
    %550 = vector.multi_reduction <add>, %549, %cst_215 [1] : vector<9x32xf32> to vector<9xf32>
    %551 = vector.shape_cast %550 : vector<9xf32> to vector<9x1xf32>
    %cst_216 = arith.constant 3.200000e+01 : f32
    %552 = vector.broadcast %cst_216 : f32 to vector<9x1xf32>
    %553 = arith.divf %551, %552 : vector<9x1xf32>
    %cst_217 = arith.constant 9.99999974E-6 : f32
    %554 = vector.broadcast %cst_217 : f32 to vector<9x1xf32>
    %555 = arith.addf %553, %554 : vector<9x1xf32>
    %556 = math.rsqrt %555 : vector<9x1xf32>
    %557 = vector.broadcast %556 : vector<9x1xf32> to vector<9x32xf32>
    %558 = arith.mulf %548, %557 : vector<9x32xf32>
    %559 = vector.broadcast %13 : vector<1x32xf32> to vector<9x32xf32>
    %560 = arith.mulf %558, %559 : vector<9x32xf32>
    %561 = vector.broadcast %12 : vector<1x32xf32> to vector<9x32xf32>
    %562 = arith.addf %560, %561 : vector<9x32xf32>
    %563 = arith.truncf %562 : vector<9x32xf32> to vector<9x32xbf16>
    %564 = arith.truncf %22 : vector<32x64xf32> to vector<32x64xbf16>
    %cst_218 = arith.constant dense<0.000000e+00> : vector<9x64xf32>
    %565 = tpu.matmul %563, %564, %cst_218 {dimension_numbers = #tpu.dot_dimension_numbers<[1], [0], [0], [1], [0, 0, 1, 1], [], []>} : vector<9x32xbf16>, vector<32x64xbf16>, vector<9x64xf32> -> vector<9x64xf32>
    %566 = vector.broadcast %2 : vector<1x64xf32> to vector<9x64xf32>
    %567 = arith.addf %565, %566 : vector<9x64xf32>
    %cst_219 = arith.constant 0.000000e+00 : f32
    %568 = vector.broadcast %cst_219 : f32 to vector<9x64xf32>
    %569 = arith.maximumf %567, %568 : vector<9x64xf32>
    %570 = arith.truncf %569 : vector<9x64xf32> to vector<9x64xbf16>
    %571 = arith.truncf %23 : vector<64x32xf32> to vector<64x32xbf16>
    %cst_220 = arith.constant dense<0.000000e+00> : vector<9x32xf32>
    %572 = tpu.matmul %570, %571, %cst_220 {dimension_numbers = #tpu.dot_dimension_numbers<[1], [0], [0], [1], [0, 0, 1, 1], [], []>} : vector<9x64xbf16>, vector<64x32xbf16>, vector<9x32xf32> -> vector<9x32xf32>
    %573 = vector.broadcast %3 : vector<1x32xf32> to vector<9x32xf32>
    %574 = arith.addf %572, %573 : vector<9x32xf32>
    %575 = arith.addf %562, %574 : vector<9x32xf32>
    %cst_221 = arith.constant dense<0.000000e+00> : vector<9xf32>
    %576 = vector.multi_reduction <add>, %575, %cst_221 [1] : vector<9x32xf32> to vector<9xf32>
    %577 = vector.shape_cast %576 : vector<9xf32> to vector<9x1xf32>
    %cst_222 = arith.constant 3.200000e+01 : f32
    %578 = vector.broadcast %cst_222 : f32 to vector<9x1xf32>
    %579 = arith.divf %577, %578 : vector<9x1xf32>
    %580 = vector.broadcast %579 : vector<9x1xf32> to vector<9x32xf32>
    %581 = arith.subf %575, %580 : vector<9x32xf32>
    %582 = arith.mulf %581, %581 : vector<9x32xf32>
    %cst_223 = arith.constant dense<0.000000e+00> : vector<9xf32>
    %583 = vector.multi_reduction <add>, %582, %cst_223 [1] : vector<9x32xf32> to vector<9xf32>
    %584 = vector.shape_cast %583 : vector<9xf32> to vector<9x1xf32>
    %cst_224 = arith.constant 3.200000e+01 : f32
    %585 = vector.broadcast %cst_224 : f32 to vector<9x1xf32>
    %586 = arith.divf %584, %585 : vector<9x1xf32>
    %cst_225 = arith.constant 9.99999974E-6 : f32
    %587 = vector.broadcast %cst_225 : f32 to vector<9x1xf32>
    %588 = arith.addf %586, %587 : vector<9x1xf32>
    %589 = math.rsqrt %588 : vector<9x1xf32>
    %590 = vector.broadcast %589 : vector<9x1xf32> to vector<9x32xf32>
    %591 = arith.mulf %581, %590 : vector<9x32xf32>
    %592 = vector.broadcast %15 : vector<1x32xf32> to vector<9x32xf32>
    %593 = arith.mulf %591, %592 : vector<9x32xf32>
    %594 = vector.broadcast %14 : vector<1x32xf32> to vector<9x32xf32>
    %595 = arith.addf %593, %594 : vector<9x32xf32>
    %596 = arith.truncf %595 : vector<9x32xf32> to vector<9x32xbf16>
    %597 = arith.truncf %44 : vector<32x32xf32> to vector<32x32xbf16>
    %cst_226 = arith.constant dense<0.000000e+00> : vector<9x32xf32>
    %598 = tpu.matmul %596, %597, %cst_226 {dimension_numbers = #tpu.dot_dimension_numbers<[1], [0], [0], [1], [0, 0, 1, 1], [], []>} : vector<9x32xbf16>, vector<32x32xbf16>, vector<9x32xf32> -> vector<9x32xf32>
    %599 = vector.broadcast %42 : vector<1x32xf32> to vector<9x32xf32>
    %600 = arith.addf %598, %599 : vector<9x32xf32>
    %cst_227 = arith.constant 0.000000e+00 : f32
    %601 = vector.broadcast %cst_227 : f32 to vector<9x32xf32>
    %602 = arith.maximumf %600, %601 : vector<9x32xf32>
    %603 = arith.truncf %602 : vector<9x32xf32> to vector<9x32xbf16>
    %604 = arith.truncf %45 : vector<32x4xf32> to vector<32x4xbf16>
    %cst_228 = arith.constant dense<0.000000e+00> : vector<9x4xf32>
    %605 = tpu.matmul %603, %604, %cst_228 {dimension_numbers = #tpu.dot_dimension_numbers<[1], [0], [0], [1], [0, 0, 1, 1], [], []>} : vector<9x32xbf16>, vector<32x4xbf16>, vector<9x4xf32> -> vector<9x4xf32>
    %606 = vector.broadcast %43 : vector<1x4xf32> to vector<9x4xf32>
    %607 = arith.addf %605, %606 : vector<9x4xf32>
    %608 = vector.extract_strided_slice %607 {offsets = [8, 0], sizes = [1, 4], strides = [1, 1]} : vector<9x4xf32> to vector<1x4xf32>
    %609 = tpu.iota {dimensions = array<i32: 0>} : vector<1x4xi32>
    %c1_i32 = arith.constant 1 : i32
    %610 = vector.broadcast %c1_i32 : i32 to vector<1x4xi32>
    %611 = arith.addi %609, %610 : vector<1x4xi32>
    %612 = arith.sitofp %611 : vector<1x4xi32> to vector<1x4xf32>
    %613 = arith.mulf %608, %612 : vector<1x4xf32>
    %c0_229 = arith.constant 0 : index
    %c0_230 = arith.constant 0 : index
    %c0_231 = arith.constant 0 : index
    %614 = vector.load %arg5[%c0_229, %c0_230, %c0_231] : memref<1x1x4xf32, #tpu.memory_space<vmem>>, vector<1x1x4xf32>
    %615 = vector.shape_cast %614 : vector<1x1x4xf32> to vector<1x4xf32>
    %616 = arith.addf %613, %615 : vector<1x4xf32>
    %c0_232 = arith.constant 0 : index
    %c0_233 = arith.constant 0 : index
    %c0_234 = arith.constant 0 : index
    %617 = vector.load %arg53[%c0_232, %c0_233, %c0_234] : memref<1x1x4xf32, #tpu.memory_space<vmem>>, vector<1x1x4xf32>
    %618 = vector.shape_cast %617 : vector<1x1x4xf32> to vector<1x4xf32>
    %619 = vector.shape_cast %616 : vector<1x4xf32> to vector<1x1x4xf32>
    tpu.vector_store %arg53[%c0_232, %c0_233, %c0_234], %619 {strides = array<i32>} : memref<1x1x4xf32, #tpu.memory_space<vmem>>, vector<1x1x4xf32>,
    return
  }
  func.func @transform_0(%arg0: i32) -> (i32, i32, i32) {
    %c0_i32 = arith.constant 0 : i32
    %c0_i32_0 = arith.constant 0 : i32
    %c0_i32_1 = arith.constant 0 : i32
    return %arg0, %c0_i32, %c0_i32_0 : i32, i32, i32
  }
  func.func @transform_1(%arg0: i32) -> (i32, i32, i32) {
    %c0_i32 = arith.constant 0 : i32
    %c0_i32_0 = arith.constant 0 : i32
    %c0_i32_1 = arith.constant 0 : i32
    return %arg0, %c0_i32, %c0_i32_0 : i32, i32, i32
  }
  func.func @transform_2(%arg0: i32) -> (i32, i32, i32) {
    %c0_i32 = arith.constant 0 : i32
    %c0_i32_0 = arith.constant 0 : i32
    %c0_i32_1 = arith.constant 0 : i32
    return %arg0, %c0_i32, %c0_i32_0 : i32, i32, i32
  }
  func.func @transform_3(%arg0: i32) -> (i32, i32, i32) {
    %c0_i32 = arith.constant 0 : i32
    %c0_i32_0 = arith.constant 0 : i32
    %c0_i32_1 = arith.constant 0 : i32
    return %arg0, %c0_i32, %c0_i32_0 : i32, i32, i32
  }
  func.func @transform_4(%arg0: i32) -> (i32, i32, i32) {
    %c0_i32 = arith.constant 0 : i32
    %c0_i32_0 = arith.constant 0 : i32
    %c0_i32_1 = arith.constant 0 : i32
    return %arg0, %c0_i32, %c0_i32_0 : i32, i32, i32
  }
  func.func @transform_5(%arg0: i32) -> (i32, i32) {
    %c0_i32 = arith.constant 0 : i32
    %c0_i32_0 = arith.constant 0 : i32
    %c0_i32_1 = arith.constant 0 : i32
    return %c0_i32, %c0_i32_0 : i32, i32
  }
  func.func @transform_6(%arg0: i32) -> (i32, i32) {
    %c0_i32 = arith.constant 0 : i32
    %c0_i32_0 = arith.constant 0 : i32
    %c0_i32_1 = arith.constant 0 : i32
    return %c0_i32, %c0_i32_0 : i32, i32
  }
  func.func @transform_7(%arg0: i32) -> (i32, i32) {
    %c0_i32 = arith.constant 0 : i32
    %c0_i32_0 = arith.constant 0 : i32
    %c0_i32_1 = arith.constant 0 : i32
    return %c0_i32, %c0_i32_0 : i32, i32
  }
  func.func @transform_8(%arg0: i32) -> (i32, i32) {
    %c0_i32 = arith.constant 0 : i32
    %c0_i32_0 = arith.constant 0 : i32
    %c0_i32_1 = arith.constant 0 : i32
    return %c0_i32, %c0_i32_0 : i32, i32
  }
  func.func @transform_9(%arg0: i32) -> (i32, i32) {
    %c0_i32 = arith.constant 0 : i32
    %c0_i32_0 = arith.constant 0 : i32
    %c0_i32_1 = arith.constant 0 : i32
    return %c0_i32, %c0_i32_0 : i32, i32
  }
  func.func @transform_10(%arg0: i32) -> (i32, i32) {
    %c0_i32 = arith.constant 0 : i32
    %c0_i32_0 = arith.constant 0 : i32
    %c0_i32_1 = arith.constant 0 : i32
    return %c0_i32, %c0_i32_0 : i32, i32
  }
  func.func @transform_11(%arg0: i32) -> (i32, i32) {
    %c0_i32 = arith.constant 0 : i32
    %c0_i32_0 = arith.constant 0 : i32
    %c0_i32_1 = arith.constant 0 : i32
    return %c0_i32, %c0_i32_0 : i32, i32
  }
  func.func @transform_12(%arg0: i32) -> (i32, i32) {
    %c0_i32 = arith.constant 0 : i32
    %c0_i32_0 = arith.constant 0 : i32
    %c0_i32_1 = arith.constant 0 : i32
    return %c0_i32, %c0_i32_0 : i32, i32
  }
  func.func @transform_13(%arg0: i32) -> (i32, i32) {
    %c0_i32 = arith.constant 0 : i32
    %c0_i32_0 = arith.constant 0 : i32
    %c0_i32_1 = arith.constant 0 : i32
    return %c0_i32, %c0_i32_0 : i32, i32
  }
  func.func @transform_14(%arg0: i32) -> (i32, i32) {
    %c0_i32 = arith.constant 0 : i32
    %c0_i32_0 = arith.constant 0 : i32
    %c0_i32_1 = arith.constant 0 : i32
    return %c0_i32, %c0_i32_0 : i32, i32
  }
  func.func @transform_15(%arg0: i32) -> (i32, i32) {
    %c0_i32 = arith.constant 0 : i32
    %c0_i32_0 = arith.constant 0 : i32
    %c0_i32_1 = arith.constant 0 : i32
    return %c0_i32, %c0_i32_0 : i32, i32
  }
  func.func @transform_16(%arg0: i32) -> (i32, i32) {
    %c0_i32 = arith.constant 0 : i32
    %c0_i32_0 = arith.constant 0 : i32
    %c0_i32_1 = arith.constant 0 : i32
    return %c0_i32, %c0_i32_0 : i32, i32
  }
  func.func @transform_17(%arg0: i32) -> (i32, i32) {
    %c0_i32 = arith.constant 0 : i32
    %c0_i32_0 = arith.constant 0 : i32
    %c0_i32_1 = arith.constant 0 : i32
    return %c0_i32, %c0_i32_0 : i32, i32
  }
  func.func @transform_18(%arg0: i32) -> (i32, i32) {
    %c0_i32 = arith.constant 0 : i32
    %c0_i32_0 = arith.constant 0 : i32
    %c0_i32_1 = arith.constant 0 : i32
    return %c0_i32, %c0_i32_0 : i32, i32
  }
  func.func @transform_19(%arg0: i32) -> (i32, i32) {
    %c0_i32 = arith.constant 0 : i32
    %c0_i32_0 = arith.constant 0 : i32
    %c0_i32_1 = arith.constant 0 : i32
    return %c0_i32, %c0_i32_0 : i32, i32
  }
  func.func @transform_20(%arg0: i32) -> (i32, i32) {
    %c0_i32 = arith.constant 0 : i32
    %c0_i32_0 = arith.constant 0 : i32
    %c0_i32_1 = arith.constant 0 : i32
    return %c0_i32, %c0_i32_0 : i32, i32
  }
  func.func @transform_21(%arg0: i32) -> (i32, i32) {
    %c0_i32 = arith.constant 0 : i32
    %c0_i32_0 = arith.constant 0 : i32
    %c0_i32_1 = arith.constant 0 : i32
    return %c0_i32, %c0_i32_0 : i32, i32
  }
  func.func @transform_22(%arg0: i32) -> (i32, i32) {
    %c0_i32 = arith.constant 0 : i32
    %c0_i32_0 = arith.constant 0 : i32
    %c0_i32_1 = arith.constant 0 : i32
    return %c0_i32, %c0_i32_0 : i32, i32
  }
  func.func @transform_23(%arg0: i32) -> (i32, i32) {
    %c0_i32 = arith.constant 0 : i32
    %c0_i32_0 = arith.constant 0 : i32
    %c0_i32_1 = arith.constant 0 : i32
    return %c0_i32, %c0_i32_0 : i32, i32
  }
  func.func @transform_24(%arg0: i32) -> (i32, i32) {
    %c0_i32 = arith.constant 0 : i32
    %c0_i32_0 = arith.constant 0 : i32
    %c0_i32_1 = arith.constant 0 : i32
    return %c0_i32, %c0_i32_0 : i32, i32
  }
  func.func @transform_25(%arg0: i32) -> (i32, i32) {
    %c0_i32 = arith.constant 0 : i32
    %c0_i32_0 = arith.constant 0 : i32
    %c0_i32_1 = arith.constant 0 : i32
    return %c0_i32, %c0_i32_0 : i32, i32
  }
  func.func @transform_26(%arg0: i32) -> (i32, i32) {
    %c0_i32 = arith.constant 0 : i32
    %c0_i32_0 = arith.constant 0 : i32
    %c0_i32_1 = arith.constant 0 : i32
    return %c0_i32, %c0_i32_0 : i32, i32
  }
  func.func @transform_27(%arg0: i32) -> (i32, i32) {
    %c0_i32 = arith.constant 0 : i32
    %c0_i32_0 = arith.constant 0 : i32
    %c0_i32_1 = arith.constant 0 : i32
    return %c0_i32, %c0_i32_0 : i32, i32
  }
  func.func @transform_28(%arg0: i32) -> (i32, i32) {
    %c0_i32 = arith.constant 0 : i32
    %c0_i32_0 = arith.constant 0 : i32
    %c0_i32_1 = arith.constant 0 : i32
    return %c0_i32, %c0_i32_0 : i32, i32
  }
  func.func @transform_29(%arg0: i32) -> (i32, i32) {
    %c0_i32 = arith.constant 0 : i32
    %c0_i32_0 = arith.constant 0 : i32
    %c0_i32_1 = arith.constant 0 : i32
    return %c0_i32, %c0_i32_0 : i32, i32
  }
  func.func @transform_30(%arg0: i32) -> (i32, i32) {
    %c0_i32 = arith.constant 0 : i32
    %c0_i32_0 = arith.constant 0 : i32
    %c0_i32_1 = arith.constant 0 : i32
    return %c0_i32, %c0_i32_0 : i32, i32
  }
  func.func @transform_31(%arg0: i32) -> (i32, i32) {
    %c0_i32 = arith.constant 0 : i32
    %c0_i32_0 = arith.constant 0 : i32
    %c0_i32_1 = arith.constant 0 : i32
    return %c0_i32, %c0_i32_0 : i32, i32
  }
  func.func @transform_32(%arg0: i32) -> (i32, i32) {
    %c0_i32 = arith.constant 0 : i32
    %c0_i32_0 = arith.constant 0 : i32
    %c0_i32_1 = arith.constant 0 : i32
    return %c0_i32, %c0_i32_0 : i32, i32
  }
  func.func @transform_33(%arg0: i32) -> (i32, i32) {
    %c0_i32 = arith.constant 0 : i32
    %c0_i32_0 = arith.constant 0 : i32
    %c0_i32_1 = arith.constant 0 : i32
    return %c0_i32, %c0_i32_0 : i32, i32
  }
  func.func @transform_34(%arg0: i32) -> (i32, i32) {
    %c0_i32 = arith.constant 0 : i32
    %c0_i32_0 = arith.constant 0 : i32
    %c0_i32_1 = arith.constant 0 : i32
    return %c0_i32, %c0_i32_0 : i32, i32
  }
  func.func @transform_35(%arg0: i32) -> (i32, i32) {
    %c0_i32 = arith.constant 0 : i32
    %c0_i32_0 = arith.constant 0 : i32
    %c0_i32_1 = arith.constant 0 : i32
    return %c0_i32, %c0_i32_0 : i32, i32
  }
  func.func @transform_36(%arg0: i32) -> (i32, i32) {
    %c0_i32 = arith.constant 0 : i32
    %c0_i32_0 = arith.constant 0 : i32
    %c0_i32_1 = arith.constant 0 : i32
    return %c0_i32, %c0_i32_0 : i32, i32
  }
  func.func @transform_37(%arg0: i32) -> (i32, i32) {
    %c0_i32 = arith.constant 0 : i32
    %c0_i32_0 = arith.constant 0 : i32
    %c0_i32_1 = arith.constant 0 : i32
    return %c0_i32, %c0_i32_0 : i32, i32
  }
  func.func @transform_38(%arg0: i32) -> (i32, i32) {
    %c0_i32 = arith.constant 0 : i32
    %c0_i32_0 = arith.constant 0 : i32
    %c0_i32_1 = arith.constant 0 : i32
    return %c0_i32, %c0_i32_0 : i32, i32
  }
  func.func @transform_39(%arg0: i32) -> (i32, i32) {
    %c0_i32 = arith.constant 0 : i32
    %c0_i32_0 = arith.constant 0 : i32
    %c0_i32_1 = arith.constant 0 : i32
    return %c0_i32, %c0_i32_0 : i32, i32
  }
  func.func @transform_40(%arg0: i32) -> (i32, i32) {
    %c0_i32 = arith.constant 0 : i32
    %c0_i32_0 = arith.constant 0 : i32
    %c0_i32_1 = arith.constant 0 : i32
    return %c0_i32, %c0_i32_0 : i32, i32
  }
  func.func @transform_41(%arg0: i32) -> (i32, i32) {
    %c0_i32 = arith.constant 0 : i32
    %c0_i32_0 = arith.constant 0 : i32
    %c0_i32_1 = arith.constant 0 : i32
    return %c0_i32, %c0_i32_0 : i32, i32
  }
  func.func @transform_42(%arg0: i32) -> (i32, i32) {
    %c0_i32 = arith.constant 0 : i32
    %c0_i32_0 = arith.constant 0 : i32
    %c0_i32_1 = arith.constant 0 : i32
    return %c0_i32, %c0_i32_0 : i32, i32
  }
  func.func @transform_43(%arg0: i32) -> (i32, i32) {
    %c0_i32 = arith.constant 0 : i32
    %c0_i32_0 = arith.constant 0 : i32
    %c0_i32_1 = arith.constant 0 : i32
    return %c0_i32, %c0_i32_0 : i32, i32
  }
  func.func @transform_44(%arg0: i32) -> (i32, i32) {
    %c0_i32 = arith.constant 0 : i32
    %c0_i32_0 = arith.constant 0 : i32
    %c0_i32_1 = arith.constant 0 : i32
    return %c0_i32, %c0_i32_0 : i32, i32
  }
  func.func @transform_45(%arg0: i32) -> (i32, i32) {
    %c0_i32 = arith.constant 0 : i32
    %c0_i32_0 = arith.constant 0 : i32
    %c0_i32_1 = arith.constant 0 : i32
    return %c0_i32, %c0_i32_0 : i32, i32
  }
  func.func @transform_46(%arg0: i32) -> (i32, i32) {
    %c0_i32 = arith.constant 0 : i32
    %c0_i32_0 = arith.constant 0 : i32
    %c0_i32_1 = arith.constant 0 : i32
    return %c0_i32, %c0_i32_0 : i32, i32
  }
  func.func @transform_47(%arg0: i32) -> (i32, i32) {
    %c0_i32 = arith.constant 0 : i32
    %c0_i32_0 = arith.constant 0 : i32
    %c0_i32_1 = arith.constant 0 : i32
    return %c0_i32, %c0_i32_0 : i32, i32
  }
  func.func @transform_48(%arg0: i32) -> (i32, i32) {
    %c0_i32 = arith.constant 0 : i32
    %c0_i32_0 = arith.constant 0 : i32
    %c0_i32_1 = arith.constant 0 : i32
    return %c0_i32, %c0_i32_0 : i32, i32
  }
  func.func @transform_49(%arg0: i32) -> (i32, i32) {
    %c0_i32 = arith.constant 0 : i32
    %c0_i32_0 = arith.constant 0 : i32
    %c0_i32_1 = arith.constant 0 : i32
    return %c0_i32, %c0_i32_0 : i32, i32
  }
  func.func @transform_50(%arg0: i32) -> (i32, i32) {
    %c0_i32 = arith.constant 0 : i32
    %c0_i32_0 = arith.constant 0 : i32
    %c0_i32_1 = arith.constant 0 : i32
    return %c0_i32, %c0_i32_0 : i32, i32
  }
  func.func @transform_51(%arg0: i32) -> (i32, i32) {
    %c0_i32 = arith.constant 0 : i32
    %c0_i32_0 = arith.constant 0 : i32
    %c0_i32_1 = arith.constant 0 : i32
    return %c0_i32, %c0_i32_0 : i32, i32
  }
  func.func @transform_52(%arg0: i32) -> (i32, i32, i32) {
    %c0_i32 = arith.constant 0 : i32
    %c0_i32_0 = arith.constant 0 : i32
    %c0_i32_1 = arith.constant 0 : i32
    return %arg0, %c0_i32, %c0_i32_0 : i32, i32, i32
  }
}

</mosaic_0001>

<llo_original>
// kernel: tpu_custom_call.1
$region0: #{tpu_custom_call.1}
  #allocation0 [shape = 'u32[]', space=smem, size = 0x4, offset = 0x4, fixed_abs, tag = 'smem constant byte address 0x4 - core index']
  #allocation1 [shape = 'u32[144,128]{1,0:T(1,128)}', space=vmem, size = 0x12000, scoped, tag = 'internal scratch']
  %s0 = inlined_call_operand.smem [shape: u32[53], index: -1, kind: input, shape index: {}]
  %s1 = sld [smem:[%s0]]
  %s2 = scalar_lea.smem %s0, 1
  %s3 = sld [smem:[%s2]]
  %s4 = scalar_lea.smem %s0, 2
  %s5 = sld [smem:[%s4]]
  %s6 = scalar_lea.smem %s0, 3
  %s7 = sld [smem:[%s6]]
  %s8 = scalar_lea.smem %s0, 4
  %s9 = sld [smem:[%s8]]
  %s10 = scalar_lea.smem %s0, 5
  %s11 = sld [smem:[%s10]]
  %s12 = scalar_lea.smem %s0, 6
  %s13 = sld [smem:[%s12]]
  %s14 = scalar_lea.smem %s0, 7
  %s15 = sld [smem:[%s14]]
  %s16 = scalar_lea.smem %s0, 8
  %s17 = sld [smem:[%s16]]
  %s18 = scalar_lea.smem %s0, 9
  %s19 = sld [smem:[%s18]]
  %s20 = scalar_lea.smem %s0, 10
  %s21 = sld [smem:[%s20]]
  %s22 = scalar_lea.smem %s0, 11
  %s23 = sld [smem:[%s22]]
  %s24 = scalar_lea.smem %s0, 12
  %s25 = sld [smem:[%s24]]
  %s26 = scalar_lea.smem %s0, 13
  %s27 = sld [smem:[%s26]]
  %s28 = scalar_lea.smem %s0, 14
  %s29 = sld [smem:[%s28]]
  %s30 = scalar_lea.smem %s0, 15
  %s31 = sld [smem:[%s30]]
  %s32 = scalar_lea.smem %s0, 16
  %s33 = sld [smem:[%s32]]
  %s34 = scalar_lea.smem %s0, 17
  %s35 = sld [smem:[%s34]]
  %s36 = scalar_lea.smem %s0, 18
  %s37 = sld [smem:[%s36]]
  %s38 = scalar_lea.smem %s0, 19
  %s39 = sld [smem:[%s38]]
  %s40 = scalar_lea.smem %s0, 20
  %s41 = sld [smem:[%s40]]
  %s42 = scalar_lea.smem %s0, 21
  %s43 = sld [smem:[%s42]]
  %s44 = scalar_lea.smem %s0, 22
  %s45 = sld [smem:[%s44]]
  %s46 = scalar_lea.smem %s0, 23
  %s47 = sld [smem:[%s46]]
  %s48 = scalar_lea.smem %s0, 24
  %s49 = sld [smem:[%s48]]
  %s50 = scalar_lea.smem %s0, 25
  %s51 = sld [smem:[%s50]]
  %s52 = scalar_lea.smem %s0, 26
  %s53 = sld [smem:[%s52]]
  %s54 = scalar_lea.smem %s0, 27
  %s55 = sld [smem:[%s54]]
  %s56 = scalar_lea.smem %s0, 28
  %s57 = sld [smem:[%s56]]
  %s58 = scalar_lea.smem %s0, 29
  %s59 = sld [smem:[%s58]]
  %s60 = scalar_lea.smem %s0, 30
  %s61 = sld [smem:[%s60]]
  %s62 = scalar_lea.smem %s0, 31
  %s63 = sld [smem:[%s62]]
  %s64 = scalar_lea.smem %s0, 32
  %s65 = sld [smem:[%s64]]
  %s66 = scalar_lea.smem %s0, 33
  %s67 = sld [smem:[%s66]]
  %s68 = scalar_lea.smem %s0, 34
  %s69 = sld [smem:[%s68]]
  %s70 = scalar_lea.smem %s0, 35
  %s71 = sld [smem:[%s70]]
  %s72 = scalar_lea.smem %s0, 36
  %s73 = sld [smem:[%s72]]
  %s74 = scalar_lea.smem %s0, 37
  %s75 = sld [smem:[%s74]]
  %s76 = scalar_lea.smem %s0, 38
  %s77 = sld [smem:[%s76]]
  %s78 = scalar_lea.smem %s0, 39
  %s79 = sld [smem:[%s78]]
  %s80 = scalar_lea.smem %s0, 40
  %s81 = sld [smem:[%s80]]
  %s82 = scalar_lea.smem %s0, 41
  %s83 = sld [smem:[%s82]]
  %s84 = scalar_lea.smem %s0, 42
  %s85 = sld [smem:[%s84]]
  %s86 = scalar_lea.smem %s0, 43
  %s87 = sld [smem:[%s86]]
  %s88 = scalar_lea.smem %s0, 44
  %s89 = sld [smem:[%s88]]
  %s90 = scalar_lea.smem %s0, 45
  %s91 = sld [smem:[%s90]]
  %s92 = scalar_lea.smem %s0, 46
  %s93 = sld [smem:[%s92]]
  %s94 = scalar_lea.smem %s0, 47
  %s95 = sld [smem:[%s94]]
  %s96 = scalar_lea.smem %s0, 48
  %s97 = sld [smem:[%s96]]
  %s98 = scalar_lea.smem %s0, 49
  %s99 = sld [smem:[%s98]]
  %s100 = scalar_lea.smem %s0, 50
  %s101 = sld [smem:[%s100]]
  %s102 = scalar_lea.smem %s0, 51
  %s103 = sld [smem:[%s102]]
  %s104 = scalar_lea.smem %s0, 52
  %s105 = sld [smem:[%s104]]
  %s106 = sld [smem:[#allocation0]]
  $region369: #{tpu_custom_call.1} parent=0
    _
  %s108 = ssub.s32 1, %s106
  %s109 = scalar_select 0, %s108, %s106
  $region1: #{tpu_custom_call.1} parent=0
    #allocation2 [shape = 'u8[1024]{0}', space=vmem, size = 0x400, scoped, tag = 'input window, operand 2']
    #allocation3 [shape = 's32[2]{0}', space=sflag, size = 0x8, scoped, tag = 'scoped memory for tpu_custom_call.1']
    #allocation4 [shape = 's32[2]{0}', space=sflag, size = 0x8, scoped, tag = 'scoped memory for tpu_custom_call.1']
    #allocation5 [shape = 'u8[1024]{0}', space=vmem, size = 0x400, scoped, tag = 'input window, operand 3']
    #allocation6 [shape = 's32[2]{0}', space=sflag, size = 0x8, scoped, tag = 'scoped memory for tpu_custom_call.1']
    #allocation7 [shape = 'u8[1024]{0}', space=vmem, size = 0x400, scoped, tag = 'input window, operand 4']
    #allocation8 [shape = 'u8[512]{0}', space=vmem, size = 0x400, scoped, tag = 'input window, operand 5, single buffered']
    #allocation9 [shape = 's32[1]{0}', space=sflag, size = 0x4, scoped, tag = 'scoped memory for tpu_custom_call.1']
    #allocation10 [shape = 'u8[2048]{0}', space=vmem, size = 0x800, scoped, tag = 'input window, operand 6, single buffered']
    #allocation11 [shape = 'u8[512]{0}', space=vmem, size = 0x400, scoped, tag = 'input window, operand 7, single buffered']
    #allocation12 [shape = 's32[1]{0}', space=sflag, size = 0x4, scoped, tag = 'scoped memory for tpu_custom_call.1']
    #allocation13 [shape = 'u8[512]{0}', space=vmem, size = 0x400, scoped, tag = 'input window, operand 8, single buffered']
    #allocation14 [shape = 'u8[512]{0}', space=vmem, size = 0x400, scoped, tag = 'input window, operand 9, single buffered']
    #allocation15 [shape = 's32[1]{0}', space=sflag, size = 0x4, scoped, tag = 'scoped memory for tpu_custom_call.1']
    #allocation16 [shape = 'u8[512]{0}', space=vmem, size = 0x400, scoped, tag = 'input window, operand 10, single buffered']
    #allocation17 [shape = 'u8[512]{0}', space=vmem, size = 0x400, scoped, tag = 'input window, operand 11, single buffered']
    #allocation18 [shape = 's32[1]{0}', space=sflag, size = 0x4, scoped, tag = 'scoped memory for tpu_custom_call.1']
    #allocation19 [shape = 'u8[512]{0}', space=vmem, size = 0x400, scoped, tag = 'input window, operand 15, single buffered']
    #allocation20 [shape = 'u8[512]{0}', space=vmem, size = 0x400, scoped, tag = 'input window, operand 16, single buffered']
    #allocation21 [shape = 's32[1]{0}', space=sflag, size = 0x4, scoped, tag = 'scoped memory for tpu_custom_call.1']
    #allocation22 [shape = 'u8[512]{0}', space=vmem, size = 0x400, scoped, tag = 'input window, operand 18, single buffered']
    #allocation23 [shape = 'u8[512]{0}', space=vmem, size = 0x400, scoped, tag = 'input window, operand 19, single buffered']
    #allocation24 [shape = 's32[1]{0}', space=sflag, size = 0x4, scoped, tag = 'scoped memory for tpu_custom_call.1']
    #allocation25 [shape = 'u8[512]{0}', space=vmem, size = 0x400, scoped, tag = 'input window, operand 20, single buffered']
    #allocation26 [shape = 'u8[512]{0}', space=vmem, size = 0x400, scoped, tag = 'input window, operand 21, single buffered']
    #allocation27 [shape = 's32[1]{0}', space=sflag, size = 0x4, scoped, tag = 'scoped memory for tpu_custom_call.1']
    #allocation28 [shape = 'u8[512]{0}', space=vmem, size = 0x400, scoped, tag = 'input window, operand 22, single buffered']
    #allocation29 [shape = 'u8[512]{0}', space=vmem, size = 0x400, scoped, tag = 'input window, operand 23, single buffered']
    #allocation30 [shape = 's32[1]{0}', space=sflag, size = 0x4, scoped, tag = 'scoped memory for tpu_custom_call.1']
    #allocation31 [shape = 'u8[512]{0}', space=vmem, size = 0x400, scoped, tag = 'input window, operand 29, single buffered']
    #allocation32 [shape = 'u8[2048]{0}', space=vmem, size = 0x800, scoped, tag = 'input window, operand 30, single buffered']
    #allocation33 [shape = 's32[1]{0}', space=sflag, size = 0x4, scoped, tag = 'scoped memory for tpu_custom_call.1']
    #allocation34 [shape = 'u8[512]{0}', space=vmem, size = 0x400, scoped, tag = 'input window, operand 31, single buffered']
    #allocation35 [shape = 'u8[512]{0}', space=vmem, size = 0x400, scoped, tag = 'input window, operand 32, single buffered']
    #allocation36 [shape = 's32[1]{0}', space=sflag, size = 0x4, scoped, tag = 'scoped memory for tpu_custom_call.1']
    #allocation37 [shape = 'u8[512]{0}', space=vmem, size = 0x400, scoped, tag = 'input window, operand 33, single buffered']
    #allocation38 [shape = 'u8[512]{0}', space=vmem, size = 0x400, scoped, tag = 'input window, operand 37, single buffered']
    #allocation39 [shape = 's32[1]{0}', space=sflag, size = 0x4, scoped, tag = 'scoped memory for tpu_custom_call.1']
    #allocation40 [shape = 'u8[512]{0}', space=vmem, size = 0x400, scoped, tag = 'input window, operand 38, single buffered']
    #allocation41 [shape = 'u8[512]{0}', space=vmem, size = 0x400, scoped, tag = 'input window, operand 39, single buffered']
    #allocation42 [shape = 's32[1]{0}', space=sflag, size = 0x4, scoped, tag = 'scoped memory for tpu_custom_call.1']
    #allocation43 [shape = 'u8[512]{0}', space=vmem, size = 0x400, scoped, tag = 'input window, operand 40, single buffered']
    #allocation44 [shape = 'u8[512]{0}', space=vmem, size = 0x400, scoped, tag = 'input window, operand 41, single buffered']
    #allocation45 [shape = 's32[1]{0}', space=sflag, size = 0x4, scoped, tag = 'scoped memory for tpu_custom_call.1']
    #allocation46 [shape = 'u8[512]{0}', space=vmem, size = 0x400, scoped, tag = 'input window, operand 42, single buffered']
    #allocation47 [shape = 'u8[512]{0}', space=vmem, size = 0x400, scoped, tag = 'input window, operand 45, single buffered']
    #allocation48 [shape = 's32[1]{0}', space=sflag, size = 0x4, scoped, tag = 'scoped memory for tpu_custom_call.1']
    #allocation49 [shape = 'u8[512]{0}', space=vmem, size = 0x400, scoped, tag = 'input window, operand 46, single buffered']
    #allocation50 [shape = 'u8[512]{0}', space=vmem, size = 0x400, scoped, tag = 'input window, operand 47, single buffered']
    #allocation51 [shape = 's32[1]{0}', space=sflag, size = 0x4, scoped, tag = 'scoped memory for tpu_custom_call.1']
    #allocation52 [shape = 'u8[1024]{0}', space=vmem, size = 0x400, scoped, tag = 'output window, operand 0']
    %110 = vsyncpa [#allocation3], 0
    %s111 = scalar_lea.sflag [#allocation3], 1
    %112 = vsyncpa %s111, 0
    %113 = vsyncpa [#allocation6], 0
    %s114 = scalar_lea.sflag [#allocation6], 1
    %115 = vsyncpa %s114, 0
    %116 = vsyncpa [#allocation9], 0
    %117 = vsyncpa [#allocation12], 0
    %118 = vsyncpa [#allocation15], 0
    %119 = vsyncpa [#allocation18], 0
    %120 = vsyncpa [#allocation21], 0
    %121 = vsyncpa [#allocation24], 0
    %122 = vsyncpa [#allocation27], 0
    %123 = vsyncpa [#allocation30], 0
    %124 = vsyncpa [#allocation33], 0
    %125 = vsyncpa [#allocation36], 0
    %126 = vsyncpa [#allocation39], 0
    %127 = vsyncpa [#allocation42], 0
    %128 = vsyncpa [#allocation45], 0
    %129 = vsyncpa [#allocation48], 0
    %130 = vsyncpa [#allocation51], 0
    %131 = vsyncpa [#allocation4], 0
    %s132 = scalar_lea.sflag [#allocation4], 1
    %133 = vsyncpa %s132, 0
    loop: start=0, step=1, limit=4
    $region2: #{tpu_custom_call.1} parent=1 // loop_pre_header
      _
    $region3: #{tpu_custom_call.1} parent=1 // loop_header
      %s135 = sphi 0, %s139
      %p136 = scmp.ge.s32.totalorder %s135, 4
      %s145 = sphi 0, %s147
      %s148 = sphi 0, %s145
      %s149 = sphi 0, %s148
      %s165 = sphi 0, %s149
      %s171 = sphi 0, %s173
      %s174 = sphi 0, %s171
      %s175 = sphi 0, %s174
      %s191 = sphi 0, %s175
      %s197 = sphi 0, %s199
      %s200 = sphi 0, %s197
      %s201 = sphi 0, %s200
      %s217 = sphi 0, %s201
      %s223 = sphi 0, %s225
      %s226 = sphi 0, %s223
      %s227 = sphi 0, %s226
      %s243 = sphi 0, %s227
      %s249 = sphi 0, %s251
      %s252 = sphi 0, %s249
      %s253 = sphi 0, %s252
      %s269 = sphi 0, %s253
      %s273 = sphi 0, %s273
      %s275 = sphi 0, %s273
      %s276 = sphi 0, %s275
      %s290 = sphi 0, %s276
      %s294 = sphi 0, %s294
      %s296 = sphi 0, %s294
      %s297 = sphi 0, %s296
      %s311 = sphi 0, %s297
      %s315 = sphi 0, %s315
      %s317 = sphi 0, %s315
      %s318 = sphi 0, %s317
      %s332 = sphi 0, %s318
      %s336 = sphi 0, %s336
      %s338 = sphi 0, %s336
      %s339 = sphi 0, %s338
      %s353 = sphi 0, %s339
      %s357 = sphi 0, %s357
      %s359 = sphi 0, %s357
      %s360 = sphi 0, %s359
      %s374 = sphi 0, %s360
      %s378 = sphi 0, %s378
      %s380 = sphi 0, %s378
      %s381 = sphi 0, %s380
      %s395 = sphi 0, %s381
      %s399 = sphi 0, %s399
      %s401 = sphi 0, %s399
      %s402 = sphi 0, %s401
      %s416 = sphi 0, %s402
      %s420 = sphi 0, %s420
      %s422 = sphi 0, %s420
      %s423 = sphi 0, %s422
      %s437 = sphi 0, %s423
      %s441 = sphi 0, %s441
      %s443 = sphi 0, %s441
      %s444 = sphi 0, %s443
      %s458 = sphi 0, %s444
      %s462 = sphi 0, %s462
      %s464 = sphi 0, %s462
      %s465 = sphi 0, %s464
      %s479 = sphi 0, %s465
      %s483 = sphi 0, %s483
      %s485 = sphi 0, %s483
      %s486 = sphi 0, %s485
      %s500 = sphi 0, %s486
      %s504 = sphi 0, %s504
      %s506 = sphi 0, %s504
      %s507 = sphi 0, %s506
      %s521 = sphi 0, %s507
      %s525 = sphi 0, %s525
      %s527 = sphi 0, %s525
      %s528 = sphi 0, %s527
      %s542 = sphi 0, %s528
      %s546 = sphi 0, %s546
      %s548 = sphi 0, %s546
      %s549 = sphi 0, %s548
      %s563 = sphi 0, %s549
      %s567 = sphi 0, %s567
      %s569 = sphi 0, %s567
      %s570 = sphi 0, %s569
      %s584 = sphi 0, %s570
      %s588 = sphi 0, %s588
      %s590 = sphi 0, %s588
      %s591 = sphi 0, %s590
      %s605 = sphi 0, %s591
      %s609 = sphi 0, %s609
      %s611 = sphi 0, %s609
      %s612 = sphi 0, %s611
      %s626 = sphi 0, %s612
      %s630 = sphi 0, %s630
      %s632 = sphi 0, %s630
      %s633 = sphi 0, %s632
      %s647 = sphi 0, %s633
      %s651 = sphi 0, %s651
      %s653 = sphi 0, %s651
      %s654 = sphi 0, %s653
      %s668 = sphi 0, %s654
      %s672 = sphi 0, %s672
      %s674 = sphi 0, %s672
      %s675 = sphi 0, %s674
      %s689 = sphi 0, %s675
      %s693 = sphi 0, %s693
      %s695 = sphi 0, %s693
      %s696 = sphi 0, %s695
      %s710 = sphi 0, %s696
      %s714 = sphi 0, %s714
      %s716 = sphi 0, %s714
      %s717 = sphi 0, %s716
      %s731 = sphi 0, %s717
      %s735 = sphi 0, %s735
      %s737 = sphi 0, %s735
      %s738 = sphi 0, %s737
      %s752 = sphi 0, %s738
      %s756 = sphi 0, %s756
      %s758 = sphi 0, %s756
      %s759 = sphi 0, %s758
      %s773 = sphi 0, %s759
      %s777 = sphi 0, %s777
      %s779 = sphi 0, %s777
      %s780 = sphi 0, %s779
      %s794 = sphi 0, %s780
      %s798 = sphi 0, %s798
      %s800 = sphi 0, %s798
      %s801 = sphi 0, %s800
      %s815 = sphi 0, %s801
      %s819 = sphi 0, %s819
      %s821 = sphi 0, %s819
      %s822 = sphi 0, %s821
      %s836 = sphi 0, %s822
      %s840 = sphi 0, %s840
      %s842 = sphi 0, %s840
      %s843 = sphi 0, %s842
      %s857 = sphi 0, %s843
      %s861 = sphi 0, %s861
      %s863 = sphi 0, %s861
      %s864 = sphi 0, %s863
      %s878 = sphi 0, %s864
      %s882 = sphi 0, %s882
      %s884 = sphi 0, %s882
      %s885 = sphi 0, %s884
      %s899 = sphi 0, %s885
      %s903 = sphi 0, %s903
      %s905 = sphi 0, %s903
      %s906 = sphi 0, %s905
      %s920 = sphi 0, %s906
      %s924 = sphi 0, %s924
      %s926 = sphi 0, %s924
      %s927 = sphi 0, %s926
      %s941 = sphi 0, %s927
      %s945 = sphi 0, %s945
      %s947 = sphi 0, %s945
      %s948 = sphi 0, %s947
      %s962 = sphi 0, %s948
      %s966 = sphi 0, %s966
      %s968 = sphi 0, %s966
      %s969 = sphi 0, %s968
      %s983 = sphi 0, %s969
      %s987 = sphi 0, %s987
      %s989 = sphi 0, %s987
      %s990 = sphi 0, %s989
      %s1004 = sphi 0, %s990
      %s1008 = sphi 0, %s1008
      %s1010 = sphi 0, %s1008
      %s1011 = sphi 0, %s1010
      %s1025 = sphi 0, %s1011
      %s1029 = sphi 0, %s1029
      %s1031 = sphi 0, %s1029
      %s1032 = sphi 0, %s1031
      %s1046 = sphi 0, %s1032
      %s1050 = sphi 0, %s1050
      %s1052 = sphi 0, %s1050
      %s1053 = sphi 0, %s1052
      %s1067 = sphi 0, %s1053
      %s1071 = sphi 0, %s1071
      %s1073 = sphi 0, %s1071
      %s1074 = sphi 0, %s1073
      %s1088 = sphi 0, %s1074
      %s1092 = sphi 0, %s1092
      %s1094 = sphi 0, %s1092
      %s1095 = sphi 0, %s1094
      %s1109 = sphi 0, %s1095
      %s1113 = sphi 0, %s1113
      %s1115 = sphi 0, %s1113
      %s1116 = sphi 0, %s1115
      %s1130 = sphi 0, %s1116
      %s1134 = sphi 0, %s1134
      %s1136 = sphi 0, %s1134
      %s1137 = sphi 0, %s1136
      %s1151 = sphi 0, %s1137
      %s1155 = sphi 0, %s1155
      %s1157 = sphi 0, %s1155
      %s1158 = sphi 0, %s1157
      %s1172 = sphi 0, %s1158
      %s1176 = sphi 0, %s1176
      %s1178 = sphi 0, %s1176
      %s1179 = sphi 0, %s1178
      %s1193 = sphi 0, %s1179
      %s1197 = sphi 0, %s1197
      %s1199 = sphi 0, %s1197
      %s1200 = sphi 0, %s1199
      %s1214 = sphi 0, %s1200
      %s1218 = sphi 0, %s1218
      %s1220 = sphi 0, %s1218
      %s1221 = sphi 0, %s1220
      %s1235 = sphi 0, %s1221
      %s1239 = sphi 0, %s1239
      %s1241 = sphi 0, %s1239
      %s1242 = sphi 0, %s1241
      %s1256 = sphi 0, %s1242
      %s1262 = sphi 0, %s1264
      %s1265 = sphi 0, %s1262
      %s1266 = sphi 0, %s1265
      %s1282 = sphi 0, %s1266
    $region4: #{tpu_custom_call.1} parent=1 // loop_header_branch
      %138 = sbr.rel (%p136) target = $region8
    $region5: #{tpu_custom_call.1} parent=1 // loop_body
      %s140 = ssub.s32 %s135, 1
      %s141 = ssub.s32 %s135, 2
      %s142 = sadd.s32 %s135, 1
      %s143 = ssub.s32 %s135, %s142
      %p144 = scmp.eq.s32.totalorder %s143, 0
      %s146 = sadd.s32 %s145, 1
      %s147 = scalar_select %p144, %s145, %s146
      %p150 = pneg %p144
      %p151 = scmp.eq.s32.totalorder %s135, 1
      %p152 = por %p150, %p151
      %p153 = scmp.ne.s32.totalorder %s145, %s148
      %p154 = scmp.eq.s32.totalorder %s135, 0
      %p155 = por %p153, %p154
      %p156 = scmp.ne.s32.totalorder %s145, %s148
      %p157 = scmp.eq.s32.totalorder %s140, 1
      %p158 = por %p156, %p157
      %p159 = scmp.ne.s32.totalorder %s148, %s149
      %p160 = scmp.eq.s32.totalorder %s140, 0
      %p161 = por %p159, %p160
      %p162 = scmp.ne.s32.totalorder %s148, %s149
      %p163 = scmp.eq.s32.totalorder %s141, 1
      %p164 = por %p162, %p163
      %p166 = scmp.ne.s32.totalorder %s149, %s165
      %p167 = scmp.eq.s32.totalorder %s141, 0
      %p168 = por %p166, %p167
      %s169 = ssub.s32 %s135, %s142
      %p170 = scmp.eq.s32.totalorder %s169, 0
      %s172 = sadd.s32 %s171, 1
      %s173 = scalar_select %p170, %s171, %s172
      %p176 = pneg %p170
      %p177 = scmp.eq.s32.totalorder %s135, 1
      %p178 = por %p176, %p177
      %p179 = scmp.ne.s32.totalorder %s171, %s174
      %p180 = scmp.eq.s32.totalorder %s135, 0
      %p181 = por %p179, %p180
      %p182 = scmp.ne.s32.totalorder %s171, %s174
      %p183 = scmp.eq.s32.totalorder %s140, 1
      %p184 = por %p182, %p183
      %p185 = scmp.ne.s32.totalorder %s174, %s175
      %p186 = scmp.eq.s32.totalorder %s140, 0
      %p187 = por %p185, %p186
      %p188 = scmp.ne.s32.totalorder %s174, %s175
      %p189 = scmp.eq.s32.totalorder %s141, 1
      %p190 = por %p188, %p189
      %p192 = scmp.ne.s32.totalorder %s175, %s191
      %p193 = scmp.eq.s32.totalorder %s141, 0
      %p194 = por %p192, %p193
      %s195 = ssub.s32 %s135, %s142
      %p196 = scmp.eq.s32.totalorder %s195, 0
      %s198 = sadd.s32 %s197, 1
      %s199 = scalar_select %p196, %s197, %s198
      %p202 = pneg %p196
      %p203 = scmp.eq.s32.totalorder %s135, 1
      %p204 = por %p202, %p203
      %p205 = scmp.ne.s32.totalorder %s197, %s200
      %p206 = scmp.eq.s32.totalorder %s135, 0
      %p207 = por %p205, %p206
      %p208 = scmp.ne.s32.totalorder %s197, %s200
      %p209 = scmp.eq.s32.totalorder %s140, 1
      %p210 = por %p208, %p209
      %p211 = scmp.ne.s32.totalorder %s200, %s201
      %p212 = scmp.eq.s32.totalorder %s140, 0
      %p213 = por %p211, %p212
      %p214 = scmp.ne.s32.totalorder %s200, %s201
      %p215 = scmp.eq.s32.totalorder %s141, 1
      %p216 = por %p214, %p215
      %p218 = scmp.ne.s32.totalorder %s201, %s217
      %p219 = scmp.eq.s32.totalorder %s141, 0
      %p220 = por %p218, %p219
      %s221 = ssub.s32 %s135, %s142
      %p222 = scmp.eq.s32.totalorder %s221, 0
      %s224 = sadd.s32 %s223, 1
      %s225 = scalar_select %p222, %s223, %s224
      %p228 = pneg %p222
      %p229 = scmp.eq.s32.totalorder %s135, 1
      %p230 = por %p228, %p229
      %p231 = scmp.ne.s32.totalorder %s223, %s226
      %p232 = scmp.eq.s32.totalorder %s135, 0
      %p233 = por %p231, %p232
      %p234 = scmp.ne.s32.totalorder %s223, %s226
      %p235 = scmp.eq.s32.totalorder %s140, 1
      %p236 = por %p234, %p235
      %p237 = scmp.ne.s32.totalorder %s226, %s227
      %p238 = scmp.eq.s32.totalorder %s140, 0
      %p239 = por %p237, %p238
      %p240 = scmp.ne.s32.totalorder %s226, %s227
      %p241 = scmp.eq.s32.totalorder %s141, 1
      %p242 = por %p240, %p241
      %p244 = scmp.ne.s32.totalorder %s227, %s243
      %p245 = scmp.eq.s32.totalorder %s141, 0
      %p246 = por %p244, %p245
      %s247 = ssub.s32 %s135, %s142
      %p248 = scmp.eq.s32.totalorder %s247, 0
      %s250 = sadd.s32 %s249, 1
      %s251 = scalar_select %p248, %s249, %s250
      %p254 = pneg %p248
      %p255 = scmp.eq.s32.totalorder %s135, 1
      %p256 = por %p254, %p255
      %p257 = scmp.ne.s32.totalorder %s249, %s252
      %p258 = scmp.eq.s32.totalorder %s135, 0
      %p259 = por %p257, %p258
      %p260 = scmp.ne.s32.totalorder %s249, %s252
      %p261 = scmp.eq.s32.totalorder %s140, 1
      %p262 = por %p260, %p261
      %p263 = scmp.ne.s32.totalorder %s252, %s253
      %p264 = scmp.eq.s32.totalorder %s140, 0
      %p265 = por %p263, %p264
      %p266 = scmp.ne.s32.totalorder %s252, %s253
      %p267 = scmp.eq.s32.totalorder %s141, 1
      %p268 = por %p266, %p267
      %p270 = scmp.ne.s32.totalorder %s253, %s269
      %p271 = scmp.eq.s32.totalorder %s141, 0
      %p272 = por %p270, %p271
      %s274 = sadd.s32 %s273, 1
      %p277 = scmp.eq.s32.totalorder %s135, 1
      %p278 = scmp.ne.s32.totalorder %s273, %s275
      %p279 = scmp.eq.s32.totalorder %s135, 0
      %p280 = por %p278, %p279
      %p281 = scmp.ne.s32.totalorder %s273, %s275
      %p282 = scmp.eq.s32.totalorder %s140, 1
      %p283 = por %p281, %p282
      %p284 = scmp.ne.s32.totalorder %s275, %s276
      %p285 = scmp.eq.s32.totalorder %s140, 0
      %p286 = por %p284, %p285
      %p287 = scmp.ne.s32.totalorder %s275, %s276
      %p288 = scmp.eq.s32.totalorder %s141, 1
      %p289 = por %p287, %p288
      %p291 = scmp.ne.s32.totalorder %s276, %s290
      %p292 = scmp.eq.s32.totalorder %s141, 0
      %p293 = por %p291, %p292
      %s295 = sadd.s32 %s294, 1
      %p298 = scmp.eq.s32.totalorder %s135, 1
      %p299 = scmp.ne.s32.totalorder %s294, %s296
      %p300 = scmp.eq.s32.totalorder %s135, 0
      %p301 = por %p299, %p300
      %p302 = scmp.ne.s32.totalorder %s294, %s296
      %p303 = scmp.eq.s32.totalorder %s140, 1
      %p304 = por %p302, %p303
      %p305 = scmp.ne.s32.totalorder %s296, %s297
      %p306 = scmp.eq.s32.totalorder %s140, 0
      %p307 = por %p305, %p306
      %p308 = scmp.ne.s32.totalorder %s296, %s297
      %p309 = scmp.eq.s32.totalorder %s141, 1
      %p310 = por %p308, %p309
      %p312 = scmp.ne.s32.totalorder %s297, %s311
      %p313 = scmp.eq.s32.totalorder %s141, 0
      %p314 = por %p312, %p313
      %s316 = sadd.s32 %s315, 1
      %p319 = scmp.eq.s32.totalorder %s135, 1
      %p320 = scmp.ne.s32.totalorder %s315, %s317
      %p321 = scmp.eq.s32.totalorder %s135, 0
      %p322 = por %p320, %p321
      %p323 = scmp.ne.s32.totalorder %s315, %s317
      %p324 = scmp.eq.s32.totalorder %s140, 1
      %p325 = por %p323, %p324
      %p326 = scmp.ne.s32.totalorder %s317, %s318
      %p327 = scmp.eq.s32.totalorder %s140, 0
      %p328 = por %p326, %p327
      %p329 = scmp.ne.s32.totalorder %s317, %s318
      %p330 = scmp.eq.s32.totalorder %s141, 1
      %p331 = por %p329, %p330
      %p333 = scmp.ne.s32.totalorder %s318, %s332
      %p334 = scmp.eq.s32.totalorder %s141, 0
      %p335 = por %p333, %p334
      %s337 = sadd.s32 %s336, 1
      %p340 = scmp.eq.s32.totalorder %s135, 1
      %p341 = scmp.ne.s32.totalorder %s336, %s338
      %p342 = scmp.eq.s32.totalorder %s135, 0
      %p343 = por %p341, %p342
      %p344 = scmp.ne.s32.totalorder %s336, %s338
      %p345 = scmp.eq.s32.totalorder %s140, 1
      %p346 = por %p344, %p345
      %p347 = scmp.ne.s32.totalorder %s338, %s339
      %p348 = scmp.eq.s32.totalorder %s140, 0
      %p349 = por %p347, %p348
      %p350 = scmp.ne.s32.totalorder %s338, %s339
      %p351 = scmp.eq.s32.totalorder %s141, 1
      %p352 = por %p350, %p351
      %p354 = scmp.ne.s32.totalorder %s339, %s353
      %p355 = scmp.eq.s32.totalorder %s141, 0
      %p356 = por %p354, %p355
      %s358 = sadd.s32 %s357, 1
      %p361 = scmp.eq.s32.totalorder %s135, 1
      %p362 = scmp.ne.s32.totalorder %s357, %s359
      %p363 = scmp.eq.s32.totalorder %s135, 0
      %p364 = por %p362, %p363
      %p365 = scmp.ne.s32.totalorder %s357, %s359
      %p366 = scmp.eq.s32.totalorder %s140, 1
      %p367 = por %p365, %p366
      %p368 = scmp.ne.s32.totalorder %s359, %s360
      %p369 = scmp.eq.s32.totalorder %s140, 0
      %p370 = por %p368, %p369
      %p371 = scmp.ne.s32.totalorder %s359, %s360
      %p372 = scmp.eq.s32.totalorder %s141, 1
      %p373 = por %p371, %p372
      %p375 = scmp.ne.s32.totalorder %s360, %s374
      %p376 = scmp.eq.s32.totalorder %s141, 0
      %p377 = por %p375, %p376
      %s379 = sadd.s32 %s378, 1
      %p382 = scmp.eq.s32.totalorder %s135, 1
      %p383 = scmp.ne.s32.totalorder %s378, %s380
      %p384 = scmp.eq.s32.totalorder %s135, 0
      %p385 = por %p383, %p384
      %p386 = scmp.ne.s32.totalorder %s378, %s380
      %p387 = scmp.eq.s32.totalorder %s140, 1
      %p388 = por %p386, %p387
      %p389 = scmp.ne.s32.totalorder %s380, %s381
      %p390 = scmp.eq.s32.totalorder %s140, 0
      %p391 = por %p389, %p390
      %p392 = scmp.ne.s32.totalorder %s380, %s381
      %p393 = scmp.eq.s32.totalorder %s141, 1
      %p394 = por %p392, %p393
      %p396 = scmp.ne.s32.totalorder %s381, %s395
      %p397 = scmp.eq.s32.totalorder %s141, 0
      %p398 = por %p396, %p397
      %s400 = sadd.s32 %s399, 1
      %p403 = scmp.eq.s32.totalorder %s135, 1
      %p404 = scmp.ne.s32.totalorder %s399, %s401
      %p405 = scmp.eq.s32.totalorder %s135, 0
      %p406 = por %p404, %p405
      %p407 = scmp.ne.s32.totalorder %s399, %s401
      %p408 = scmp.eq.s32.totalorder %s140, 1
      %p409 = por %p407, %p408
      %p410 = scmp.ne.s32.totalorder %s401, %s402
      %p411 = scmp.eq.s32.totalorder %s140, 0
      %p412 = por %p410, %p411
      %p413 = scmp.ne.s32.totalorder %s401, %s402
      %p414 = scmp.eq.s32.totalorder %s141, 1
      %p415 = por %p413, %p414
      %p417 = scmp.ne.s32.totalorder %s402, %s416
      %p418 = scmp.eq.s32.totalorder %s141, 0
      %p419 = por %p417, %p418
      %s421 = sadd.s32 %s420, 1
      %p424 = scmp.eq.s32.totalorder %s135, 1
      %p425 = scmp.ne.s32.totalorder %s420, %s422
      %p426 = scmp.eq.s32.totalorder %s135, 0
      %p427 = por %p425, %p426
      %p428 = scmp.ne.s32.totalorder %s420, %s422
      %p429 = scmp.eq.s32.totalorder %s140, 1
      %p430 = por %p428, %p429
      %p431 = scmp.ne.s32.totalorder %s422, %s423
      %p432 = scmp.eq.s32.totalorder %s140, 0
      %p433 = por %p431, %p432
      %p434 = scmp.ne.s32.totalorder %s422, %s423
      %p435 = scmp.eq.s32.totalorder %s141, 1
      %p436 = por %p434, %p435
      %p438 = scmp.ne.s32.totalorder %s423, %s437
      %p439 = scmp.eq.s32.totalorder %s141, 0
      %p440 = por %p438, %p439
      %s442 = sadd.s32 %s441, 1
      %p445 = scmp.eq.s32.totalorder %s135, 1
      %p446 = scmp.ne.s32.totalorder %s441, %s443
      %p447 = scmp.eq.s32.totalorder %s135, 0
      %p448 = por %p446, %p447
      %p449 = scmp.ne.s32.totalorder %s441, %s443
      %p450 = scmp.eq.s32.totalorder %s140, 1
      %p451 = por %p449, %p450
      %p452 = scmp.ne.s32.totalorder %s443, %s444
      %p453 = scmp.eq.s32.totalorder %s140, 0
      %p454 = por %p452, %p453
      %p455 = scmp.ne.s32.totalorder %s443, %s444
      %p456 = scmp.eq.s32.totalorder %s141, 1
      %p457 = por %p455, %p456
      %p459 = scmp.ne.s32.totalorder %s444, %s458
      %p460 = scmp.eq.s32.totalorder %s141, 0
      %p461 = por %p459, %p460
      %s463 = sadd.s32 %s462, 1
      %p466 = scmp.eq.s32.totalorder %s135, 1
      %p467 = scmp.ne.s32.totalorder %s462, %s464
      %p468 = scmp.eq.s32.totalorder %s135, 0
      %p469 = por %p467, %p468
      %p470 = scmp.ne.s32.totalorder %s462, %s464
      %p471 = scmp.eq.s32.totalorder %s140, 1
      %p472 = por %p470, %p471
      %p473 = scmp.ne.s32.totalorder %s464, %s465
      %p474 = scmp.eq.s32.totalorder %s140, 0
      %p475 = por %p473, %p474
      %p476 = scmp.ne.s32.totalorder %s464, %s465
      %p477 = scmp.eq.s32.totalorder %s141, 1
      %p478 = por %p476, %p477
      %p480 = scmp.ne.s32.totalorder %s465, %s479
      %p481 = scmp.eq.s32.totalorder %s141, 0
      %p482 = por %p480, %p481
      %s484 = sadd.s32 %s483, 1
      %p487 = scmp.eq.s32.totalorder %s135, 1
      %p488 = scmp.ne.s32.totalorder %s483, %s485
      %p489 = scmp.eq.s32.totalorder %s135, 0
      %p490 = por %p488, %p489
      %p491 = scmp.ne.s32.totalorder %s483, %s485
      %p492 = scmp.eq.s32.totalorder %s140, 1
      %p493 = por %p491, %p492
      %p494 = scmp.ne.s32.totalorder %s485, %s486
      %p495 = scmp.eq.s32.totalorder %s140, 0
      %p496 = por %p494, %p495
      %p497 = scmp.ne.s32.totalorder %s485, %s486
      %p498 = scmp.eq.s32.totalorder %s141, 1
      %p499 = por %p497, %p498
      %p501 = scmp.ne.s32.totalorder %s486, %s500
      %p502 = scmp.eq.s32.totalorder %s141, 0
      %p503 = por %p501, %p502
      %s505 = sadd.s32 %s504, 1
      %p508 = scmp.eq.s32.totalorder %s135, 1
      %p509 = scmp.ne.s32.totalorder %s504, %s506
      %p510 = scmp.eq.s32.totalorder %s135, 0
      %p511 = por %p509, %p510
      %p512 = scmp.ne.s32.totalorder %s504, %s506
      %p513 = scmp.eq.s32.totalorder %s140, 1
      %p514 = por %p512, %p513
      %p515 = scmp.ne.s32.totalorder %s506, %s507
      %p516 = scmp.eq.s32.totalorder %s140, 0
      %p517 = por %p515, %p516
      %p518 = scmp.ne.s32.totalorder %s506, %s507
      %p519 = scmp.eq.s32.totalorder %s141, 1
      %p520 = por %p518, %p519
      %p522 = scmp.ne.s32.totalorder %s507, %s521
      %p523 = scmp.eq.s32.totalorder %s141, 0
      %p524 = por %p522, %p523
      %s526 = sadd.s32 %s525, 1
      %p529 = scmp.eq.s32.totalorder %s135, 1
      %p530 = scmp.ne.s32.totalorder %s525, %s527
      %p531 = scmp.eq.s32.totalorder %s135, 0
      %p532 = por %p530, %p531
      %p533 = scmp.ne.s32.totalorder %s525, %s527
      %p534 = scmp.eq.s32.totalorder %s140, 1
      %p535 = por %p533, %p534
      %p536 = scmp.ne.s32.totalorder %s527, %s528
      %p537 = scmp.eq.s32.totalorder %s140, 0
      %p538 = por %p536, %p537
      %p539 = scmp.ne.s32.totalorder %s527, %s528
      %p540 = scmp.eq.s32.totalorder %s141, 1
      %p541 = por %p539, %p540
      %p543 = scmp.ne.s32.totalorder %s528, %s542
      %p544 = scmp.eq.s32.totalorder %s141, 0
      %p545 = por %p543, %p544
      %s547 = sadd.s32 %s546, 1
      %p550 = scmp.eq.s32.totalorder %s135, 1
      %p551 = scmp.ne.s32.totalorder %s546, %s548
      %p552 = scmp.eq.s32.totalorder %s135, 0
      %p553 = por %p551, %p552
      %p554 = scmp.ne.s32.totalorder %s546, %s548
      %p555 = scmp.eq.s32.totalorder %s140, 1
      %p556 = por %p554, %p555
      %p557 = scmp.ne.s32.totalorder %s548, %s549
      %p558 = scmp.eq.s32.totalorder %s140, 0
      %p559 = por %p557, %p558
      %p560 = scmp.ne.s32.totalorder %s548, %s549
      %p561 = scmp.eq.s32.totalorder %s141, 1
      %p562 = por %p560, %p561
      %p564 = scmp.ne.s32.totalorder %s549, %s563
      %p565 = scmp.eq.s32.totalorder %s141, 0
      %p566 = por %p564, %p565
      %s568 = sadd.s32 %s567, 1
      %p571 = scmp.eq.s32.totalorder %s135, 1
      %p572 = scmp.ne.s32.totalorder %s567, %s569
      %p573 = scmp.eq.s32.totalorder %s135, 0
      %p574 = por %p572, %p573
      %p575 = scmp.ne.s32.totalorder %s567, %s569
      %p576 = scmp.eq.s32.totalorder %s140, 1
      %p577 = por %p575, %p576
      %p578 = scmp.ne.s32.totalorder %s569, %s570
      %p579 = scmp.eq.s32.totalorder %s140, 0
      %p580 = por %p578, %p579
      %p581 = scmp.ne.s32.totalorder %s569, %s570
      %p582 = scmp.eq.s32.totalorder %s141, 1
      %p583 = por %p581, %p582
      %p585 = scmp.ne.s32.totalorder %s570, %s584
      %p586 = scmp.eq.s32.totalorder %s141, 0
      %p587 = por %p585, %p586
      %s589 = sadd.s32 %s588, 1
      %p592 = scmp.eq.s32.totalorder %s135, 1
      %p593 = scmp.ne.s32.totalorder %s588, %s590
      %p594 = scmp.eq.s32.totalorder %s135, 0
      %p595 = por %p593, %p594
      %p596 = scmp.ne.s32.totalorder %s588, %s590
      %p597 = scmp.eq.s32.totalorder %s140, 1
      %p598 = por %p596, %p597
      %p599 = scmp.ne.s32.totalorder %s590, %s591
      %p600 = scmp.eq.s32.totalorder %s140, 0
      %p601 = por %p599, %p600
      %p602 = scmp.ne.s32.totalorder %s590, %s591
      %p603 = scmp.eq.s32.totalorder %s141, 1
      %p604 = por %p602, %p603
      %p606 = scmp.ne.s32.totalorder %s591, %s605
      %p607 = scmp.eq.s32.totalorder %s141, 0
      %p608 = por %p606, %p607
      %s610 = sadd.s32 %s609, 1
      %p613 = scmp.eq.s32.totalorder %s135, 1
      %p614 = scmp.ne.s32.totalorder %s609, %s611
      %p615 = scmp.eq.s32.totalorder %s135, 0
      %p616 = por %p614, %p615
      %p617 = scmp.ne.s32.totalorder %s609, %s611
      %p618 = scmp.eq.s32.totalorder %s140, 1
      %p619 = por %p617, %p618
      %p620 = scmp.ne.s32.totalorder %s611, %s612
      %p621 = scmp.eq.s32.totalorder %s140, 0
      %p622 = por %p620, %p621
      %p623 = scmp.ne.s32.totalorder %s611, %s612
      %p624 = scmp.eq.s32.totalorder %s141, 1
      %p625 = por %p623, %p624
      %p627 = scmp.ne.s32.totalorder %s612, %s626
      %p628 = scmp.eq.s32.totalorder %s141, 0
      %p629 = por %p627, %p628
      %s631 = sadd.s32 %s630, 1
      %p634 = scmp.eq.s32.totalorder %s135, 1
      %p635 = scmp.ne.s32.totalorder %s630, %s632
      %p636 = scmp.eq.s32.totalorder %s135, 0
      %p637 = por %p635, %p636
      %p638 = scmp.ne.s32.totalorder %s630, %s632
      %p639 = scmp.eq.s32.totalorder %s140, 1
      %p640 = por %p638, %p639
      %p641 = scmp.ne.s32.totalorder %s632, %s633
      %p642 = scmp.eq.s32.totalorder %s140, 0
      %p643 = por %p641, %p642
      %p644 = scmp.ne.s32.totalorder %s632, %s633
      %p645 = scmp.eq.s32.totalorder %s141, 1
      %p646 = por %p644, %p645
      %p648 = scmp.ne.s32.totalorder %s633, %s647
      %p649 = scmp.eq.s32.totalorder %s141, 0
      %p650 = por %p648, %p649
      %s652 = sadd.s32 %s651, 1
      %p655 = scmp.eq.s32.totalorder %s135, 1
      %p656 = scmp.ne.s32.totalorder %s651, %s653
      %p657 = scmp.eq.s32.totalorder %s135, 0
      %p658 = por %p656, %p657
      %p659 = scmp.ne.s32.totalorder %s651, %s653
      %p660 = scmp.eq.s32.totalorder %s140, 1
      %p661 = por %p659, %p660
      %p662 = scmp.ne.s32.totalorder %s653, %s654
      %p663 = scmp.eq.s32.totalorder %s140, 0
      %p664 = por %p662, %p663
      %p665 = scmp.ne.s32.totalorder %s653, %s654
      %p666 = scmp.eq.s32.totalorder %s141, 1
      %p667 = por %p665, %p666
      %p669 = scmp.ne.s32.totalorder %s654, %s668
      %p670 = scmp.eq.s32.totalorder %s141, 0
      %p671 = por %p669, %p670
      %s673 = sadd.s32 %s672, 1
      %p676 = scmp.eq.s32.totalorder %s135, 1
      %p677 = scmp.ne.s32.totalorder %s672, %s674
      %p678 = scmp.eq.s32.totalorder %s135, 0
      %p679 = por %p677, %p678
      %p680 = scmp.ne.s32.totalorder %s672, %s674
      %p681 = scmp.eq.s32.totalorder %s140, 1
      %p682 = por %p680, %p681
      %p683 = scmp.ne.s32.totalorder %s674, %s675
      %p684 = scmp.eq.s32.totalorder %s140, 0
      %p685 = por %p683, %p684
      %p686 = scmp.ne.s32.totalorder %s674, %s675
      %p687 = scmp.eq.s32.totalorder %s141, 1
      %p688 = por %p686, %p687
      %p690 = scmp.ne.s32.totalorder %s675, %s689
      %p691 = scmp.eq.s32.totalorder %s141, 0
      %p692 = por %p690, %p691
      %s694 = sadd.s32 %s693, 1
      %p697 = scmp.eq.s32.totalorder %s135, 1
      %p698 = scmp.ne.s32.totalorder %s693, %s695
      %p699 = scmp.eq.s32.totalorder %s135, 0
      %p700 = por %p698, %p699
      %p701 = scmp.ne.s32.totalorder %s693, %s695
      %p702 = scmp.eq.s32.totalorder %s140, 1
      %p703 = por %p701, %p702
      %p704 = scmp.ne.s32.totalorder %s695, %s696
      %p705 = scmp.eq.s32.totalorder %s140, 0
      %p706 = por %p704, %p705
      %p707 = scmp.ne.s32.totalorder %s695, %s696
      %p708 = scmp.eq.s32.totalorder %s141, 1
      %p709 = por %p707, %p708
      %p711 = scmp.ne.s32.totalorder %s696, %s710
      %p712 = scmp.eq.s32.totalorder %s141, 0
      %p713 = por %p711, %p712
      %s715 = sadd.s32 %s714, 1
      %p718 = scmp.eq.s32.totalorder %s135, 1
      %p719 = scmp.ne.s32.totalorder %s714, %s716
      %p720 = scmp.eq.s32.totalorder %s135, 0
      %p721 = por %p719, %p720
      %p722 = scmp.ne.s32.totalorder %s714, %s716
      %p723 = scmp.eq.s32.totalorder %s140, 1
      %p724 = por %p722, %p723
      %p725 = scmp.ne.s32.totalorder %s716, %s717
      %p726 = scmp.eq.s32.totalorder %s140, 0
      %p727 = por %p725, %p726
      %p728 = scmp.ne.s32.totalorder %s716, %s717
      %p729 = scmp.eq.s32.totalorder %s141, 1
      %p730 = por %p728, %p729
      %p732 = scmp.ne.s32.totalorder %s717, %s731
      %p733 = scmp.eq.s32.totalorder %s141, 0
      %p734 = por %p732, %p733
      %s736 = sadd.s32 %s735, 1
      %p739 = scmp.eq.s32.totalorder %s135, 1
      %p740 = scmp.ne.s32.totalorder %s735, %s737
      %p741 = scmp.eq.s32.totalorder %s135, 0
      %p742 = por %p740, %p741
      %p743 = scmp.ne.s32.totalorder %s735, %s737
      %p744 = scmp.eq.s32.totalorder %s140, 1
      %p745 = por %p743, %p744
      %p746 = scmp.ne.s32.totalorder %s737, %s738
      %p747 = scmp.eq.s32.totalorder %s140, 0
      %p748 = por %p746, %p747
      %p749 = scmp.ne.s32.totalorder %s737, %s738
      %p750 = scmp.eq.s32.totalorder %s141, 1
      %p751 = por %p749, %p750
      %p753 = scmp.ne.s32.totalorder %s738, %s752
      %p754 = scmp.eq.s32.totalorder %s141, 0
      %p755 = por %p753, %p754
      %s757 = sadd.s32 %s756, 1
      %p760 = scmp.eq.s32.totalorder %s135, 1
      %p761 = scmp.ne.s32.totalorder %s756, %s758
      %p762 = scmp.eq.s32.totalorder %s135, 0
      %p763 = por %p761, %p762
      %p764 = scmp.ne.s32.totalorder %s756, %s758
      %p765 = scmp.eq.s32.totalorder %s140, 1
      %p766 = por %p764, %p765
      %p767 = scmp.ne.s32.totalorder %s758, %s759
      %p768 = scmp.eq.s32.totalorder %s140, 0
      %p769 = por %p767, %p768
      %p770 = scmp.ne.s32.totalorder %s758, %s759
      %p771 = scmp.eq.s32.totalorder %s141, 1
      %p772 = por %p770, %p771
      %p774 = scmp.ne.s32.totalorder %s759, %s773
      %p775 = scmp.eq.s32.totalorder %s141, 0
      %p776 = por %p774, %p775
      %s778 = sadd.s32 %s777, 1
      %p781 = scmp.eq.s32.totalorder %s135, 1
      %p782 = scmp.ne.s32.totalorder %s777, %s779
      %p783 = scmp.eq.s32.totalorder %s135, 0
      %p784 = por %p782, %p783
      %p785 = scmp.ne.s32.totalorder %s777, %s779
      %p786 = scmp.eq.s32.totalorder %s140, 1
      %p787 = por %p785, %p786
      %p788 = scmp.ne.s32.totalorder %s779, %s780
      %p789 = scmp.eq.s32.totalorder %s140, 0
      %p790 = por %p788, %p789
      %p791 = scmp.ne.s32.totalorder %s779, %s780
      %p792 = scmp.eq.s32.totalorder %s141, 1
      %p793 = por %p791, %p792
      %p795 = scmp.ne.s32.totalorder %s780, %s794
      %p796 = scmp.eq.s32.totalorder %s141, 0
      %p797 = por %p795, %p796
      %s799 = sadd.s32 %s798, 1
      %p802 = scmp.eq.s32.totalorder %s135, 1
      %p803 = scmp.ne.s32.totalorder %s798, %s800
      %p804 = scmp.eq.s32.totalorder %s135, 0
      %p805 = por %p803, %p804
      %p806 = scmp.ne.s32.totalorder %s798, %s800
      %p807 = scmp.eq.s32.totalorder %s140, 1
      %p808 = por %p806, %p807
      %p809 = scmp.ne.s32.totalorder %s800, %s801
      %p810 = scmp.eq.s32.totalorder %s140, 0
      %p811 = por %p809, %p810
      %p812 = scmp.ne.s32.totalorder %s800, %s801
      %p813 = scmp.eq.s32.totalorder %s141, 1
      %p814 = por %p812, %p813
      %p816 = scmp.ne.s32.totalorder %s801, %s815
      %p817 = scmp.eq.s32.totalorder %s141, 0
      %p818 = por %p816, %p817
      %s820 = sadd.s32 %s819, 1
      %p823 = scmp.eq.s32.totalorder %s135, 1
      %p824 = scmp.ne.s32.totalorder %s819, %s821
      %p825 = scmp.eq.s32.totalorder %s135, 0
      %p826 = por %p824, %p825
      %p827 = scmp.ne.s32.totalorder %s819, %s821
      %p828 = scmp.eq.s32.totalorder %s140, 1
      %p829 = por %p827, %p828
      %p830 = scmp.ne.s32.totalorder %s821, %s822
      %p831 = scmp.eq.s32.totalorder %s140, 0
      %p832 = por %p830, %p831
      %p833 = scmp.ne.s32.totalorder %s821, %s822
      %p834 = scmp.eq.s32.totalorder %s141, 1
      %p835 = por %p833, %p834
      %p837 = scmp.ne.s32.totalorder %s822, %s836
      %p838 = scmp.eq.s32.totalorder %s141, 0
      %p839 = por %p837, %p838
      %s841 = sadd.s32 %s840, 1
      %p844 = scmp.eq.s32.totalorder %s135, 1
      %p845 = scmp.ne.s32.totalorder %s840, %s842
      %p846 = scmp.eq.s32.totalorder %s135, 0
      %p847 = por %p845, %p846
      %p848 = scmp.ne.s32.totalorder %s840, %s842
      %p849 = scmp.eq.s32.totalorder %s140, 1
      %p850 = por %p848, %p849
      %p851 = scmp.ne.s32.totalorder %s842, %s843
      %p852 = scmp.eq.s32.totalorder %s140, 0
      %p853 = por %p851, %p852
      %p854 = scmp.ne.s32.totalorder %s842, %s843
      %p855 = scmp.eq.s32.totalorder %s141, 1
      %p856 = por %p854, %p855
      %p858 = scmp.ne.s32.totalorder %s843, %s857
      %p859 = scmp.eq.s32.totalorder %s141, 0
      %p860 = por %p858, %p859
      %s862 = sadd.s32 %s861, 1
      %p865 = scmp.eq.s32.totalorder %s135, 1
      %p866 = scmp.ne.s32.totalorder %s861, %s863
      %p867 = scmp.eq.s32.totalorder %s135, 0
      %p868 = por %p866, %p867
      %p869 = scmp.ne.s32.totalorder %s861, %s863
      %p870 = scmp.eq.s32.totalorder %s140, 1
      %p871 = por %p869, %p870
      %p872 = scmp.ne.s32.totalorder %s863, %s864
      %p873 = scmp.eq.s32.totalorder %s140, 0
      %p874 = por %p872, %p873
      %p875 = scmp.ne.s32.totalorder %s863, %s864
      %p876 = scmp.eq.s32.totalorder %s141, 1
      %p877 = por %p875, %p876
      %p879 = scmp.ne.s32.totalorder %s864, %s878
      %p880 = scmp.eq.s32.totalorder %s141, 0
      %p881 = por %p879, %p880
      %s883 = sadd.s32 %s882, 1
      %p886 = scmp.eq.s32.totalorder %s135, 1
      %p887 = scmp.ne.s32.totalorder %s882, %s884
      %p888 = scmp.eq.s32.totalorder %s135, 0
      %p889 = por %p887, %p888
      %p890 = scmp.ne.s32.totalorder %s882, %s884
      %p891 = scmp.eq.s32.totalorder %s140, 1
      %p892 = por %p890, %p891
      %p893 = scmp.ne.s32.totalorder %s884, %s885
      %p894 = scmp.eq.s32.totalorder %s140, 0
      %p895 = por %p893, %p894
      %p896 = scmp.ne.s32.totalorder %s884, %s885
      %p897 = scmp.eq.s32.totalorder %s141, 1
      %p898 = por %p896, %p897
      %p900 = scmp.ne.s32.totalorder %s885, %s899
      %p901 = scmp.eq.s32.totalorder %s141, 0
      %p902 = por %p900, %p901
      %s904 = sadd.s32 %s903, 1
      %p907 = scmp.eq.s32.totalorder %s135, 1
      %p908 = scmp.ne.s32.totalorder %s903, %s905
      %p909 = scmp.eq.s32.totalorder %s135, 0
      %p910 = por %p908, %p909
      %p911 = scmp.ne.s32.totalorder %s903, %s905
      %p912 = scmp.eq.s32.totalorder %s140, 1
      %p913 = por %p911, %p912
      %p914 = scmp.ne.s32.totalorder %s905, %s906
      %p915 = scmp.eq.s32.totalorder %s140, 0
      %p916 = por %p914, %p915
      %p917 = scmp.ne.s32.totalorder %s905, %s906
      %p918 = scmp.eq.s32.totalorder %s141, 1
      %p919 = por %p917, %p918
      %p921 = scmp.ne.s32.totalorder %s906, %s920
      %p922 = scmp.eq.s32.totalorder %s141, 0
      %p923 = por %p921, %p922
      %s925 = sadd.s32 %s924, 1
      %p928 = scmp.eq.s32.totalorder %s135, 1
      %p929 = scmp.ne.s32.totalorder %s924, %s926
      %p930 = scmp.eq.s32.totalorder %s135, 0
      %p931 = por %p929, %p930
      %p932 = scmp.ne.s32.totalorder %s924, %s926
      %p933 = scmp.eq.s32.totalorder %s140, 1
      %p934 = por %p932, %p933
      %p935 = scmp.ne.s32.totalorder %s926, %s927
      %p936 = scmp.eq.s32.totalorder %s140, 0
      %p937 = por %p935, %p936
      %p938 = scmp.ne.s32.totalorder %s926, %s927
      %p939 = scmp.eq.s32.totalorder %s141, 1
      %p940 = por %p938, %p939
      %p942 = scmp.ne.s32.totalorder %s927, %s941
      %p943 = scmp.eq.s32.totalorder %s141, 0
      %p944 = por %p942, %p943
      %s946 = sadd.s32 %s945, 1
      %p949 = scmp.eq.s32.totalorder %s135, 1
      %p950 = scmp.ne.s32.totalorder %s945, %s947
      %p951 = scmp.eq.s32.totalorder %s135, 0
      %p952 = por %p950, %p951
      %p953 = scmp.ne.s32.totalorder %s945, %s947
      %p954 = scmp.eq.s32.totalorder %s140, 1
      %p955 = por %p953, %p954
      %p956 = scmp.ne.s32.totalorder %s947, %s948
      %p957 = scmp.eq.s32.totalorder %s140, 0
      %p958 = por %p956, %p957
      %p959 = scmp.ne.s32.totalorder %s947, %s948
      %p960 = scmp.eq.s32.totalorder %s141, 1
      %p961 = por %p959, %p960
      %p963 = scmp.ne.s32.totalorder %s948, %s962
      %p964 = scmp.eq.s32.totalorder %s141, 0
      %p965 = por %p963, %p964
      %s967 = sadd.s32 %s966, 1
      %p970 = scmp.eq.s32.totalorder %s135, 1
      %p971 = scmp.ne.s32.totalorder %s966, %s968
      %p972 = scmp.eq.s32.totalorder %s135, 0
      %p973 = por %p971, %p972
      %p974 = scmp.ne.s32.totalorder %s966, %s968
      %p975 = scmp.eq.s32.totalorder %s140, 1
      %p976 = por %p974, %p975
      %p977 = scmp.ne.s32.totalorder %s968, %s969
      %p978 = scmp.eq.s32.totalorder %s140, 0
      %p979 = por %p977, %p978
      %p980 = scmp.ne.s32.totalorder %s968, %s969
      %p981 = scmp.eq.s32.totalorder %s141, 1
      %p982 = por %p980, %p981
      %p984 = scmp.ne.s32.totalorder %s969, %s983
      %p985 = scmp.eq.s32.totalorder %s141, 0
      %p986 = por %p984, %p985
      %s988 = sadd.s32 %s987, 1
      %p991 = scmp.eq.s32.totalorder %s135, 1
      %p992 = scmp.ne.s32.totalorder %s987, %s989
      %p993 = scmp.eq.s32.totalorder %s135, 0
      %p994 = por %p992, %p993
      %p995 = scmp.ne.s32.totalorder %s987, %s989
      %p996 = scmp.eq.s32.totalorder %s140, 1
      %p997 = por %p995, %p996
      %p998 = scmp.ne.s32.totalorder %s989, %s990
      %p999 = scmp.eq.s32.totalorder %s140, 0
      %p1000 = por %p998, %p999
      %p1001 = scmp.ne.s32.totalorder %s989, %s990
      %p1002 = scmp.eq.s32.totalorder %s141, 1
      %p1003 = por %p1001, %p1002
      %p1005 = scmp.ne.s32.totalorder %s990, %s1004
      %p1006 = scmp.eq.s32.totalorder %s141, 0
      %p1007 = por %p1005, %p1006
      %s1009 = sadd.s32 %s1008, 1
      %p1012 = scmp.eq.s32.totalorder %s135, 1
      %p1013 = scmp.ne.s32.totalorder %s1008, %s1010
      %p1014 = scmp.eq.s32.totalorder %s135, 0
      %p1015 = por %p1013, %p1014
      %p1016 = scmp.ne.s32.totalorder %s1008, %s1010
      %p1017 = scmp.eq.s32.totalorder %s140, 1
      %p1018 = por %p1016, %p1017
      %p1019 = scmp.ne.s32.totalorder %s1010, %s1011
      %p1020 = scmp.eq.s32.totalorder %s140, 0
      %p1021 = por %p1019, %p1020
      %p1022 = scmp.ne.s32.totalorder %s1010, %s1011
      %p1023 = scmp.eq.s32.totalorder %s141, 1
      %p1024 = por %p1022, %p1023
      %p1026 = scmp.ne.s32.totalorder %s1011, %s1025
      %p1027 = scmp.eq.s32.totalorder %s141, 0
      %p1028 = por %p1026, %p1027
      %s1030 = sadd.s32 %s1029, 1
      %p1033 = scmp.eq.s32.totalorder %s135, 1
      %p1034 = scmp.ne.s32.totalorder %s1029, %s1031
      %p1035 = scmp.eq.s32.totalorder %s135, 0
      %p1036 = por %p1034, %p1035
      %p1037 = scmp.ne.s32.totalorder %s1029, %s1031
      %p1038 = scmp.eq.s32.totalorder %s140, 1
      %p1039 = por %p1037, %p1038
      %p1040 = scmp.ne.s32.totalorder %s1031, %s1032
      %p1041 = scmp.eq.s32.totalorder %s140, 0
      %p1042 = por %p1040, %p1041
      %p1043 = scmp.ne.s32.totalorder %s1031, %s1032
      %p1044 = scmp.eq.s32.totalorder %s141, 1
      %p1045 = por %p1043, %p1044
      %p1047 = scmp.ne.s32.totalorder %s1032, %s1046
      %p1048 = scmp.eq.s32.totalorder %s141, 0
      %p1049 = por %p1047, %p1048
      %s1051 = sadd.s32 %s1050, 1
      %p1054 = scmp.eq.s32.totalorder %s135, 1
      %p1055 = scmp.ne.s32.totalorder %s1050, %s1052
      %p1056 = scmp.eq.s32.totalorder %s135, 0
      %p1057 = por %p1055, %p1056
      %p1058 = scmp.ne.s32.totalorder %s1050, %s1052
      %p1059 = scmp.eq.s32.totalorder %s140, 1
      %p1060 = por %p1058, %p1059
      %p1061 = scmp.ne.s32.totalorder %s1052, %s1053
      %p1062 = scmp.eq.s32.totalorder %s140, 0
      %p1063 = por %p1061, %p1062
      %p1064 = scmp.ne.s32.totalorder %s1052, %s1053
      %p1065 = scmp.eq.s32.totalorder %s141, 1
      %p1066 = por %p1064, %p1065
      %p1068 = scmp.ne.s32.totalorder %s1053, %s1067
      %p1069 = scmp.eq.s32.totalorder %s141, 0
      %p1070 = por %p1068, %p1069
      %s1072 = sadd.s32 %s1071, 1
      %p1075 = scmp.eq.s32.totalorder %s135, 1
      %p1076 = scmp.ne.s32.totalorder %s1071, %s1073
      %p1077 = scmp.eq.s32.totalorder %s135, 0
      %p1078 = por %p1076, %p1077
      %p1079 = scmp.ne.s32.totalorder %s1071, %s1073
      %p1080 = scmp.eq.s32.totalorder %s140, 1
      %p1081 = por %p1079, %p1080
      %p1082 = scmp.ne.s32.totalorder %s1073, %s1074
      %p1083 = scmp.eq.s32.totalorder %s140, 0
      %p1084 = por %p1082, %p1083
      %p1085 = scmp.ne.s32.totalorder %s1073, %s1074
      %p1086 = scmp.eq.s32.totalorder %s141, 1
      %p1087 = por %p1085, %p1086
      %p1089 = scmp.ne.s32.totalorder %s1074, %s1088
      %p1090 = scmp.eq.s32.totalorder %s141, 0
      %p1091 = por %p1089, %p1090
      %s1093 = sadd.s32 %s1092, 1
      %p1096 = scmp.eq.s32.totalorder %s135, 1
      %p1097 = scmp.ne.s32.totalorder %s1092, %s1094
      %p1098 = scmp.eq.s32.totalorder %s135, 0
      %p1099 = por %p1097, %p1098
      %p1100 = scmp.ne.s32.totalorder %s1092, %s1094
      %p1101 = scmp.eq.s32.totalorder %s140, 1
      %p1102 = por %p1100, %p1101
      %p1103 = scmp.ne.s32.totalorder %s1094, %s1095
      %p1104 = scmp.eq.s32.totalorder %s140, 0
      %p1105 = por %p1103, %p1104
      %p1106 = scmp.ne.s32.totalorder %s1094, %s1095
      %p1107 = scmp.eq.s32.totalorder %s141, 1
      %p1108 = por %p1106, %p1107
      %p1110 = scmp.ne.s32.totalorder %s1095, %s1109
      %p1111 = scmp.eq.s32.totalorder %s141, 0
      %p1112 = por %p1110, %p1111
      %s1114 = sadd.s32 %s1113, 1
      %p1117 = scmp.eq.s32.totalorder %s135, 1
      %p1118 = scmp.ne.s32.totalorder %s1113, %s1115
      %p1119 = scmp.eq.s32.totalorder %s135, 0
      %p1120 = por %p1118, %p1119
      %p1121 = scmp.ne.s32.totalorder %s1113, %s1115
      %p1122 = scmp.eq.s32.totalorder %s140, 1
      %p1123 = por %p1121, %p1122
      %p1124 = scmp.ne.s32.totalorder %s1115, %s1116
      %p1125 = scmp.eq.s32.totalorder %s140, 0
      %p1126 = por %p1124, %p1125
      %p1127 = scmp.ne.s32.totalorder %s1115, %s1116
      %p1128 = scmp.eq.s32.totalorder %s141, 1
      %p1129 = por %p1127, %p1128
      %p1131 = scmp.ne.s32.totalorder %s1116, %s1130
      %p1132 = scmp.eq.s32.totalorder %s141, 0
      %p1133 = por %p1131, %p1132
      %s1135 = sadd.s32 %s1134, 1
      %p1138 = scmp.eq.s32.totalorder %s135, 1
      %p1139 = scmp.ne.s32.totalorder %s1134, %s1136
      %p1140 = scmp.eq.s32.totalorder %s135, 0
      %p1141 = por %p1139, %p1140
      %p1142 = scmp.ne.s32.totalorder %s1134, %s1136
      %p1143 = scmp.eq.s32.totalorder %s140, 1
      %p1144 = por %p1142, %p1143
      %p1145 = scmp.ne.s32.totalorder %s1136, %s1137
      %p1146 = scmp.eq.s32.totalorder %s140, 0
      %p1147 = por %p1145, %p1146
      %p1148 = scmp.ne.s32.totalorder %s1136, %s1137
      %p1149 = scmp.eq.s32.totalorder %s141, 1
      %p1150 = por %p1148, %p1149
      %p1152 = scmp.ne.s32.totalorder %s1137, %s1151
      %p1153 = scmp.eq.s32.totalorder %s141, 0
      %p1154 = por %p1152, %p1153
      %s1156 = sadd.s32 %s1155, 1
      %p1159 = scmp.eq.s32.totalorder %s135, 1
      %p1160 = scmp.ne.s32.totalorder %s1155, %s1157
      %p1161 = scmp.eq.s32.totalorder %s135, 0
      %p1162 = por %p1160, %p1161
      %p1163 = scmp.ne.s32.totalorder %s1155, %s1157
      %p1164 = scmp.eq.s32.totalorder %s140, 1
      %p1165 = por %p1163, %p1164
      %p1166 = scmp.ne.s32.totalorder %s1157, %s1158
      %p1167 = scmp.eq.s32.totalorder %s140, 0
      %p1168 = por %p1166, %p1167
      %p1169 = scmp.ne.s32.totalorder %s1157, %s1158
      %p1170 = scmp.eq.s32.totalorder %s141, 1
      %p1171 = por %p1169, %p1170
      %p1173 = scmp.ne.s32.totalorder %s1158, %s1172
      %p1174 = scmp.eq.s32.totalorder %s141, 0
      %p1175 = por %p1173, %p1174
      %s1177 = sadd.s32 %s1176, 1
      %p1180 = scmp.eq.s32.totalorder %s135, 1
      %p1181 = scmp.ne.s32.totalorder %s1176, %s1178
      %p1182 = scmp.eq.s32.totalorder %s135, 0
      %p1183 = por %p1181, %p1182
      %p1184 = scmp.ne.s32.totalorder %s1176, %s1178
      %p1185 = scmp.eq.s32.totalorder %s140, 1
      %p1186 = por %p1184, %p1185
      %p1187 = scmp.ne.s32.totalorder %s1178, %s1179
      %p1188 = scmp.eq.s32.totalorder %s140, 0
      %p1189 = por %p1187, %p1188
      %p1190 = scmp.ne.s32.totalorder %s1178, %s1179
      %p1191 = scmp.eq.s32.totalorder %s141, 1
      %p1192 = por %p1190, %p1191
      %p1194 = scmp.ne.s32.totalorder %s1179, %s1193
      %p1195 = scmp.eq.s32.totalorder %s141, 0
      %p1196 = por %p1194, %p1195
      %s1198 = sadd.s32 %s1197, 1
      %p1201 = scmp.eq.s32.totalorder %s135, 1
      %p1202 = scmp.ne.s32.totalorder %s1197, %s1199
      %p1203 = scmp.eq.s32.totalorder %s135, 0
      %p1204 = por %p1202, %p1203
      %p1205 = scmp.ne.s32.totalorder %s1197, %s1199
      %p1206 = scmp.eq.s32.totalorder %s140, 1
      %p1207 = por %p1205, %p1206
      %p1208 = scmp.ne.s32.totalorder %s1199, %s1200
      %p1209 = scmp.eq.s32.totalorder %s140, 0
      %p1210 = por %p1208, %p1209
      %p1211 = scmp.ne.s32.totalorder %s1199, %s1200
      %p1212 = scmp.eq.s32.totalorder %s141, 1
      %p1213 = por %p1211, %p1212
      %p1215 = scmp.ne.s32.totalorder %s1200, %s1214
      %p1216 = scmp.eq.s32.totalorder %s141, 0
      %p1217 = por %p1215, %p1216
      %s1219 = sadd.s32 %s1218, 1
      %p1222 = scmp.eq.s32.totalorder %s135, 1
      %p1223 = scmp.ne.s32.totalorder %s1218, %s1220
      %p1224 = scmp.eq.s32.totalorder %s135, 0
      %p1225 = por %p1223, %p1224
      %p1226 = scmp.ne.s32.totalorder %s1218, %s1220
      %p1227 = scmp.eq.s32.totalorder %s140, 1
      %p1228 = por %p1226, %p1227
      %p1229 = scmp.ne.s32.totalorder %s1220, %s1221
      %p1230 = scmp.eq.s32.totalorder %s140, 0
      %p1231 = por %p1229, %p1230
      %p1232 = scmp.ne.s32.totalorder %s1220, %s1221
      %p1233 = scmp.eq.s32.totalorder %s141, 1
      %p1234 = por %p1232, %p1233
      %p1236 = scmp.ne.s32.totalorder %s1221, %s1235
      %p1237 = scmp.eq.s32.totalorder %s141, 0
      %p1238 = por %p1236, %p1237
      %s1240 = sadd.s32 %s1239, 1
      %p1243 = scmp.eq.s32.totalorder %s135, 1
      %p1244 = scmp.ne.s32.totalorder %s1239, %s1241
      %p1245 = scmp.eq.s32.totalorder %s135, 0
      %p1246 = por %p1244, %p1245
      %p1247 = scmp.ne.s32.totalorder %s1239, %s1241
      %p1248 = scmp.eq.s32.totalorder %s140, 1
      %p1249 = por %p1247, %p1248
      %p1250 = scmp.ne.s32.totalorder %s1241, %s1242
      %p1251 = scmp.eq.s32.totalorder %s140, 0
      %p1252 = por %p1250, %p1251
      %p1253 = scmp.ne.s32.totalorder %s1241, %s1242
      %p1254 = scmp.eq.s32.totalorder %s141, 1
      %p1255 = por %p1253, %p1254
      %p1257 = scmp.ne.s32.totalorder %s1242, %s1256
      %p1258 = scmp.eq.s32.totalorder %s141, 0
      %p1259 = por %p1257, %p1258
      %s1260 = ssub.s32 %s135, %s142
      %p1261 = scmp.eq.s32.totalorder %s1260, 0
      %s1263 = sadd.s32 %s1262, 1
      %s1264 = scalar_select %p1261, %s1262, %s1263
      %p1267 = pneg %p1261
      %p1268 = scmp.eq.s32.totalorder %s135, 1
      %p1269 = por %p1267, %p1268
      %p1270 = scmp.ne.s32.totalorder %s1262, %s1265
      %p1271 = scmp.eq.s32.totalorder %s135, 0
      %p1272 = por %p1270, %p1271
      %p1273 = scmp.ne.s32.totalorder %s1262, %s1265
      %p1274 = scmp.eq.s32.totalorder %s140, 1
      %p1275 = por %p1273, %p1274
      %p1276 = scmp.ne.s32.totalorder %s1265, %s1266
      %p1277 = scmp.eq.s32.totalorder %s140, 0
      %p1278 = por %p1276, %p1277
      %p1279 = scmp.ne.s32.totalorder %s1265, %s1266
      %p1280 = scmp.eq.s32.totalorder %s141, 1
      %p1281 = por %p1279, %p1280
      %p1283 = scmp.ne.s32.totalorder %s1266, %s1282
      %p1284 = scmp.eq.s32.totalorder %s141, 0
      %p1285 = por %p1283, %p1284
      %p1286 = scmp.le.s32.totalorder 1, %s135
      %p1287 = scmp.lt.s32.totalorder %s135, 3
      %p1288 = pnand %p1286, %p1287
      %p1289 = pneg %p1288
      // Predicated region
      $region9: #{tpu_custom_call.1} parent=5 // pred_check
        _
      $region10: #{tpu_custom_call.1} parent=5 // pred_check_branch
        %1291 = sbr.rel (%p1288) target = $region12
      $region11: #{tpu_custom_call.1} parent=5 // pred_region
        %s1292 = ssub.s32 %s135, 1
        // Predicated region
        $region13: #{tpu_custom_call.1} parent=11 // pred_check
          %p1293 = pneg %p286
        $region14: #{tpu_custom_call.1} parent=11 // pred_check_branch
          %1295 = sbr.rel (%p1293) target = $region16
        $region15: #{tpu_custom_call.1} parent=11 // pred_region
          %s1297 = ssub.s32 16, 16
          %1298 = vsyncadd [#allocation9], %s1297
          %s1300 = sshll.u32 [#allocation8], 4
          %s1301 = int_to_ptr.vmem [resolvable:$true] %s1300
          %1303 = dma.hbm_to_vmem [thread:$0]  %s11, 16, %s1301, [#allocation9]
        $region16: #{tpu_custom_call.1} parent=11 // pred_fallthru
          _
        // Predicated region
        $region17: #{tpu_custom_call.1} parent=11 // pred_check
          %p1304 = pneg %p307
        $region18: #{tpu_custom_call.1} parent=11 // pred_check_branch
          %1306 = sbr.rel (%p1304) target = $region20
        $region19: #{tpu_custom_call.1} parent=11 // pred_region
          %s1308 = ssub.s32 64, 64
          %1309 = vsyncadd [#allocation9], %s1308
          %s1311 = sshll.u32 [#allocation10], 4
          %s1312 = int_to_ptr.vmem [resolvable:$true] %s1311
          %1314 = dma.hbm_to_vmem [thread:$0]  %s13, 64, %s1312, [#allocation9]
        $region20: #{tpu_custom_call.1} parent=11 // pred_fallthru
          _
        // Predicated region
        $region21: #{tpu_custom_call.1} parent=11 // pred_check
          %p1315 = pneg %p328
        $region22: #{tpu_custom_call.1} parent=11 // pred_check_branch
          %1317 = sbr.rel (%p1315) target = $region24
        $region23: #{tpu_custom_call.1} parent=11 // pred_region
          %s1319 = ssub.s32 16, 16
          %1320 = vsyncadd [#allocation12], %s1319
          %s1322 = sshll.u32 [#allocation11], 4
          %s1323 = int_to_ptr.vmem [resolvable:$true] %s1322
          %1325 = dma.hbm_to_vmem [thread:$0]  %s15, 16, %s1323, [#allocation12]
        $region24: #{tpu_custom_call.1} parent=11 // pred_fallthru
          _
        // Predicated region
        $region25: #{tpu_custom_call.1} parent=11 // pred_check
          %p1326 = pneg %p349
        $region26: #{tpu_custom_call.1} parent=11 // pred_check_branch
          %1328 = sbr.rel (%p1326) target = $region28
        $region27: #{tpu_custom_call.1} parent=11 // pred_region
          %s1330 = ssub.s32 16, 16
          %1331 = vsyncadd [#allocation12], %s1330
          %s1333 = sshll.u32 [#allocation13], 4
          %s1334 = int_to_ptr.vmem [resolvable:$true] %s1333
          %1336 = dma.hbm_to_vmem [thread:$0]  %s17, 16, %s1334, [#allocation12]
        $region28: #{tpu_custom_call.1} parent=11 // pred_fallthru
          _
        // Predicated region
        $region29: #{tpu_custom_call.1} parent=11 // pred_check
          %p1337 = pneg %p370
        $region30: #{tpu_custom_call.1} parent=11 // pred_check_branch
          %1339 = sbr.rel (%p1337) target = $region32
        $region31: #{tpu_custom_call.1} parent=11 // pred_region
          %s1341 = ssub.s32 16, 16
          %1342 = vsyncadd [#allocation15], %s1341
          %s1344 = sshll.u32 [#allocation14], 4
          %s1345 = int_to_ptr.vmem [resolvable:$true] %s1344
          %1347 = dma.hbm_to_vmem [thread:$0]  %s19, 16, %s1345, [#allocation15]
        $region32: #{tpu_custom_call.1} parent=11 // pred_fallthru
          _
        // Predicated region
        $region33: #{tpu_custom_call.1} parent=11 // pred_check
          %p1348 = pneg %p391
        $region34: #{tpu_custom_call.1} parent=11 // pred_check_branch
          %1350 = sbr.rel (%p1348) target = $region36
        $region35: #{tpu_custom_call.1} parent=11 // pred_region
          %s1352 = ssub.s32 16, 16
          %1353 = vsyncadd [#allocation15], %s1352
          %s1355 = sshll.u32 [#allocation16], 4
          %s1356 = int_to_ptr.vmem [resolvable:$true] %s1355
          %1358 = dma.hbm_to_vmem [thread:$0]  %s21, 16, %s1356, [#allocation15]
        $region36: #{tpu_custom_call.1} parent=11 // pred_fallthru
          _
        // Predicated region
        $region37: #{tpu_custom_call.1} parent=11 // pred_check
          %p1359 = pneg %p412
        $region38: #{tpu_custom_call.1} parent=11 // pred_check_branch
          %1361 = sbr.rel (%p1359) target = $region40
        $region39: #{tpu_custom_call.1} parent=11 // pred_region
          %s1363 = ssub.s32 16, 16
          %1364 = vsyncadd [#allocation18], %s1363
          %s1366 = sshll.u32 [#allocation17], 4
          %s1367 = int_to_ptr.vmem [resolvable:$true] %s1366
          %1369 = dma.hbm_to_vmem [thread:$0]  %s23, 16, %s1367, [#allocation18]
        $region40: #{tpu_custom_call.1} parent=11 // pred_fallthru
          _
        // Predicated region
        $region41: #{tpu_custom_call.1} parent=11 // pred_check
          %p1370 = pneg %p433
        $region42: #{tpu_custom_call.1} parent=11 // pred_check_branch
          %1372 = sbr.rel (%p1370) target = $region44
        $region43: #{tpu_custom_call.1} parent=11 // pred_region
          _
        $region44: #{tpu_custom_call.1} parent=11 // pred_fallthru
          _
        // Predicated region
        $region45: #{tpu_custom_call.1} parent=11 // pred_check
          %p1373 = pneg %p454
        $region46: #{tpu_custom_call.1} parent=11 // pred_check_branch
          %1375 = sbr.rel (%p1373) target = $region48
        $region47: #{tpu_custom_call.1} parent=11 // pred_region
          _
        $region48: #{tpu_custom_call.1} parent=11 // pred_fallthru
          _
        // Predicated region
        $region49: #{tpu_custom_call.1} parent=11 // pred_check
          %p1376 = pneg %p475
        $region50: #{tpu_custom_call.1} parent=11 // pred_check_branch
          %1378 = sbr.rel (%p1376) target = $region52
        $region51: #{tpu_custom_call.1} parent=11 // pred_region
          _
        $region52: #{tpu_custom_call.1} parent=11 // pred_fallthru
          _
        // Predicated region
        $region53: #{tpu_custom_call.1} parent=11 // pred_check
          %p1379 = pneg %p496
        $region54: #{tpu_custom_call.1} parent=11 // pred_check_branch
          %1381 = sbr.rel (%p1379) target = $region56
        $region55: #{tpu_custom_call.1} parent=11 // pred_region
          %s1383 = ssub.s32 16, 16
          %1384 = vsyncadd [#allocation18], %s1383
          %s1386 = sshll.u32 [#allocation19], 4
          %s1387 = int_to_ptr.vmem [resolvable:$true] %s1386
          %1389 = dma.hbm_to_vmem [thread:$0]  %s31, 16, %s1387, [#allocation18]
        $region56: #{tpu_custom_call.1} parent=11 // pred_fallthru
          _
        // Predicated region
        $region57: #{tpu_custom_call.1} parent=11 // pred_check
          %p1390 = pneg %p517
        $region58: #{tpu_custom_call.1} parent=11 // pred_check_branch
          %1392 = sbr.rel (%p1390) target = $region60
        $region59: #{tpu_custom_call.1} parent=11 // pred_region
          %s1394 = ssub.s32 16, 16
          %1395 = vsyncadd [#allocation21], %s1394
          %s1397 = sshll.u32 [#allocation20], 4
          %s1398 = int_to_ptr.vmem [resolvable:$true] %s1397
          %1400 = dma.hbm_to_vmem [thread:$0]  %s33, 16, %s1398, [#allocation21]
        $region60: #{tpu_custom_call.1} parent=11 // pred_fallthru
          _
        // Predicated region
        $region61: #{tpu_custom_call.1} parent=11 // pred_check
          %p1401 = pneg %p538
        $region62: #{tpu_custom_call.1} parent=11 // pred_check_branch
          %1403 = sbr.rel (%p1401) target = $region64
        $region63: #{tpu_custom_call.1} parent=11 // pred_region
          _
        $region64: #{tpu_custom_call.1} parent=11 // pred_fallthru
          _
        // Predicated region
        $region65: #{tpu_custom_call.1} parent=11 // pred_check
          %p1404 = pneg %p559
        $region66: #{tpu_custom_call.1} parent=11 // pred_check_branch
          %1406 = sbr.rel (%p1404) target = $region68
        $region67: #{tpu_custom_call.1} parent=11 // pred_region
          %s1408 = ssub.s32 16, 16
          %1409 = vsyncadd [#allocation21], %s1408
          %s1411 = sshll.u32 [#allocation22], 4
          %s1412 = int_to_ptr.vmem [resolvable:$true] %s1411
          %1414 = dma.hbm_to_vmem [thread:$0]  %s37, 16, %s1412, [#allocation21]
        $region68: #{tpu_custom_call.1} parent=11 // pred_fallthru
          _
        // Predicated region
        $region69: #{tpu_custom_call.1} parent=11 // pred_check
          %p1415 = pneg %p580
        $region70: #{tpu_custom_call.1} parent=11 // pred_check_branch
          %1417 = sbr.rel (%p1415) target = $region72
        $region71: #{tpu_custom_call.1} parent=11 // pred_region
          %s1419 = ssub.s32 16, 16
          %1420 = vsyncadd [#allocation24], %s1419
          %s1422 = sshll.u32 [#allocation23], 4
          %s1423 = int_to_ptr.vmem [resolvable:$true] %s1422
          %1425 = dma.hbm_to_vmem [thread:$0]  %s39, 16, %s1423, [#allocation24]
        $region72: #{tpu_custom_call.1} parent=11 // pred_fallthru
          _
        // Predicated region
        $region73: #{tpu_custom_call.1} parent=11 // pred_check
          %p1426 = pneg %p601
        $region74: #{tpu_custom_call.1} parent=11 // pred_check_branch
          %1428 = sbr.rel (%p1426) target = $region76
        $region75: #{tpu_custom_call.1} parent=11 // pred_region
          %s1430 = ssub.s32 16, 16
          %1431 = vsyncadd [#allocation24], %s1430
          %s1433 = sshll.u32 [#allocation25], 4
          %s1434 = int_to_ptr.vmem [resolvable:$true] %s1433
          %1436 = dma.hbm_to_vmem [thread:$0]  %s41, 16, %s1434, [#allocation24]
        $region76: #{tpu_custom_call.1} parent=11 // pred_fallthru
          _
        // Predicated region
        $region77: #{tpu_custom_call.1} parent=11 // pred_check
          %p1437 = pneg %p622
        $region78: #{tpu_custom_call.1} parent=11 // pred_check_branch
          %1439 = sbr.rel (%p1437) target = $region80
        $region79: #{tpu_custom_call.1} parent=11 // pred_region
          %s1441 = ssub.s32 16, 16
          %1442 = vsyncadd [#allocation27], %s1441
          %s1444 = sshll.u32 [#allocation26], 4
          %s1445 = int_to_ptr.vmem [resolvable:$true] %s1444
          %1447 = dma.hbm_to_vmem [thread:$0]  %s43, 16, %s1445, [#allocation27]
        $region80: #{tpu_custom_call.1} parent=11 // pred_fallthru
          _
        // Predicated region
        $region81: #{tpu_custom_call.1} parent=11 // pred_check
          %p1448 = pneg %p643
        $region82: #{tpu_custom_call.1} parent=11 // pred_check_branch
          %1450 = sbr.rel (%p1448) target = $region84
        $region83: #{tpu_custom_call.1} parent=11 // pred_region
          %s1452 = ssub.s32 16, 16
          %1453 = vsyncadd [#allocation27], %s1452
          %s1455 = sshll.u32 [#allocation28], 4
          %s1456 = int_to_ptr.vmem [resolvable:$true] %s1455
          %1458 = dma.hbm_to_vmem [thread:$0]  %s45, 16, %s1456, [#allocation27]
        $region84: #{tpu_custom_call.1} parent=11 // pred_fallthru
          _
        // Predicated region
        $region85: #{tpu_custom_call.1} parent=11 // pred_check
          %p1459 = pneg %p664
        $region86: #{tpu_custom_call.1} parent=11 // pred_check_branch
          %1461 = sbr.rel (%p1459) target = $region88
        $region87: #{tpu_custom_call.1} parent=11 // pred_region
          %s1463 = ssub.s32 16, 16
          %1464 = vsyncadd [#allocation30], %s1463
          %s1466 = sshll.u32 [#allocation29], 4
          %s1467 = int_to_ptr.vmem [resolvable:$true] %s1466
          %1469 = dma.hbm_to_vmem [thread:$0]  %s47, 16, %s1467, [#allocation30]
        $region88: #{tpu_custom_call.1} parent=11 // pred_fallthru
          _
        // Predicated region
        $region89: #{tpu_custom_call.1} parent=11 // pred_check
          %p1470 = pneg %p685
        $region90: #{tpu_custom_call.1} parent=11 // pred_check_branch
          %1472 = sbr.rel (%p1470) target = $region92
        $region91: #{tpu_custom_call.1} parent=11 // pred_region
          _
        $region92: #{tpu_custom_call.1} parent=11 // pred_fallthru
          _
        // Predicated region
        $region93: #{tpu_custom_call.1} parent=11 // pred_check
          %p1473 = pneg %p706
        $region94: #{tpu_custom_call.1} parent=11 // pred_check_branch
          %1475 = sbr.rel (%p1473) target = $region96
        $region95: #{tpu_custom_call.1} parent=11 // pred_region
          _
        $region96: #{tpu_custom_call.1} parent=11 // pred_fallthru
          _
        // Predicated region
        $region97: #{tpu_custom_call.1} parent=11 // pred_check
          %p1476 = pneg %p727
        $region98: #{tpu_custom_call.1} parent=11 // pred_check_branch
          %1478 = sbr.rel (%p1476) target = $region100
        $region99: #{tpu_custom_call.1} parent=11 // pred_region
          _
        $region100: #{tpu_custom_call.1} parent=11 // pred_fallthru
          _
        // Predicated region
        $region101: #{tpu_custom_call.1} parent=11 // pred_check
          %p1479 = pneg %p748
        $region102: #{tpu_custom_call.1} parent=11 // pred_check_branch
          %1481 = sbr.rel (%p1479) target = $region104
        $region103: #{tpu_custom_call.1} parent=11 // pred_region
          _
        $region104: #{tpu_custom_call.1} parent=11 // pred_fallthru
          _
        // Predicated region
        $region105: #{tpu_custom_call.1} parent=11 // pred_check
          %p1482 = pneg %p769
        $region106: #{tpu_custom_call.1} parent=11 // pred_check_branch
          %1484 = sbr.rel (%p1482) target = $region108
        $region107: #{tpu_custom_call.1} parent=11 // pred_region
          _
        $region108: #{tpu_custom_call.1} parent=11 // pred_fallthru
          _
        // Predicated region
        $region109: #{tpu_custom_call.1} parent=11 // pred_check
          %p1485 = pneg %p790
        $region110: #{tpu_custom_call.1} parent=11 // pred_check_branch
          %1487 = sbr.rel (%p1485) target = $region112
        $region111: #{tpu_custom_call.1} parent=11 // pred_region
          %s1489 = ssub.s32 16, 16
          %1490 = vsyncadd [#allocation30], %s1489
          %s1492 = sshll.u32 [#allocation31], 4
          %s1493 = int_to_ptr.vmem [resolvable:$true] %s1492
          %1495 = dma.hbm_to_vmem [thread:$0]  %s59, 16, %s1493, [#allocation30]
        $region112: #{tpu_custom_call.1} parent=11 // pred_fallthru
          _
        // Predicated region
        $region113: #{tpu_custom_call.1} parent=11 // pred_check
          %p1496 = pneg %p811
        $region114: #{tpu_custom_call.1} parent=11 // pred_check_branch
          %1498 = sbr.rel (%p1496) target = $region116
        $region115: #{tpu_custom_call.1} parent=11 // pred_region
          %s1500 = ssub.s32 64, 64
          %1501 = vsyncadd [#allocation33], %s1500
          %s1503 = sshll.u32 [#allocation32], 4
          %s1504 = int_to_ptr.vmem [resolvable:$true] %s1503
          %1506 = dma.hbm_to_vmem [thread:$0]  %s61, 64, %s1504, [#allocation33]
        $region116: #{tpu_custom_call.1} parent=11 // pred_fallthru
          _
        // Predicated region
        $region117: #{tpu_custom_call.1} parent=11 // pred_check
          %p1507 = pneg %p832
        $region118: #{tpu_custom_call.1} parent=11 // pred_check_branch
          %1509 = sbr.rel (%p1507) target = $region120
        $region119: #{tpu_custom_call.1} parent=11 // pred_region
          %s1511 = ssub.s32 16, 16
          %1512 = vsyncadd [#allocation33], %s1511
          %s1514 = sshll.u32 [#allocation34], 4
          %s1515 = int_to_ptr.vmem [resolvable:$true] %s1514
          %1517 = dma.hbm_to_vmem [thread:$0]  %s63, 16, %s1515, [#allocation33]
        $region120: #{tpu_custom_call.1} parent=11 // pred_fallthru
          _
        // Predicated region
        $region121: #{tpu_custom_call.1} parent=11 // pred_check
          %p1518 = pneg %p853
        $region122: #{tpu_custom_call.1} parent=11 // pred_check_branch
          %1520 = sbr.rel (%p1518) target = $region124
        $region123: #{tpu_custom_call.1} parent=11 // pred_region
          %s1522 = ssub.s32 16, 16
          %1523 = vsyncadd [#allocation36], %s1522
          %s1525 = sshll.u32 [#allocation35], 4
          %s1526 = int_to_ptr.vmem [resolvable:$true] %s1525
          %1528 = dma.hbm_to_vmem [thread:$0]  %s65, 16, %s1526, [#allocation36]
        $region124: #{tpu_custom_call.1} parent=11 // pred_fallthru
          _
        // Predicated region
        $region125: #{tpu_custom_call.1} parent=11 // pred_check
          %p1529 = pneg %p874
        $region126: #{tpu_custom_call.1} parent=11 // pred_check_branch
          %1531 = sbr.rel (%p1529) target = $region128
        $region127: #{tpu_custom_call.1} parent=11 // pred_region
          %s1533 = ssub.s32 16, 16
          %1534 = vsyncadd [#allocation36], %s1533
          %s1536 = sshll.u32 [#allocation37], 4
          %s1537 = int_to_ptr.vmem [resolvable:$true] %s1536
          %1539 = dma.hbm_to_vmem [thread:$0]  %s67, 16, %s1537, [#allocation36]
        $region128: #{tpu_custom_call.1} parent=11 // pred_fallthru
          _
        // Predicated region
        $region129: #{tpu_custom_call.1} parent=11 // pred_check
          %p1540 = pneg %p895
        $region130: #{tpu_custom_call.1} parent=11 // pred_check_branch
          %1542 = sbr.rel (%p1540) target = $region132
        $region131: #{tpu_custom_call.1} parent=11 // pred_region
          _
        $region132: #{tpu_custom_call.1} parent=11 // pred_fallthru
          _
        // Predicated region
        $region133: #{tpu_custom_call.1} parent=11 // pred_check
          %p1543 = pneg %p916
        $region134: #{tpu_custom_call.1} parent=11 // pred_check_branch
          %1545 = sbr.rel (%p1543) target = $region136
        $region135: #{tpu_custom_call.1} parent=11 // pred_region
          _
        $region136: #{tpu_custom_call.1} parent=11 // pred_fallthru
          _
        // Predicated region
        $region137: #{tpu_custom_call.1} parent=11 // pred_check
          %p1546 = pneg %p937
        $region138: #{tpu_custom_call.1} parent=11 // pred_check_branch
          %1548 = sbr.rel (%p1546) target = $region140
        $region139: #{tpu_custom_call.1} parent=11 // pred_region
          _
        $region140: #{tpu_custom_call.1} parent=11 // pred_fallthru
          _
        // Predicated region
        $region141: #{tpu_custom_call.1} parent=11 // pred_check
          %p1549 = pneg %p958
        $region142: #{tpu_custom_call.1} parent=11 // pred_check_branch
          %1551 = sbr.rel (%p1549) target = $region144
        $region143: #{tpu_custom_call.1} parent=11 // pred_region
          %s1553 = ssub.s32 16, 16
          %1554 = vsyncadd [#allocation39], %s1553
          %s1556 = sshll.u32 [#allocation38], 4
          %s1557 = int_to_ptr.vmem [resolvable:$true] %s1556
          %1559 = dma.hbm_to_vmem [thread:$0]  %s75, 16, %s1557, [#allocation39]
        $region144: #{tpu_custom_call.1} parent=11 // pred_fallthru
          _
        // Predicated region
        $region145: #{tpu_custom_call.1} parent=11 // pred_check
          %p1560 = pneg %p979
        $region146: #{tpu_custom_call.1} parent=11 // pred_check_branch
          %1562 = sbr.rel (%p1560) target = $region148
        $region147: #{tpu_custom_call.1} parent=11 // pred_region
          %s1564 = ssub.s32 16, 16
          %1565 = vsyncadd [#allocation39], %s1564
          %s1567 = sshll.u32 [#allocation40], 4
          %s1568 = int_to_ptr.vmem [resolvable:$true] %s1567
          %1570 = dma.hbm_to_vmem [thread:$0]  %s77, 16, %s1568, [#allocation39]
        $region148: #{tpu_custom_call.1} parent=11 // pred_fallthru
          _
        // Predicated region
        $region149: #{tpu_custom_call.1} parent=11 // pred_check
          %p1571 = pneg %p1000
        $region150: #{tpu_custom_call.1} parent=11 // pred_check_branch
          %1573 = sbr.rel (%p1571) target = $region152
        $region151: #{tpu_custom_call.1} parent=11 // pred_region
          %s1575 = ssub.s32 16, 16
          %1576 = vsyncadd [#allocation42], %s1575
          %s1578 = sshll.u32 [#allocation41], 4
          %s1579 = int_to_ptr.vmem [resolvable:$true] %s1578
          %1581 = dma.hbm_to_vmem [thread:$0]  %s79, 16, %s1579, [#allocation42]
        $region152: #{tpu_custom_call.1} parent=11 // pred_fallthru
          _
        // Predicated region
        $region153: #{tpu_custom_call.1} parent=11 // pred_check
          %p1582 = pneg %p1021
        $region154: #{tpu_custom_call.1} parent=11 // pred_check_branch
          %1584 = sbr.rel (%p1582) target = $region156
        $region155: #{tpu_custom_call.1} parent=11 // pred_region
          %s1586 = ssub.s32 16, 16
          %1587 = vsyncadd [#allocation42], %s1586
          %s1589 = sshll.u32 [#allocation43], 4
          %s1590 = int_to_ptr.vmem [resolvable:$true] %s1589
          %1592 = dma.hbm_to_vmem [thread:$0]  %s81, 16, %s1590, [#allocation42]
        $region156: #{tpu_custom_call.1} parent=11 // pred_fallthru
          _
        // Predicated region
        $region157: #{tpu_custom_call.1} parent=11 // pred_check
          %p1593 = pneg %p1042
        $region158: #{tpu_custom_call.1} parent=11 // pred_check_branch
          %1595 = sbr.rel (%p1593) target = $region160
        $region159: #{tpu_custom_call.1} parent=11 // pred_region
          %s1597 = ssub.s32 16, 16
          %1598 = vsyncadd [#allocation45], %s1597
          %s1600 = sshll.u32 [#allocation44], 4
          %s1601 = int_to_ptr.vmem [resolvable:$true] %s1600
          %1603 = dma.hbm_to_vmem [thread:$0]  %s83, 16, %s1601, [#allocation45]
        $region160: #{tpu_custom_call.1} parent=11 // pred_fallthru
          _
        // Predicated region
        $region161: #{tpu_custom_call.1} parent=11 // pred_check
          %p1604 = pneg %p1063
        $region162: #{tpu_custom_call.1} parent=11 // pred_check_branch
          %1606 = sbr.rel (%p1604) target = $region164
        $region163: #{tpu_custom_call.1} parent=11 // pred_region
          %s1608 = ssub.s32 16, 16
          %1609 = vsyncadd [#allocation45], %s1608
          %s1611 = sshll.u32 [#allocation46], 4
          %s1612 = int_to_ptr.vmem [resolvable:$true] %s1611
          %1614 = dma.hbm_to_vmem [thread:$0]  %s85, 16, %s1612, [#allocation45]
        $region164: #{tpu_custom_call.1} parent=11 // pred_fallthru
          _
        // Predicated region
        $region165: #{tpu_custom_call.1} parent=11 // pred_check
          %p1615 = pneg %p1084
        $region166: #{tpu_custom_call.1} parent=11 // pred_check_branch
          %1617 = sbr.rel (%p1615) target = $region168
        $region167: #{tpu_custom_call.1} parent=11 // pred_region
          _
        $region168: #{tpu_custom_call.1} parent=11 // pred_fallthru
          _
        // Predicated region
        $region169: #{tpu_custom_call.1} parent=11 // pred_check
          %p1618 = pneg %p1105
        $region170: #{tpu_custom_call.1} parent=11 // pred_check_branch
          %1620 = sbr.rel (%p1618) target = $region172
        $region171: #{tpu_custom_call.1} parent=11 // pred_region
          _
        $region172: #{tpu_custom_call.1} parent=11 // pred_fallthru
          _
        // Predicated region
        $region173: #{tpu_custom_call.1} parent=11 // pred_check
          %p1621 = pneg %p1126
        $region174: #{tpu_custom_call.1} parent=11 // pred_check_branch
          %1623 = sbr.rel (%p1621) target = $region176
        $region175: #{tpu_custom_call.1} parent=11 // pred_region
          %s1625 = ssub.s32 16, 16
          %1626 = vsyncadd [#allocation48], %s1625
          %s1628 = sshll.u32 [#allocation47], 4
          %s1629 = int_to_ptr.vmem [resolvable:$true] %s1628
          %1631 = dma.hbm_to_vmem [thread:$0]  %s91, 16, %s1629, [#allocation48]
        $region176: #{tpu_custom_call.1} parent=11 // pred_fallthru
          _
        // Predicated region
        $region177: #{tpu_custom_call.1} parent=11 // pred_check
          %p1632 = pneg %p1147
        $region178: #{tpu_custom_call.1} parent=11 // pred_check_branch
          %1634 = sbr.rel (%p1632) target = $region180
        $region179: #{tpu_custom_call.1} parent=11 // pred_region
          %s1636 = ssub.s32 16, 16
          %1637 = vsyncadd [#allocation48], %s1636
          %s1639 = sshll.u32 [#allocation49], 4
          %s1640 = int_to_ptr.vmem [resolvable:$true] %s1639
          %1642 = dma.hbm_to_vmem [thread:$0]  %s93, 16, %s1640, [#allocation48]
        $region180: #{tpu_custom_call.1} parent=11 // pred_fallthru
          _
        // Predicated region
        $region181: #{tpu_custom_call.1} parent=11 // pred_check
          %p1643 = pneg %p1168
        $region182: #{tpu_custom_call.1} parent=11 // pred_check_branch
          %1645 = sbr.rel (%p1643) target = $region184
        $region183: #{tpu_custom_call.1} parent=11 // pred_region
          %s1647 = ssub.s32 16, 16
          %1648 = vsyncadd [#allocation51], %s1647
          %s1650 = sshll.u32 [#allocation50], 4
          %s1651 = int_to_ptr.vmem [resolvable:$true] %s1650
          %1653 = dma.hbm_to_vmem [thread:$0]  %s95, 16, %s1651, [#allocation51]
        $region184: #{tpu_custom_call.1} parent=11 // pred_fallthru
          _
        // Predicated region
        $region185: #{tpu_custom_call.1} parent=11 // pred_check
          %p1654 = pneg %p1189
        $region186: #{tpu_custom_call.1} parent=11 // pred_check_branch
          %1656 = sbr.rel (%p1654) target = $region188
        $region187: #{tpu_custom_call.1} parent=11 // pred_region
          _
        $region188: #{tpu_custom_call.1} parent=11 // pred_fallthru
          _
        // Predicated region
        $region189: #{tpu_custom_call.1} parent=11 // pred_check
          %p1657 = pneg %p1210
        $region190: #{tpu_custom_call.1} parent=11 // pred_check_branch
          %1659 = sbr.rel (%p1657) target = $region192
        $region191: #{tpu_custom_call.1} parent=11 // pred_region
          _
        $region192: #{tpu_custom_call.1} parent=11 // pred_fallthru
          _
        // Predicated region
        $region193: #{tpu_custom_call.1} parent=11 // pred_check
          %p1660 = pneg %p1231
        $region194: #{tpu_custom_call.1} parent=11 // pred_check_branch
          %1662 = sbr.rel (%p1660) target = $region196
        $region195: #{tpu_custom_call.1} parent=11 // pred_region
          _
        $region196: #{tpu_custom_call.1} parent=11 // pred_fallthru
          _
        // Predicated region
        $region197: #{tpu_custom_call.1} parent=11 // pred_check
          %p1663 = pneg %p1252
        $region198: #{tpu_custom_call.1} parent=11 // pred_check_branch
          %1665 = sbr.rel (%p1663) target = $region200
        $region199: #{tpu_custom_call.1} parent=11 // pred_region
          _
        $region200: #{tpu_custom_call.1} parent=11 // pred_fallthru
          _
      $region12: #{tpu_custom_call.1} parent=5 // pred_fallthru
        _
      %p1666 = scmp.lt.s32.totalorder %s135, 2
      // Predicated region
      $region201: #{tpu_custom_call.1} parent=5 // pred_check
        %p1667 = pneg %p1666
      $region202: #{tpu_custom_call.1} parent=5 // pred_check_branch
        %1669 = sbr.rel (%p1667) target = $region204
      $region203: #{tpu_custom_call.1} parent=5 // pred_region
        // Predicated region
        $region205: #{tpu_custom_call.1} parent=203 // pred_check
          %p1670 = pneg %p155
        $region206: #{tpu_custom_call.1} parent=203 // pred_check_branch
          %1672 = sbr.rel (%p1670) target = $region208
        $region207: #{tpu_custom_call.1} parent=203 // pred_region
          %p1673 = scmp.lt.s32.totalorder %s135, 1
          %s1674 = scalar_select %p1673, %s135, 1
          %s1675 = smul.addr %s1674, 8
          %s1676 = scalar_lea.vmem %s1, %s1675
        $region208: #{tpu_custom_call.1} parent=203 // pred_fallthru
          _
        // Predicated region
        $region209: #{tpu_custom_call.1} parent=203 // pred_check
          %p1677 = pneg %p181
        $region210: #{tpu_custom_call.1} parent=203 // pred_check_branch
          %1679 = sbr.rel (%p1677) target = $region212
        $region211: #{tpu_custom_call.1} parent=203 // pred_region
          %p1680 = scmp.lt.s32.totalorder %s135, 1
          %s1681 = scalar_select %p1680, %s135, 1
          %s1682 = smul.addr %s1681, 2
          %s1683 = smul.addr %s1682, 8
          %s1684 = scalar_lea.vmem %s3, %s1683
        $region212: #{tpu_custom_call.1} parent=203 // pred_fallthru
          _
        // Predicated region
        $region213: #{tpu_custom_call.1} parent=203 // pred_check
          %p1685 = pneg %p207
        $region214: #{tpu_custom_call.1} parent=203 // pred_check_branch
          %1687 = sbr.rel (%p1685) target = $region216
        $region215: #{tpu_custom_call.1} parent=203 // pred_region
          %s1688 = sand.u32 %s197, 1
          %s1689 = scalar_lea.sflag [#allocation3], %s1688
          %s1690 = sand.u32 %s197, 1
          %s1691 = scalar_lea.vmem [#allocation2], %s1690
          %s1693 = ssub.s32 16, 16
          %1694 = vsyncadd %s1689, %s1693
          %s1695 = smul.addr %s135, 16
          %s1696 = scalar_lea.hbm %s5, %s1695
          %s1698 = sshll.u32 %s1691, 4
          %s1699 = int_to_ptr.vmem [resolvable:$true] %s1698
          %1701 = dma.hbm_to_vmem [thread:$0]  %s1696, 16, %s1699, %s1689
        $region216: #{tpu_custom_call.1} parent=203 // pred_fallthru
          _
        // Predicated region
        $region217: #{tpu_custom_call.1} parent=203 // pred_check
          %p1702 = pneg %p233
        $region218: #{tpu_custom_call.1} parent=203 // pred_check_branch
          %1704 = sbr.rel (%p1702) target = $region220
        $region219: #{tpu_custom_call.1} parent=203 // pred_region
          %s1705 = sand.u32 %s135, 1
          %s1706 = scalar_lea.sflag [#allocation6], %s1705
          %s1707 = sand.u32 %s223, 1
          %s1708 = scalar_lea.vmem [#allocation5], %s1707
          %s1710 = ssub.s32 16, 16
          %1711 = vsyncadd %s1706, %s1710
          %s1712 = smul.addr %s135, 16
          %s1713 = scalar_lea.hbm %s7, %s1712
          %s1715 = sshll.u32 %s1708, 4
          %s1716 = int_to_ptr.vmem [resolvable:$true] %s1715
          %1718 = dma.hbm_to_vmem [thread:$0]  %s1713, 16, %s1716, %s1706
        $region220: #{tpu_custom_call.1} parent=203 // pred_fallthru
          _
        // Predicated region
        $region221: #{tpu_custom_call.1} parent=203 // pred_check
          %p1719 = pneg %p259
        $region222: #{tpu_custom_call.1} parent=203 // pred_check_branch
          %1721 = sbr.rel (%p1719) target = $region224
        $region223: #{tpu_custom_call.1} parent=203 // pred_region
          %s1722 = sand.u32 %s135, 1
          %s1723 = scalar_lea.sflag [#allocation6], %s1722
          %s1724 = sand.u32 %s249, 1
          %s1725 = scalar_lea.vmem [#allocation7], %s1724
          %s1727 = ssub.s32 16, 16
          %1728 = vsyncadd %s1723, %s1727
          %s1729 = smul.addr %s135, 16
          %s1730 = scalar_lea.hbm %s9, %s1729
          %s1732 = sshll.u32 %s1725, 4
          %s1733 = int_to_ptr.vmem [resolvable:$true] %s1732
          %1735 = dma.hbm_to_vmem [thread:$0]  %s1730, 16, %s1733, %s1723
        $region224: #{tpu_custom_call.1} parent=203 // pred_fallthru
          _
      $region204: #{tpu_custom_call.1} parent=5 // pred_fallthru
        _
      %p1736 = scmp.le.s32.totalorder 1, %s135
      %p1737 = scmp.lt.s32.totalorder %s135, 3
      %p1738 = pnand %p1736, %p1737
      %p1739 = pneg %p1738
      // Predicated region
      $region225: #{tpu_custom_call.1} parent=5 // pred_check
        _
      $region226: #{tpu_custom_call.1} parent=5 // pred_check_branch
        %1741 = sbr.rel (%p1738) target = $region228
      $region227: #{tpu_custom_call.1} parent=5 // pred_region
        %s1742 = ssub.s32 %s135, 1
        %s1743 = sand.u32 %s200, 1
        %s1744 = scalar_lea.sflag [#allocation3], %s1743
        %s1745 = sand.u32 %s200, 1
        %s1746 = scalar_lea.vmem [#allocation2], %s1745
        // Predicated region
        $region229: #{tpu_custom_call.1} parent=227 // pred_check
          %p1747 = pneg %p213
        $region230: #{tpu_custom_call.1} parent=227 // pred_check_branch
          %1749 = sbr.rel (%p1747) target = $region232
        $region231: #{tpu_custom_call.1} parent=227 // pred_region
          %1750 = dma.done %s1744, 16
        $region232: #{tpu_custom_call.1} parent=227 // pred_fallthru
          _
        %s1751 = sand.u32 %s140, 1
        %s1752 = scalar_lea.sflag [#allocation6], %s1751
        %s1753 = sand.u32 %s226, 1
        %s1754 = scalar_lea.vmem [#allocation5], %s1753
        // Predicated region
        $region233: #{tpu_custom_call.1} parent=227 // pred_check
          %p1755 = pneg %p239
        $region234: #{tpu_custom_call.1} parent=227 // pred_check_branch
          %1757 = sbr.rel (%p1755) target = $region236
        $region235: #{tpu_custom_call.1} parent=227 // pred_region
          %1758 = dma.done %s1752, 16
        $region236: #{tpu_custom_call.1} parent=227 // pred_fallthru
          _
        %s1759 = sand.u32 %s140, 1
        %s1760 = scalar_lea.sflag [#allocation6], %s1759
        %s1761 = sand.u32 %s252, 1
        %s1762 = scalar_lea.vmem [#allocation7], %s1761
        // Predicated region
        $region237: #{tpu_custom_call.1} parent=227 // pred_check
          %p1763 = pneg %p265
        $region238: #{tpu_custom_call.1} parent=227 // pred_check_branch
          %1765 = sbr.rel (%p1763) target = $region240
        $region239: #{tpu_custom_call.1} parent=227 // pred_region
          %1766 = dma.done %s1760, 16
        $region240: #{tpu_custom_call.1} parent=227 // pred_fallthru
          _
        // Predicated region
        $region241: #{tpu_custom_call.1} parent=227 // pred_check
          %p1767 = pneg %p286
        $region242: #{tpu_custom_call.1} parent=227 // pred_check_branch
          %1769 = sbr.rel (%p1767) target = $region244
        $region243: #{tpu_custom_call.1} parent=227 // pred_region
          %1770 = dma.done [#allocation9], 16
        $region244: #{tpu_custom_call.1} parent=227 // pred_fallthru
          _
        // Predicated region
        $region245: #{tpu_custom_call.1} parent=227 // pred_check
          %p1771 = pneg %p307
        $region246: #{tpu_custom_call.1} parent=227 // pred_check_branch
          %1773 = sbr.rel (%p1771) target = $region248
        $region247: #{tpu_custom_call.1} parent=227 // pred_region
          %1774 = dma.done [#allocation9], 64
        $region248: #{tpu_custom_call.1} parent=227 // pred_fallthru
          _
        // Predicated region
        $region249: #{tpu_custom_call.1} parent=227 // pred_check
          %p1775 = pneg %p328
        $region250: #{tpu_custom_call.1} parent=227 // pred_check_branch
          %1777 = sbr.rel (%p1775) target = $region252
        $region251: #{tpu_custom_call.1} parent=227 // pred_region
          %1778 = dma.done [#allocation12], 16
        $region252: #{tpu_custom_call.1} parent=227 // pred_fallthru
          _
        // Predicated region
        $region253: #{tpu_custom_call.1} parent=227 // pred_check
          %p1779 = pneg %p349
        $region254: #{tpu_custom_call.1} parent=227 // pred_check_branch
          %1781 = sbr.rel (%p1779) target = $region256
        $region255: #{tpu_custom_call.1} parent=227 // pred_region
          %1782 = dma.done [#allocation12], 16
        $region256: #{tpu_custom_call.1} parent=227 // pred_fallthru
          _
        // Predicated region
        $region257: #{tpu_custom_call.1} parent=227 // pred_check
          %p1783 = pneg %p370
        $region258: #{tpu_custom_call.1} parent=227 // pred_check_branch
          %1785 = sbr.rel (%p1783) target = $region260
        $region259: #{tpu_custom_call.1} parent=227 // pred_region
          %1786 = dma.done [#allocation15], 16
        $region260: #{tpu_custom_call.1} parent=227 // pred_fallthru
          _
        // Predicated region
        $region261: #{tpu_custom_call.1} parent=227 // pred_check
          %p1787 = pneg %p391
        $region262: #{tpu_custom_call.1} parent=227 // pred_check_branch
          %1789 = sbr.rel (%p1787) target = $region264
        $region263: #{tpu_custom_call.1} parent=227 // pred_region
          %1790 = dma.done [#allocation15], 16
        $region264: #{tpu_custom_call.1} parent=227 // pred_fallthru
          _
        // Predicated region
        $region265: #{tpu_custom_call.1} parent=227 // pred_check
          %p1791 = pneg %p412
        $region266: #{tpu_custom_call.1} parent=227 // pred_check_branch
          %1793 = sbr.rel (%p1791) target = $region268
        $region267: #{tpu_custom_call.1} parent=227 // pred_region
          %1794 = dma.done [#allocation18], 16
        $region268: #{tpu_custom_call.1} parent=227 // pred_fallthru
          _
        // Predicated region
        $region269: #{tpu_custom_call.1} parent=227 // pred_check
          %p1795 = pneg %p496
        $region270: #{tpu_custom_call.1} parent=227 // pred_check_branch
          %1797 = sbr.rel (%p1795) target = $region272
        $region271: #{tpu_custom_call.1} parent=227 // pred_region
          %1798 = dma.done [#allocation18], 16
        $region272: #{tpu_custom_call.1} parent=227 // pred_fallthru
          _
        // Predicated region
        $region273: #{tpu_custom_call.1} parent=227 // pred_check
          %p1799 = pneg %p517
        $region274: #{tpu_custom_call.1} parent=227 // pred_check_branch
          %1801 = sbr.rel (%p1799) target = $region276
        $region275: #{tpu_custom_call.1} parent=227 // pred_region
          %1802 = dma.done [#allocation21], 16
        $region276: #{tpu_custom_call.1} parent=227 // pred_fallthru
          _
        // Predicated region
        $region277: #{tpu_custom_call.1} parent=227 // pred_check
          %p1803 = pneg %p559
        $region278: #{tpu_custom_call.1} parent=227 // pred_check_branch
          %1805 = sbr.rel (%p1803) target = $region280
        $region279: #{tpu_custom_call.1} parent=227 // pred_region
          %1806 = dma.done [#allocation21], 16
        $region280: #{tpu_custom_call.1} parent=227 // pred_fallthru
          _
        // Predicated region
        $region281: #{tpu_custom_call.1} parent=227 // pred_check
          %p1807 = pneg %p580
        $region282: #{tpu_custom_call.1} parent=227 // pred_check_branch
          %1809 = sbr.rel (%p1807) target = $region284
        $region283: #{tpu_custom_call.1} parent=227 // pred_region
          %1810 = dma.done [#allocation24], 16
        $region284: #{tpu_custom_call.1} parent=227 // pred_fallthru
          _
        // Predicated region
        $region285: #{tpu_custom_call.1} parent=227 // pred_check
          %p1811 = pneg %p601
        $region286: #{tpu_custom_call.1} parent=227 // pred_check_branch
          %1813 = sbr.rel (%p1811) target = $region288
        $region287: #{tpu_custom_call.1} parent=227 // pred_region
          %1814 = dma.done [#allocation24], 16
        $region288: #{tpu_custom_call.1} parent=227 // pred_fallthru
          _
        // Predicated region
        $region289: #{tpu_custom_call.1} parent=227 // pred_check
          %p1815 = pneg %p622
        $region290: #{tpu_custom_call.1} parent=227 // pred_check_branch
          %1817 = sbr.rel (%p1815) target = $region292
        $region291: #{tpu_custom_call.1} parent=227 // pred_region
          %1818 = dma.done [#allocation27], 16
        $region292: #{tpu_custom_call.1} parent=227 // pred_fallthru
          _
        // Predicated region
        $region293: #{tpu_custom_call.1} parent=227 // pred_check
          %p1819 = pneg %p643
        $region294: #{tpu_custom_call.1} parent=227 // pred_check_branch
          %1821 = sbr.rel (%p1819) target = $region296
        $region295: #{tpu_custom_call.1} parent=227 // pred_region
          %1822 = dma.done [#allocation27], 16
        $region296: #{tpu_custom_call.1} parent=227 // pred_fallthru
          _
        // Predicated region
        $region297: #{tpu_custom_call.1} parent=227 // pred_check
          %p1823 = pneg %p664
        $region298: #{tpu_custom_call.1} parent=227 // pred_check_branch
          %1825 = sbr.rel (%p1823) target = $region300
        $region299: #{tpu_custom_call.1} parent=227 // pred_region
          %1826 = dma.done [#allocation30], 16
        $region300: #{tpu_custom_call.1} parent=227 // pred_fallthru
          _
        // Predicated region
        $region301: #{tpu_custom_call.1} parent=227 // pred_check
          %p1827 = pneg %p790
        $region302: #{tpu_custom_call.1} parent=227 // pred_check_branch
          %1829 = sbr.rel (%p1827) target = $region304
        $region303: #{tpu_custom_call.1} parent=227 // pred_region
          %1830 = dma.done [#allocation30], 16
        $region304: #{tpu_custom_call.1} parent=227 // pred_fallthru
          _
        // Predicated region
        $region305: #{tpu_custom_call.1} parent=227 // pred_check
          %p1831 = pneg %p811
        $region306: #{tpu_custom_call.1} parent=227 // pred_check_branch
          %1833 = sbr.rel (%p1831) target = $region308
        $region307: #{tpu_custom_call.1} parent=227 // pred_region
          %1834 = dma.done [#allocation33], 64
        $region308: #{tpu_custom_call.1} parent=227 // pred_fallthru
          _
        // Predicated region
        $region309: #{tpu_custom_call.1} parent=227 // pred_check
          %p1835 = pneg %p832
        $region310: #{tpu_custom_call.1} parent=227 // pred_check_branch
          %1837 = sbr.rel (%p1835) target = $region312
        $region311: #{tpu_custom_call.1} parent=227 // pred_region
          %1838 = dma.done [#allocation33], 16
        $region312: #{tpu_custom_call.1} parent=227 // pred_fallthru
          _
        // Predicated region
        $region313: #{tpu_custom_call.1} parent=227 // pred_check
          %p1839 = pneg %p853
        $region314: #{tpu_custom_call.1} parent=227 // pred_check_branch
          %1841 = sbr.rel (%p1839) target = $region316
        $region315: #{tpu_custom_call.1} parent=227 // pred_region
          %1842 = dma.done [#allocation36], 16
        $region316: #{tpu_custom_call.1} parent=227 // pred_fallthru
          _
        // Predicated region
        $region317: #{tpu_custom_call.1} parent=227 // pred_check
          %p1843 = pneg %p874
        $region318: #{tpu_custom_call.1} parent=227 // pred_check_branch
          %1845 = sbr.rel (%p1843) target = $region320
        $region319: #{tpu_custom_call.1} parent=227 // pred_region
          %1846 = dma.done [#allocation36], 16
        $region320: #{tpu_custom_call.1} parent=227 // pred_fallthru
          _
        // Predicated region
        $region321: #{tpu_custom_call.1} parent=227 // pred_check
          %p1847 = pneg %p958
        $region322: #{tpu_custom_call.1} parent=227 // pred_check_branch
          %1849 = sbr.rel (%p1847) target = $region324
        $region323: #{tpu_custom_call.1} parent=227 // pred_region
          %1850 = dma.done [#allocation39], 16
        $region324: #{tpu_custom_call.1} parent=227 // pred_fallthru
          _
        // Predicated region
        $region325: #{tpu_custom_call.1} parent=227 // pred_check
          %p1851 = pneg %p979
        $region326: #{tpu_custom_call.1} parent=227 // pred_check_branch
          %1853 = sbr.rel (%p1851) target = $region328
        $region327: #{tpu_custom_call.1} parent=227 // pred_region
          %1854 = dma.done [#allocation39], 16
        $region328: #{tpu_custom_call.1} parent=227 // pred_fallthru
          _
        // Predicated region
        $region329: #{tpu_custom_call.1} parent=227 // pred_check
          %p1855 = pneg %p1000
        $region330: #{tpu_custom_call.1} parent=227 // pred_check_branch
          %1857 = sbr.rel (%p1855) target = $region332
        $region331: #{tpu_custom_call.1} parent=227 // pred_region
          %1858 = dma.done [#allocation42], 16
        $region332: #{tpu_custom_call.1} parent=227 // pred_fallthru
          _
        // Predicated region
        $region333: #{tpu_custom_call.1} parent=227 // pred_check
          %p1859 = pneg %p1021
        $region334: #{tpu_custom_call.1} parent=227 // pred_check_branch
          %1861 = sbr.rel (%p1859) target = $region336
        $region335: #{tpu_custom_call.1} parent=227 // pred_region
          %1862 = dma.done [#allocation42], 16
        $region336: #{tpu_custom_call.1} parent=227 // pred_fallthru
          _
        // Predicated region
        $region337: #{tpu_custom_call.1} parent=227 // pred_check
          %p1863 = pneg %p1042
        $region338: #{tpu_custom_call.1} parent=227 // pred_check_branch
          %1865 = sbr.rel (%p1863) target = $region340
        $region339: #{tpu_custom_call.1} parent=227 // pred_region
          %1866 = dma.done [#allocation45], 16
        $region340: #{tpu_custom_call.1} parent=227 // pred_fallthru
          _
        // Predicated region
        $region341: #{tpu_custom_call.1} parent=227 // pred_check
          %p1867 = pneg %p1063
        $region342: #{tpu_custom_call.1} parent=227 // pred_check_branch
          %1869 = sbr.rel (%p1867) target = $region344
        $region343: #{tpu_custom_call.1} parent=227 // pred_region
          %1870 = dma.done [#allocation45], 16
        $region344: #{tpu_custom_call.1} parent=227 // pred_fallthru
          _
        // Predicated region
        $region345: #{tpu_custom_call.1} parent=227 // pred_check
          %p1871 = pneg %p1126
        $region346: #{tpu_custom_call.1} parent=227 // pred_check_branch
          %1873 = sbr.rel (%p1871) target = $region348
        $region347: #{tpu_custom_call.1} parent=227 // pred_region
          %1874 = dma.done [#allocation48], 16
        $region348: #{tpu_custom_call.1} parent=227 // pred_fallthru
          _
        // Predicated region
        $region349: #{tpu_custom_call.1} parent=227 // pred_check
          %p1875 = pneg %p1147
        $region350: #{tpu_custom_call.1} parent=227 // pred_check_branch
          %1877 = sbr.rel (%p1875) target = $region352
        $region351: #{tpu_custom_call.1} parent=227 // pred_region
          %1878 = dma.done [#allocation48], 16
        $region352: #{tpu_custom_call.1} parent=227 // pred_fallthru
          _
        // Predicated region
        $region353: #{tpu_custom_call.1} parent=227 // pred_check
          %p1879 = pneg %p1168
        $region354: #{tpu_custom_call.1} parent=227 // pred_check_branch
          %1881 = sbr.rel (%p1879) target = $region356
        $region355: #{tpu_custom_call.1} parent=227 // pred_region
          %1882 = dma.done [#allocation51], 16
        $region356: #{tpu_custom_call.1} parent=227 // pred_fallthru
          _
        %p1883 = scmp.lt.s32.totalorder %s140, 1
        %s1884 = scalar_select %p1883, %s140, 1
        %s1885 = smul.addr %s1884, 8
        %s1886 = scalar_lea.vmem %s1, %s1885
        %p1887 = pneg %p161
        %p1888 = pneg %p158
        %p1889 = scmp.lt.s32.totalorder %s140, 1
        %s1890 = scalar_select %p1889, %s140, 1
        %s1891 = smul.addr %s1890, 2
        %s1892 = smul.addr %s1891, 8
        %s1893 = scalar_lea.vmem %s3, %s1892
        %p1894 = pneg %p187
        %p1895 = pneg %p184
        %s1896 = sand.u32 %s200, 1
        %s1897 = scalar_lea.sflag [#allocation3], %s1896
        %s1898 = sand.u32 %s200, 1
        %s1899 = scalar_lea.vmem [#allocation2], %s1898
        %p1900 = pneg %p213
        %p1901 = pneg %p210
        %s1902 = sand.u32 %s140, 1
        %s1903 = scalar_lea.sflag [#allocation6], %s1902
        %s1904 = sand.u32 %s226, 1
        %s1905 = scalar_lea.vmem [#allocation5], %s1904
        %p1906 = pneg %p239
        %p1907 = pneg %p236
        %s1908 = sand.u32 %s140, 1
        %s1909 = scalar_lea.sflag [#allocation6], %s1908
        %s1910 = sand.u32 %s252, 1
        %s1911 = scalar_lea.vmem [#allocation7], %s1910
        %p1912 = pneg %p265
        %p1913 = pneg %p262
        %p1914 = pneg %p286
        %p1915 = pneg %p283
        %p1916 = pneg %p307
        %p1917 = pneg %p304
        %p1918 = pneg %p328
        %p1919 = pneg %p325
        %p1920 = pneg %p349
        %p1921 = pneg %p346
        %p1922 = pneg %p370
        %p1923 = pneg %p367
        %p1924 = pneg %p391
        %p1925 = pneg %p388
        %p1926 = pneg %p412
        %p1927 = pneg %p409
        %p1928 = pneg %p433
        %p1929 = pneg %p430
        %p1930 = pneg %p454
        %p1931 = pneg %p451
        %p1932 = pneg %p475
        %p1933 = pneg %p472
        %p1934 = pneg %p496
        %p1935 = pneg %p493
        %p1936 = pneg %p517
        %p1937 = pneg %p514
        %p1938 = pneg %p538
        %p1939 = pneg %p535
        %p1940 = pneg %p559
        %p1941 = pneg %p556
        %p1942 = pneg %p580
        %p1943 = pneg %p577
        %p1944 = pneg %p601
        %p1945 = pneg %p598
        %p1946 = pneg %p622
        %p1947 = pneg %p619
        %p1948 = pneg %p643
        %p1949 = pneg %p640
        %p1950 = pneg %p664
        %p1951 = pneg %p661
        %p1952 = pneg %p685
        %p1953 = pneg %p682
        %p1954 = pneg %p706
        %p1955 = pneg %p703
        %p1956 = pneg %p727
        %p1957 = pneg %p724
        %p1958 = pneg %p748
        %p1959 = pneg %p745
        %p1960 = pneg %p769
        %p1961 = pneg %p766
        %p1962 = pneg %p790
        %p1963 = pneg %p787
        %p1964 = pneg %p811
        %p1965 = pneg %p808
        %p1966 = pneg %p832
        %p1967 = pneg %p829
        %p1968 = pneg %p853
        %p1969 = pneg %p850
        %p1970 = pneg %p874
        %p1971 = pneg %p871
        %p1972 = pneg %p895
        %p1973 = pneg %p892
        %p1974 = pneg %p916
        %p1975 = pneg %p913
        %p1976 = pneg %p937
        %p1977 = pneg %p934
        %p1978 = pneg %p958
        %p1979 = pneg %p955
        %p1980 = pneg %p979
        %p1981 = pneg %p976
        %p1982 = pneg %p1000
        %p1983 = pneg %p997
        %p1984 = pneg %p1021
        %p1985 = pneg %p1018
        %p1986 = pneg %p1042
        %p1987 = pneg %p1039
        %p1988 = pneg %p1063
        %p1989 = pneg %p1060
        %p1990 = pneg %p1084
        %p1991 = pneg %p1081
        %p1992 = pneg %p1105
        %p1993 = pneg %p1102
        %p1994 = pneg %p1126
        %p1995 = pneg %p1123
        %p1996 = pneg %p1147
        %p1997 = pneg %p1144
        %p1998 = pneg %p1168
        %p1999 = pneg %p1165
        %p2000 = pneg %p1189
        %p2001 = pneg %p1186
        %p2002 = pneg %p1210
        %p2003 = pneg %p1207
        %p2004 = pneg %p1231
        %p2005 = pneg %p1228
        %p2006 = pneg %p1252
        %p2007 = pneg %p1249
        %p2008 = pneg %p1278
        %p2009 = pneg %p1275
        %s2010 = sand.u32 %s1265, 1
        %s2011 = scalar_lea.sflag [#allocation4], %s2010
        %s2012 = sand.u32 %s1265, 1
        %s2013 = scalar_lea.vmem [#allocation52], %s2012
        %p2014 = scmp.lt.s32.totalorder %s140, 1
        %s2015 = scalar_select %p2014, %s140, 1
        %s2016 = smul.addr %s2015, 8
        %s2017 = scalar_lea.vmem %s1, %s2016
        %p2018 = scmp.lt.s32.totalorder %s140, 1
        %s2019 = scalar_select %p2018, %s140, 1
        %s2020 = smul.addr %s2019, 2
        %s2021 = smul.addr %s2020, 8
        %s2022 = scalar_lea.vmem %s3, %s2021
        %v2024 = vld [vmem:[#allocation8] sm:$0x1]
        %v2025 = vld [vmem:[#allocation10] sm:$0xf]
        %v2026 = vld [vmem:[#allocation11] sm:$0x1]
        %v2027 = vld [vmem:[#allocation13] sm:$0x1]
        %v2028 = vld [vmem:[#allocation14] sm:$0x1]
        %v2029 = vld [vmem:[#allocation16] sm:$0x1]
        %v2030 = vld [vmem:[#allocation17] sm:$0x1]
        %v2031 = vld [vmem:[%s25] sm:$0xff]
        %v2032 = vld [vmem:[%s25 + $0x8] sm:$0xff]
        %v2033 = vld [vmem:[%s25 + $0x10] sm:$0xff]
        %v2034 = vld [vmem:[%s25 + $0x18] sm:$0xff]
        %v2035 = vld [vmem:[%s27] sm:$0xff]
        %v2036 = vld [vmem:[%s27 + $0x8] sm:$0xff]
        %v2037 = vld [vmem:[%s27 + $0x10] sm:$0xff]
        %v2038 = vld [vmem:[%s27 + $0x18] sm:$0xff]
        %v2039 = vld [vmem:[%s29] sm:$0xff]
        %v2040 = vld [vmem:[%s29 + $0x8] sm:$0xff]
        %v2041 = vld [vmem:[%s29 + $0x10] sm:$0xff]
        %v2042 = vld [vmem:[%s29 + $0x18] sm:$0xff]
        %v2043 = vld [vmem:[#allocation19] sm:$0x1]
        %v2044 = vld [vmem:[#allocation20] sm:$0x1]
        %v2045 = vld [vmem:[%s35] sm:$0x1]
        %v2046 = vld [vmem:[#allocation22] sm:$0x1]
        %v2047 = vld [vmem:[#allocation23] sm:$0x1]
        %v2048 = vld [vmem:[#allocation25] sm:$0x1]
        %v2049 = vld [vmem:[#allocation26] sm:$0x1]
        %v2050 = vld [vmem:[#allocation28] sm:$0x1]
        %v2051 = vld [vmem:[#allocation29] sm:$0x1]
        %v2052 = vld [vmem:[%s49] sm:$0xff]
        %v2053 = vld [vmem:[%s49 + $0x8] sm:$0xff]
        %v2054 = vld [vmem:[%s49 + $0x10] sm:$0xff]
        %v2055 = vld [vmem:[%s49 + $0x18] sm:$0xff]
        %v2056 = vld [vmem:[%s51] sm:$0xff]
        %v2057 = vld [vmem:[%s51 + $0x8] sm:$0xff]
        %v2058 = vld [vmem:[%s51 + $0x10] sm:$0xff]
        %v2059 = vld [vmem:[%s51 + $0x18] sm:$0xff]
        %v2060 = vld [vmem:[%s53] sm:$0xff]
        %v2061 = vld [vmem:[%s53 + $0x8] sm:$0xff]
        %v2062 = vld [vmem:[%s53 + $0x10] sm:$0xff]
        %v2063 = vld [vmem:[%s53 + $0x18] sm:$0xff]
        %v2064 = vld [vmem:[%s55] sm:$0xff]
        %v2065 = vld [vmem:[%s55 + $0x8] sm:$0xff]
        %v2066 = vld [vmem:[%s55 + $0x10] sm:$0xff]
        %v2067 = vld [vmem:[%s55 + $0x18] sm:$0xff]
        %v2068 = vld [vmem:[%s57] sm:$0xff]
        %v2069 = vld [vmem:[%s57 + $0x8] sm:$0xff]
        %v2070 = vld [vmem:[%s57 + $0x10] sm:$0xff]
        %v2071 = vld [vmem:[%s57 + $0x18] sm:$0xff]
        %v2072 = vld [vmem:[%s57 + $0x20] sm:$0xff]
        %v2073 = vld [vmem:[%s57 + $0x28] sm:$0xff]
        %v2074 = vld [vmem:[%s57 + $0x30] sm:$0xff]
        %v2075 = vld [vmem:[%s57 + $0x38] sm:$0xff]
        %v2076 = vld [vmem:[#allocation31] sm:$0x1]
        %v2077 = vld [vmem:[#allocation32] sm:$0xf]
        %v2078 = vld [vmem:[#allocation34] sm:$0x1]
        %v2079 = vld [vmem:[#allocation35] sm:$0x1]
        %v2080 = vld [vmem:[#allocation37] sm:$0x1]
        %v2081 = vld [vmem:[%s69] sm:$0xff]
        %v2082 = vld [vmem:[%s69 + $0x8] sm:$0xff]
        %v2083 = vld [vmem:[%s69 + $0x10] sm:$0xff]
        %v2084 = vld [vmem:[%s69 + $0x18] sm:$0xff]
        %v2085 = vld [vmem:[%s71] sm:$0xff]
        %v2086 = vld [vmem:[%s71 + $0x8] sm:$0xff]
        %v2087 = vld [vmem:[%s71 + $0x10] sm:$0xff]
        %v2088 = vld [vmem:[%s71 + $0x18] sm:$0xff]
        %v2089 = vld [vmem:[%s73] sm:$0xff]
        %v2090 = vld [vmem:[%s73 + $0x8] sm:$0xff]
        %v2091 = vld [vmem:[%s73 + $0x10] sm:$0xff]
        %v2092 = vld [vmem:[%s73 + $0x18] sm:$0xff]
        %v2093 = vld [vmem:[#allocation38] sm:$0x1]
        %v2094 = vld [vmem:[#allocation40] sm:$0x1]
        %v2095 = vld [vmem:[#allocation41] sm:$0x1]
        %v2096 = vld [vmem:[#allocation43] sm:$0x1]
        %v2097 = vld [vmem:[#allocation44] sm:$0x1]
        %v2098 = vld [vmem:[#allocation46] sm:$0x1]
        %v2099 = vld [vmem:[%s87] sm:$0xff]
        %v2100 = vld [vmem:[%s87 + $0x8] sm:$0xff]
        %v2101 = vld [vmem:[%s87 + $0x10] sm:$0xff]
        %v2102 = vld [vmem:[%s87 + $0x18] sm:$0xff]
        %v2103 = vld [vmem:[%s89] sm:$0xff]
        %v2104 = vld [vmem:[%s89 + $0x8] sm:$0xff]
        %v2105 = vld [vmem:[%s89 + $0x10] sm:$0xff]
        %v2106 = vld [vmem:[%s89 + $0x18] sm:$0xff]
        %v2107 = vld [vmem:[%s89 + $0x20] sm:$0xff]
        %v2108 = vld [vmem:[%s89 + $0x28] sm:$0xff]
        %v2109 = vld [vmem:[%s89 + $0x30] sm:$0xff]
        %v2110 = vld [vmem:[%s89 + $0x38] sm:$0xff]
        %v2111 = vld [vmem:[#allocation47] sm:$0x1]
        %v2112 = vld [vmem:[#allocation49] sm:$0x1]
        %v2113 = vld [vmem:[#allocation50] sm:$0x1]
        %v2114 = vld [vmem:[%s97] sm:$0x1]
        %v2115 = vld [vmem:[%s99] sm:$0xff]
        %v2116 = vld [vmem:[%s99 + $0x8] sm:$0xff]
        %v2117 = vld [vmem:[%s99 + $0x10] sm:$0xff]
        %v2118 = vld [vmem:[%s99 + $0x18] sm:$0xff]
        %v2119 = vld [vmem:[%s101] sm:$0xff]
        %v2120 = vld [vmem:[%s101 + $0x8] sm:$0xff]
        %v2121 = vld [vmem:[%s101 + $0x10] sm:$0xff]
        %v2122 = vld [vmem:[%s101 + $0x18] sm:$0xff]
        %v2123 = vld [vmem:[%s103] sm:$0xff]
        %v2124 = vld [vmem:[%s103 + $0x8] sm:$0x1]
        %v2125 = vld [vmem:[%s2017] sm:$0xff]
        %v2126 = vld [vmem:[%s2022] sm:$0xff]
        %v2127 = vld [vmem:[%s2022 + $0x8] sm:$0x1]
        %v2128 = vld [vmem:[%s1746] sm:$0x1]
        %vm2129 = vcmp.ne.f32.partialorder %v2128, 0.0
        %v2130 = vsel %vm2129, -1e+30, 0.0
        %v2131 = vld [vmem:[%s1754] sm:$0x1]
        %vm2132 = vcmp.ne.f32.partialorder %v2131, 0.0
        %v2133 = vsel %vm2132, -1e+30, 0.0
        %v2134 = vpack.c.bf16 %v2125, %v2125
        %v2135 = vpack.c.bf16 %v2077, %v2077
        %v2137 = vlaneseq
        %v2138 = vshrl.u32 %v2137, 7
        %v2139 = vsub.s32 0, %v2138
        %v2140 = vrot.slane %v2076, %v2139
        %vm2142 = vcmask 31744
        %v2144 = vsel %vm2142, %v2134, 0
        %vm2146 = vcmask 1041408
        %v2148 = vsel %vm2146, %v2135, 0
        %2150 = vmatprep.subr.bf16.mxu0 0
        %2151 = vmatpush1.bf16.msra.mxu0 %v2148
        %2152 = vmatprep.subr.bf16.mxu0 0
        %2153 = vmatpush1.bf16.msra.mxu0 0
        %2154 = vmatprep.subr.bf16.mxu0 0
        %2155 = vmatpush1.bf16.msra.mxu0 0
        %2156 = vmatprep.subr.bf16.mxu0 0
        %2157 = vmatpush1.bf16.msra.mxu0 0
        %2158 = vmatprep.subr.bf16.mxu0 0
        %2159 = vmatpush1.bf16.msra.mxu0 0
        %2160 = vmatprep.subr.bf16.mxu0 0
        %2161 = vmatpush1.bf16.msra.mxu0 0
        %2162 = vmatprep.subr.bf16.mxu0 0
        %2163 = vmatpush1.bf16.msra.mxu0 0
        %2164 = vmatprep.subr.bf16.mxu0 0
        %2165 = vmatpush1.bf16.msra.mxu0 0
        %2166 = vmatprep.subr.bf16.mxu0 0
        %2167 = vmatpush1.bf16.msra.mxu0 0
        %2168 = vmatprep.subr.bf16.mxu0 0
        %2169 = vmatpush1.bf16.msra.mxu0 0
        %2170 = vmatprep.subr.bf16.mxu0 0
        %2171 = vmatpush1.bf16.msra.mxu0 0
        %2172 = vmatprep.subr.bf16.mxu0 0
        %2173 = vmatpush1.bf16.msra.mxu0 0
        %2174 = vmatprep.subr.bf16.mxu0 0
        %2175 = vmatpush1.bf16.msra.mxu0 0
        %2176 = vmatprep.subr.bf16.mxu0 0
        %2177 = vmatpush1.bf16.msra.mxu0 0
        %2178 = vmatprep.subr.bf16.mxu0 0
        %2179 = vmatpush1.bf16.msra.mxu0 0
        %2180 = vmatprep.subr.bf16.mxu0 0
        %2181 = vmatpush1.bf16.msra.mxu0 0
        %2182 = vmatprep.mubr.bf16.mxu0 0
        %2183 = vmatmul.mubr.bf16.gmra.mrb[0].mxu0 %v2144
        %v2184 = vpop.f32.mrb[0].mxu0
        %v2185 = vadd.f32 %v2140, %v2184
        %v2186 = vpop.f32.mrb[0].mxu0
        %v2187 = vpop.f32.mrb[0].mxu0
        %v2188 = vpop.f32.mrb[0].mxu0
        %2189 = vdwg.mxu0
        %v2190 = vadd.f32 %v2185, %v2123
        %v2191 = vpack.c.bf16 %v2190, %v2190
        %v2192 = vpack.c.bf16 %v2090, %v2089
        %v2193 = vpack.c.bf16 %v2092, %v2091
        %v2195 = vlaneseq
        %v2196 = vshrl.u32 %v2195, 7
        %v2197 = vsub.s32 0, %v2196
        %v2198 = vrot.slane %v2080, %v2197
        %vm2200 = vcmask 261120
        %v2202 = vsel %vm2200, %v2191, 0
        %2204 = vmatprep.subr.bf16.mxu0 0
        %2205 = vmatpush1.bf16.msra.mxu0 %v2192
        %2206 = vmatprep.subr.bf16.mxu0 0
        %2207 = vmatpush1.bf16.msra.mxu0 %v2193
        %2208 = vmatprep.subr.bf16.mxu0 0
        %2209 = vmatpush1.bf16.msra.mxu0 0
        %2210 = vmatprep.subr.bf16.mxu0 0
        %2211 = vmatpush1.bf16.msra.mxu0 0
        %2212 = vmatprep.subr.bf16.mxu0 0
        %2213 = vmatpush1.bf16.msra.mxu0 0
        %2214 = vmatprep.subr.bf16.mxu0 0
        %2215 = vmatpush1.bf16.msra.mxu0 0
        %2216 = vmatprep.subr.bf16.mxu0 0
        %2217 = vmatpush1.bf16.msra.mxu0 0
        %2218 = vmatprep.subr.bf16.mxu0 0
        %2219 = vmatpush1.bf16.msra.mxu0 0
        %2220 = vmatprep.subr.bf16.mxu0 0
        %2221 = vmatpush1.bf16.msra.mxu0 0
        %2222 = vmatprep.subr.bf16.mxu0 0
        %2223 = vmatpush1.bf16.msra.mxu0 0
        %2224 = vmatprep.subr.bf16.mxu0 0
        %2225 = vmatpush1.bf16.msra.mxu0 0
        %2226 = vmatprep.subr.bf16.mxu0 0
        %2227 = vmatpush1.bf16.msra.mxu0 0
        %2228 = vmatprep.subr.bf16.mxu0 0
        %2229 = vmatpush1.bf16.msra.mxu0 0
        %2230 = vmatprep.subr.bf16.mxu0 0
        %2231 = vmatpush1.bf16.msra.mxu0 0
        %2232 = vmatprep.subr.bf16.mxu0 0
        %2233 = vmatpush1.bf16.msra.mxu0 0
        %2234 = vmatprep.subr.bf16.mxu0 0
        %2235 = vmatpush1.bf16.msra.mxu0 0
        %2236 = vmatprep.mubr.bf16.mxu0 0
        %2237 = vmatmul.mubr.bf16.gmra.mrb[0].mxu0 %v2202
        %v2238 = vpop.f32.mrb[0].mxu0
        %v2239 = vadd.f32 %v2198, %v2238
        %v2240 = vpop.f32.mrb[0].mxu0
        %v2241 = vpop.f32.mrb[0].mxu0
        %v2242 = vpop.f32.mrb[0].mxu0
        %2243 = vdwg.mxu0
        %v2244 = vpack.c.bf16 %v2082, %v2081
        %v2245 = vpack.c.bf16 %v2084, %v2083
        %v2247 = vlaneseq
        %v2248 = vshrl.u32 %v2247, 7
        %v2249 = vsub.s32 0, %v2248
        %v2250 = vrot.slane %v2078, %v2249
        %2252 = vmatprep.subr.bf16.mxu0 0
        %2253 = vmatpush1.bf16.msra.mxu0 %v2244
        %2254 = vmatprep.subr.bf16.mxu0 0
        %2255 = vmatpush1.bf16.msra.mxu0 %v2245
        %2256 = vmatprep.subr.bf16.mxu0 0
        %2257 = vmatpush1.bf16.msra.mxu0 0
        %2258 = vmatprep.subr.bf16.mxu0 0
        %2259 = vmatpush1.bf16.msra.mxu0 0
        %2260 = vmatprep.subr.bf16.mxu0 0
        %2261 = vmatpush1.bf16.msra.mxu0 0
        %2262 = vmatprep.subr.bf16.mxu0 0
        %2263 = vmatpush1.bf16.msra.mxu0 0
        %2264 = vmatprep.subr.bf16.mxu0 0
        %2265 = vmatpush1.bf16.msra.mxu0 0
        %2266 = vmatprep.subr.bf16.mxu0 0
        %2267 = vmatpush1.bf16.msra.mxu0 0
        %2268 = vmatprep.subr.bf16.mxu0 0
        %2269 = vmatpush1.bf16.msra.mxu0 0
        %2270 = vmatprep.subr.bf16.mxu0 0
        %2271 = vmatpush1.bf16.msra.mxu0 0
        %2272 = vmatprep.subr.bf16.mxu0 0
        %2273 = vmatpush1.bf16.msra.mxu0 0
        %2274 = vmatprep.subr.bf16.mxu0 0
        %2275 = vmatpush1.bf16.msra.mxu0 0
        %2276 = vmatprep.subr.bf16.mxu0 0
        %2277 = vmatpush1.bf16.msra.mxu0 0
        %2278 = vmatprep.subr.bf16.mxu0 0
        %2279 = vmatpush1.bf16.msra.mxu0 0
        %2280 = vmatprep.subr.bf16.mxu0 0
        %2281 = vmatpush1.bf16.msra.mxu0 0
        %2282 = vmatprep.subr.bf16.mxu0 0
        %2283 = vmatpush1.bf16.msra.mxu0 0
        %2284 = vmatprep.mubr.bf16.mxu0 0
        %2285 = vmatmul.mubr.bf16.gmra.mrb[0].mxu0 %v2202
        %v2286 = vpop.f32.mrb[0].mxu0
        %v2287 = vadd.f32 %v2250, %v2286
        %v2288 = vpop.f32.mrb[0].mxu0
        %v2289 = vpop.f32.mrb[0].mxu0
        %v2290 = vpop.f32.mrb[0].mxu0
        %2291 = vdwg.mxu0
        %v2292 = vpack.c.bf16 %v2239, %v2239
        %v2293 = vpack.c.bf16 %v2287, %v2287
        %vm2294 = vcmask 64512
        %v2296 = vsel %vm2294, %v2292, 0
        %v2299 = vsel %vm2294, %v2293, 0
        %2301 = vmatprep.subr.bf16.mxu0 0
        %2302 = vmatpush1.bf16.xpose.msra.mxu0 %v2299
        %2303 = vmatprep.subr.bf16.mxu0 0
        %2304 = vmatpush1.bf16.xpose.msra.mxu0 0
        %2305 = vmatprep.subr.bf16.mxu0 0
        %2306 = vmatpush1.bf16.xpose.msra.mxu0 0
        %2307 = vmatprep.subr.bf16.mxu0 0
        %2308 = vmatpush1.bf16.xpose.msra.mxu0 0
        %2309 = vmatprep.subr.bf16.mxu0 0
        %2310 = vmatpush1.bf16.xpose.msra.mxu0 0
        %2311 = vmatprep.subr.bf16.mxu0 0
        %2312 = vmatpush1.bf16.xpose.msra.mxu0 0
        %2313 = vmatprep.subr.bf16.mxu0 0
        %2314 = vmatpush1.bf16.xpose.msra.mxu0 0
        %2315 = vmatprep.subr.bf16.mxu0 0
        %2316 = vmatpush1.bf16.xpose.msra.mxu0 0
        %2317 = vmatprep.subr.bf16.mxu0 0
        %2318 = vmatpush1.bf16.xpose.msra.mxu0 0
        %2319 = vmatprep.subr.bf16.mxu0 0
        %2320 = vmatpush1.bf16.xpose.msra.mxu0 0
        %2321 = vmatprep.subr.bf16.mxu0 0
        %2322 = vmatpush1.bf16.xpose.msra.mxu0 0
        %2323 = vmatprep.subr.bf16.mxu0 0
        %2324 = vmatpush1.bf16.xpose.msra.mxu0 0
        %2325 = vmatprep.subr.bf16.mxu0 0
        %2326 = vmatpush1.bf16.xpose.msra.mxu0 0
        %2327 = vmatprep.subr.bf16.mxu0 0
        %2328 = vmatpush1.bf16.xpose.msra.mxu0 0
        %2329 = vmatprep.subr.bf16.mxu0 0
        %2330 = vmatpush1.bf16.xpose.msra.mxu0 0
        %2331 = vmatprep.subr.bf16.mxu0 0
        %2332 = vmatpush1.bf16.xpose.msra.mxu0 0
        %2333 = vmatprep.mubr.bf16.mxu0 0
        %2334 = vmatmul.mubr.bf16.gmra.mrb[0].mxu0 %v2296
        %v2335 = vpop.f32.mrb[0].mxu0
        %v2336 = vadd.f32 0.0, %v2335
        %v2337 = vpop.f32.mrb[0].mxu0
        %v2338 = vpop.f32.mrb[0].mxu0
        %v2339 = vpop.f32.mrb[0].mxu0
        %2340 = vdwg.mxu0
        %v2341 = vmul.f32 %v2336, 0.35355338
        %v2343 = vlaneseq
        %v2344 = vshrl.u32 %v2343, 7
        %v2345 = vsub.s32 0, %v2344
        %v2346 = vrot.slane %v2130, %v2345
        %v2348 = vadd.f32 %v2341, %v2346
        %v2349 = vsel %vm2294, %v2348, -inf
        %2350 = vmax.xlane.f32.xlu0 %v2349
        %v2351 = vpop.xlane.xlu0 %2350
        %v2352 = vsub.f32 %v2348, %v2351
        %v2353 = vmul.f32 %v2352, 1.442695
        %v2354 = vpow.pop %v2353
        %v2355 = vsel %vm2294, %v2354, 0.0
        %2356 = vadd.xlane.f32.xlu0 %v2355
        %v2357 = vpop.xlane.xlu0 %2356
        %v2358 = vrcp.pop %v2357
        %v2359 = vmul.f32 %v2354, %v2358
        %v2360 = vpack.c.bf16 %v2359, %v2359
        %2362 = vrot.lane.b32.xlu0 %v2293, 96
        %v2363 = vpop.permute.xlu0 %2362
        %v2365 = vsel %vm2294, %v2360, 0
        %vm2367 = vcmask 1043456
        %v2369 = vsel %vm2367, %v2363, 0
        %2371 = vmatprep.subr.bf16.mxu0 0
        %2372 = vmatpush1.bf16.msra.mxu0 %v2369
        %2373 = vmatprep.subr.bf16.mxu0 0
        %2374 = vmatpush1.bf16.msra.mxu0 0
        %2375 = vmatprep.subr.bf16.mxu0 0
        %2376 = vmatpush1.bf16.msra.mxu0 0
        %2377 = vmatprep.subr.bf16.mxu0 0
        %2378 = vmatpush1.bf16.msra.mxu0 0
        %2379 = vmatprep.subr.bf16.mxu0 0
        %2380 = vmatpush1.bf16.msra.mxu0 0
        %2381 = vmatprep.subr.bf16.mxu0 0
        %2382 = vmatpush1.bf16.msra.mxu0 0
        %2383 = vmatprep.subr.bf16.mxu0 0
        %2384 = vmatpush1.bf16.msra.mxu0 0
        %2385 = vmatprep.subr.bf16.mxu0 0
        %2386 = vmatpush1.bf16.msra.mxu0 0
        %2387 = vmatprep.subr.bf16.mxu0 0
        %2388 = vmatpush1.bf16.msra.mxu0 0
        %2389 = vmatprep.subr.bf16.mxu0 0
        %2390 = vmatpush1.bf16.msra.mxu0 0
        %2391 = vmatprep.subr.bf16.mxu0 0
        %2392 = vmatpush1.bf16.msra.mxu0 0
        %2393 = vmatprep.subr.bf16.mxu0 0
        %2394 = vmatpush1.bf16.msra.mxu0 0
        %2395 = vmatprep.subr.bf16.mxu0 0
        %2396 = vmatpush1.bf16.msra.mxu0 0
        %2397 = vmatprep.subr.bf16.mxu0 0
        %2398 = vmatpush1.bf16.msra.mxu0 0
        %2399 = vmatprep.subr.bf16.mxu0 0
        %2400 = vmatpush1.bf16.msra.mxu0 0
        %2401 = vmatprep.subr.bf16.mxu0 0
        %2402 = vmatpush1.bf16.msra.mxu0 0
        %2403 = vmatprep.mubr.bf16.mxu0 0
        %2404 = vmatmul.mubr.bf16.gmra.mrb[0].mxu0 %v2365
        %v2405 = vpop.f32.mrb[0].mxu0
        %v2406 = vadd.f32 0.0, %v2405
        %v2407 = vpop.f32.mrb[0].mxu0
        %v2408 = vpop.f32.mrb[0].mxu0
        %v2409 = vpop.f32.mrb[0].mxu0
        %2410 = vdwg.mxu0
        %v2411 = vpack.c.bf16 %v2406, %v2406
        %v2412 = vpack.c.bf16 %v2085, %v2085
        %2414 = vrot.lane.b32.xlu0 %v2292, 120
        %v2415 = vpop.permute.xlu0 %2414
        %2416 = vrot.lane.b32.xlu0 %v2293, 120
        %v2417 = vpop.permute.xlu0 %2416
        %v2419 = vsel %vm2294, %v2415, 0
        %v2422 = vsel %vm2294, %v2417, 0
        %2424 = vmatprep.subr.bf16.mxu0 0
        %2425 = vmatpush1.bf16.xpose.msra.mxu0 %v2422
        %2426 = vmatprep.subr.bf16.mxu0 0
        %2427 = vmatpush1.bf16.xpose.msra.mxu0 0
        %2428 = vmatprep.subr.bf16.mxu0 0
        %2429 = vmatpush1.bf16.xpose.msra.mxu0 0
        %2430 = vmatprep.subr.bf16.mxu0 0
        %2431 = vmatpush1.bf16.xpose.msra.mxu0 0
        %2432 = vmatprep.subr.bf16.mxu0 0
        %2433 = vmatpush1.bf16.xpose.msra.mxu0 0
        %2434 = vmatprep.subr.bf16.mxu0 0
        %2435 = vmatpush1.bf16.xpose.msra.mxu0 0
        %2436 = vmatprep.subr.bf16.mxu0 0
        %2437 = vmatpush1.bf16.xpose.msra.mxu0 0
        %2438 = vmatprep.subr.bf16.mxu0 0
        %2439 = vmatpush1.bf16.xpose.msra.mxu0 0
        %2440 = vmatprep.subr.bf16.mxu0 0
        %2441 = vmatpush1.bf16.xpose.msra.mxu0 0
        %2442 = vmatprep.subr.bf16.mxu0 0
        %2443 = vmatpush1.bf16.xpose.msra.mxu0 0
        %2444 = vmatprep.subr.bf16.mxu0 0
        %2445 = vmatpush1.bf16.xpose.msra.mxu0 0
        %2446 = vmatprep.subr.bf16.mxu0 0
        %2447 = vmatpush1.bf16.xpose.msra.mxu0 0
        %2448 = vmatprep.subr.bf16.mxu0 0
        %2449 = vmatpush1.bf16.xpose.msra.mxu0 0
        %2450 = vmatprep.subr.bf16.mxu0 0
        %2451 = vmatpush1.bf16.xpose.msra.mxu0 0
        %2452 = vmatprep.subr.bf16.mxu0 0
        %2453 = vmatpush1.bf16.xpose.msra.mxu0 0
        %2454 = vmatprep.subr.bf16.mxu0 0
        %2455 = vmatpush1.bf16.xpose.msra.mxu0 0
        %2456 = vmatprep.mubr.bf16.mxu0 0
        %2457 = vmatmul.mubr.bf16.gmra.mrb[0].mxu0 %v2419
        %v2458 = vpop.f32.mrb[0].mxu0
        %v2459 = vadd.f32 0.0, %v2458
        %v2460 = vpop.f32.mrb[0].mxu0
        %v2461 = vpop.f32.mrb[0].mxu0
        %v2462 = vpop.f32.mrb[0].mxu0
        %2463 = vdwg.mxu0
        %v2464 = vmul.f32 %v2459, 0.35355338
        %v2465 = vadd.f32 %v2464, %v2346
        %v2466 = vsel %vm2294, %v2465, -inf
        %2467 = vmax.xlane.f32.xlu0 %v2466
        %v2468 = vpop.xlane.xlu0 %2467
        %v2469 = vsub.f32 %v2465, %v2468
        %v2470 = vmul.f32 %v2469, 1.442695
        %v2471 = vpow.pop %v2470
        %v2472 = vsel %vm2294, %v2471, 0.0
        %2473 = vadd.xlane.f32.xlu0 %v2472
        %v2474 = vpop.xlane.xlu0 %2473
        %v2475 = vrcp.pop %v2474
        %v2476 = vmul.f32 %v2471, %v2475
        %v2477 = vpack.c.bf16 %v2476, %v2476
        %2478 = vrot.lane.b32.xlu0 %v2293, 88
        %v2479 = vpop.permute.xlu0 %2478
        %v2481 = vsel %vm2294, %v2477, 0
        %v2484 = vsel %vm2367, %v2479, 0
        %2486 = vmatprep.subr.bf16.mxu0 0
        %2487 = vmatpush1.bf16.msra.mxu0 %v2484
        %2488 = vmatprep.subr.bf16.mxu0 0
        %2489 = vmatpush1.bf16.msra.mxu0 0
        %2490 = vmatprep.subr.bf16.mxu0 0
        %2491 = vmatpush1.bf16.msra.mxu0 0
        %2492 = vmatprep.subr.bf16.mxu0 0
        %2493 = vmatpush1.bf16.msra.mxu0 0
        %2494 = vmatprep.subr.bf16.mxu0 0
        %2495 = vmatpush1.bf16.msra.mxu0 0
        %2496 = vmatprep.subr.bf16.mxu0 0
        %2497 = vmatpush1.bf16.msra.mxu0 0
        %2498 = vmatprep.subr.bf16.mxu0 0
        %2499 = vmatpush1.bf16.msra.mxu0 0
        %2500 = vmatprep.subr.bf16.mxu0 0
        %2501 = vmatpush1.bf16.msra.mxu0 0
        %2502 = vmatprep.subr.bf16.mxu0 0
        %2503 = vmatpush1.bf16.msra.mxu0 0
        %2504 = vmatprep.subr.bf16.mxu0 0
        %2505 = vmatpush1.bf16.msra.mxu0 0
        %2506 = vmatprep.subr.bf16.mxu0 0
        %2507 = vmatpush1.bf16.msra.mxu0 0
        %2508 = vmatprep.subr.bf16.mxu0 0
        %2509 = vmatpush1.bf16.msra.mxu0 0
        %2510 = vmatprep.subr.bf16.mxu0 0
        %2511 = vmatpush1.bf16.msra.mxu0 0
        %2512 = vmatprep.subr.bf16.mxu0 0
        %2513 = vmatpush1.bf16.msra.mxu0 0
        %2514 = vmatprep.subr.bf16.mxu0 0
        %2515 = vmatpush1.bf16.msra.mxu0 0
        %2516 = vmatprep.subr.bf16.mxu0 0
        %2517 = vmatpush1.bf16.msra.mxu0 0
        %2518 = vmatprep.mubr.bf16.mxu0 0
        %2519 = vmatmul.mubr.bf16.gmra.mrb[0].mxu0 %v2481
        %v2520 = vpop.f32.mrb[0].mxu0
        %v2521 = vadd.f32 0.0, %v2520
        %v2522 = vpop.f32.mrb[0].mxu0
        %v2523 = vpop.f32.mrb[0].mxu0
        %v2524 = vpop.f32.mrb[0].mxu0
        %2525 = vdwg.mxu0
        %v2526 = vpack.c.bf16 %v2521, %v2521
        %v2527 = vpack.c.bf16 %v2086, %v2086
        %v2529 = vsel %vm2294, %v2526, 0
        %v2532 = vsel %vm2367, %v2527, 0
        %2534 = vmatprep.subr.bf16.mxu0 0
        %2535 = vmatpush1.bf16.msra.mxu0 %v2532
        %2536 = vmatprep.subr.bf16.mxu0 0
        %2537 = vmatpush1.bf16.msra.mxu0 0
        %2538 = vmatprep.subr.bf16.mxu0 0
        %2539 = vmatpush1.bf16.msra.mxu0 0
        %2540 = vmatprep.subr.bf16.mxu0 0
        %2541 = vmatpush1.bf16.msra.mxu0 0
        %2542 = vmatprep.subr.bf16.mxu0 0
        %2543 = vmatpush1.bf16.msra.mxu0 0
        %2544 = vmatprep.subr.bf16.mxu0 0
        %2545 = vmatpush1.bf16.msra.mxu0 0
        %2546 = vmatprep.subr.bf16.mxu0 0
        %2547 = vmatpush1.bf16.msra.mxu0 0
        %2548 = vmatprep.subr.bf16.mxu0 0
        %2549 = vmatpush1.bf16.msra.mxu0 0
        %2550 = vmatprep.subr.bf16.mxu0 0
        %2551 = vmatpush1.bf16.msra.mxu0 0
        %2552 = vmatprep.subr.bf16.mxu0 0
        %2553 = vmatpush1.bf16.msra.mxu0 0
        %2554 = vmatprep.subr.bf16.mxu0 0
        %2555 = vmatpush1.bf16.msra.mxu0 0
        %2556 = vmatprep.subr.bf16.mxu0 0
        %2557 = vmatpush1.bf16.msra.mxu0 0
        %2558 = vmatprep.subr.bf16.mxu0 0
        %2559 = vmatpush1.bf16.msra.mxu0 0
        %2560 = vmatprep.subr.bf16.mxu0 0
        %2561 = vmatpush1.bf16.msra.mxu0 0
        %2562 = vmatprep.subr.bf16.mxu0 0
        %2563 = vmatpush1.bf16.msra.mxu0 0
        %2564 = vmatprep.subr.bf16.mxu0 0
        %2565 = vmatpush1.bf16.msra.mxu0 0
        %2566 = vmatprep.mubr.bf16.mxu0 0
        %2567 = vmatmul.mubr.bf16.gmra.mrb[0].mxu0 %v2529
        %v2568 = vpop.f32.mrb[0].mxu0
        %v2569 = vadd.f32 0.0, %v2568
        %v2570 = vpop.f32.mrb[0].mxu0
        %v2571 = vpop.f32.mrb[0].mxu0
        %v2572 = vpop.f32.mrb[0].mxu0
        %2573 = vdwg.mxu0
        %v2575 = vsel %vm2294, %v2411, 0
        %v2578 = vsel %vm2367, %v2412, 0
        %2580 = vmatprep.subr.bf16.mxu0 0
        %2581 = vmatpush1.bf16.msra.mxu0 %v2578
        %2582 = vmatprep.subr.bf16.mxu0 0
        %2583 = vmatpush1.bf16.msra.mxu0 0
        %2584 = vmatprep.subr.bf16.mxu0 0
        %2585 = vmatpush1.bf16.msra.mxu0 0
        %2586 = vmatprep.subr.bf16.mxu0 0
        %2587 = vmatpush1.bf16.msra.mxu0 0
        %2588 = vmatprep.subr.bf16.mxu0 0
        %2589 = vmatpush1.bf16.msra.mxu0 0
        %2590 = vmatprep.subr.bf16.mxu0 0
        %2591 = vmatpush1.bf16.msra.mxu0 0
        %2592 = vmatprep.subr.bf16.mxu0 0
        %2593 = vmatpush1.bf16.msra.mxu0 0
        %2594 = vmatprep.subr.bf16.mxu0 0
        %2595 = vmatpush1.bf16.msra.mxu0 0
        %2596 = vmatprep.subr.bf16.mxu0 0
        %2597 = vmatpush1.bf16.msra.mxu0 0
        %2598 = vmatprep.subr.bf16.mxu0 0
        %2599 = vmatpush1.bf16.msra.mxu0 0
        %2600 = vmatprep.subr.bf16.mxu0 0
        %2601 = vmatpush1.bf16.msra.mxu0 0
        %2602 = vmatprep.subr.bf16.mxu0 0
        %2603 = vmatpush1.bf16.msra.mxu0 0
        %2604 = vmatprep.subr.bf16.mxu0 0
        %2605 = vmatpush1.bf16.msra.mxu0 0
        %2606 = vmatprep.subr.bf16.mxu0 0
        %2607 = vmatpush1.bf16.msra.mxu0 0
        %2608 = vmatprep.subr.bf16.mxu0 0
        %2609 = vmatpush1.bf16.msra.mxu0 0
        %2610 = vmatprep.subr.bf16.mxu0 0
        %2611 = vmatpush1.bf16.msra.mxu0 0
        %2612 = vmatprep.mubr.bf16.mxu0 0
        %2613 = vmatmul.mubr.bf16.gmra.mrb[0].mxu0 %v2575
        %v2614 = vpop.f32.mrb[0].mxu0
        %v2615 = vadd.f32 %v2569, %v2614
        %v2616 = vpop.f32.mrb[0].mxu0
        %v2617 = vpop.f32.mrb[0].mxu0
        %v2618 = vpop.f32.mrb[0].mxu0
        %2619 = vdwg.mxu0
        %2620 = vrot.lane.b32.xlu0 %v2292, 112
        %v2621 = vpop.permute.xlu0 %2620
        %2622 = vrot.lane.b32.xlu0 %v2293, 112
        %v2623 = vpop.permute.xlu0 %2622
        %v2625 = vsel %vm2294, %v2621, 0
        %v2628 = vsel %vm2294, %v2623, 0
        %2630 = vmatprep.subr.bf16.mxu0 0
        %2631 = vmatpush1.bf16.xpose.msra.mxu0 %v2628
        %2632 = vmatprep.subr.bf16.mxu0 0
        %2633 = vmatpush1.bf16.xpose.msra.mxu0 0
        %2634 = vmatprep.subr.bf16.mxu0 0
        %2635 = vmatpush1.bf16.xpose.msra.mxu0 0
        %2636 = vmatprep.subr.bf16.mxu0 0
        %2637 = vmatpush1.bf16.xpose.msra.mxu0 0
        %2638 = vmatprep.subr.bf16.mxu0 0
        %2639 = vmatpush1.bf16.xpose.msra.mxu0 0
        %2640 = vmatprep.subr.bf16.mxu0 0
        %2641 = vmatpush1.bf16.xpose.msra.mxu0 0
        %2642 = vmatprep.subr.bf16.mxu0 0
        %2643 = vmatpush1.bf16.xpose.msra.mxu0 0
        %2644 = vmatprep.subr.bf16.mxu0 0
        %2645 = vmatpush1.bf16.xpose.msra.mxu0 0
        %2646 = vmatprep.subr.bf16.mxu0 0
        %2647 = vmatpush1.bf16.xpose.msra.mxu0 0
        %2648 = vmatprep.subr.bf16.mxu0 0
        %2649 = vmatpush1.bf16.xpose.msra.mxu0 0
        %2650 = vmatprep.subr.bf16.mxu0 0
        %2651 = vmatpush1.bf16.xpose.msra.mxu0 0
        %2652 = vmatprep.subr.bf16.mxu0 0
        %2653 = vmatpush1.bf16.xpose.msra.mxu0 0
        %2654 = vmatprep.subr.bf16.mxu0 0
        %2655 = vmatpush1.bf16.xpose.msra.mxu0 0
        %2656 = vmatprep.subr.bf16.mxu0 0
        %2657 = vmatpush1.bf16.xpose.msra.mxu0 0
        %2658 = vmatprep.subr.bf16.mxu0 0
        %2659 = vmatpush1.bf16.xpose.msra.mxu0 0
        %2660 = vmatprep.subr.bf16.mxu0 0
        %2661 = vmatpush1.bf16.xpose.msra.mxu0 0
        %2662 = vmatprep.mubr.bf16.mxu0 0
        %2663 = vmatmul.mubr.bf16.gmra.mrb[0].mxu0 %v2625
        %v2664 = vpop.f32.mrb[0].mxu0
        %v2665 = vadd.f32 0.0, %v2664
        %v2666 = vpop.f32.mrb[0].mxu0
        %v2667 = vpop.f32.mrb[0].mxu0
        %v2668 = vpop.f32.mrb[0].mxu0
        %2669 = vdwg.mxu0
        %v2670 = vmul.f32 %v2665, 0.35355338
        %v2671 = vadd.f32 %v2670, %v2346
        %v2672 = vsel %vm2294, %v2671, -inf
        %2673 = vmax.xlane.f32.xlu0 %v2672
        %v2674 = vpop.xlane.xlu0 %2673
        %v2675 = vsub.f32 %v2671, %v2674
        %v2676 = vmul.f32 %v2675, 1.442695
        %v2677 = vpow.pop %v2676
        %v2678 = vsel %vm2294, %v2677, 0.0
        %2679 = vadd.xlane.f32.xlu0 %v2678
        %v2680 = vpop.xlane.xlu0 %2679
        %v2681 = vrcp.pop %v2680
        %v2682 = vmul.f32 %v2677, %v2681
        %v2683 = vpack.c.bf16 %v2682, %v2682
        %2684 = vrot.lane.b32.xlu0 %v2293, 80
        %v2685 = vpop.permute.xlu0 %2684
        %v2687 = vsel %vm2294, %v2683, 0
        %v2690 = vsel %vm2367, %v2685, 0
        %2692 = vmatprep.subr.bf16.mxu0 0
        %2693 = vmatpush1.bf16.msra.mxu0 %v2690
        %2694 = vmatprep.subr.bf16.mxu0 0
        %2695 = vmatpush1.bf16.msra.mxu0 0
        %2696 = vmatprep.subr.bf16.mxu0 0
        %2697 = vmatpush1.bf16.msra.mxu0 0
        %2698 = vmatprep.subr.bf16.mxu0 0
        %2699 = vmatpush1.bf16.msra.mxu0 0
        %2700 = vmatprep.subr.bf16.mxu0 0
        %2701 = vmatpush1.bf16.msra.mxu0 0
        %2702 = vmatprep.subr.bf16.mxu0 0
        %2703 = vmatpush1.bf16.msra.mxu0 0
        %2704 = vmatprep.subr.bf16.mxu0 0
        %2705 = vmatpush1.bf16.msra.mxu0 0
        %2706 = vmatprep.subr.bf16.mxu0 0
        %2707 = vmatpush1.bf16.msra.mxu0 0
        %2708 = vmatprep.subr.bf16.mxu0 0
        %2709 = vmatpush1.bf16.msra.mxu0 0
        %2710 = vmatprep.subr.bf16.mxu0 0
        %2711 = vmatpush1.bf16.msra.mxu0 0
        %2712 = vmatprep.subr.bf16.mxu0 0
        %2713 = vmatpush1.bf16.msra.mxu0 0
        %2714 = vmatprep.subr.bf16.mxu0 0
        %2715 = vmatpush1.bf16.msra.mxu0 0
        %2716 = vmatprep.subr.bf16.mxu0 0
        %2717 = vmatpush1.bf16.msra.mxu0 0
        %2718 = vmatprep.subr.bf16.mxu0 0
        %2719 = vmatpush1.bf16.msra.mxu0 0
        %2720 = vmatprep.subr.bf16.mxu0 0
        %2721 = vmatpush1.bf16.msra.mxu0 0
        %2722 = vmatprep.subr.bf16.mxu0 0
        %2723 = vmatpush1.bf16.msra.mxu0 0
        %2724 = vmatprep.mubr.bf16.mxu0 0
        %2725 = vmatmul.mubr.bf16.gmra.mrb[0].mxu0 %v2687
        %v2726 = vpop.f32.mrb[0].mxu0
        %v2727 = vadd.f32 0.0, %v2726
        %v2728 = vpop.f32.mrb[0].mxu0
        %v2729 = vpop.f32.mrb[0].mxu0
        %v2730 = vpop.f32.mrb[0].mxu0
        %2731 = vdwg.mxu0
        %v2732 = vpack.c.bf16 %v2727, %v2727
        %v2733 = vpack.c.bf16 %v2087, %v2087
        %v2735 = vsel %vm2294, %v2732, 0
        %v2738 = vsel %vm2367, %v2733, 0
        %2740 = vmatprep.subr.bf16.mxu0 0
        %2741 = vmatpush1.bf16.msra.mxu0 %v2738
        %2742 = vmatprep.subr.bf16.mxu0 0
        %2743 = vmatpush1.bf16.msra.mxu0 0
        %2744 = vmatprep.subr.bf16.mxu0 0
        %2745 = vmatpush1.bf16.msra.mxu0 0
        %2746 = vmatprep.subr.bf16.mxu0 0
        %2747 = vmatpush1.bf16.msra.mxu0 0
        %2748 = vmatprep.subr.bf16.mxu0 0
        %2749 = vmatpush1.bf16.msra.mxu0 0
        %2750 = vmatprep.subr.bf16.mxu0 0
        %2751 = vmatpush1.bf16.msra.mxu0 0
        %2752 = vmatprep.subr.bf16.mxu0 0
        %2753 = vmatpush1.bf16.msra.mxu0 0
        %2754 = vmatprep.subr.bf16.mxu0 0
        %2755 = vmatpush1.bf16.msra.mxu0 0
        %2756 = vmatprep.subr.bf16.mxu0 0
        %2757 = vmatpush1.bf16.msra.mxu0 0
        %2758 = vmatprep.subr.bf16.mxu0 0
        %2759 = vmatpush1.bf16.msra.mxu0 0
        %2760 = vmatprep.subr.bf16.mxu0 0
        %2761 = vmatpush1.bf16.msra.mxu0 0
        %2762 = vmatprep.subr.bf16.mxu0 0
        %2763 = vmatpush1.bf16.msra.mxu0 0
        %2764 = vmatprep.subr.bf16.mxu0 0
        %2765 = vmatpush1.bf16.msra.mxu0 0
        %2766 = vmatprep.subr.bf16.mxu0 0
        %2767 = vmatpush1.bf16.msra.mxu0 0
        %2768 = vmatprep.subr.bf16.mxu0 0
        %2769 = vmatpush1.bf16.msra.mxu0 0
        %2770 = vmatprep.subr.bf16.mxu0 0
        %2771 = vmatpush1.bf16.msra.mxu0 0
        %2772 = vmatprep.mubr.bf16.mxu0 0
        %2773 = vmatmul.mubr.bf16.gmra.mrb[0].mxu0 %v2735
        %v2774 = vpop.f32.mrb[0].mxu0
        %v2775 = vadd.f32 0.0, %v2774
        %v2776 = vpop.f32.mrb[0].mxu0
        %v2777 = vpop.f32.mrb[0].mxu0
        %v2778 = vpop.f32.mrb[0].mxu0
        %2779 = vdwg.mxu0
        %v2780 = vadd.f32 %v2615, %v2775
        %2781 = vrot.lane.b32.xlu0 %v2292, 104
        %v2782 = vpop.permute.xlu0 %2781
        %2783 = vrot.lane.b32.xlu0 %v2293, 104
        %v2784 = vpop.permute.xlu0 %2783
        %v2786 = vsel %vm2294, %v2782, 0
        %v2789 = vsel %vm2294, %v2784, 0
        %2791 = vmatprep.subr.bf16.mxu0 0
        %2792 = vmatpush1.bf16.xpose.msra.mxu0 %v2789
        %2793 = vmatprep.subr.bf16.mxu0 0
        %2794 = vmatpush1.bf16.xpose.msra.mxu0 0
        %2795 = vmatprep.subr.bf16.mxu0 0
        %2796 = vmatpush1.bf16.xpose.msra.mxu0 0
        %2797 = vmatprep.subr.bf16.mxu0 0
        %2798 = vmatpush1.bf16.xpose.msra.mxu0 0
        %2799 = vmatprep.subr.bf16.mxu0 0
        %2800 = vmatpush1.bf16.xpose.msra.mxu0 0
        %2801 = vmatprep.subr.bf16.mxu0 0
        %2802 = vmatpush1.bf16.xpose.msra.mxu0 0
        %2803 = vmatprep.subr.bf16.mxu0 0
        %2804 = vmatpush1.bf16.xpose.msra.mxu0 0
        %2805 = vmatprep.subr.bf16.mxu0 0
        %2806 = vmatpush1.bf16.xpose.msra.mxu0 0
        %2807 = vmatprep.subr.bf16.mxu0 0
        %2808 = vmatpush1.bf16.xpose.msra.mxu0 0
        %2809 = vmatprep.subr.bf16.mxu0 0
        %2810 = vmatpush1.bf16.xpose.msra.mxu0 0
        %2811 = vmatprep.subr.bf16.mxu0 0
        %2812 = vmatpush1.bf16.xpose.msra.mxu0 0
        %2813 = vmatprep.subr.bf16.mxu0 0
        %2814 = vmatpush1.bf16.xpose.msra.mxu0 0
        %2815 = vmatprep.subr.bf16.mxu0 0
        %2816 = vmatpush1.bf16.xpose.msra.mxu0 0
        %2817 = vmatprep.subr.bf16.mxu0 0
        %2818 = vmatpush1.bf16.xpose.msra.mxu0 0
        %2819 = vmatprep.subr.bf16.mxu0 0
        %2820 = vmatpush1.bf16.xpose.msra.mxu0 0
        %2821 = vmatprep.subr.bf16.mxu0 0
        %2822 = vmatpush1.bf16.xpose.msra.mxu0 0
        %2823 = vmatprep.mubr.bf16.mxu0 0
        %2824 = vmatmul.mubr.bf16.gmra.mrb[0].mxu0 %v2786
        %v2825 = vpop.f32.mrb[0].mxu0
        %v2826 = vadd.f32 0.0, %v2825
        %v2827 = vpop.f32.mrb[0].mxu0
        %v2828 = vpop.f32.mrb[0].mxu0
        %v2829 = vpop.f32.mrb[0].mxu0
        %2830 = vdwg.mxu0
        %v2831 = vmul.f32 %v2826, 0.35355338
        %v2832 = vadd.f32 %v2831, %v2346
        %v2833 = vsel %vm2294, %v2832, -inf
        %2834 = vmax.xlane.f32.xlu0 %v2833
        %v2835 = vpop.xlane.xlu0 %2834
        %v2836 = vsub.f32 %v2832, %v2835
        %v2837 = vmul.f32 %v2836, 1.442695
        %v2838 = vpow.pop %v2837
        %v2839 = vsel %vm2294, %v2838, 0.0
        %2840 = vadd.xlane.f32.xlu0 %v2839
        %v2841 = vpop.xlane.xlu0 %2840
        %v2842 = vrcp.pop %v2841
        %v2843 = vmul.f32 %v2838, %v2842
        %v2844 = vpack.c.bf16 %v2843, %v2843
        %2845 = vrot.lane.b32.xlu0 %v2293, 72
        %v2846 = vpop.permute.xlu0 %2845
        %v2848 = vsel %vm2294, %v2844, 0
        %v2851 = vsel %vm2367, %v2846, 0
        %2853 = vmatprep.subr.bf16.mxu0 0
        %2854 = vmatpush1.bf16.msra.mxu0 %v2851
        %2855 = vmatprep.subr.bf16.mxu0 0
        %2856 = vmatpush1.bf16.msra.mxu0 0
        %2857 = vmatprep.subr.bf16.mxu0 0
        %2858 = vmatpush1.bf16.msra.mxu0 0
        %2859 = vmatprep.subr.bf16.mxu0 0
        %2860 = vmatpush1.bf16.msra.mxu0 0
        %2861 = vmatprep.subr.bf16.mxu0 0
        %2862 = vmatpush1.bf16.msra.mxu0 0
        %2863 = vmatprep.subr.bf16.mxu0 0
        %2864 = vmatpush1.bf16.msra.mxu0 0
        %2865 = vmatprep.subr.bf16.mxu0 0
        %2866 = vmatpush1.bf16.msra.mxu0 0
        %2867 = vmatprep.subr.bf16.mxu0 0
        %2868 = vmatpush1.bf16.msra.mxu0 0
        %2869 = vmatprep.subr.bf16.mxu0 0
        %2870 = vmatpush1.bf16.msra.mxu0 0
        %2871 = vmatprep.subr.bf16.mxu0 0
        %2872 = vmatpush1.bf16.msra.mxu0 0
        %2873 = vmatprep.subr.bf16.mxu0 0
        %2874 = vmatpush1.bf16.msra.mxu0 0
        %2875 = vmatprep.subr.bf16.mxu0 0
        %2876 = vmatpush1.bf16.msra.mxu0 0
        %2877 = vmatprep.subr.bf16.mxu0 0
        %2878 = vmatpush1.bf16.msra.mxu0 0
        %2879 = vmatprep.subr.bf16.mxu0 0
        %2880 = vmatpush1.bf16.msra.mxu0 0
        %2881 = vmatprep.subr.bf16.mxu0 0
        %2882 = vmatpush1.bf16.msra.mxu0 0
        %2883 = vmatprep.subr.bf16.mxu0 0
        %2884 = vmatpush1.bf16.msra.mxu0 0
        %2885 = vmatprep.mubr.bf16.mxu0 0
        %2886 = vmatmul.mubr.bf16.gmra.mrb[0].mxu0 %v2848
        %v2887 = vpop.f32.mrb[0].mxu0
        %v2888 = vadd.f32 0.0, %v2887
        %v2889 = vpop.f32.mrb[0].mxu0
        %v2890 = vpop.f32.mrb[0].mxu0
        %v2891 = vpop.f32.mrb[0].mxu0
        %2892 = vdwg.mxu0
        %v2893 = vpack.c.bf16 %v2888, %v2888
        %v2894 = vpack.c.bf16 %v2088, %v2088
        %v2896 = vsel %vm2294, %v2893, 0
        %v2899 = vsel %vm2367, %v2894, 0
        %2901 = vmatprep.subr.bf16.mxu0 0
        %2902 = vmatpush1.bf16.msra.mxu0 %v2899
        %2903 = vmatprep.subr.bf16.mxu0 0
        %2904 = vmatpush1.bf16.msra.mxu0 0
        %2905 = vmatprep.subr.bf16.mxu0 0
        %2906 = vmatpush1.bf16.msra.mxu0 0
        %2907 = vmatprep.subr.bf16.mxu0 0
        %2908 = vmatpush1.bf16.msra.mxu0 0
        %2909 = vmatprep.subr.bf16.mxu0 0
        %2910 = vmatpush1.bf16.msra.mxu0 0
        %2911 = vmatprep.subr.bf16.mxu0 0
        %2912 = vmatpush1.bf16.msra.mxu0 0
        %2913 = vmatprep.subr.bf16.mxu0 0
        %2914 = vmatpush1.bf16.msra.mxu0 0
        %2915 = vmatprep.subr.bf16.mxu0 0
        %2916 = vmatpush1.bf16.msra.mxu0 0
        %2917 = vmatprep.subr.bf16.mxu0 0
        %2918 = vmatpush1.bf16.msra.mxu0 0
        %2919 = vmatprep.subr.bf16.mxu0 0
        %2920 = vmatpush1.bf16.msra.mxu0 0
        %2921 = vmatprep.subr.bf16.mxu0 0
        %2922 = vmatpush1.bf16.msra.mxu0 0
        %2923 = vmatprep.subr.bf16.mxu0 0
        %2924 = vmatpush1.bf16.msra.mxu0 0
        %2925 = vmatprep.subr.bf16.mxu0 0
        %2926 = vmatpush1.bf16.msra.mxu0 0
        %2927 = vmatprep.subr.bf16.mxu0 0
        %2928 = vmatpush1.bf16.msra.mxu0 0
        %2929 = vmatprep.subr.bf16.mxu0 0
        %2930 = vmatpush1.bf16.msra.mxu0 0
        %2931 = vmatprep.subr.bf16.mxu0 0
        %2932 = vmatpush1.bf16.msra.mxu0 0
        %2933 = vmatprep.mubr.bf16.mxu0 0
        %2934 = vmatmul.mubr.bf16.gmra.mrb[0].mxu0 %v2896
        %v2935 = vpop.f32.mrb[0].mxu0
        %v2936 = vadd.f32 0.0, %v2935
        %v2937 = vpop.f32.mrb[0].mxu0
        %v2938 = vpop.f32.mrb[0].mxu0
        %v2939 = vpop.f32.mrb[0].mxu0
        %2940 = vdwg.mxu0
        %v2941 = vadd.f32 %v2780, %v2936
        %v2943 = vlaneseq
        %v2944 = vshrl.u32 %v2943, 7
        %v2945 = vsub.s32 0, %v2944
        %v2946 = vrot.slane %v2079, %v2945
        %v2948 = vadd.f32 %v2941, %v2946
        %v2949 = vadd.f32 %v2190, %v2948
        %v2950 = vsel %vm2200, %v2949, 0.0
        %2951 = vadd.xlane.f32.xlu0 %v2950
        %v2952 = vpop.xlane.xlu0 %2951
        %v2953 = vrcp.pop 32.0
        %v2954 = vmul.f32 %v2952, %v2953
        %v2955 = vsub.f32 %v2949, %v2954
        %v2956 = vmul.f32 %v2955, %v2955
        %v2957 = vsel %vm2200, %v2956, 0.0
        %2958 = vadd.xlane.f32.xlu0 %v2957
        %v2959 = vpop.xlane.xlu0 %2958
        %v2960 = vmul.f32 %v2959, %v2953
        %v2961 = vadd.f32 %v2960, 1e-05
        %v2962 = vrsqrt.pop %v2961
        %v2963 = vmul.f32 %v2955, %v2962
        %v2965 = vlaneseq
        %v2966 = vshrl.u32 %v2965, 7
        %v2967 = vsub.s32 0, %v2966
        %v2968 = vrot.slane %v2096, %v2967
        %v2970 = vmul.f32 %v2963, %v2968
        %v2972 = vlaneseq
        %v2973 = vshrl.u32 %v2972, 7
        %v2974 = vsub.s32 0, %v2973
        %v2975 = vrot.slane %v2095, %v2974
        %v2977 = vadd.f32 %v2970, %v2975
        %v2978 = vpack.c.bf16 %v2977, %v2977
        %v2979 = vpack.c.bf16 %v2100, %v2099
        %v2980 = vpack.c.bf16 %v2102, %v2101
        %v2982 = vlaneseq
        %v2983 = vshrl.u32 %v2982, 7
        %v2984 = vsub.s32 0, %v2983
        %v2985 = vrot.slane %v2093, %v2984
        %v2988 = vsel %vm2200, %v2978, 0
        %2990 = vmatprep.subr.bf16.mxu0 0
        %2991 = vmatpush1.bf16.msra.mxu0 %v2979
        %2992 = vmatprep.subr.bf16.mxu0 0
        %2993 = vmatpush1.bf16.msra.mxu0 %v2980
        %2994 = vmatprep.subr.bf16.mxu0 0
        %2995 = vmatpush1.bf16.msra.mxu0 0
        %2996 = vmatprep.subr.bf16.mxu0 0
        %2997 = vmatpush1.bf16.msra.mxu0 0
        %2998 = vmatprep.subr.bf16.mxu0 0
        %2999 = vmatpush1.bf16.msra.mxu0 0
        %3000 = vmatprep.subr.bf16.mxu0 0
        %3001 = vmatpush1.bf16.msra.mxu0 0
        %3002 = vmatprep.subr.bf16.mxu0 0
        %3003 = vmatpush1.bf16.msra.mxu0 0
        %3004 = vmatprep.subr.bf16.mxu0 0
        %3005 = vmatpush1.bf16.msra.mxu0 0
        %3006 = vmatprep.subr.bf16.mxu0 0
        %3007 = vmatpush1.bf16.msra.mxu0 0
        %3008 = vmatprep.subr.bf16.mxu0 0
        %3009 = vmatpush1.bf16.msra.mxu0 0
        %3010 = vmatprep.subr.bf16.mxu0 0
        %3011 = vmatpush1.bf16.msra.mxu0 0
        %3012 = vmatprep.subr.bf16.mxu0 0
        %3013 = vmatpush1.bf16.msra.mxu0 0
        %3014 = vmatprep.subr.bf16.mxu0 0
        %3015 = vmatpush1.bf16.msra.mxu0 0
        %3016 = vmatprep.subr.bf16.mxu0 0
        %3017 = vmatpush1.bf16.msra.mxu0 0
        %3018 = vmatprep.subr.bf16.mxu0 0
        %3019 = vmatpush1.bf16.msra.mxu0 0
        %3020 = vmatprep.subr.bf16.mxu0 0
        %3021 = vmatpush1.bf16.msra.mxu0 0
        %3022 = vmatprep.mubr.bf16.mxu0 0
        %3023 = vmatmul.mubr.bf16.gmra.mrb[0].mxu0 %v2988
        %v3024 = vpop.f32.mrb[0].mxu0
        %v3025 = vadd.f32 %v2985, %v3024
        %v3026 = vpop.f32.mrb[0].mxu0
        %v3027 = vpop.f32.mrb[0].mxu0
        %v3028 = vpop.f32.mrb[0].mxu0
        %3029 = vdwg.mxu0
        %v3030 = vmax.f32 %v3025, 0.0
        %v3031 = vpack.c.bf16 %v3030, %v3030
        %v3032 = vpack.c.bf16 %v2104, %v2103
        %v3033 = vpack.c.bf16 %v2106, %v2105
        %v3034 = vpack.c.bf16 %v2108, %v2107
        %v3035 = vpack.c.bf16 %v2110, %v2109
        %v3037 = vlaneseq
        %v3038 = vshrl.u32 %v3037, 7
        %v3039 = vsub.s32 0, %v3038
        %v3040 = vrot.slane %v2094, %v3039
        %vm3042 = vcmask 523264
        %v3044 = vsel %vm3042, %v3031, 0
        %3046 = vmatprep.subr.bf16.mxu0 0
        %3047 = vmatpush1.bf16.msra.mxu0 %v3032
        %3048 = vmatprep.subr.bf16.mxu0 0
        %3049 = vmatpush1.bf16.msra.mxu0 %v3033
        %3050 = vmatprep.subr.bf16.mxu0 0
        %3051 = vmatpush1.bf16.msra.mxu0 %v3034
        %3052 = vmatprep.subr.bf16.mxu0 0
        %3053 = vmatpush1.bf16.msra.mxu0 %v3035
        %3054 = vmatprep.subr.bf16.mxu0 0
        %3055 = vmatpush1.bf16.msra.mxu0 0
        %3056 = vmatprep.subr.bf16.mxu0 0
        %3057 = vmatpush1.bf16.msra.mxu0 0
        %3058 = vmatprep.subr.bf16.mxu0 0
        %3059 = vmatpush1.bf16.msra.mxu0 0
        %3060 = vmatprep.subr.bf16.mxu0 0
        %3061 = vmatpush1.bf16.msra.mxu0 0
        %3062 = vmatprep.subr.bf16.mxu0 0
        %3063 = vmatpush1.bf16.msra.mxu0 0
        %3064 = vmatprep.subr.bf16.mxu0 0
        %3065 = vmatpush1.bf16.msra.mxu0 0
        %3066 = vmatprep.subr.bf16.mxu0 0
        %3067 = vmatpush1.bf16.msra.mxu0 0
        %3068 = vmatprep.subr.bf16.mxu0 0
        %3069 = vmatpush1.bf16.msra.mxu0 0
        %3070 = vmatprep.subr.bf16.mxu0 0
        %3071 = vmatpush1.bf16.msra.mxu0 0
        %3072 = vmatprep.subr.bf16.mxu0 0
        %3073 = vmatpush1.bf16.msra.mxu0 0
        %3074 = vmatprep.subr.bf16.mxu0 0
        %3075 = vmatpush1.bf16.msra.mxu0 0
        %3076 = vmatprep.subr.bf16.mxu0 0
        %3077 = vmatpush1.bf16.msra.mxu0 0
        %3078 = vmatprep.mubr.bf16.mxu0 0
        %3079 = vmatmul.mubr.bf16.gmra.mrb[0].mxu0 %v3044
        %v3080 = vpop.f32.mrb[0].mxu0
        %v3081 = vadd.f32 %v3040, %v3080
        %v3082 = vpop.f32.mrb[0].mxu0
        %v3083 = vpop.f32.mrb[0].mxu0
        %v3084 = vpop.f32.mrb[0].mxu0
        %3085 = vdwg.mxu0
        %v3086 = vadd.f32 %v2977, %v3081
        %v3087 = vsel %vm2200, %v3086, 0.0
        %3088 = vadd.xlane.f32.xlu0 %v3087
        %v3089 = vpop.xlane.xlu0 %3088
        %v3090 = vmul.f32 %v3089, %v2953
        %v3091 = vsub.f32 %v3086, %v3090
        %v3092 = vmul.f32 %v3091, %v3091
        %v3093 = vsel %vm2200, %v3092, 0.0
        %3094 = vadd.xlane.f32.xlu0 %v3093
        %v3095 = vpop.xlane.xlu0 %3094
        %v3096 = vmul.f32 %v3095, %v2953
        %v3097 = vadd.f32 %v3096, 1e-05
        %v3098 = vrsqrt.pop %v3097
        %v3099 = vmul.f32 %v3091, %v3098
        %v3101 = vlaneseq
        %v3102 = vshrl.u32 %v3101, 7
        %v3103 = vsub.s32 0, %v3102
        %v3104 = vrot.slane %v2098, %v3103
        %v3106 = vmul.f32 %v3099, %v3104
        %v3108 = vlaneseq
        %v3109 = vshrl.u32 %v3108, 7
        %v3110 = vsub.s32 0, %v3109
        %v3111 = vrot.slane %v2097, %v3110
        %v3113 = vadd.f32 %v3106, %v3111
        %v3114 = vsel %vm2200, %v3113, 0.0
        %3115 = vadd.xlane.f32.xlu0 %v3114
        %v3116 = vpop.xlane.xlu0 %3115
        %v3117 = vmul.f32 %v3116, %v2953
        %v3118 = vsub.f32 %v3113, %v3117
        %v3119 = vmul.f32 %v3118, %v3118
        %v3120 = vsel %vm2200, %v3119, 0.0
        %3121 = vadd.xlane.f32.xlu0 %v3120
        %v3122 = vpop.xlane.xlu0 %3121
        %v3123 = vmul.f32 %v3122, %v2953
        %v3124 = vadd.f32 %v3123, 1e-05
        %v3125 = vrsqrt.pop %v3124
        %v3126 = vmul.f32 %v3118, %v3125
        %v3128 = vlaneseq
        %v3129 = vshrl.u32 %v3128, 7
        %v3130 = vsub.s32 0, %v3129
        %v3131 = vrot.slane %v2112, %v3130
        %v3133 = vmul.f32 %v3126, %v3131
        %v3135 = vlaneseq
        %v3136 = vshrl.u32 %v3135, 7
        %v3137 = vsub.s32 0, %v3136
        %v3138 = vrot.slane %v2111, %v3137
        %v3140 = vadd.f32 %v3133, %v3138
        %v3141 = vpack.c.bf16 %v2127, %v2126
        %v3142 = vpack.c.bf16 %v2025, %v2025
        %v3144 = vlaneseq
        %v3145 = vshrl.u32 %v3144, 7
        %v3146 = vsub.s32 0, %v3145
        %v3147 = vrot.slane %v2024, %v3146
        %v3150 = vsel %vm2142, %v3141, 0
        %v3153 = vsel %vm2146, %v3142, 0
        %3155 = vmatprep.subr.bf16.mxu0 0
        %3156 = vmatpush1.bf16.msra.mxu0 %v3153
        %3157 = vmatprep.subr.bf16.mxu0 0
        %3158 = vmatpush1.bf16.msra.mxu0 0
        %3159 = vmatprep.subr.bf16.mxu0 0
        %3160 = vmatpush1.bf16.msra.mxu0 0
        %3161 = vmatprep.subr.bf16.mxu0 0
        %3162 = vmatpush1.bf16.msra.mxu0 0
        %3163 = vmatprep.subr.bf16.mxu0 0
        %3164 = vmatpush1.bf16.msra.mxu0 0
        %3165 = vmatprep.subr.bf16.mxu0 0
        %3166 = vmatpush1.bf16.msra.mxu0 0
        %3167 = vmatprep.subr.bf16.mxu0 0
        %3168 = vmatpush1.bf16.msra.mxu0 0
        %3169 = vmatprep.subr.bf16.mxu0 0
        %3170 = vmatpush1.bf16.msra.mxu0 0
        %3171 = vmatprep.subr.bf16.mxu0 0
        %3172 = vmatpush1.bf16.msra.mxu0 0
        %3173 = vmatprep.subr.bf16.mxu0 0
        %3174 = vmatpush1.bf16.msra.mxu0 0
        %3175 = vmatprep.subr.bf16.mxu0 0
        %3176 = vmatpush1.bf16.msra.mxu0 0
        %3177 = vmatprep.subr.bf16.mxu0 0
        %3178 = vmatpush1.bf16.msra.mxu0 0
        %3179 = vmatprep.subr.bf16.mxu0 0
        %3180 = vmatpush1.bf16.msra.mxu0 0
        %3181 = vmatprep.subr.bf16.mxu0 0
        %3182 = vmatpush1.bf16.msra.mxu0 0
        %3183 = vmatprep.subr.bf16.mxu0 0
        %3184 = vmatpush1.bf16.msra.mxu0 0
        %3185 = vmatprep.subr.bf16.mxu0 0
        %3186 = vmatpush1.bf16.msra.mxu0 0
        %3187 = vmatprep.mubr.bf16.mxu0 0
        %3188 = vmatmul.mubr.bf16.gmra.mrb[0].mxu0 %v3150
        %v3189 = vpop.f32.mrb[0].mxu0
        %v3190 = vadd.f32 %v3147, %v3189
        %v3191 = vpop.f32.mrb[0].mxu0
        %v3192 = vpop.f32.mrb[0].mxu0
        %v3193 = vadd.f32 %v3147, %v3192
        %v3194 = vpop.f32.mrb[0].mxu0
        %3195 = vdwg.mxu0
        %v3196 = vadd.f32 %v3190, %v2123
        %v3197 = vadd.f32 %v3193, %v2124
        %v3198 = vpack.c.bf16 %v3197, %v3196
        %v3199 = vpack.c.bf16 %v2061, %v2060
        %v3200 = vpack.c.bf16 %v2063, %v2062
        %v3202 = vlaneseq
        %v3203 = vshrl.u32 %v3202, 7
        %v3204 = vsub.s32 0, %v3203
        %v3205 = vrot.slane %v2051, %v3204
        %v3208 = vsel %vm2200, %v3198, 0
        %3210 = vmatprep.subr.bf16.mxu0 0
        %3211 = vmatpush1.bf16.msra.mxu0 %v3199
        %3212 = vmatprep.subr.bf16.mxu0 0
        %3213 = vmatpush1.bf16.msra.mxu0 %v3200
        %3214 = vmatprep.subr.bf16.mxu0 0
        %3215 = vmatpush1.bf16.msra.mxu0 0
        %3216 = vmatprep.subr.bf16.mxu0 0
        %3217 = vmatpush1.bf16.msra.mxu0 0
        %3218 = vmatprep.subr.bf16.mxu0 0
        %3219 = vmatpush1.bf16.msra.mxu0 0
        %3220 = vmatprep.subr.bf16.mxu0 0
        %3221 = vmatpush1.bf16.msra.mxu0 0
        %3222 = vmatprep.subr.bf16.mxu0 0
        %3223 = vmatpush1.bf16.msra.mxu0 0
        %3224 = vmatprep.subr.bf16.mxu0 0
        %3225 = vmatpush1.bf16.msra.mxu0 0
        %3226 = vmatprep.subr.bf16.mxu0 0
        %3227 = vmatpush1.bf16.msra.mxu0 0
        %3228 = vmatprep.subr.bf16.mxu0 0
        %3229 = vmatpush1.bf16.msra.mxu0 0
        %3230 = vmatprep.subr.bf16.mxu0 0
        %3231 = vmatpush1.bf16.msra.mxu0 0
        %3232 = vmatprep.subr.bf16.mxu0 0
        %3233 = vmatpush1.bf16.msra.mxu0 0
        %3234 = vmatprep.subr.bf16.mxu0 0
        %3235 = vmatpush1.bf16.msra.mxu0 0
        %3236 = vmatprep.subr.bf16.mxu0 0
        %3237 = vmatpush1.bf16.msra.mxu0 0
        %3238 = vmatprep.subr.bf16.mxu0 0
        %3239 = vmatpush1.bf16.msra.mxu0 0
        %3240 = vmatprep.subr.bf16.mxu0 0
        %3241 = vmatpush1.bf16.msra.mxu0 0
        %3242 = vmatprep.mubr.bf16.mxu0 0
        %3243 = vmatmul.mubr.bf16.gmra.mrb[0].mxu0 %v3208
        %v3244 = vpop.f32.mrb[0].mxu0
        %v3245 = vadd.f32 %v3205, %v3244
        %v3246 = vpop.f32.mrb[0].mxu0
        %v3247 = vpop.f32.mrb[0].mxu0
        %v3248 = vadd.f32 %v3205, %v3247
        %v3249 = vpop.f32.mrb[0].mxu0
        %3250 = vdwg.mxu0
        %v3251 = vpack.c.bf16 %v2053, %v2052
        %v3252 = vpack.c.bf16 %v2055, %v2054
        %v3254 = vlaneseq
        %v3255 = vshrl.u32 %v3254, 7
        %v3256 = vsub.s32 0, %v3255
        %v3257 = vrot.slane %v2049, %v3256
        %3259 = vmatprep.subr.bf16.mxu0 0
        %3260 = vmatpush1.bf16.msra.mxu0 %v3251
        %3261 = vmatprep.subr.bf16.mxu0 0
        %3262 = vmatpush1.bf16.msra.mxu0 %v3252
        %3263 = vmatprep.subr.bf16.mxu0 0
        %3264 = vmatpush1.bf16.msra.mxu0 0
        %3265 = vmatprep.subr.bf16.mxu0 0
        %3266 = vmatpush1.bf16.msra.mxu0 0
        %3267 = vmatprep.subr.bf16.mxu0 0
        %3268 = vmatpush1.bf16.msra.mxu0 0
        %3269 = vmatprep.subr.bf16.mxu0 0
        %3270 = vmatpush1.bf16.msra.mxu0 0
        %3271 = vmatprep.subr.bf16.mxu0 0
        %3272 = vmatpush1.bf16.msra.mxu0 0
        %3273 = vmatprep.subr.bf16.mxu0 0
        %3274 = vmatpush1.bf16.msra.mxu0 0
        %3275 = vmatprep.subr.bf16.mxu0 0
        %3276 = vmatpush1.bf16.msra.mxu0 0
        %3277 = vmatprep.subr.bf16.mxu0 0
        %3278 = vmatpush1.bf16.msra.mxu0 0
        %3279 = vmatprep.subr.bf16.mxu0 0
        %3280 = vmatpush1.bf16.msra.mxu0 0
        %3281 = vmatprep.subr.bf16.mxu0 0
        %3282 = vmatpush1.bf16.msra.mxu0 0
        %3283 = vmatprep.subr.bf16.mxu0 0
        %3284 = vmatpush1.bf16.msra.mxu0 0
        %3285 = vmatprep.subr.bf16.mxu0 0
        %3286 = vmatpush1.bf16.msra.mxu0 0
        %3287 = vmatprep.subr.bf16.mxu0 0
        %3288 = vmatpush1.bf16.msra.mxu0 0
        %3289 = vmatprep.subr.bf16.mxu0 0
        %3290 = vmatpush1.bf16.msra.mxu0 0
        %3291 = vmatprep.mubr.bf16.mxu0 0
        %3292 = vmatmul.mubr.bf16.gmra.mrb[0].mxu0 %v3208
        %v3293 = vpop.f32.mrb[0].mxu0
        %v3294 = vadd.f32 %v3257, %v3293
        %v3295 = vpop.f32.mrb[0].mxu0
        %v3296 = vpop.f32.mrb[0].mxu0
        %v3297 = vadd.f32 %v3257, %v3296
        %v3298 = vpop.f32.mrb[0].mxu0
        %3299 = vdwg.mxu0
        %v3300 = vpack.c.bf16 %v3248, %v3245
        %v3301 = vpack.c.bf16 %v3297, %v3294
        %v3303 = vsel %vm2294, %v3300, 0
        %v3306 = vsel %vm2294, %v3301, 0
        %3308 = vmatprep.subr.bf16.mxu0 0
        %3309 = vmatpush1.bf16.xpose.msra.mxu0 %v3306
        %3310 = vmatprep.subr.bf16.mxu0 0
        %3311 = vmatpush1.bf16.xpose.msra.mxu0 0
        %3312 = vmatprep.subr.bf16.mxu0 0
        %3313 = vmatpush1.bf16.xpose.msra.mxu0 0
        %3314 = vmatprep.subr.bf16.mxu0 0
        %3315 = vmatpush1.bf16.xpose.msra.mxu0 0
        %3316 = vmatprep.subr.bf16.mxu0 0
        %3317 = vmatpush1.bf16.xpose.msra.mxu0 0
        %3318 = vmatprep.subr.bf16.mxu0 0
        %3319 = vmatpush1.bf16.xpose.msra.mxu0 0
        %3320 = vmatprep.subr.bf16.mxu0 0
        %3321 = vmatpush1.bf16.xpose.msra.mxu0 0
        %3322 = vmatprep.subr.bf16.mxu0 0
        %3323 = vmatpush1.bf16.xpose.msra.mxu0 0
        %3324 = vmatprep.subr.bf16.mxu0 0
        %3325 = vmatpush1.bf16.xpose.msra.mxu0 0
        %3326 = vmatprep.subr.bf16.mxu0 0
        %3327 = vmatpush1.bf16.xpose.msra.mxu0 0
        %3328 = vmatprep.subr.bf16.mxu0 0
        %3329 = vmatpush1.bf16.xpose.msra.mxu0 0
        %3330 = vmatprep.subr.bf16.mxu0 0
        %3331 = vmatpush1.bf16.xpose.msra.mxu0 0
        %3332 = vmatprep.subr.bf16.mxu0 0
        %3333 = vmatpush1.bf16.xpose.msra.mxu0 0
        %3334 = vmatprep.subr.bf16.mxu0 0
        %3335 = vmatpush1.bf16.xpose.msra.mxu0 0
        %3336 = vmatprep.subr.bf16.mxu0 0
        %3337 = vmatpush1.bf16.xpose.msra.mxu0 0
        %3338 = vmatprep.subr.bf16.mxu0 0
        %3339 = vmatpush1.bf16.xpose.msra.mxu0 0
        %3340 = vmatprep.mubr.bf16.mxu0 0
        %3341 = vmatmul.mubr.bf16.gmra.mrb[0].mxu0 %v3303
        %v3342 = vpop.f32.mrb[0].mxu0
        %v3343 = vadd.f32 0.0, %v3342
        %v3344 = vpop.f32.mrb[0].mxu0
        %v3345 = vpop.f32.mrb[0].mxu0
        %v3346 = vadd.f32 0.0, %v3345
        %v3347 = vpop.f32.mrb[0].mxu0
        %3348 = vdwg.mxu0
        %v3349 = vmul.f32 %v3343, 0.35355338
        %v3350 = vmul.f32 %v3346, 0.35355338
        %v3352 = vlaneseq
        %v3353 = vshrl.u32 %v3352, 7
        %v3354 = vsub.s32 0, %v3353
        %v3355 = vrot.slane %v2133, %v3354
        %v3357 = vadd.f32 %v3349, %v3355
        %v3358 = vadd.f32 %v3350, %v3355
        %vm3359 = vcmask 72704
        %v3360 = vsel %vm3359, %v3357, -inf
        %3361 = vmax.xlane.f32.xlu0 %v3360
        %v3362 = vpop.xlane.xlu0 %3361
        %vm3363 = vcmask 65536
        %v3364 = vsel %vm3363, %v3358, -inf
        %3365 = vmax.xlane.f32.xlu0 %v3364
        %v3366 = vpop.xlane.xlu0 %3365
        %v3367 = vsub.f32 %v3357, %v3362
        %v3368 = vsub.f32 %v3358, %v3366
        %v3369 = vmul.f32 %v3367, 1.442695
        %v3370 = vpow.pop %v3369
        %v3371 = vmul.f32 %v3368, 1.442695
        %v3372 = vpow.pop %v3371
        %v3373 = vsel %vm3359, %v3370, 0.0
        %3374 = vadd.xlane.f32.xlu0 %v3373
        %v3375 = vpop.xlane.xlu0 %3374
        %v3376 = vsel %vm3363, %v3372, 0.0
        %3377 = vadd.xlane.f32.xlu0 %v3376
        %v3378 = vpop.xlane.xlu0 %3377
        %v3379 = vrcp.pop %v3375
        %v3380 = vrcp.pop %v3378
        %v3381 = vmul.f32 %v3370, %v3379
        %v3382 = vmul.f32 %v3372, %v3380
        %v3383 = vpack.c.bf16 %v3382, %v3381
        %3385 = vrot.lane.b32.xlu0 %v3301, 96
        %v3386 = vpop.permute.xlu0 %3385
        %v3388 = vsel %vm3359, %v3383, 0
        %vm3390 = vcmask 1044480
        %v3391 = vsel %vm2367, 4294967295, 65535
        %v3392 = vsel %vm3390, %v3391, 0
        %v3394 = vand.u32 %v3386, %v3392
        %3396 = vmatprep.subr.bf16.mxu0 0
        %3397 = vmatpush1.bf16.msra.mxu0 %v3394
        %3398 = vmatprep.subr.bf16.mxu0 0
        %3399 = vmatpush1.bf16.msra.mxu0 0
        %3400 = vmatprep.subr.bf16.mxu0 0
        %3401 = vmatpush1.bf16.msra.mxu0 0
        %3402 = vmatprep.subr.bf16.mxu0 0
        %3403 = vmatpush1.bf16.msra.mxu0 0
        %3404 = vmatprep.subr.bf16.mxu0 0
        %3405 = vmatpush1.bf16.msra.mxu0 0
        %3406 = vmatprep.subr.bf16.mxu0 0
        %3407 = vmatpush1.bf16.msra.mxu0 0
        %3408 = vmatprep.subr.bf16.mxu0 0
        %3409 = vmatpush1.bf16.msra.mxu0 0
        %3410 = vmatprep.subr.bf16.mxu0 0
        %3411 = vmatpush1.bf16.msra.mxu0 0
        %3412 = vmatprep.subr.bf16.mxu0 0
        %3413 = vmatpush1.bf16.msra.mxu0 0
        %3414 = vmatprep.subr.bf16.mxu0 0
        %3415 = vmatpush1.bf16.msra.mxu0 0
        %3416 = vmatprep.subr.bf16.mxu0 0
        %3417 = vmatpush1.bf16.msra.mxu0 0
        %3418 = vmatprep.subr.bf16.mxu0 0
        %3419 = vmatpush1.bf16.msra.mxu0 0
        %3420 = vmatprep.subr.bf16.mxu0 0
        %3421 = vmatpush1.bf16.msra.mxu0 0
        %3422 = vmatprep.subr.bf16.mxu0 0
        %3423 = vmatpush1.bf16.msra.mxu0 0
        %3424 = vmatprep.subr.bf16.mxu0 0
        %3425 = vmatpush1.bf16.msra.mxu0 0
        %3426 = vmatprep.subr.bf16.mxu0 0
        %3427 = vmatpush1.bf16.msra.mxu0 0
        %3428 = vmatprep.mubr.bf16.mxu0 0
        %3429 = vmatmul.mubr.bf16.gmra.mrb[0].mxu0 %v3388
        %v3430 = vpop.f32.mrb[0].mxu0
        %v3431 = vadd.f32 0.0, %v3430
        %v3432 = vpop.f32.mrb[0].mxu0
        %v3433 = vpop.f32.mrb[0].mxu0
        %v3434 = vadd.f32 0.0, %v3433
        %v3435 = vpop.f32.mrb[0].mxu0
        %3436 = vdwg.mxu0
        %v3437 = vpack.c.bf16 %v3434, %v3431
        %v3438 = vpack.c.bf16 %v2056, %v2056
        %3440 = vrot.lane.b32.xlu0 %v3300, 120
        %v3441 = vpop.permute.xlu0 %3440
        %3442 = vrot.lane.b32.xlu0 %v3301, 120
        %v3443 = vpop.permute.xlu0 %3442
        %v3445 = vsel %vm2294, %v3441, 0
        %v3448 = vsel %vm2294, %v3443, 0
        %3450 = vmatprep.subr.bf16.mxu0 0
        %3451 = vmatpush1.bf16.xpose.msra.mxu0 %v3448
        %3452 = vmatprep.subr.bf16.mxu0 0
        %3453 = vmatpush1.bf16.xpose.msra.mxu0 0
        %3454 = vmatprep.subr.bf16.mxu0 0
        %3455 = vmatpush1.bf16.xpose.msra.mxu0 0
        %3456 = vmatprep.subr.bf16.mxu0 0
        %3457 = vmatpush1.bf16.xpose.msra.mxu0 0
        %3458 = vmatprep.subr.bf16.mxu0 0
        %3459 = vmatpush1.bf16.xpose.msra.mxu0 0
        %3460 = vmatprep.subr.bf16.mxu0 0
        %3461 = vmatpush1.bf16.xpose.msra.mxu0 0
        %3462 = vmatprep.subr.bf16.mxu0 0
        %3463 = vmatpush1.bf16.xpose.msra.mxu0 0
        %3464 = vmatprep.subr.bf16.mxu0 0
        %3465 = vmatpush1.bf16.xpose.msra.mxu0 0
        %3466 = vmatprep.subr.bf16.mxu0 0
        %3467 = vmatpush1.bf16.xpose.msra.mxu0 0
        %3468 = vmatprep.subr.bf16.mxu0 0
        %3469 = vmatpush1.bf16.xpose.msra.mxu0 0
        %3470 = vmatprep.subr.bf16.mxu0 0
        %3471 = vmatpush1.bf16.xpose.msra.mxu0 0
        %3472 = vmatprep.subr.bf16.mxu0 0
        %3473 = vmatpush1.bf16.xpose.msra.mxu0 0
        %3474 = vmatprep.subr.bf16.mxu0 0
        %3475 = vmatpush1.bf16.xpose.msra.mxu0 0
        %3476 = vmatprep.subr.bf16.mxu0 0
        %3477 = vmatpush1.bf16.xpose.msra.mxu0 0
        %3478 = vmatprep.subr.bf16.mxu0 0
        %3479 = vmatpush1.bf16.xpose.msra.mxu0 0
        %3480 = vmatprep.subr.bf16.mxu0 0
        %3481 = vmatpush1.bf16.xpose.msra.mxu0 0
        %3482 = vmatprep.mubr.bf16.mxu0 0
        %3483 = vmatmul.mubr.bf16.gmra.mrb[0].mxu0 %v3445
        %v3484 = vpop.f32.mrb[0].mxu0
        %v3485 = vadd.f32 0.0, %v3484
        %v3486 = vpop.f32.mrb[0].mxu0
        %v3487 = vpop.f32.mrb[0].mxu0
        %v3488 = vadd.f32 0.0, %v3487
        %v3489 = vpop.f32.mrb[0].mxu0
        %3490 = vdwg.mxu0
        %v3491 = vmul.f32 %v3485, 0.35355338
        %v3492 = vmul.f32 %v3488, 0.35355338
        %v3493 = vadd.f32 %v3491, %v3355
        %v3494 = vadd.f32 %v3492, %v3355
        %v3495 = vsel %vm3359, %v3493, -inf
        %3496 = vmax.xlane.f32.xlu0 %v3495
        %v3497 = vpop.xlane.xlu0 %3496
        %v3498 = vsel %vm3363, %v3494, -inf
        %3499 = vmax.xlane.f32.xlu0 %v3498
        %v3500 = vpop.xlane.xlu0 %3499
        %v3501 = vsub.f32 %v3493, %v3497
        %v3502 = vsub.f32 %v3494, %v3500
        %v3503 = vmul.f32 %v3501, 1.442695
        %v3504 = vpow.pop %v3503
        %v3505 = vmul.f32 %v3502, 1.442695
        %v3506 = vpow.pop %v3505
        %v3507 = vsel %vm3359, %v3504, 0.0
        %3508 = vadd.xlane.f32.xlu0 %v3507
        %v3509 = vpop.xlane.xlu0 %3508
        %v3510 = vsel %vm3363, %v3506, 0.0
        %3511 = vadd.xlane.f32.xlu0 %v3510
        %v3512 = vpop.xlane.xlu0 %3511
        %v3513 = vrcp.pop %v3509
        %v3514 = vrcp.pop %v3512
        %v3515 = vmul.f32 %v3504, %v3513
        %v3516 = vmul.f32 %v3506, %v3514
        %v3517 = vpack.c.bf16 %v3516, %v3515
        %3518 = vrot.lane.b32.xlu0 %v3301, 88
        %v3519 = vpop.permute.xlu0 %3518
        %v3521 = vsel %vm3359, %v3517, 0
        %v3524 = vand.u32 %v3519, %v3392
        %3526 = vmatprep.subr.bf16.mxu0 0
        %3527 = vmatpush1.bf16.msra.mxu0 %v3524
        %3528 = vmatprep.subr.bf16.mxu0 0
        %3529 = vmatpush1.bf16.msra.mxu0 0
        %3530 = vmatprep.subr.bf16.mxu0 0
        %3531 = vmatpush1.bf16.msra.mxu0 0
        %3532 = vmatprep.subr.bf16.mxu0 0
        %3533 = vmatpush1.bf16.msra.mxu0 0
        %3534 = vmatprep.subr.bf16.mxu0 0
        %3535 = vmatpush1.bf16.msra.mxu0 0
        %3536 = vmatprep.subr.bf16.mxu0 0
        %3537 = vmatpush1.bf16.msra.mxu0 0
        %3538 = vmatprep.subr.bf16.mxu0 0
        %3539 = vmatpush1.bf16.msra.mxu0 0
        %3540 = vmatprep.subr.bf16.mxu0 0
        %3541 = vmatpush1.bf16.msra.mxu0 0
        %3542 = vmatprep.subr.bf16.mxu0 0
        %3543 = vmatpush1.bf16.msra.mxu0 0
        %3544 = vmatprep.subr.bf16.mxu0 0
        %3545 = vmatpush1.bf16.msra.mxu0 0
        %3546 = vmatprep.subr.bf16.mxu0 0
        %3547 = vmatpush1.bf16.msra.mxu0 0
        %3548 = vmatprep.subr.bf16.mxu0 0
        %3549 = vmatpush1.bf16.msra.mxu0 0
        %3550 = vmatprep.subr.bf16.mxu0 0
        %3551 = vmatpush1.bf16.msra.mxu0 0
        %3552 = vmatprep.subr.bf16.mxu0 0
        %3553 = vmatpush1.bf16.msra.mxu0 0
        %3554 = vmatprep.subr.bf16.mxu0 0
        %3555 = vmatpush1.bf16.msra.mxu0 0
        %3556 = vmatprep.subr.bf16.mxu0 0
        %3557 = vmatpush1.bf16.msra.mxu0 0
        %3558 = vmatprep.mubr.bf16.mxu0 0
        %3559 = vmatmul.mubr.bf16.gmra.mrb[0].mxu0 %v3521
        %v3560 = vpop.f32.mrb[0].mxu0
        %v3561 = vadd.f32 0.0, %v3560
        %v3562 = vpop.f32.mrb[0].mxu0
        %v3563 = vpop.f32.mrb[0].mxu0
        %v3564 = vadd.f32 0.0, %v3563
        %v3565 = vpop.f32.mrb[0].mxu0
        %3566 = vdwg.mxu0
        %v3567 = vpack.c.bf16 %v3564, %v3561
        %v3568 = vpack.c.bf16 %v2057, %v2057
        %v3570 = vsel %vm2294, %v3567, 0
        %v3573 = vsel %vm2367, %v3568, 0
        %3575 = vmatprep.subr.bf16.mxu0 0
        %3576 = vmatpush1.bf16.msra.mxu0 %v3573
        %3577 = vmatprep.subr.bf16.mxu0 0
        %3578 = vmatpush1.bf16.msra.mxu0 0
        %3579 = vmatprep.subr.bf16.mxu0 0
        %3580 = vmatpush1.bf16.msra.mxu0 0
        %3581 = vmatprep.subr.bf16.mxu0 0
        %3582 = vmatpush1.bf16.msra.mxu0 0
        %3583 = vmatprep.subr.bf16.mxu0 0
        %3584 = vmatpush1.bf16.msra.mxu0 0
        %3585 = vmatprep.subr.bf16.mxu0 0
        %3586 = vmatpush1.bf16.msra.mxu0 0
        %3587 = vmatprep.subr.bf16.mxu0 0
        %3588 = vmatpush1.bf16.msra.mxu0 0
        %3589 = vmatprep.subr.bf16.mxu0 0
        %3590 = vmatpush1.bf16.msra.mxu0 0
        %3591 = vmatprep.subr.bf16.mxu0 0
        %3592 = vmatpush1.bf16.msra.mxu0 0
        %3593 = vmatprep.subr.bf16.mxu0 0
        %3594 = vmatpush1.bf16.msra.mxu0 0
        %3595 = vmatprep.subr.bf16.mxu0 0
        %3596 = vmatpush1.bf16.msra.mxu0 0
        %3597 = vmatprep.subr.bf16.mxu0 0
        %3598 = vmatpush1.bf16.msra.mxu0 0
        %3599 = vmatprep.subr.bf16.mxu0 0
        %3600 = vmatpush1.bf16.msra.mxu0 0
        %3601 = vmatprep.subr.bf16.mxu0 0
        %3602 = vmatpush1.bf16.msra.mxu0 0
        %3603 = vmatprep.subr.bf16.mxu0 0
        %3604 = vmatpush1.bf16.msra.mxu0 0
        %3605 = vmatprep.subr.bf16.mxu0 0
        %3606 = vmatpush1.bf16.msra.mxu0 0
        %3607 = vmatprep.mubr.bf16.mxu0 0
        %3608 = vmatmul.mubr.bf16.gmra.mrb[0].mxu0 %v3570
        %v3609 = vpop.f32.mrb[0].mxu0
        %v3610 = vadd.f32 0.0, %v3609
        %v3611 = vpop.f32.mrb[0].mxu0
        %v3612 = vpop.f32.mrb[0].mxu0
        %v3613 = vadd.f32 0.0, %v3612
        %v3614 = vpop.f32.mrb[0].mxu0
        %3615 = vdwg.mxu0
        %v3617 = vsel %vm2294, %v3437, 0
        %v3620 = vsel %vm2367, %v3438, 0
        %3622 = vmatprep.subr.bf16.mxu0 0
        %3623 = vmatpush1.bf16.msra.mxu0 %v3620
        %3624 = vmatprep.subr.bf16.mxu0 0
        %3625 = vmatpush1.bf16.msra.mxu0 0
        %3626 = vmatprep.subr.bf16.mxu0 0
        %3627 = vmatpush1.bf16.msra.mxu0 0
        %3628 = vmatprep.subr.bf16.mxu0 0
        %3629 = vmatpush1.bf16.msra.mxu0 0
        %3630 = vmatprep.subr.bf16.mxu0 0
        %3631 = vmatpush1.bf16.msra.mxu0 0
        %3632 = vmatprep.subr.bf16.mxu0 0
        %3633 = vmatpush1.bf16.msra.mxu0 0
        %3634 = vmatprep.subr.bf16.mxu0 0
        %3635 = vmatpush1.bf16.msra.mxu0 0
        %3636 = vmatprep.subr.bf16.mxu0 0
        %3637 = vmatpush1.bf16.msra.mxu0 0
        %3638 = vmatprep.subr.bf16.mxu0 0
        %3639 = vmatpush1.bf16.msra.mxu0 0
        %3640 = vmatprep.subr.bf16.mxu0 0
        %3641 = vmatpush1.bf16.msra.mxu0 0
        %3642 = vmatprep.subr.bf16.mxu0 0
        %3643 = vmatpush1.bf16.msra.mxu0 0
        %3644 = vmatprep.subr.bf16.mxu0 0
        %3645 = vmatpush1.bf16.msra.mxu0 0
        %3646 = vmatprep.subr.bf16.mxu0 0
        %3647 = vmatpush1.bf16.msra.mxu0 0
        %3648 = vmatprep.subr.bf16.mxu0 0
        %3649 = vmatpush1.bf16.msra.mxu0 0
        %3650 = vmatprep.subr.bf16.mxu0 0
        %3651 = vmatpush1.bf16.msra.mxu0 0
        %3652 = vmatprep.subr.bf16.mxu0 0
        %3653 = vmatpush1.bf16.msra.mxu0 0
        %3654 = vmatprep.mubr.bf16.mxu0 0
        %3655 = vmatmul.mubr.bf16.gmra.mrb[0].mxu0 %v3617
        %v3656 = vpop.f32.mrb[0].mxu0
        %v3657 = vadd.f32 %v3610, %v3656
        %v3658 = vpop.f32.mrb[0].mxu0
        %v3659 = vpop.f32.mrb[0].mxu0
        %v3660 = vadd.f32 %v3613, %v3659
        %v3661 = vpop.f32.mrb[0].mxu0
        %3662 = vdwg.mxu0
        %3663 = vrot.lane.b32.xlu0 %v3300, 112
        %v3664 = vpop.permute.xlu0 %3663
        %3665 = vrot.lane.b32.xlu0 %v3301, 112
        %v3666 = vpop.permute.xlu0 %3665
        %v3668 = vsel %vm2294, %v3664, 0
        %v3671 = vsel %vm2294, %v3666, 0
        %3673 = vmatprep.subr.bf16.mxu0 0
        %3674 = vmatpush1.bf16.xpose.msra.mxu0 %v3671
        %3675 = vmatprep.subr.bf16.mxu0 0
        %3676 = vmatpush1.bf16.xpose.msra.mxu0 0
        %3677 = vmatprep.subr.bf16.mxu0 0
        %3678 = vmatpush1.bf16.xpose.msra.mxu0 0
        %3679 = vmatprep.subr.bf16.mxu0 0
        %3680 = vmatpush1.bf16.xpose.msra.mxu0 0
        %3681 = vmatprep.subr.bf16.mxu0 0
        %3682 = vmatpush1.bf16.xpose.msra.mxu0 0
        %3683 = vmatprep.subr.bf16.mxu0 0
        %3684 = vmatpush1.bf16.xpose.msra.mxu0 0
        %3685 = vmatprep.subr.bf16.mxu0 0
        %3686 = vmatpush1.bf16.xpose.msra.mxu0 0
        %3687 = vmatprep.subr.bf16.mxu0 0
        %3688 = vmatpush1.bf16.xpose.msra.mxu0 0
        %3689 = vmatprep.subr.bf16.mxu0 0
        %3690 = vmatpush1.bf16.xpose.msra.mxu0 0
        %3691 = vmatprep.subr.bf16.mxu0 0
        %3692 = vmatpush1.bf16.xpose.msra.mxu0 0
        %3693 = vmatprep.subr.bf16.mxu0 0
        %3694 = vmatpush1.bf16.xpose.msra.mxu0 0
        %3695 = vmatprep.subr.bf16.mxu0 0
        %3696 = vmatpush1.bf16.xpose.msra.mxu0 0
        %3697 = vmatprep.subr.bf16.mxu0 0
        %3698 = vmatpush1.bf16.xpose.msra.mxu0 0
        %3699 = vmatprep.subr.bf16.mxu0 0
        %3700 = vmatpush1.bf16.xpose.msra.mxu0 0
        %3701 = vmatprep.subr.bf16.mxu0 0
        %3702 = vmatpush1.bf16.xpose.msra.mxu0 0
        %3703 = vmatprep.subr.bf16.mxu0 0
        %3704 = vmatpush1.bf16.xpose.msra.mxu0 0
        %3705 = vmatprep.mubr.bf16.mxu0 0
        %3706 = vmatmul.mubr.bf16.gmra.mrb[0].mxu0 %v3668
        %v3707 = vpop.f32.mrb[0].mxu0
        %v3708 = vadd.f32 0.0, %v3707
        %v3709 = vpop.f32.mrb[0].mxu0
        %v3710 = vpop.f32.mrb[0].mxu0
        %v3711 = vadd.f32 0.0, %v3710
        %v3712 = vpop.f32.mrb[0].mxu0
        %3713 = vdwg.mxu0
        %v3714 = vmul.f32 %v3708, 0.35355338
        %v3715 = vmul.f32 %v3711, 0.35355338
        %v3716 = vadd.f32 %v3714, %v3355
        %v3717 = vadd.f32 %v3715, %v3355
        %v3718 = vsel %vm3359, %v3716, -inf
        %3719 = vmax.xlane.f32.xlu0 %v3718
        %v3720 = vpop.xlane.xlu0 %3719
        %v3721 = vsel %vm3363, %v3717, -inf
        %3722 = vmax.xlane.f32.xlu0 %v3721
        %v3723 = vpop.xlane.xlu0 %3722
        %v3724 = vsub.f32 %v3716, %v3720
        %v3725 = vsub.f32 %v3717, %v3723
        %v3726 = vmul.f32 %v3724, 1.442695
        %v3727 = vpow.pop %v3726
        %v3728 = vmul.f32 %v3725, 1.442695
        %v3729 = vpow.pop %v3728
        %v3730 = vsel %vm3359, %v3727, 0.0
        %3731 = vadd.xlane.f32.xlu0 %v3730
        %v3732 = vpop.xlane.xlu0 %3731
        %v3733 = vsel %vm3363, %v3729, 0.0
        %3734 = vadd.xlane.f32.xlu0 %v3733
        %v3735 = vpop.xlane.xlu0 %3734
        %v3736 = vrcp.pop %v3732
        %v3737 = vrcp.pop %v3735
        %v3738 = vmul.f32 %v3727, %v3736
        %v3739 = vmul.f32 %v3729, %v3737
        %v3740 = vpack.c.bf16 %v3739, %v3738
        %3741 = vrot.lane.b32.xlu0 %v3301, 80
        %v3742 = vpop.permute.xlu0 %3741
        %v3744 = vsel %vm3359, %v3740, 0
        %v3747 = vand.u32 %v3742, %v3392
        %3749 = vmatprep.subr.bf16.mxu0 0
        %3750 = vmatpush1.bf16.msra.mxu0 %v3747
        %3751 = vmatprep.subr.bf16.mxu0 0
        %3752 = vmatpush1.bf16.msra.mxu0 0
        %3753 = vmatprep.subr.bf16.mxu0 0
        %3754 = vmatpush1.bf16.msra.mxu0 0
        %3755 = vmatprep.subr.bf16.mxu0 0
        %3756 = vmatpush1.bf16.msra.mxu0 0
        %3757 = vmatprep.subr.bf16.mxu0 0
        %3758 = vmatpush1.bf16.msra.mxu0 0
        %3759 = vmatprep.subr.bf16.mxu0 0
        %3760 = vmatpush1.bf16.msra.mxu0 0
        %3761 = vmatprep.subr.bf16.mxu0 0
        %3762 = vmatpush1.bf16.msra.mxu0 0
        %3763 = vmatprep.subr.bf16.mxu0 0
        %3764 = vmatpush1.bf16.msra.mxu0 0
        %3765 = vmatprep.subr.bf16.mxu0 0
        %3766 = vmatpush1.bf16.msra.mxu0 0
        %3767 = vmatprep.subr.bf16.mxu0 0
        %3768 = vmatpush1.bf16.msra.mxu0 0
        %3769 = vmatprep.subr.bf16.mxu0 0
        %3770 = vmatpush1.bf16.msra.mxu0 0
        %3771 = vmatprep.subr.bf16.mxu0 0
        %3772 = vmatpush1.bf16.msra.mxu0 0
        %3773 = vmatprep.subr.bf16.mxu0 0
        %3774 = vmatpush1.bf16.msra.mxu0 0
        %3775 = vmatprep.subr.bf16.mxu0 0
        %3776 = vmatpush1.bf16.msra.mxu0 0
        %3777 = vmatprep.subr.bf16.mxu0 0
        %3778 = vmatpush1.bf16.msra.mxu0 0
        %3779 = vmatprep.subr.bf16.mxu0 0
        %3780 = vmatpush1.bf16.msra.mxu0 0
        %3781 = vmatprep.mubr.bf16.mxu0 0
        %3782 = vmatmul.mubr.bf16.gmra.mrb[0].mxu0 %v3744
        %v3783 = vpop.f32.mrb[0].mxu0
        %v3784 = vadd.f32 0.0, %v3783
        %v3785 = vpop.f32.mrb[0].mxu0
        %v3786 = vpop.f32.mrb[0].mxu0
        %v3787 = vadd.f32 0.0, %v3786
        %v3788 = vpop.f32.mrb[0].mxu0
        %3789 = vdwg.mxu0
        %v3790 = vpack.c.bf16 %v3787, %v3784
        %v3791 = vpack.c.bf16 %v2058, %v2058
        %v3793 = vsel %vm2294, %v3790, 0
        %v3796 = vsel %vm2367, %v3791, 0
        %3798 = vmatprep.subr.bf16.mxu0 0
        %3799 = vmatpush1.bf16.msra.mxu0 %v3796
        %3800 = vmatprep.subr.bf16.mxu0 0
        %3801 = vmatpush1.bf16.msra.mxu0 0
        %3802 = vmatprep.subr.bf16.mxu0 0
        %3803 = vmatpush1.bf16.msra.mxu0 0
        %3804 = vmatprep.subr.bf16.mxu0 0
        %3805 = vmatpush1.bf16.msra.mxu0 0
        %3806 = vmatprep.subr.bf16.mxu0 0
        %3807 = vmatpush1.bf16.msra.mxu0 0
        %3808 = vmatprep.subr.bf16.mxu0 0
        %3809 = vmatpush1.bf16.msra.mxu0 0
        %3810 = vmatprep.subr.bf16.mxu0 0
        %3811 = vmatpush1.bf16.msra.mxu0 0
        %3812 = vmatprep.subr.bf16.mxu0 0
        %3813 = vmatpush1.bf16.msra.mxu0 0
        %3814 = vmatprep.subr.bf16.mxu0 0
        %3815 = vmatpush1.bf16.msra.mxu0 0
        %3816 = vmatprep.subr.bf16.mxu0 0
        %3817 = vmatpush1.bf16.msra.mxu0 0
        %3818 = vmatprep.subr.bf16.mxu0 0
        %3819 = vmatpush1.bf16.msra.mxu0 0
        %3820 = vmatprep.subr.bf16.mxu0 0
        %3821 = vmatpush1.bf16.msra.mxu0 0
        %3822 = vmatprep.subr.bf16.mxu0 0
        %3823 = vmatpush1.bf16.msra.mxu0 0
        %3824 = vmatprep.subr.bf16.mxu0 0
        %3825 = vmatpush1.bf16.msra.mxu0 0
        %3826 = vmatprep.subr.bf16.mxu0 0
        %3827 = vmatpush1.bf16.msra.mxu0 0
        %3828 = vmatprep.subr.bf16.mxu0 0
        %3829 = vmatpush1.bf16.msra.mxu0 0
        %3830 = vmatprep.mubr.bf16.mxu0 0
        %3831 = vmatmul.mubr.bf16.gmra.mrb[0].mxu0 %v3793
        %v3832 = vpop.f32.mrb[0].mxu0
        %v3833 = vadd.f32 0.0, %v3832
        %v3834 = vpop.f32.mrb[0].mxu0
        %v3835 = vpop.f32.mrb[0].mxu0
        %v3836 = vadd.f32 0.0, %v3835
        %v3837 = vpop.f32.mrb[0].mxu0
        %3838 = vdwg.mxu0
        %v3839 = vadd.f32 %v3657, %v3833
        %v3840 = vadd.f32 %v3660, %v3836
        %3841 = vrot.lane.b32.xlu0 %v3300, 104
        %v3842 = vpop.permute.xlu0 %3841
        %3843 = vrot.lane.b32.xlu0 %v3301, 104
        %v3844 = vpop.permute.xlu0 %3843
        %v3846 = vsel %vm2294, %v3842, 0
        %v3849 = vsel %vm2294, %v3844, 0
        %3851 = vmatprep.subr.bf16.mxu0 0
        %3852 = vmatpush1.bf16.xpose.msra.mxu0 %v3849
        %3853 = vmatprep.subr.bf16.mxu0 0
        %3854 = vmatpush1.bf16.xpose.msra.mxu0 0
        %3855 = vmatprep.subr.bf16.mxu0 0
        %3856 = vmatpush1.bf16.xpose.msra.mxu0 0
        %3857 = vmatprep.subr.bf16.mxu0 0
        %3858 = vmatpush1.bf16.xpose.msra.mxu0 0
        %3859 = vmatprep.subr.bf16.mxu0 0
        %3860 = vmatpush1.bf16.xpose.msra.mxu0 0
        %3861 = vmatprep.subr.bf16.mxu0 0
        %3862 = vmatpush1.bf16.xpose.msra.mxu0 0
        %3863 = vmatprep.subr.bf16.mxu0 0
        %3864 = vmatpush1.bf16.xpose.msra.mxu0 0
        %3865 = vmatprep.subr.bf16.mxu0 0
        %3866 = vmatpush1.bf16.xpose.msra.mxu0 0
        %3867 = vmatprep.subr.bf16.mxu0 0
        %3868 = vmatpush1.bf16.xpose.msra.mxu0 0
        %3869 = vmatprep.subr.bf16.mxu0 0
        %3870 = vmatpush1.bf16.xpose.msra.mxu0 0
        %3871 = vmatprep.subr.bf16.mxu0 0
        %3872 = vmatpush1.bf16.xpose.msra.mxu0 0
        %3873 = vmatprep.subr.bf16.mxu0 0
        %3874 = vmatpush1.bf16.xpose.msra.mxu0 0
        %3875 = vmatprep.subr.bf16.mxu0 0
        %3876 = vmatpush1.bf16.xpose.msra.mxu0 0
        %3877 = vmatprep.subr.bf16.mxu0 0
        %3878 = vmatpush1.bf16.xpose.msra.mxu0 0
        %3879 = vmatprep.subr.bf16.mxu0 0
        %3880 = vmatpush1.bf16.xpose.msra.mxu0 0
        %3881 = vmatprep.subr.bf16.mxu0 0
        %3882 = vmatpush1.bf16.xpose.msra.mxu0 0
        %3883 = vmatprep.mubr.bf16.mxu0 0
        %3884 = vmatmul.mubr.bf16.gmra.mrb[0].mxu0 %v3846
        %v3885 = vpop.f32.mrb[0].mxu0
        %v3886 = vadd.f32 0.0, %v3885
        %v3887 = vpop.f32.mrb[0].mxu0
        %v3888 = vpop.f32.mrb[0].mxu0
        %v3889 = vadd.f32 0.0, %v3888
        %v3890 = vpop.f32.mrb[0].mxu0
        %3891 = vdwg.mxu0
        %v3892 = vmul.f32 %v3886, 0.35355338
        %v3893 = vmul.f32 %v3889, 0.35355338
        %v3894 = vadd.f32 %v3892, %v3355
        %v3895 = vadd.f32 %v3893, %v3355
        %v3896 = vsel %vm3359, %v3894, -inf
        %3897 = vmax.xlane.f32.xlu0 %v3896
        %v3898 = vpop.xlane.xlu0 %3897
        %v3899 = vsel %vm3363, %v3895, -inf
        %3900 = vmax.xlane.f32.xlu0 %v3899
        %v3901 = vpop.xlane.xlu0 %3900
        %v3902 = vsub.f32 %v3894, %v3898
        %v3903 = vsub.f32 %v3895, %v3901
        %v3904 = vmul.f32 %v3902, 1.442695
        %v3905 = vpow.pop %v3904
        %v3906 = vmul.f32 %v3903, 1.442695
        %v3907 = vpow.pop %v3906
        %v3908 = vsel %vm3359, %v3905, 0.0
        %3909 = vadd.xlane.f32.xlu0 %v3908
        %v3910 = vpop.xlane.xlu0 %3909
        %v3911 = vsel %vm3363, %v3907, 0.0
        %3912 = vadd.xlane.f32.xlu0 %v3911
        %v3913 = vpop.xlane.xlu0 %3912
        %v3914 = vrcp.pop %v3910
        %v3915 = vrcp.pop %v3913
        %v3916 = vmul.f32 %v3905, %v3914
        %v3917 = vmul.f32 %v3907, %v3915
        %v3918 = vpack.c.bf16 %v3917, %v3916
        %3919 = vrot.lane.b32.xlu0 %v3301, 72
        %v3920 = vpop.permute.xlu0 %3919
        %v3922 = vsel %vm3359, %v3918, 0
        %v3925 = vand.u32 %v3920, %v3392
        %3927 = vmatprep.subr.bf16.mxu0 0
        %3928 = vmatpush1.bf16.msra.mxu0 %v3925
        %3929 = vmatprep.subr.bf16.mxu0 0
        %3930 = vmatpush1.bf16.msra.mxu0 0
        %3931 = vmatprep.subr.bf16.mxu0 0
        %3932 = vmatpush1.bf16.msra.mxu0 0
        %3933 = vmatprep.subr.bf16.mxu0 0
        %3934 = vmatpush1.bf16.msra.mxu0 0
        %3935 = vmatprep.subr.bf16.mxu0 0
        %3936 = vmatpush1.bf16.msra.mxu0 0
        %3937 = vmatprep.subr.bf16.mxu0 0
        %3938 = vmatpush1.bf16.msra.mxu0 0
        %3939 = vmatprep.subr.bf16.mxu0 0
        %3940 = vmatpush1.bf16.msra.mxu0 0
        %3941 = vmatprep.subr.bf16.mxu0 0
        %3942 = vmatpush1.bf16.msra.mxu0 0
        %3943 = vmatprep.subr.bf16.mxu0 0
        %3944 = vmatpush1.bf16.msra.mxu0 0
        %3945 = vmatprep.subr.bf16.mxu0 0
        %3946 = vmatpush1.bf16.msra.mxu0 0
        %3947 = vmatprep.subr.bf16.mxu0 0
        %3948 = vmatpush1.bf16.msra.mxu0 0
        %3949 = vmatprep.subr.bf16.mxu0 0
        %3950 = vmatpush1.bf16.msra.mxu0 0
        %3951 = vmatprep.subr.bf16.mxu0 0
        %3952 = vmatpush1.bf16.msra.mxu0 0
        %3953 = vmatprep.subr.bf16.mxu0 0
        %3954 = vmatpush1.bf16.msra.mxu0 0
        %3955 = vmatprep.subr.bf16.mxu0 0
        %3956 = vmatpush1.bf16.msra.mxu0 0
        %3957 = vmatprep.subr.bf16.mxu0 0
        %3958 = vmatpush1.bf16.msra.mxu0 0
        %3959 = vmatprep.mubr.bf16.mxu0 0
        %3960 = vmatmul.mubr.bf16.gmra.mrb[0].mxu0 %v3922
        %v3961 = vpop.f32.mrb[0].mxu0
        %v3962 = vadd.f32 0.0, %v3961
        %v3963 = vpop.f32.mrb[0].mxu0
        %v3964 = vpop.f32.mrb[0].mxu0
        %v3965 = vadd.f32 0.0, %v3964
        %v3966 = vpop.f32.mrb[0].mxu0
        %3967 = vdwg.mxu0
        %v3968 = vpack.c.bf16 %v3965, %v3962
        %v3969 = vpack.c.bf16 %v2059, %v2059
        %v3971 = vsel %vm2294, %v3968, 0
        %v3974 = vsel %vm2367, %v3969, 0
        %3976 = vmatprep.subr.bf16.mxu0 0
        %3977 = vmatpush1.bf16.msra.mxu0 %v3974
        %3978 = vmatprep.subr.bf16.mxu0 0
        %3979 = vmatpush1.bf16.msra.mxu0 0
        %3980 = vmatprep.subr.bf16.mxu0 0
        %3981 = vmatpush1.bf16.msra.mxu0 0
        %3982 = vmatprep.subr.bf16.mxu0 0
        %3983 = vmatpush1.bf16.msra.mxu0 0
        %3984 = vmatprep.subr.bf16.mxu0 0
        %3985 = vmatpush1.bf16.msra.mxu0 0
        %3986 = vmatprep.subr.bf16.mxu0 0
        %3987 = vmatpush1.bf16.msra.mxu0 0
        %3988 = vmatprep.subr.bf16.mxu0 0
        %3989 = vmatpush1.bf16.msra.mxu0 0
        %3990 = vmatprep.subr.bf16.mxu0 0
        %3991 = vmatpush1.bf16.msra.mxu0 0
        %3992 = vmatprep.subr.bf16.mxu0 0
        %3993 = vmatpush1.bf16.msra.mxu0 0
        %3994 = vmatprep.subr.bf16.mxu0 0
        %3995 = vmatpush1.bf16.msra.mxu0 0
        %3996 = vmatprep.subr.bf16.mxu0 0
        %3997 = vmatpush1.bf16.msra.mxu0 0
        %3998 = vmatprep.subr.bf16.mxu0 0
        %3999 = vmatpush1.bf16.msra.mxu0 0
        %4000 = vmatprep.subr.bf16.mxu0 0
        %4001 = vmatpush1.bf16.msra.mxu0 0
        %4002 = vmatprep.subr.bf16.mxu0 0
        %4003 = vmatpush1.bf16.msra.mxu0 0
        %4004 = vmatprep.subr.bf16.mxu0 0
        %4005 = vmatpush1.bf16.msra.mxu0 0
        %4006 = vmatprep.subr.bf16.mxu0 0
        %4007 = vmatpush1.bf16.msra.mxu0 0
        %4008 = vmatprep.mubr.bf16.mxu0 0
        %4009 = vmatmul.mubr.bf16.gmra.mrb[0].mxu0 %v3971
        %v4010 = vpop.f32.mrb[0].mxu0
        %v4011 = vadd.f32 0.0, %v4010
        %v4012 = vpop.f32.mrb[0].mxu0
        %v4013 = vpop.f32.mrb[0].mxu0
        %v4014 = vadd.f32 0.0, %v4013
        %v4015 = vpop.f32.mrb[0].mxu0
        %4016 = vdwg.mxu0
        %v4017 = vadd.f32 %v3839, %v4011
        %v4018 = vadd.f32 %v3840, %v4014
        %v4020 = vlaneseq
        %v4021 = vshrl.u32 %v4020, 7
        %v4022 = vsub.s32 0, %v4021
        %v4023 = vrot.slane %v2050, %v4022
        %v4025 = vadd.f32 %v4017, %v4023
        %v4026 = vadd.f32 %v4018, %v4023
        %v4027 = vadd.f32 %v3196, %v4025
        %v4028 = vadd.f32 %v3197, %v4026
        %v4029 = vsel %vm2200, %v4027, 0.0
        %4030 = vadd.xlane.f32.xlu0 %v4029
        %v4031 = vpop.xlane.xlu0 %4030
        %vm4032 = vcmask 253952
        %v4033 = vsel %vm4032, %v4028, 0.0
        %4034 = vadd.xlane.f32.xlu0 %v4033
        %v4035 = vpop.xlane.xlu0 %4034
        %v4036 = vmul.f32 %v4031, %v2953
        %v4037 = vmul.f32 %v4035, %v2953
        %v4038 = vsub.f32 %v4027, %v4036
        %v4039 = vsub.f32 %v4028, %v4037
        %v4040 = vmul.f32 %v4038, %v4038
        %v4041 = vmul.f32 %v4039, %v4039
        %v4042 = vsel %vm2200, %v4040, 0.0
        %4043 = vadd.xlane.f32.xlu0 %v4042
        %v4044 = vpop.xlane.xlu0 %4043
        %v4045 = vsel %vm4032, %v4041, 0.0
        %4046 = vadd.xlane.f32.xlu0 %v4045
        %v4047 = vpop.xlane.xlu0 %4046
        %v4048 = vmul.f32 %v4044, %v2953
        %v4049 = vmul.f32 %v4047, %v2953
        %v4050 = vadd.f32 %v4048, 1e-05
        %v4051 = vadd.f32 %v4049, 1e-05
        %v4052 = vrsqrt.pop %v4050
        %v4053 = vrsqrt.pop %v4051
        %v4054 = vmul.f32 %v4038, %v4052
        %v4055 = vmul.f32 %v4039, %v4053
        %v4057 = vlaneseq
        %v4058 = vshrl.u32 %v4057, 7
        %v4059 = vsub.s32 0, %v4058
        %v4060 = vrot.slane %v2044, %v4059
        %v4062 = vmul.f32 %v4054, %v4060
        %v4063 = vmul.f32 %v4055, %v4060
        %v4065 = vlaneseq
        %v4066 = vshrl.u32 %v4065, 7
        %v4067 = vsub.s32 0, %v4066
        %v4068 = vrot.slane %v2043, %v4067
        %v4070 = vadd.f32 %v4062, %v4068
        %v4071 = vadd.f32 %v4063, %v4068
        %v4072 = vpack.c.bf16 %v4071, %v4070
        %v4073 = vpack.c.bf16 %v2040, %v2039
        %v4074 = vpack.c.bf16 %v2042, %v2041
        %v4076 = vlaneseq
        %v4077 = vshrl.u32 %v4076, 7
        %v4078 = vsub.s32 0, %v4077
        %v4079 = vrot.slane %v2030, %v4078
        %v4082 = vsel %vm2200, %v4072, 0
        %4084 = vmatprep.subr.bf16.mxu0 0
        %4085 = vmatpush1.bf16.msra.mxu0 %v4073
        %4086 = vmatprep.subr.bf16.mxu0 0
        %4087 = vmatpush1.bf16.msra.mxu0 %v4074
        %4088 = vmatprep.subr.bf16.mxu0 0
        %4089 = vmatpush1.bf16.msra.mxu0 0
        %4090 = vmatprep.subr.bf16.mxu0 0
        %4091 = vmatpush1.bf16.msra.mxu0 0
        %4092 = vmatprep.subr.bf16.mxu0 0
        %4093 = vmatpush1.bf16.msra.mxu0 0
        %4094 = vmatprep.subr.bf16.mxu0 0
        %4095 = vmatpush1.bf16.msra.mxu0 0
        %4096 = vmatprep.subr.bf16.mxu0 0
        %4097 = vmatpush1.bf16.msra.mxu0 0
        %4098 = vmatprep.subr.bf16.mxu0 0
        %4099 = vmatpush1.bf16.msra.mxu0 0
        %4100 = vmatprep.subr.bf16.mxu0 0
        %4101 = vmatpush1.bf16.msra.mxu0 0
        %4102 = vmatprep.subr.bf16.mxu0 0
        %4103 = vmatpush1.bf16.msra.mxu0 0
        %4104 = vmatprep.subr.bf16.mxu0 0
        %4105 = vmatpush1.bf16.msra.mxu0 0
        %4106 = vmatprep.subr.bf16.mxu0 0
        %4107 = vmatpush1.bf16.msra.mxu0 0
        %4108 = vmatprep.subr.bf16.mxu0 0
        %4109 = vmatpush1.bf16.msra.mxu0 0
        %4110 = vmatprep.subr.bf16.mxu0 0
        %4111 = vmatpush1.bf16.msra.mxu0 0
        %4112 = vmatprep.subr.bf16.mxu0 0
        %4113 = vmatpush1.bf16.msra.mxu0 0
        %4114 = vmatprep.subr.bf16.mxu0 0
        %4115 = vmatpush1.bf16.msra.mxu0 0
        %4116 = vmatprep.mubr.bf16.mxu0 0
        %4117 = vmatmul.mubr.bf16.gmra.mrb[0].mxu0 %v4082
        %v4118 = vpop.f32.mrb[0].mxu0
        %v4119 = vadd.f32 %v4079, %v4118
        %v4120 = vpop.f32.mrb[0].mxu0
        %v4121 = vpop.f32.mrb[0].mxu0
        %v4122 = vadd.f32 %v4079, %v4121
        %v4123 = vpop.f32.mrb[0].mxu0
        %4124 = vdwg.mxu0
        %v4125 = vpack.c.bf16 %v3140, %v3140
        %v4126 = vpack.c.bf16 %v2032, %v2031
        %v4127 = vpack.c.bf16 %v2034, %v2033
        %v4129 = vlaneseq
        %v4130 = vshrl.u32 %v4129, 7
        %v4131 = vsub.s32 0, %v4130
        %v4132 = vrot.slane %v2028, %v4131
        %v4135 = vsel %vm2200, %v4125, 0
        %4137 = vmatprep.subr.bf16.mxu0 0
        %4138 = vmatpush1.bf16.msra.mxu0 %v4126
        %4139 = vmatprep.subr.bf16.mxu0 0
        %4140 = vmatpush1.bf16.msra.mxu0 %v4127
        %4141 = vmatprep.subr.bf16.mxu0 0
        %4142 = vmatpush1.bf16.msra.mxu0 0
        %4143 = vmatprep.subr.bf16.mxu0 0
        %4144 = vmatpush1.bf16.msra.mxu0 0
        %4145 = vmatprep.subr.bf16.mxu0 0
        %4146 = vmatpush1.bf16.msra.mxu0 0
        %4147 = vmatprep.subr.bf16.mxu0 0
        %4148 = vmatpush1.bf16.msra.mxu0 0
        %4149 = vmatprep.subr.bf16.mxu0 0
        %4150 = vmatpush1.bf16.msra.mxu0 0
        %4151 = vmatprep.subr.bf16.mxu0 0
        %4152 = vmatpush1.bf16.msra.mxu0 0
        %4153 = vmatprep.subr.bf16.mxu0 0
        %4154 = vmatpush1.bf16.msra.mxu0 0
        %4155 = vmatprep.subr.bf16.mxu0 0
        %4156 = vmatpush1.bf16.msra.mxu0 0
        %4157 = vmatprep.subr.bf16.mxu0 0
        %4158 = vmatpush1.bf16.msra.mxu0 0
        %4159 = vmatprep.subr.bf16.mxu0 0
        %4160 = vmatpush1.bf16.msra.mxu0 0
        %4161 = vmatprep.subr.bf16.mxu0 0
        %4162 = vmatpush1.bf16.msra.mxu0 0
        %4163 = vmatprep.subr.bf16.mxu0 0
        %4164 = vmatpush1.bf16.msra.mxu0 0
        %4165 = vmatprep.subr.bf16.mxu0 0
        %4166 = vmatpush1.bf16.msra.mxu0 0
        %4167 = vmatprep.subr.bf16.mxu0 0
        %4168 = vmatpush1.bf16.msra.mxu0 0
        %4169 = vmatprep.mubr.bf16.mxu0 0
        %4170 = vmatmul.mubr.bf16.gmra.mrb[0].mxu0 %v4135
        %v4171 = vpop.f32.mrb[0].mxu0
        %v4172 = vadd.f32 %v4132, %v4171
        %v4173 = vpop.f32.mrb[0].mxu0
        %v4174 = vpop.f32.mrb[0].mxu0
        %v4175 = vpop.f32.mrb[0].mxu0
        %4176 = vdwg.mxu0
        %v4177 = vpack.c.bf16 %v4122, %v4119
        %v4178 = vpack.c.bf16 %v4172, %v4172
        %v4180 = vsel %vm2294, %v4177, 0
        %v4183 = vsel %vm2294, %v4178, 0
        %4185 = vmatprep.subr.bf16.mxu0 0
        %4186 = vmatpush1.bf16.xpose.msra.mxu0 %v4183
        %4187 = vmatprep.subr.bf16.mxu0 0
        %4188 = vmatpush1.bf16.xpose.msra.mxu0 0
        %4189 = vmatprep.subr.bf16.mxu0 0
        %4190 = vmatpush1.bf16.xpose.msra.mxu0 0
        %4191 = vmatprep.subr.bf16.mxu0 0
        %4192 = vmatpush1.bf16.xpose.msra.mxu0 0
        %4193 = vmatprep.subr.bf16.mxu0 0
        %4194 = vmatpush1.bf16.xpose.msra.mxu0 0
        %4195 = vmatprep.subr.bf16.mxu0 0
        %4196 = vmatpush1.bf16.xpose.msra.mxu0 0
        %4197 = vmatprep.subr.bf16.mxu0 0
        %4198 = vmatpush1.bf16.xpose.msra.mxu0 0
        %4199 = vmatprep.subr.bf16.mxu0 0
        %4200 = vmatpush1.bf16.xpose.msra.mxu0 0
        %4201 = vmatprep.subr.bf16.mxu0 0
        %4202 = vmatpush1.bf16.xpose.msra.mxu0 0
        %4203 = vmatprep.subr.bf16.mxu0 0
        %4204 = vmatpush1.bf16.xpose.msra.mxu0 0
        %4205 = vmatprep.subr.bf16.mxu0 0
        %4206 = vmatpush1.bf16.xpose.msra.mxu0 0
        %4207 = vmatprep.subr.bf16.mxu0 0
        %4208 = vmatpush1.bf16.xpose.msra.mxu0 0
        %4209 = vmatprep.subr.bf16.mxu0 0
        %4210 = vmatpush1.bf16.xpose.msra.mxu0 0
        %4211 = vmatprep.subr.bf16.mxu0 0
        %4212 = vmatpush1.bf16.xpose.msra.mxu0 0
        %4213 = vmatprep.subr.bf16.mxu0 0
        %4214 = vmatpush1.bf16.xpose.msra.mxu0 0
        %4215 = vmatprep.subr.bf16.mxu0 0
        %4216 = vmatpush1.bf16.xpose.msra.mxu0 0
        %4217 = vmatprep.mubr.bf16.mxu0 0
        %4218 = vmatmul.mubr.bf16.gmra.mrb[0].mxu0 %v4180
        %v4219 = vpop.f32.mrb[0].mxu0
        %v4220 = vadd.f32 0.0, %v4219
        %v4221 = vpop.f32.mrb[0].mxu0
        %v4222 = vpop.f32.mrb[0].mxu0
        %v4223 = vadd.f32 0.0, %v4222
        %v4224 = vpop.f32.mrb[0].mxu0
        %4225 = vdwg.mxu0
        %v4226 = vmul.f32 %v4220, 0.35355338
        %v4227 = vmul.f32 %v4223, 0.35355338
        %v4228 = vadd.f32 %v4226, %v2346
        %v4229 = vadd.f32 %v4227, %v2346
        %v4230 = vsel %vm2294, %v4228, -inf
        %4231 = vmax.xlane.f32.xlu0 %v4230
        %v4232 = vpop.xlane.xlu0 %4231
        %vm4233 = vcmask 57344
        %v4234 = vsel %vm4233, %v4229, -inf
        %4235 = vmax.xlane.f32.xlu0 %v4234
        %v4236 = vpop.xlane.xlu0 %4235
        %v4237 = vsub.f32 %v4228, %v4232
        %v4238 = vsub.f32 %v4229, %v4236
        %v4239 = vmul.f32 %v4237, 1.442695
        %v4240 = vpow.pop %v4239
        %v4241 = vmul.f32 %v4238, 1.442695
        %v4242 = vpow.pop %v4241
        %v4243 = vsel %vm2294, %v4240, 0.0
        %4244 = vadd.xlane.f32.xlu0 %v4243
        %v4245 = vpop.xlane.xlu0 %4244
        %v4246 = vsel %vm4233, %v4242, 0.0
        %4247 = vadd.xlane.f32.xlu0 %v4246
        %v4248 = vpop.xlane.xlu0 %4247
        %v4249 = vrcp.pop %v4245
        %v4250 = vrcp.pop %v4248
        %v4251 = vmul.f32 %v4240, %v4249
        %v4252 = vmul.f32 %v4242, %v4250
        %v4253 = vpack.c.bf16 %v4252, %v4251
        %4255 = vrot.lane.b32.xlu0 %v4178, 96
        %v4256 = vpop.permute.xlu0 %4255
        %v4258 = vsel %vm2294, %v4253, 0
        %v4261 = vsel %vm2367, %v4256, 0
        %4263 = vmatprep.subr.bf16.mxu0 0
        %4264 = vmatpush1.bf16.msra.mxu0 %v4261
        %4265 = vmatprep.subr.bf16.mxu0 0
        %4266 = vmatpush1.bf16.msra.mxu0 0
        %4267 = vmatprep.subr.bf16.mxu0 0
        %4268 = vmatpush1.bf16.msra.mxu0 0
        %4269 = vmatprep.subr.bf16.mxu0 0
        %4270 = vmatpush1.bf16.msra.mxu0 0
        %4271 = vmatprep.subr.bf16.mxu0 0
        %4272 = vmatpush1.bf16.msra.mxu0 0
        %4273 = vmatprep.subr.bf16.mxu0 0
        %4274 = vmatpush1.bf16.msra.mxu0 0
        %4275 = vmatprep.subr.bf16.mxu0 0
        %4276 = vmatpush1.bf16.msra.mxu0 0
        %4277 = vmatprep.subr.bf16.mxu0 0
        %4278 = vmatpush1.bf16.msra.mxu0 0
        %4279 = vmatprep.subr.bf16.mxu0 0
        %4280 = vmatpush1.bf16.msra.mxu0 0
        %4281 = vmatprep.subr.bf16.mxu0 0
        %4282 = vmatpush1.bf16.msra.mxu0 0
        %4283 = vmatprep.subr.bf16.mxu0 0
        %4284 = vmatpush1.bf16.msra.mxu0 0
        %4285 = vmatprep.subr.bf16.mxu0 0
        %4286 = vmatpush1.bf16.msra.mxu0 0
        %4287 = vmatprep.subr.bf16.mxu0 0
        %4288 = vmatpush1.bf16.msra.mxu0 0
        %4289 = vmatprep.subr.bf16.mxu0 0
        %4290 = vmatpush1.bf16.msra.mxu0 0
        %4291 = vmatprep.subr.bf16.mxu0 0
        %4292 = vmatpush1.bf16.msra.mxu0 0
        %4293 = vmatprep.subr.bf16.mxu0 0
        %4294 = vmatpush1.bf16.msra.mxu0 0
        %4295 = vmatprep.mubr.bf16.mxu0 0
        %4296 = vmatmul.mubr.bf16.gmra.mrb[0].mxu0 %v4258
        %v4297 = vpop.f32.mrb[0].mxu0
        %v4298 = vadd.f32 0.0, %v4297
        %v4299 = vpop.f32.mrb[0].mxu0
        %v4300 = vpop.f32.mrb[0].mxu0
        %v4301 = vadd.f32 0.0, %v4300
        %v4302 = vpop.f32.mrb[0].mxu0
        %4303 = vdwg.mxu0
        %v4304 = vpack.c.bf16 %v4301, %v4298
        %v4305 = vpack.c.bf16 %v2035, %v2035
        %4307 = vrot.lane.b32.xlu0 %v4177, 120
        %v4308 = vpop.permute.xlu0 %4307
        %4309 = vrot.lane.b32.xlu0 %v4178, 120
        %v4310 = vpop.permute.xlu0 %4309
        %v4312 = vsel %vm2294, %v4308, 0
        %v4315 = vsel %vm2294, %v4310, 0
        %4317 = vmatprep.subr.bf16.mxu0 0
        %4318 = vmatpush1.bf16.xpose.msra.mxu0 %v4315
        %4319 = vmatprep.subr.bf16.mxu0 0
        %4320 = vmatpush1.bf16.xpose.msra.mxu0 0
        %4321 = vmatprep.subr.bf16.mxu0 0
        %4322 = vmatpush1.bf16.xpose.msra.mxu0 0
        %4323 = vmatprep.subr.bf16.mxu0 0
        %4324 = vmatpush1.bf16.xpose.msra.mxu0 0
        %4325 = vmatprep.subr.bf16.mxu0 0
        %4326 = vmatpush1.bf16.xpose.msra.mxu0 0
        %4327 = vmatprep.subr.bf16.mxu0 0
        %4328 = vmatpush1.bf16.xpose.msra.mxu0 0
        %4329 = vmatprep.subr.bf16.mxu0 0
        %4330 = vmatpush1.bf16.xpose.msra.mxu0 0
        %4331 = vmatprep.subr.bf16.mxu0 0
        %4332 = vmatpush1.bf16.xpose.msra.mxu0 0
        %4333 = vmatprep.subr.bf16.mxu0 0
        %4334 = vmatpush1.bf16.xpose.msra.mxu0 0
        %4335 = vmatprep.subr.bf16.mxu0 0
        %4336 = vmatpush1.bf16.xpose.msra.mxu0 0
        %4337 = vmatprep.subr.bf16.mxu0 0
        %4338 = vmatpush1.bf16.xpose.msra.mxu0 0
        %4339 = vmatprep.subr.bf16.mxu0 0
        %4340 = vmatpush1.bf16.xpose.msra.mxu0 0
        %4341 = vmatprep.subr.bf16.mxu0 0
        %4342 = vmatpush1.bf16.xpose.msra.mxu0 0
        %4343 = vmatprep.subr.bf16.mxu0 0
        %4344 = vmatpush1.bf16.xpose.msra.mxu0 0
        %4345 = vmatprep.subr.bf16.mxu0 0
        %4346 = vmatpush1.bf16.xpose.msra.mxu0 0
        %4347 = vmatprep.subr.bf16.mxu0 0
        %4348 = vmatpush1.bf16.xpose.msra.mxu0 0
        %4349 = vmatprep.mubr.bf16.mxu0 0
        %4350 = vmatmul.mubr.bf16.gmra.mrb[0].mxu0 %v4312
        %v4351 = vpop.f32.mrb[0].mxu0
        %v4352 = vadd.f32 0.0, %v4351
        %v4353 = vpop.f32.mrb[0].mxu0
        %v4354 = vpop.f32.mrb[0].mxu0
        %v4355 = vadd.f32 0.0, %v4354
        %v4356 = vpop.f32.mrb[0].mxu0
        %4357 = vdwg.mxu0
        %v4358 = vmul.f32 %v4352, 0.35355338
        %v4359 = vmul.f32 %v4355, 0.35355338
        %v4360 = vadd.f32 %v4358, %v2346
        %v4361 = vadd.f32 %v4359, %v2346
        %v4362 = vsel %vm2294, %v4360, -inf
        %4363 = vmax.xlane.f32.xlu0 %v4362
        %v4364 = vpop.xlane.xlu0 %4363
        %v4365 = vsel %vm4233, %v4361, -inf
        %4366 = vmax.xlane.f32.xlu0 %v4365
        %v4367 = vpop.xlane.xlu0 %4366
        %v4368 = vsub.f32 %v4360, %v4364
        %v4369 = vsub.f32 %v4361, %v4367
        %v4370 = vmul.f32 %v4368, 1.442695
        %v4371 = vpow.pop %v4370
        %v4372 = vmul.f32 %v4369, 1.442695
        %v4373 = vpow.pop %v4372
        %v4374 = vsel %vm2294, %v4371, 0.0
        %4375 = vadd.xlane.f32.xlu0 %v4374
        %v4376 = vpop.xlane.xlu0 %4375
        %v4377 = vsel %vm4233, %v4373, 0.0
        %4378 = vadd.xlane.f32.xlu0 %v4377
        %v4379 = vpop.xlane.xlu0 %4378
        %v4380 = vrcp.pop %v4376
        %v4381 = vrcp.pop %v4379
        %v4382 = vmul.f32 %v4371, %v4380
        %v4383 = vmul.f32 %v4373, %v4381
        %v4384 = vpack.c.bf16 %v4383, %v4382
        %4385 = vrot.lane.b32.xlu0 %v4178, 88
        %v4386 = vpop.permute.xlu0 %4385
        %v4388 = vsel %vm2294, %v4384, 0
        %v4391 = vsel %vm2367, %v4386, 0
        %4393 = vmatprep.subr.bf16.mxu0 0
        %4394 = vmatpush1.bf16.msra.mxu0 %v4391
        %4395 = vmatprep.subr.bf16.mxu0 0
        %4396 = vmatpush1.bf16.msra.mxu0 0
        %4397 = vmatprep.subr.bf16.mxu0 0
        %4398 = vmatpush1.bf16.msra.mxu0 0
        %4399 = vmatprep.subr.bf16.mxu0 0
        %4400 = vmatpush1.bf16.msra.mxu0 0
        %4401 = vmatprep.subr.bf16.mxu0 0
        %4402 = vmatpush1.bf16.msra.mxu0 0
        %4403 = vmatprep.subr.bf16.mxu0 0
        %4404 = vmatpush1.bf16.msra.mxu0 0
        %4405 = vmatprep.subr.bf16.mxu0 0
        %4406 = vmatpush1.bf16.msra.mxu0 0
        %4407 = vmatprep.subr.bf16.mxu0 0
        %4408 = vmatpush1.bf16.msra.mxu0 0
        %4409 = vmatprep.subr.bf16.mxu0 0
        %4410 = vmatpush1.bf16.msra.mxu0 0
        %4411 = vmatprep.subr.bf16.mxu0 0
        %4412 = vmatpush1.bf16.msra.mxu0 0
        %4413 = vmatprep.subr.bf16.mxu0 0
        %4414 = vmatpush1.bf16.msra.mxu0 0
        %4415 = vmatprep.subr.bf16.mxu0 0
        %4416 = vmatpush1.bf16.msra.mxu0 0
        %4417 = vmatprep.subr.bf16.mxu0 0
        %4418 = vmatpush1.bf16.msra.mxu0 0
        %4419 = vmatprep.subr.bf16.mxu0 0
        %4420 = vmatpush1.bf16.msra.mxu0 0
        %4421 = vmatprep.subr.bf16.mxu0 0
        %4422 = vmatpush1.bf16.msra.mxu0 0
        %4423 = vmatprep.subr.bf16.mxu0 0
        %4424 = vmatpush1.bf16.msra.mxu0 0
        %4425 = vmatprep.mubr.bf16.mxu0 0
        %4426 = vmatmul.mubr.bf16.gmra.mrb[0].mxu0 %v4388
        %v4427 = vpop.f32.mrb[0].mxu0
        %v4428 = vadd.f32 0.0, %v4427
        %v4429 = vpop.f32.mrb[0].mxu0
        %v4430 = vpop.f32.mrb[0].mxu0
        %v4431 = vadd.f32 0.0, %v4430
        %v4432 = vpop.f32.mrb[0].mxu0
        %4433 = vdwg.mxu0
        %v4434 = vpack.c.bf16 %v4431, %v4428
        %v4435 = vpack.c.bf16 %v2036, %v2036
        %v4437 = vsel %vm2294, %v4434, 0
        %v4440 = vsel %vm2367, %v4435, 0
        %4442 = vmatprep.subr.bf16.mxu0 0
        %4443 = vmatpush1.bf16.msra.mxu0 %v4440
        %4444 = vmatprep.subr.bf16.mxu0 0
        %4445 = vmatpush1.bf16.msra.mxu0 0
        %4446 = vmatprep.subr.bf16.mxu0 0
        %4447 = vmatpush1.bf16.msra.mxu0 0
        %4448 = vmatprep.subr.bf16.mxu0 0
        %4449 = vmatpush1.bf16.msra.mxu0 0
        %4450 = vmatprep.subr.bf16.mxu0 0
        %4451 = vmatpush1.bf16.msra.mxu0 0
        %4452 = vmatprep.subr.bf16.mxu0 0
        %4453 = vmatpush1.bf16.msra.mxu0 0
        %4454 = vmatprep.subr.bf16.mxu0 0
        %4455 = vmatpush1.bf16.msra.mxu0 0
        %4456 = vmatprep.subr.bf16.mxu0 0
        %4457 = vmatpush1.bf16.msra.mxu0 0
        %4458 = vmatprep.subr.bf16.mxu0 0
        %4459 = vmatpush1.bf16.msra.mxu0 0
        %4460 = vmatprep.subr.bf16.mxu0 0
        %4461 = vmatpush1.bf16.msra.mxu0 0
        %4462 = vmatprep.subr.bf16.mxu0 0
        %4463 = vmatpush1.bf16.msra.mxu0 0
        %4464 = vmatprep.subr.bf16.mxu0 0
        %4465 = vmatpush1.bf16.msra.mxu0 0
        %4466 = vmatprep.subr.bf16.mxu0 0
        %4467 = vmatpush1.bf16.msra.mxu0 0
        %4468 = vmatprep.subr.bf16.mxu0 0
        %4469 = vmatpush1.bf16.msra.mxu0 0
        %4470 = vmatprep.subr.bf16.mxu0 0
        %4471 = vmatpush1.bf16.msra.mxu0 0
        %4472 = vmatprep.subr.bf16.mxu0 0
        %4473 = vmatpush1.bf16.msra.mxu0 0
        %4474 = vmatprep.mubr.bf16.mxu0 0
        %4475 = vmatmul.mubr.bf16.gmra.mrb[0].mxu0 %v4437
        %v4476 = vpop.f32.mrb[0].mxu0
        %v4477 = vadd.f32 0.0, %v4476
        %v4478 = vpop.f32.mrb[0].mxu0
        %v4479 = vpop.f32.mrb[0].mxu0
        %v4480 = vadd.f32 0.0, %v4479
        %v4481 = vpop.f32.mrb[0].mxu0
        %4482 = vdwg.mxu0
        %v4484 = vsel %vm2294, %v4304, 0
        %v4487 = vsel %vm2367, %v4305, 0
        %4489 = vmatprep.subr.bf16.mxu0 0
        %4490 = vmatpush1.bf16.msra.mxu0 %v4487
        %4491 = vmatprep.subr.bf16.mxu0 0
        %4492 = vmatpush1.bf16.msra.mxu0 0
        %4493 = vmatprep.subr.bf16.mxu0 0
        %4494 = vmatpush1.bf16.msra.mxu0 0
        %4495 = vmatprep.subr.bf16.mxu0 0
        %4496 = vmatpush1.bf16.msra.mxu0 0
        %4497 = vmatprep.subr.bf16.mxu0 0
        %4498 = vmatpush1.bf16.msra.mxu0 0
        %4499 = vmatprep.subr.bf16.mxu0 0
        %4500 = vmatpush1.bf16.msra.mxu0 0
        %4501 = vmatprep.subr.bf16.mxu0 0
        %4502 = vmatpush1.bf16.msra.mxu0 0
        %4503 = vmatprep.subr.bf16.mxu0 0
        %4504 = vmatpush1.bf16.msra.mxu0 0
        %4505 = vmatprep.subr.bf16.mxu0 0
        %4506 = vmatpush1.bf16.msra.mxu0 0
        %4507 = vmatprep.subr.bf16.mxu0 0
        %4508 = vmatpush1.bf16.msra.mxu0 0
        %4509 = vmatprep.subr.bf16.mxu0 0
        %4510 = vmatpush1.bf16.msra.mxu0 0
        %4511 = vmatprep.subr.bf16.mxu0 0
        %4512 = vmatpush1.bf16.msra.mxu0 0
        %4513 = vmatprep.subr.bf16.mxu0 0
        %4514 = vmatpush1.bf16.msra.mxu0 0
        %4515 = vmatprep.subr.bf16.mxu0 0
        %4516 = vmatpush1.bf16.msra.mxu0 0
        %4517 = vmatprep.subr.bf16.mxu0 0
        %4518 = vmatpush1.bf16.msra.mxu0 0
        %4519 = vmatprep.subr.bf16.mxu0 0
        %4520 = vmatpush1.bf16.msra.mxu0 0
        %4521 = vmatprep.mubr.bf16.mxu0 0
        %4522 = vmatmul.mubr.bf16.gmra.mrb[0].mxu0 %v4484
        %v4523 = vpop.f32.mrb[0].mxu0
        %v4524 = vadd.f32 %v4477, %v4523
        %v4525 = vpop.f32.mrb[0].mxu0
        %v4526 = vpop.f32.mrb[0].mxu0
        %v4527 = vadd.f32 %v4480, %v4526
        %v4528 = vpop.f32.mrb[0].mxu0
        %4529 = vdwg.mxu0
        %4530 = vrot.lane.b32.xlu0 %v4177, 112
        %v4531 = vpop.permute.xlu0 %4530
        %4532 = vrot.lane.b32.xlu0 %v4178, 112
        %v4533 = vpop.permute.xlu0 %4532
        %v4535 = vsel %vm2294, %v4531, 0
        %v4538 = vsel %vm2294, %v4533, 0
        %4540 = vmatprep.subr.bf16.mxu0 0
        %4541 = vmatpush1.bf16.xpose.msra.mxu0 %v4538
        %4542 = vmatprep.subr.bf16.mxu0 0
        %4543 = vmatpush1.bf16.xpose.msra.mxu0 0
        %4544 = vmatprep.subr.bf16.mxu0 0
        %4545 = vmatpush1.bf16.xpose.msra.mxu0 0
        %4546 = vmatprep.subr.bf16.mxu0 0
        %4547 = vmatpush1.bf16.xpose.msra.mxu0 0
        %4548 = vmatprep.subr.bf16.mxu0 0
        %4549 = vmatpush1.bf16.xpose.msra.mxu0 0
        %4550 = vmatprep.subr.bf16.mxu0 0
        %4551 = vmatpush1.bf16.xpose.msra.mxu0 0
        %4552 = vmatprep.subr.bf16.mxu0 0
        %4553 = vmatpush1.bf16.xpose.msra.mxu0 0
        %4554 = vmatprep.subr.bf16.mxu0 0
        %4555 = vmatpush1.bf16.xpose.msra.mxu0 0
        %4556 = vmatprep.subr.bf16.mxu0 0
        %4557 = vmatpush1.bf16.xpose.msra.mxu0 0
        %4558 = vmatprep.subr.bf16.mxu0 0
        %4559 = vmatpush1.bf16.xpose.msra.mxu0 0
        %4560 = vmatprep.subr.bf16.mxu0 0
        %4561 = vmatpush1.bf16.xpose.msra.mxu0 0
        %4562 = vmatprep.subr.bf16.mxu0 0
        %4563 = vmatpush1.bf16.xpose.msra.mxu0 0
        %4564 = vmatprep.subr.bf16.mxu0 0
        %4565 = vmatpush1.bf16.xpose.msra.mxu0 0
        %4566 = vmatprep.subr.bf16.mxu0 0
        %4567 = vmatpush1.bf16.xpose.msra.mxu0 0
        %4568 = vmatprep.subr.bf16.mxu0 0
        %4569 = vmatpush1.bf16.xpose.msra.mxu0 0
        %4570 = vmatprep.subr.bf16.mxu0 0
        %4571 = vmatpush1.bf16.xpose.msra.mxu0 0
        %4572 = vmatprep.mubr.bf16.mxu0 0
        %4573 = vmatmul.mubr.bf16.gmra.mrb[0].mxu0 %v4535
        %v4574 = vpop.f32.mrb[0].mxu0
        %v4575 = vadd.f32 0.0, %v4574
        %v4576 = vpop.f32.mrb[0].mxu0
        %v4577 = vpop.f32.mrb[0].mxu0
        %v4578 = vadd.f32 0.0, %v4577
        %v4579 = vpop.f32.mrb[0].mxu0
        %4580 = vdwg.mxu0
        %v4581 = vmul.f32 %v4575, 0.35355338
        %v4582 = vmul.f32 %v4578, 0.35355338
        %v4583 = vadd.f32 %v4581, %v2346
        %v4584 = vadd.f32 %v4582, %v2346
        %v4585 = vsel %vm2294, %v4583, -inf
        %4586 = vmax.xlane.f32.xlu0 %v4585
        %v4587 = vpop.xlane.xlu0 %4586
        %v4588 = vsel %vm4233, %v4584, -inf
        %4589 = vmax.xlane.f32.xlu0 %v4588
        %v4590 = vpop.xlane.xlu0 %4589
        %v4591 = vsub.f32 %v4583, %v4587
        %v4592 = vsub.f32 %v4584, %v4590
        %v4593 = vmul.f32 %v4591, 1.442695
        %v4594 = vpow.pop %v4593
        %v4595 = vmul.f32 %v4592, 1.442695
        %v4596 = vpow.pop %v4595
        %v4597 = vsel %vm2294, %v4594, 0.0
        %4598 = vadd.xlane.f32.xlu0 %v4597
        %v4599 = vpop.xlane.xlu0 %4598
        %v4600 = vsel %vm4233, %v4596, 0.0
        %4601 = vadd.xlane.f32.xlu0 %v4600
        %v4602 = vpop.xlane.xlu0 %4601
        %v4603 = vrcp.pop %v4599
        %v4604 = vrcp.pop %v4602
        %v4605 = vmul.f32 %v4594, %v4603
        %v4606 = vmul.f32 %v4596, %v4604
        %v4607 = vpack.c.bf16 %v4606, %v4605
        %4608 = vrot.lane.b32.xlu0 %v4178, 80
        %v4609 = vpop.permute.xlu0 %4608
        %v4611 = vsel %vm2294, %v4607, 0
        %v4614 = vsel %vm2367, %v4609, 0
        %4616 = vmatprep.subr.bf16.mxu0 0
        %4617 = vmatpush1.bf16.msra.mxu0 %v4614
        %4618 = vmatprep.subr.bf16.mxu0 0
        %4619 = vmatpush1.bf16.msra.mxu0 0
        %4620 = vmatprep.subr.bf16.mxu0 0
        %4621 = vmatpush1.bf16.msra.mxu0 0
        %4622 = vmatprep.subr.bf16.mxu0 0
        %4623 = vmatpush1.bf16.msra.mxu0 0
        %4624 = vmatprep.subr.bf16.mxu0 0
        %4625 = vmatpush1.bf16.msra.mxu0 0
        %4626 = vmatprep.subr.bf16.mxu0 0
        %4627 = vmatpush1.bf16.msra.mxu0 0
        %4628 = vmatprep.subr.bf16.mxu0 0
        %4629 = vmatpush1.bf16.msra.mxu0 0
        %4630 = vmatprep.subr.bf16.mxu0 0
        %4631 = vmatpush1.bf16.msra.mxu0 0
        %4632 = vmatprep.subr.bf16.mxu0 0
        %4633 = vmatpush1.bf16.msra.mxu0 0
        %4634 = vmatprep.subr.bf16.mxu0 0
        %4635 = vmatpush1.bf16.msra.mxu0 0
        %4636 = vmatprep.subr.bf16.mxu0 0
        %4637 = vmatpush1.bf16.msra.mxu0 0
        %4638 = vmatprep.subr.bf16.mxu0 0
        %4639 = vmatpush1.bf16.msra.mxu0 0
        %4640 = vmatprep.subr.bf16.mxu0 0
        %4641 = vmatpush1.bf16.msra.mxu0 0
        %4642 = vmatprep.subr.bf16.mxu0 0
        %4643 = vmatpush1.bf16.msra.mxu0 0
        %4644 = vmatprep.subr.bf16.mxu0 0
        %4645 = vmatpush1.bf16.msra.mxu0 0
        %4646 = vmatprep.subr.bf16.mxu0 0
        %4647 = vmatpush1.bf16.msra.mxu0 0
        %4648 = vmatprep.mubr.bf16.mxu0 0
        %4649 = vmatmul.mubr.bf16.gmra.mrb[0].mxu0 %v4611
        %v4650 = vpop.f32.mrb[0].mxu0
        %v4651 = vadd.f32 0.0, %v4650
        %v4652 = vpop.f32.mrb[0].mxu0
        %v4653 = vpop.f32.mrb[0].mxu0
        %v4654 = vadd.f32 0.0, %v4653
        %v4655 = vpop.f32.mrb[0].mxu0
        %4656 = vdwg.mxu0
        %v4657 = vpack.c.bf16 %v4654, %v4651
        %v4658 = vpack.c.bf16 %v2037, %v2037
        %v4660 = vsel %vm2294, %v4657, 0
        %v4663 = vsel %vm2367, %v4658, 0
        %4665 = vmatprep.subr.bf16.mxu0 0
        %4666 = vmatpush1.bf16.msra.mxu0 %v4663
        %4667 = vmatprep.subr.bf16.mxu0 0
        %4668 = vmatpush1.bf16.msra.mxu0 0
        %4669 = vmatprep.subr.bf16.mxu0 0
        %4670 = vmatpush1.bf16.msra.mxu0 0
        %4671 = vmatprep.subr.bf16.mxu0 0
        %4672 = vmatpush1.bf16.msra.mxu0 0
        %4673 = vmatprep.subr.bf16.mxu0 0
        %4674 = vmatpush1.bf16.msra.mxu0 0
        %4675 = vmatprep.subr.bf16.mxu0 0
        %4676 = vmatpush1.bf16.msra.mxu0 0
        %4677 = vmatprep.subr.bf16.mxu0 0
        %4678 = vmatpush1.bf16.msra.mxu0 0
        %4679 = vmatprep.subr.bf16.mxu0 0
        %4680 = vmatpush1.bf16.msra.mxu0 0
        %4681 = vmatprep.subr.bf16.mxu0 0
        %4682 = vmatpush1.bf16.msra.mxu0 0
        %4683 = vmatprep.subr.bf16.mxu0 0
        %4684 = vmatpush1.bf16.msra.mxu0 0
        %4685 = vmatprep.subr.bf16.mxu0 0
        %4686 = vmatpush1.bf16.msra.mxu0 0
        %4687 = vmatprep.subr.bf16.mxu0 0
        %4688 = vmatpush1.bf16.msra.mxu0 0
        %4689 = vmatprep.subr.bf16.mxu0 0
        %4690 = vmatpush1.bf16.msra.mxu0 0
        %4691 = vmatprep.subr.bf16.mxu0 0
        %4692 = vmatpush1.bf16.msra.mxu0 0
        %4693 = vmatprep.subr.bf16.mxu0 0
        %4694 = vmatpush1.bf16.msra.mxu0 0
        %4695 = vmatprep.subr.bf16.mxu0 0
        %4696 = vmatpush1.bf16.msra.mxu0 0
        %4697 = vmatprep.mubr.bf16.mxu0 0
        %4698 = vmatmul.mubr.bf16.gmra.mrb[0].mxu0 %v4660
        %v4699 = vpop.f32.mrb[0].mxu0
        %v4700 = vadd.f32 0.0, %v4699
        %v4701 = vpop.f32.mrb[0].mxu0
        %v4702 = vpop.f32.mrb[0].mxu0
        %v4703 = vadd.f32 0.0, %v4702
        %v4704 = vpop.f32.mrb[0].mxu0
        %4705 = vdwg.mxu0
        %v4706 = vadd.f32 %v4524, %v4700
        %v4707 = vadd.f32 %v4527, %v4703
        %4708 = vrot.lane.b32.xlu0 %v4177, 104
        %v4709 = vpop.permute.xlu0 %4708
        %4710 = vrot.lane.b32.xlu0 %v4178, 104
        %v4711 = vpop.permute.xlu0 %4710
        %v4713 = vsel %vm2294, %v4709, 0
        %v4716 = vsel %vm2294, %v4711, 0
        %4718 = vmatprep.subr.bf16.mxu0 0
        %4719 = vmatpush1.bf16.xpose.msra.mxu0 %v4716
        %4720 = vmatprep.subr.bf16.mxu0 0
        %4721 = vmatpush1.bf16.xpose.msra.mxu0 0
        %4722 = vmatprep.subr.bf16.mxu0 0
        %4723 = vmatpush1.bf16.xpose.msra.mxu0 0
        %4724 = vmatprep.subr.bf16.mxu0 0
        %4725 = vmatpush1.bf16.xpose.msra.mxu0 0
        %4726 = vmatprep.subr.bf16.mxu0 0
        %4727 = vmatpush1.bf16.xpose.msra.mxu0 0
        %4728 = vmatprep.subr.bf16.mxu0 0
        %4729 = vmatpush1.bf16.xpose.msra.mxu0 0
        %4730 = vmatprep.subr.bf16.mxu0 0
        %4731 = vmatpush1.bf16.xpose.msra.mxu0 0
        %4732 = vmatprep.subr.bf16.mxu0 0
        %4733 = vmatpush1.bf16.xpose.msra.mxu0 0
        %4734 = vmatprep.subr.bf16.mxu0 0
        %4735 = vmatpush1.bf16.xpose.msra.mxu0 0
        %4736 = vmatprep.subr.bf16.mxu0 0
        %4737 = vmatpush1.bf16.xpose.msra.mxu0 0
        %4738 = vmatprep.subr.bf16.mxu0 0
        %4739 = vmatpush1.bf16.xpose.msra.mxu0 0
        %4740 = vmatprep.subr.bf16.mxu0 0
        %4741 = vmatpush1.bf16.xpose.msra.mxu0 0
        %4742 = vmatprep.subr.bf16.mxu0 0
        %4743 = vmatpush1.bf16.xpose.msra.mxu0 0
        %4744 = vmatprep.subr.bf16.mxu0 0
        %4745 = vmatpush1.bf16.xpose.msra.mxu0 0
        %4746 = vmatprep.subr.bf16.mxu0 0
        %4747 = vmatpush1.bf16.xpose.msra.mxu0 0
        %4748 = vmatprep.subr.bf16.mxu0 0
        %4749 = vmatpush1.bf16.xpose.msra.mxu0 0
        %4750 = vmatprep.mubr.bf16.mxu0 0
        %4751 = vmatmul.mubr.bf16.gmra.mrb[0].mxu0 %v4713
        %v4752 = vpop.f32.mrb[0].mxu0
        %v4753 = vadd.f32 0.0, %v4752
        %v4754 = vpop.f32.mrb[0].mxu0
        %v4755 = vpop.f32.mrb[0].mxu0
        %v4756 = vadd.f32 0.0, %v4755
        %v4757 = vpop.f32.mrb[0].mxu0
        %4758 = vdwg.mxu0
        %v4759 = vmul.f32 %v4753, 0.35355338
        %v4760 = vmul.f32 %v4756, 0.35355338
        %v4761 = vadd.f32 %v4759, %v2346
        %v4762 = vadd.f32 %v4760, %v2346
        %v4763 = vsel %vm2294, %v4761, -inf
        %4764 = vmax.xlane.f32.xlu0 %v4763
        %v4765 = vpop.xlane.xlu0 %4764
        %v4766 = vsel %vm4233, %v4762, -inf
        %4767 = vmax.xlane.f32.xlu0 %v4766
        %v4768 = vpop.xlane.xlu0 %4767
        %v4769 = vsub.f32 %v4761, %v4765
        %v4770 = vsub.f32 %v4762, %v4768
        %v4771 = vmul.f32 %v4769, 1.442695
        %v4772 = vpow.pop %v4771
        %v4773 = vmul.f32 %v4770, 1.442695
        %v4774 = vpow.pop %v4773
        %v4775 = vsel %vm2294, %v4772, 0.0
        %4776 = vadd.xlane.f32.xlu0 %v4775
        %v4777 = vpop.xlane.xlu0 %4776
        %v4778 = vsel %vm4233, %v4774, 0.0
        %4779 = vadd.xlane.f32.xlu0 %v4778
        %v4780 = vpop.xlane.xlu0 %4779
        %v4781 = vrcp.pop %v4777
        %v4782 = vrcp.pop %v4780
        %v4783 = vmul.f32 %v4772, %v4781
        %v4784 = vmul.f32 %v4774, %v4782
        %v4785 = vpack.c.bf16 %v4784, %v4783
        %4786 = vrot.lane.b32.xlu0 %v4178, 72
        %v4787 = vpop.permute.xlu0 %4786
        %v4789 = vsel %vm2294, %v4785, 0
        %v4792 = vsel %vm2367, %v4787, 0
        %4794 = vmatprep.subr.bf16.mxu0 0
        %4795 = vmatpush1.bf16.msra.mxu0 %v4792
        %4796 = vmatprep.subr.bf16.mxu0 0
        %4797 = vmatpush1.bf16.msra.mxu0 0
        %4798 = vmatprep.subr.bf16.mxu0 0
        %4799 = vmatpush1.bf16.msra.mxu0 0
        %4800 = vmatprep.subr.bf16.mxu0 0
        %4801 = vmatpush1.bf16.msra.mxu0 0
        %4802 = vmatprep.subr.bf16.mxu0 0
        %4803 = vmatpush1.bf16.msra.mxu0 0
        %4804 = vmatprep.subr.bf16.mxu0 0
        %4805 = vmatpush1.bf16.msra.mxu0 0
        %4806 = vmatprep.subr.bf16.mxu0 0
        %4807 = vmatpush1.bf16.msra.mxu0 0
        %4808 = vmatprep.subr.bf16.mxu0 0
        %4809 = vmatpush1.bf16.msra.mxu0 0
        %4810 = vmatprep.subr.bf16.mxu0 0
        %4811 = vmatpush1.bf16.msra.mxu0 0
        %4812 = vmatprep.subr.bf16.mxu0 0
        %4813 = vmatpush1.bf16.msra.mxu0 0
        %4814 = vmatprep.subr.bf16.mxu0 0
        %4815 = vmatpush1.bf16.msra.mxu0 0
        %4816 = vmatprep.subr.bf16.mxu0 0
        %4817 = vmatpush1.bf16.msra.mxu0 0
        %4818 = vmatprep.subr.bf16.mxu0 0
        %4819 = vmatpush1.bf16.msra.mxu0 0
        %4820 = vmatprep.subr.bf16.mxu0 0
        %4821 = vmatpush1.bf16.msra.mxu0 0
        %4822 = vmatprep.subr.bf16.mxu0 0
        %4823 = vmatpush1.bf16.msra.mxu0 0
        %4824 = vmatprep.subr.bf16.mxu0 0
        %4825 = vmatpush1.bf16.msra.mxu0 0
        %4826 = vmatprep.mubr.bf16.mxu0 0
        %4827 = vmatmul.mubr.bf16.gmra.mrb[0].mxu0 %v4789
        %v4828 = vpop.f32.mrb[0].mxu0
        %v4829 = vadd.f32 0.0, %v4828
        %v4830 = vpop.f32.mrb[0].mxu0
        %v4831 = vpop.f32.mrb[0].mxu0
        %v4832 = vadd.f32 0.0, %v4831
        %v4833 = vpop.f32.mrb[0].mxu0
        %4834 = vdwg.mxu0
        %v4835 = vpack.c.bf16 %v4832, %v4829
        %v4836 = vpack.c.bf16 %v2038, %v2038
        %v4838 = vsel %vm2294, %v4835, 0
        %v4841 = vsel %vm2367, %v4836, 0
        %4843 = vmatprep.subr.bf16.mxu0 0
        %4844 = vmatpush1.bf16.msra.mxu0 %v4841
        %4845 = vmatprep.subr.bf16.mxu0 0
        %4846 = vmatpush1.bf16.msra.mxu0 0
        %4847 = vmatprep.subr.bf16.mxu0 0
        %4848 = vmatpush1.bf16.msra.mxu0 0
        %4849 = vmatprep.subr.bf16.mxu0 0
        %4850 = vmatpush1.bf16.msra.mxu0 0
        %4851 = vmatprep.subr.bf16.mxu0 0
        %4852 = vmatpush1.bf16.msra.mxu0 0
        %4853 = vmatprep.subr.bf16.mxu0 0
        %4854 = vmatpush1.bf16.msra.mxu0 0
        %4855 = vmatprep.subr.bf16.mxu0 0
        %4856 = vmatpush1.bf16.msra.mxu0 0
        %4857 = vmatprep.subr.bf16.mxu0 0
        %4858 = vmatpush1.bf16.msra.mxu0 0
        %4859 = vmatprep.subr.bf16.mxu0 0
        %4860 = vmatpush1.bf16.msra.mxu0 0
        %4861 = vmatprep.subr.bf16.mxu0 0
        %4862 = vmatpush1.bf16.msra.mxu0 0
        %4863 = vmatprep.subr.bf16.mxu0 0
        %4864 = vmatpush1.bf16.msra.mxu0 0
        %4865 = vmatprep.subr.bf16.mxu0 0
        %4866 = vmatpush1.bf16.msra.mxu0 0
        %4867 = vmatprep.subr.bf16.mxu0 0
        %4868 = vmatpush1.bf16.msra.mxu0 0
        %4869 = vmatprep.subr.bf16.mxu0 0
        %4870 = vmatpush1.bf16.msra.mxu0 0
        %4871 = vmatprep.subr.bf16.mxu0 0
        %4872 = vmatpush1.bf16.msra.mxu0 0
        %4873 = vmatprep.subr.bf16.mxu0 0
        %4874 = vmatpush1.bf16.msra.mxu0 0
        %4875 = vmatprep.mubr.bf16.mxu0 0
        %4876 = vmatmul.mubr.bf16.gmra.mrb[0].mxu0 %v4838
        %v4877 = vpop.f32.mrb[0].mxu0
        %v4878 = vadd.f32 0.0, %v4877
        %v4879 = vpop.f32.mrb[0].mxu0
        %v4880 = vpop.f32.mrb[0].mxu0
        %v4881 = vadd.f32 0.0, %v4880
        %v4882 = vpop.f32.mrb[0].mxu0
        %4883 = vdwg.mxu0
        %v4884 = vadd.f32 %v4706, %v4878
        %v4885 = vadd.f32 %v4707, %v4881
        %v4887 = vlaneseq
        %v4888 = vshrl.u32 %v4887, 7
        %v4889 = vsub.s32 0, %v4888
        %v4890 = vrot.slane %v2029, %v4889
        %v4892 = vadd.f32 %v4884, %v4890
        %v4893 = vadd.f32 %v4885, %v4890
        %v4894 = vadd.f32 %v4070, %v4892
        %v4895 = vadd.f32 %v4071, %v4893
        %v4896 = vsel %vm2200, %v4894, 0.0
        %4897 = vadd.xlane.f32.xlu0 %v4896
        %v4898 = vpop.xlane.xlu0 %4897
        %v4899 = vsel %vm4032, %v4895, 0.0
        %4900 = vadd.xlane.f32.xlu0 %v4899
        %v4901 = vpop.xlane.xlu0 %4900
        %v4902 = vmul.f32 %v4898, %v2953
        %v4903 = vmul.f32 %v4901, %v2953
        %v4904 = vsub.f32 %v4894, %v4902
        %v4905 = vsub.f32 %v4895, %v4903
        %v4906 = vmul.f32 %v4904, %v4904
        %v4907 = vmul.f32 %v4905, %v4905
        %v4908 = vsel %vm2200, %v4906, 0.0
        %4909 = vadd.xlane.f32.xlu0 %v4908
        %v4910 = vpop.xlane.xlu0 %4909
        %v4911 = vsel %vm4032, %v4907, 0.0
        %4912 = vadd.xlane.f32.xlu0 %v4911
        %v4913 = vpop.xlane.xlu0 %4912
        %v4914 = vmul.f32 %v4910, %v2953
        %v4915 = vmul.f32 %v4913, %v2953
        %v4916 = vadd.f32 %v4914, 1e-05
        %v4917 = vadd.f32 %v4915, 1e-05
        %v4918 = vrsqrt.pop %v4916
        %v4919 = vrsqrt.pop %v4917
        %v4920 = vmul.f32 %v4904, %v4918
        %v4921 = vmul.f32 %v4905, %v4919
        %v4923 = vlaneseq
        %v4924 = vshrl.u32 %v4923, 7
        %v4925 = vsub.s32 0, %v4924
        %v4926 = vrot.slane %v2046, %v4925
        %v4928 = vmul.f32 %v4920, %v4926
        %v4929 = vmul.f32 %v4921, %v4926
        %v4931 = vlaneseq
        %v4932 = vshrl.u32 %v4931, 7
        %v4933 = vsub.s32 0, %v4932
        %v4934 = vrot.slane %v2045, %v4933
        %v4936 = vadd.f32 %v4928, %v4934
        %v4937 = vadd.f32 %v4929, %v4934
        %v4938 = vpack.c.bf16 %v4937, %v4936
        %v4939 = vpack.c.bf16 %v2065, %v2064
        %v4940 = vpack.c.bf16 %v2067, %v2066
        %v4942 = vlaneseq
        %v4943 = vshrl.u32 %v4942, 7
        %v4944 = vsub.s32 0, %v4943
        %v4945 = vrot.slane %v2026, %v4944
        %v4948 = vsel %vm2200, %v4938, 0
        %4950 = vmatprep.subr.bf16.mxu0 0
        %4951 = vmatpush1.bf16.msra.mxu0 %v4939
        %4952 = vmatprep.subr.bf16.mxu0 0
        %4953 = vmatpush1.bf16.msra.mxu0 %v4940
        %4954 = vmatprep.subr.bf16.mxu0 0
        %4955 = vmatpush1.bf16.msra.mxu0 0
        %4956 = vmatprep.subr.bf16.mxu0 0
        %4957 = vmatpush1.bf16.msra.mxu0 0
        %4958 = vmatprep.subr.bf16.mxu0 0
        %4959 = vmatpush1.bf16.msra.mxu0 0
        %4960 = vmatprep.subr.bf16.mxu0 0
        %4961 = vmatpush1.bf16.msra.mxu0 0
        %4962 = vmatprep.subr.bf16.mxu0 0
        %4963 = vmatpush1.bf16.msra.mxu0 0
        %4964 = vmatprep.subr.bf16.mxu0 0
        %4965 = vmatpush1.bf16.msra.mxu0 0
        %4966 = vmatprep.subr.bf16.mxu0 0
        %4967 = vmatpush1.bf16.msra.mxu0 0
        %4968 = vmatprep.subr.bf16.mxu0 0
        %4969 = vmatpush1.bf16.msra.mxu0 0
        %4970 = vmatprep.subr.bf16.mxu0 0
        %4971 = vmatpush1.bf16.msra.mxu0 0
        %4972 = vmatprep.subr.bf16.mxu0 0
        %4973 = vmatpush1.bf16.msra.mxu0 0
        %4974 = vmatprep.subr.bf16.mxu0 0
        %4975 = vmatpush1.bf16.msra.mxu0 0
        %4976 = vmatprep.subr.bf16.mxu0 0
        %4977 = vmatpush1.bf16.msra.mxu0 0
        %4978 = vmatprep.subr.bf16.mxu0 0
        %4979 = vmatpush1.bf16.msra.mxu0 0
        %4980 = vmatprep.subr.bf16.mxu0 0
        %4981 = vmatpush1.bf16.msra.mxu0 0
        %4982 = vmatprep.mubr.bf16.mxu0 0
        %4983 = vmatmul.mubr.bf16.gmra.mrb[0].mxu0 %v4948
        %v4984 = vpop.f32.mrb[0].mxu0
        %v4985 = vadd.f32 %v4945, %v4984
        %v4986 = vpop.f32.mrb[0].mxu0
        %v4987 = vpop.f32.mrb[0].mxu0
        %v4988 = vadd.f32 %v4945, %v4987
        %v4989 = vpop.f32.mrb[0].mxu0
        %4990 = vdwg.mxu0
        %v4991 = vmax.f32 %v4985, 0.0
        %v4992 = vmax.f32 %v4988, 0.0
        %v4993 = vpack.c.bf16 %v4992, %v4991
        %v4994 = vpack.c.bf16 %v2069, %v2068
        %v4995 = vpack.c.bf16 %v2071, %v2070
        %v4996 = vpack.c.bf16 %v2073, %v2072
        %v4997 = vpack.c.bf16 %v2075, %v2074
        %v4999 = vlaneseq
        %v5000 = vshrl.u32 %v4999, 7
        %v5001 = vsub.s32 0, %v5000
        %v5002 = vrot.slane %v2027, %v5001
        %v5005 = vsel %vm3042, %v4993, 0
        %5007 = vmatprep.subr.bf16.mxu0 0
        %5008 = vmatpush1.bf16.msra.mxu0 %v4994
        %5009 = vmatprep.subr.bf16.mxu0 0
        %5010 = vmatpush1.bf16.msra.mxu0 %v4995
        %5011 = vmatprep.subr.bf16.mxu0 0
        %5012 = vmatpush1.bf16.msra.mxu0 %v4996
        %5013 = vmatprep.subr.bf16.mxu0 0
        %5014 = vmatpush1.bf16.msra.mxu0 %v4997
        %5015 = vmatprep.subr.bf16.mxu0 0
        %5016 = vmatpush1.bf16.msra.mxu0 0
        %5017 = vmatprep.subr.bf16.mxu0 0
        %5018 = vmatpush1.bf16.msra.mxu0 0
        %5019 = vmatprep.subr.bf16.mxu0 0
        %5020 = vmatpush1.bf16.msra.mxu0 0
        %5021 = vmatprep.subr.bf16.mxu0 0
        %5022 = vmatpush1.bf16.msra.mxu0 0
        %5023 = vmatprep.subr.bf16.mxu0 0
        %5024 = vmatpush1.bf16.msra.mxu0 0
        %5025 = vmatprep.subr.bf16.mxu0 0
        %5026 = vmatpush1.bf16.msra.mxu0 0
        %5027 = vmatprep.subr.bf16.mxu0 0
        %5028 = vmatpush1.bf16.msra.mxu0 0
        %5029 = vmatprep.subr.bf16.mxu0 0
        %5030 = vmatpush1.bf16.msra.mxu0 0
        %5031 = vmatprep.subr.bf16.mxu0 0
        %5032 = vmatpush1.bf16.msra.mxu0 0
        %5033 = vmatprep.subr.bf16.mxu0 0
        %5034 = vmatpush1.bf16.msra.mxu0 0
        %5035 = vmatprep.subr.bf16.mxu0 0
        %5036 = vmatpush1.bf16.msra.mxu0 0
        %5037 = vmatprep.subr.bf16.mxu0 0
        %5038 = vmatpush1.bf16.msra.mxu0 0
        %5039 = vmatprep.mubr.bf16.mxu0 0
        %5040 = vmatmul.mubr.bf16.gmra.mrb[0].mxu0 %v5005
        %v5041 = vpop.f32.mrb[0].mxu0
        %v5042 = vadd.f32 %v5002, %v5041
        %v5043 = vpop.f32.mrb[0].mxu0
        %v5044 = vpop.f32.mrb[0].mxu0
        %v5045 = vadd.f32 %v5002, %v5044
        %v5046 = vpop.f32.mrb[0].mxu0
        %5047 = vdwg.mxu0
        %v5048 = vadd.f32 %v4936, %v5042
        %v5049 = vadd.f32 %v4937, %v5045
        %v5050 = vsel %vm2200, %v5048, 0.0
        %5051 = vadd.xlane.f32.xlu0 %v5050
        %v5052 = vpop.xlane.xlu0 %5051
        %v5053 = vsel %vm4032, %v5049, 0.0
        %5054 = vadd.xlane.f32.xlu0 %v5053
        %v5055 = vpop.xlane.xlu0 %5054
        %v5056 = vmul.f32 %v5052, %v2953
        %v5057 = vmul.f32 %v5055, %v2953
        %v5058 = vsub.f32 %v5048, %v5056
        %v5059 = vsub.f32 %v5049, %v5057
        %v5060 = vmul.f32 %v5058, %v5058
        %v5061 = vmul.f32 %v5059, %v5059
        %v5062 = vsel %vm2200, %v5060, 0.0
        %5063 = vadd.xlane.f32.xlu0 %v5062
        %v5064 = vpop.xlane.xlu0 %5063
        %v5065 = vsel %vm4032, %v5061, 0.0
        %5066 = vadd.xlane.f32.xlu0 %v5065
        %v5067 = vpop.xlane.xlu0 %5066
        %v5068 = vmul.f32 %v5064, %v2953
        %v5069 = vmul.f32 %v5067, %v2953
        %v5070 = vadd.f32 %v5068, 1e-05
        %v5071 = vadd.f32 %v5069, 1e-05
        %v5072 = vrsqrt.pop %v5070
        %v5073 = vrsqrt.pop %v5071
        %v5074 = vmul.f32 %v5058, %v5072
        %v5075 = vmul.f32 %v5059, %v5073
        %v5077 = vlaneseq
        %v5078 = vshrl.u32 %v5077, 7
        %v5079 = vsub.s32 0, %v5078
        %v5080 = vrot.slane %v2048, %v5079
        %v5082 = vmul.f32 %v5074, %v5080
        %v5083 = vmul.f32 %v5075, %v5080
        %v5085 = vlaneseq
        %v5086 = vshrl.u32 %v5085, 7
        %v5087 = vsub.s32 0, %v5086
        %v5088 = vrot.slane %v2047, %v5087
        %v5090 = vadd.f32 %v5082, %v5088
        %v5091 = vadd.f32 %v5083, %v5088
        %v5092 = vpack.c.bf16 %v5091, %v5090
        %v5093 = vpack.c.bf16 %v2116, %v2115
        %v5094 = vpack.c.bf16 %v2118, %v2117
        %v5096 = vlaneseq
        %v5097 = vshrl.u32 %v5096, 7
        %v5098 = vsub.s32 0, %v5097
        %v5099 = vrot.slane %v2113, %v5098
        %v5102 = vsel %vm2200, %v5092, 0
        %5104 = vmatprep.subr.bf16.mxu0 0
        %5105 = vmatpush1.bf16.msra.mxu0 %v5093
        %5106 = vmatprep.subr.bf16.mxu0 0
        %5107 = vmatpush1.bf16.msra.mxu0 %v5094
        %5108 = vmatprep.subr.bf16.mxu0 0
        %5109 = vmatpush1.bf16.msra.mxu0 0
        %5110 = vmatprep.subr.bf16.mxu0 0
        %5111 = vmatpush1.bf16.msra.mxu0 0
        %5112 = vmatprep.subr.bf16.mxu0 0
        %5113 = vmatpush1.bf16.msra.mxu0 0
        %5114 = vmatprep.subr.bf16.mxu0 0
        %5115 = vmatpush1.bf16.msra.mxu0 0
        %5116 = vmatprep.subr.bf16.mxu0 0
        %5117 = vmatpush1.bf16.msra.mxu0 0
        %5118 = vmatprep.subr.bf16.mxu0 0
        %5119 = vmatpush1.bf16.msra.mxu0 0
        %5120 = vmatprep.subr.bf16.mxu0 0
        %5121 = vmatpush1.bf16.msra.mxu0 0
        %5122 = vmatprep.subr.bf16.mxu0 0
        %5123 = vmatpush1.bf16.msra.mxu0 0
        %5124 = vmatprep.subr.bf16.mxu0 0
        %5125 = vmatpush1.bf16.msra.mxu0 0
        %5126 = vmatprep.subr.bf16.mxu0 0
        %5127 = vmatpush1.bf16.msra.mxu0 0
        %5128 = vmatprep.subr.bf16.mxu0 0
        %5129 = vmatpush1.bf16.msra.mxu0 0
        %5130 = vmatprep.subr.bf16.mxu0 0
        %5131 = vmatpush1.bf16.msra.mxu0 0
        %5132 = vmatprep.subr.bf16.mxu0 0
        %5133 = vmatpush1.bf16.msra.mxu0 0
        %5134 = vmatprep.subr.bf16.mxu0 0
        %5135 = vmatpush1.bf16.msra.mxu0 0
        %5136 = vmatprep.mubr.bf16.mxu0 0
        %5137 = vmatmul.mubr.bf16.gmra.mrb[0].mxu0 %v5102
        %v5138 = vpop.f32.mrb[0].mxu0
        %v5139 = vadd.f32 %v5099, %v5138
        %v5140 = vpop.f32.mrb[0].mxu0
        %v5141 = vpop.f32.mrb[0].mxu0
        %v5142 = vadd.f32 %v5099, %v5141
        %v5143 = vpop.f32.mrb[0].mxu0
        %5144 = vdwg.mxu0
        %v5145 = vmax.f32 %v5139, 0.0
        %v5146 = vmax.f32 %v5142, 0.0
        %v5147 = vpack.c.bf16 %v5146, %v5145
        %v5148 = vpack.c.bf16 %v2120, %v2119
        %v5149 = vpack.c.bf16 %v2122, %v2121
        %v5151 = vlaneseq
        %v5152 = vshrl.u32 %v5151, 7
        %v5153 = vsub.s32 0, %v5152
        %v5154 = vrot.slane %v2114, %v5153
        %v5157 = vsel %vm2200, %v5147, 0
        %5159 = vmatprep.subr.bf16.mxu0 0
        %5160 = vmatpush1.bf16.msra.mxu0 %v5148
        %5161 = vmatprep.subr.bf16.mxu0 0
        %5162 = vmatpush1.bf16.msra.mxu0 %v5149
        %5163 = vmatprep.subr.bf16.mxu0 0
        %5164 = vmatpush1.bf16.msra.mxu0 0
        %5165 = vmatprep.subr.bf16.mxu0 0
        %5166 = vmatpush1.bf16.msra.mxu0 0
        %5167 = vmatprep.subr.bf16.mxu0 0
        %5168 = vmatpush1.bf16.msra.mxu0 0
        %5169 = vmatprep.subr.bf16.mxu0 0
        %5170 = vmatpush1.bf16.msra.mxu0 0
        %5171 = vmatprep.subr.bf16.mxu0 0
        %5172 = vmatpush1.bf16.msra.mxu0 0
        %5173 = vmatprep.subr.bf16.mxu0 0
        %5174 = vmatpush1.bf16.msra.mxu0 0
        %5175 = vmatprep.subr.bf16.mxu0 0
        %5176 = vmatpush1.bf16.msra.mxu0 0
        %5177 = vmatprep.subr.bf16.mxu0 0
        %5178 = vmatpush1.bf16.msra.mxu0 0
        %5179 = vmatprep.subr.bf16.mxu0 0
        %5180 = vmatpush1.bf16.msra.mxu0 0
        %5181 = vmatprep.subr.bf16.mxu0 0
        %5182 = vmatpush1.bf16.msra.mxu0 0
        %5183 = vmatprep.subr.bf16.mxu0 0
        %5184 = vmatpush1.bf16.msra.mxu0 0
        %5185 = vmatprep.subr.bf16.mxu0 0
        %5186 = vmatpush1.bf16.msra.mxu0 0
        %5187 = vmatprep.subr.bf16.mxu0 0
        %5188 = vmatpush1.bf16.msra.mxu0 0
        %5189 = vmatprep.subr.bf16.mxu0 0
        %5190 = vmatpush1.bf16.msra.mxu0 0
        %5191 = vmatprep.mubr.bf16.mxu0 0
        %5192 = vmatmul.mubr.bf16.gmra.mrb[0].mxu0 %v5157
        %v5193 = vpop.f32.mrb[0].mxu0
        %v5194 = vpop.f32.mrb[0].mxu0
        %v5195 = vpop.f32.mrb[0].mxu0
        %v5196 = vadd.f32 %v5154, %v5195
        %v5197 = vpop.f32.mrb[0].mxu0
        %5198 = vdwg.mxu0
        %v5199 = vlaneseq
        %v5200 = vshrl.u32 %v5199, 7
        %v5201 = vadd.s32 %v5200, 1
        %v5202 = vcvt.s32.f32 %v5201
        %v5203 = vmul.f32 %v5196, %v5202
        %v5204 = vld [vmem:[%s1762] sm:$0x1]
        %v5205 = vadd.f32 %v5203, %v5204
        %vm5206 = vcmask 24576
        %5207 = vst.msk [vmem:[%s2013] sm:$0x1] %vm5206, %v5205
        %s5208 = sand.u32 %s1265, 1
        %s5209 = scalar_lea.sflag [#allocation4], %s5208
        %s5210 = sand.u32 %s1265, 1
        %s5211 = scalar_lea.vmem [#allocation52], %s5210
        // Predicated region
        $region357: #{tpu_custom_call.1} parent=227 // pred_check
          %p5212 = pneg %p1275
        $region358: #{tpu_custom_call.1} parent=227 // pred_check_branch
          %5214 = sbr.rel (%p5212) target = $region360
        $region359: #{tpu_custom_call.1} parent=227 // pred_region
          %s5216 = ssub.s32 16, 16
          %5217 = vsyncadd %s5209, %s5216
          %s5218 = smul.addr %s140, 16
          %s5219 = scalar_lea.hbm %s105, %s5218
          %s5221 = sshll.u32 %s5211, 4
          %s5222 = int_to_ptr.vmem [resolvable:$true] %s5221
          %5224 = dma.vmem_to_hbm [thread:$0]  %s5222, 16, %s5219, %s5209
        $region360: #{tpu_custom_call.1} parent=227 // pred_fallthru
          _
      $region228: #{tpu_custom_call.1} parent=5 // pred_fallthru
        _
      %p5225 = scmp.le.s32.totalorder 2, %s135
      // Predicated region
      $region361: #{tpu_custom_call.1} parent=5 // pred_check
        %p5226 = pneg %p5225
      $region362: #{tpu_custom_call.1} parent=5 // pred_check_branch
        %5228 = sbr.rel (%p5226) target = $region364
      $region363: #{tpu_custom_call.1} parent=5 // pred_region
        %s5229 = ssub.s32 %s135, 2
        // Predicated region
        $region365: #{tpu_custom_call.1} parent=363 // pred_check
          %p5230 = pneg %p1281
        $region366: #{tpu_custom_call.1} parent=363 // pred_check_branch
          %5232 = sbr.rel (%p5230) target = $region368
        $region367: #{tpu_custom_call.1} parent=363 // pred_region
          %s5233 = sand.u32 %s1266, 1
          %s5234 = scalar_lea.sflag [#allocation4], %s5233
          %s5235 = sand.u32 %s1266, 1
          %s5236 = scalar_lea.vmem [#allocation52], %s5235
          %5237 = dma.done %s5234, 16
        $region368: #{tpu_custom_call.1} parent=363 // pred_fallthru
          _
      $region364: #{tpu_custom_call.1} parent=5 // pred_fallthru
        _
    $region6: #{tpu_custom_call.1} parent=1 // loop_footer
      %s139 = sadd.s32 1, %s135
    $region7: #{tpu_custom_call.1} parent=1 // loop_footer_branch
      %134 = sbr.rel target = $region3
    $region8: #{tpu_custom_call.1} parent=1 // loop_exit
      _
    %5238 = vsyncpa [#allocation3], 1
    %s5239 = scalar_lea.sflag [#allocation3], 1
    %5240 = vsyncpa %s5239, 1
    %5241 = vsyncpa [#allocation6], 1
    %s5242 = scalar_lea.sflag [#allocation6], 1
    %5243 = vsyncpa %s5242, 1
    %5244 = vsyncpa [#allocation9], 1
    %5245 = vsyncpa [#allocation12], 1
    %5246 = vsyncpa [#allocation15], 1
    %5247 = vsyncpa [#allocation18], 1
    %5248 = vsyncpa [#allocation21], 1
    %5249 = vsyncpa [#allocation24], 1
    %5250 = vsyncpa [#allocation27], 1
    %5251 = vsyncpa [#allocation30], 1
    %5252 = vsyncpa [#allocation33], 1
    %5253 = vsyncpa [#allocation36], 1
    %5254 = vsyncpa [#allocation39], 1
    %5255 = vsyncpa [#allocation42], 1
    %5256 = vsyncpa [#allocation45], 1
    %5257 = vsyncpa [#allocation48], 1
    %5258 = vsyncpa [#allocation51], 1
    %5259 = vsyncpa [#allocation4], 1
    %s5260 = scalar_lea.sflag [#allocation4], 1
    %5261 = vsyncpa %s5260, 1

</llo_original>
